<compile_context>
chip_gen: v7x
topology: tpu7x:2x2x1
jax: 0.10.0
libtpu: 0.0.40
codegen_flags: <defaults>
</compile_context>

<pallas_src>
import jax
import jax.numpy as jnp
from jax.experimental import pallas as pl
from jax.experimental.pallas import tpu as pltpu

EPS = 1e-3  # BatchNorm2d eps


def se_conv_bn_kernel(xse_ref, w47_ref, b47_ref, x_hbm_ref, w48_hbm_ref, gb_ref,
                      o_ref, x_buf, w_buf, sem):
    # ---- kick off the two large HBM -> VMEM copies; SE branch runs underneath ----
    cp_x = pltpu.make_async_copy(x_hbm_ref, x_buf, sem.at[0])
    cp_w = pltpu.make_async_copy(w48_hbm_ref, w_buf, sem.at[1])
    cp_x.start()
    cp_w.start()

    # ---- SE branch: 1x1 conv (32 -> 512) on a 1x1 spatial input, then sigmoid ----
    # s[1,512] = xse[1,32] @ w47_t[32,512] + b47[1,512]   (w47 pre-transposed, lane-dense)
    s = jax.lax.dot_general(
        xse_ref[...], w47_ref[...],
        dimension_numbers=(((1,), (0,)), ((), ())),
        precision=jax.lax.Precision.HIGHEST,
        preferred_element_type=jnp.float32) + b47_ref[...]
    s = 1.0 / (1.0 + jnp.exp(-s))                        # exact sigmoid [1, 512]

    # ---- fold the per-input-channel SE scale into the 512 -> 128 conv weight ----
    cp_w.wait()
    w_scaled = w_buf[...].astype(jnp.float32) * s        # [128,512] * [1,512] -> f32

    # ---- main 1x1 conv, channels-first: y^T[128,P] = w_scaled @ x^T[512,P] ----
    cp_x.wait()
    y = jnp.dot(w_scaled, x_buf[...].astype(jnp.float32),
                precision=jax.lax.Precision.HIGHEST,
                preferred_element_type=jnp.float32)      # [128, P]

    # ---- BatchNorm2d (training mode): batch stats over N*H*W (= lane axis) ----
    inv_p = 1.0 / y.shape[1]                             # true count (no padding)
    mean = jnp.sum(y, axis=1, keepdims=True) * inv_p     # [128, 1]
    yc = y - mean
    var = jnp.maximum(jnp.sum(yc * yc, axis=1, keepdims=True) * inv_p, 0.0)  # two-pass, clamped
    gb = gb_ref[...]                                     # [128, 2] = [gamma | beta]
    gamma = gb[:, 0:1]
    beta = gb[:, 1:2]
    o_ref[...] = yc * (jax.lax.rsqrt(var + EPS) * gamma) + beta


def module_forward(x152, x149, w47, b47, w48, gamma, beta):
    """x152: [1,32,1,1]; x149: [1,512,14,14] NCHW (f32 or bf16). Returns NCHW [1,128,14,14] f32."""
    N, C_se = x152.shape[:2]
    _, C_in, H, W = x149.shape
    C_out = w48.shape[0]
    P = N * H * W
    assert N == 1, "channels-first reshape below assumes batch size 1 (module spec)"

    # Wrapper glue: pure reshapes on the big tensors; tiny one-time parameter prep otherwise.
    xse = x152.reshape(N, C_se).astype(jnp.float32)                 # [1, 32]
    w47_t = w47.reshape(C_in, C_se).T.astype(jnp.float32)           # [32, 512]   lane-dense, one-time
    b47_r = b47.reshape(1, C_in).astype(jnp.float32)                # [1, 512]
    x_cf = x149.astype(jnp.bfloat16).reshape(C_in, P)               # [512, 196]  channels-first view, bf16
    w48_m = w48.astype(jnp.bfloat16).reshape(C_out, C_in)           # [128, 512]  bf16
    gb = jnp.concatenate([gamma.reshape(C_out, 1),
                          beta.reshape(C_out, 1)], axis=1).astype(jnp.float32)   # [128, 2]

    flops = (2 * N * C_se * C_in          # SE conv
             + C_out * C_in               # weight scaling
             + 2 * C_out * C_in * P       # main matmul
             + 10 * C_out * P)            # BN elementwise (two-pass)
    bytes_accessed = (4 * (N * C_se + C_in * C_se + C_in + 2 * C_out + C_out * P)
                      + 2 * (C_in * P + C_out * C_in))              # bf16 for the two big operands
    transcendentals = C_in + C_out        # exp + rsqrt

    vmem = pl.BlockSpec(memory_space=pltpu.MemorySpace.VMEM)
    hbm = pl.BlockSpec(memory_space=pl.ANY)

    y_t = pl.pallas_call(
        se_conv_bn_kernel,
        out_shape=jax.ShapeDtypeStruct((C_out, P), jnp.float32),
        in_specs=[vmem, vmem, vmem, hbm, hbm, vmem],
        out_specs=vmem,
        scratch_shapes=[
            pltpu.VMEM((C_in, P), jnp.bfloat16),      # x149 channels-first buffer
            pltpu.VMEM((C_out, C_in), jnp.bfloat16),  # w48 buffer
            pltpu.SemaphoreType.DMA((2,)),
        ],
        cost_estimate=pl.CostEstimate(flops=flops,
                                      transcendentals=transcendentals,
                                      bytes_accessed=bytes_accessed),
    )(xse, w47_t, b47_r, x_cf, w48_m, gb)

    # [128, 196] -> NCHW [1, 128, 14, 14] is a pure reshape (row-major bitcast)
    return y_t.reshape(N, C_out, H, W)


def reference_forward(x152, x149, w47, b47, w48, gamma, beta):
    # pure-JAX reference (f32, HIGHEST precision), same math as the PyTorch module
    N, C_in, H, W = x149.shape
    C_out = w48.shape[0]
    x149f = x149.astype(jnp.float32)
    w48f = w48.reshape(C_out, C_in).astype(jnp.float32)
    logits = jnp.dot(x152.reshape(N, -1).astype(jnp.float32),
                     w47.reshape(C_in, -1).T.astype(jnp.float32),
                     precision=jax.lax.Precision.HIGHEST) + b47[None, :]
    s = 1.0 / (1.0 + jnp.exp(-logits))                                      # [N, 512]
    x = x149f * s[:, :, None, None]                                         # [N, 512, H, W]
    y = jnp.einsum("nchw,oc->nohw", x, w48f,
                   precision=jax.lax.Precision.HIGHEST)                     # [N, 128, H, W]
    mean = jnp.mean(y, axis=(0, 2, 3), keepdims=True)
    var = jnp.mean(jnp.square(y - mean), axis=(0, 2, 3), keepdims=True)
    return ((y - mean) * jax.lax.rsqrt(var + EPS) * gamma[None, :, None, None]
            + beta[None, :, None, None])


if __name__ == "__main__":
    key = jax.random.PRNGKey(0)
    k1, k2, k3, k4, k5, k6, k7 = jax.random.split(key, 7)

    # inputs (shapes from the PyTorch module); large activation fed in bf16 ("cast upstream")
    x152 = jax.random.normal(k1, (1, 32, 1, 1), dtype=jnp.float32)
    x149 = jax.random.normal(k2, (1, 512, 14, 14), dtype=jnp.float32).astype(jnp.bfloat16)

    # deterministic parameter init (shapes from __init__); big conv weight in bf16
    w47 = 0.1 * jax.random.normal(k3, (512, 32, 1, 1), dtype=jnp.float32)     # conv2d47 weight
    b47 = 0.1 * jax.random.normal(k4, (512,), dtype=jnp.float32)              # conv2d47 bias
    w48 = (0.05 * jax.random.normal(k5, (128, 512, 1, 1),
                                    dtype=jnp.float32)).astype(jnp.bfloat16)  # conv2d48 weight (no bias)
    gamma = 1.0 + 0.1 * jax.random.normal(k6, (128,), dtype=jnp.float32)      # BN affine weight
    beta = 0.1 * jax.random.normal(k7, (128,), dtype=jnp.float32)             # BN affine bias

    out = jax.block_until_ready(module_forward(x152, x149, w47, b47, w48, gamma, beta))
    assert out.shape == (1, 128, 14, 14), out.shape

    ref = jax.block_until_ready(reference_forward(x152, x149, w47, b47, w48, gamma, beta))
    max_err = float(jnp.max(jnp.abs(out - ref)))
    assert jnp.allclose(out, ref, rtol=5e-3, atol=5e-3), max_err

    print("KERNEL_OK")
</pallas_src>

<mosaic_0001>
module attributes {stable_mosaic.version = 11 : i64} {
  func.func @se_conv_bn_kernel(%arg0: memref<1x32xf32, #tpu.memory_space<vmem>>, %arg1: memref<32x512xf32, #tpu.memory_space<vmem>>, %arg2: memref<1x512xf32, #tpu.memory_space<vmem>>, %arg3: memref<512x196xbf16, #tpu.memory_space<any>>, %arg4: memref<128x512xbf16, #tpu.memory_space<any>>, %arg5: memref<128x2xf32, #tpu.memory_space<vmem>>, %arg6: memref<128x196xf32, #tpu.memory_space<vmem>>, %arg7: memref<512x196xbf16, #tpu.memory_space<vmem>>, %arg8: memref<128x512xbf16, #tpu.memory_space<vmem>>, %arg9: memref<2x!tpu.dma_semaphore, #tpu.memory_space<semaphore_mem>>) attributes {dimension_semantics = [], scalar_prefetch = 0 : i64, scratch_operands = 3 : i64, tpu.core_type = #tpu.core_type<tc>} {
    %c0_i32 = arith.constant 0 : i32
    %0 = tpu.memref_slice %arg9[%c0_i32] : memref<2x!tpu.dma_semaphore, #tpu.memory_space<semaphore_mem>> -> memref<1x!tpu.dma_semaphore, #tpu.memory_space<semaphore_mem>>
    %1 = tpu.memref_squeeze %0 : memref<1x!tpu.dma_semaphore, #tpu.memory_space<semaphore_mem>> -> memref<!tpu.dma_semaphore, #tpu.memory_space<semaphore_mem>>
    tpu.enqueue_dma source(%arg3 : memref<512x196xbf16, #tpu.memory_space<any>>) target(%arg7 : memref<512x196xbf16, #tpu.memory_space<vmem>>) target_semaphore(%1 : memref<!tpu.dma_semaphore, #tpu.memory_space<semaphore_mem>>)
    %c1_i32 = arith.constant 1 : i32
    %2 = tpu.memref_slice %arg9[%c1_i32] : memref<2x!tpu.dma_semaphore, #tpu.memory_space<semaphore_mem>> -> memref<1x!tpu.dma_semaphore, #tpu.memory_space<semaphore_mem>>
    %3 = tpu.memref_squeeze %2 : memref<1x!tpu.dma_semaphore, #tpu.memory_space<semaphore_mem>> -> memref<!tpu.dma_semaphore, #tpu.memory_space<semaphore_mem>>
    tpu.enqueue_dma source(%arg4 : memref<128x512xbf16, #tpu.memory_space<any>>) target(%arg8 : memref<128x512xbf16, #tpu.memory_space<vmem>>) target_semaphore(%3 : memref<!tpu.dma_semaphore, #tpu.memory_space<semaphore_mem>>)
    %c0 = arith.constant 0 : index
    %c0_0 = arith.constant 0 : index
    %4 = vector.load %arg0[%c0, %c0_0] : memref<1x32xf32, #tpu.memory_space<vmem>>, vector<1x32xf32>
    %c0_1 = arith.constant 0 : index
    %c0_2 = arith.constant 0 : index
    %5 = vector.load %arg1[%c0_1, %c0_2] : memref<32x512xf32, #tpu.memory_space<vmem>>, vector<32x512xf32>
    %cst = arith.constant dense<0.000000e+00> : vector<1x512xf32>
    %6 = tpu.matmul %4, %5, %cst {dimension_numbers = #tpu.dot_dimension_numbers<[1], [0], [0], [1], [0, 0, 1, 1], [], []>, precision = #tpu.contract_precision<fp32>} : vector<1x32xf32>, vector<32x512xf32>, vector<1x512xf32> -> vector<1x512xf32>
    %c0_3 = arith.constant 0 : index
    %c0_4 = arith.constant 0 : index
    %7 = vector.load %arg2[%c0_3, %c0_4] : memref<1x512xf32, #tpu.memory_space<vmem>>, vector<1x512xf32>
    %8 = arith.addf %6, %7 : vector<1x512xf32>
    %cst_5 = arith.constant 0.000000e+00 : f32
    %9 = vector.broadcast %cst_5 : f32 to vector<1x512xf32>
    %10 = arith.subf %9, %8 : vector<1x512xf32>
    %11 = math.exp %10 : vector<1x512xf32>
    %cst_6 = arith.constant 1.000000e+00 : f32
    %12 = vector.broadcast %cst_6 : f32 to vector<1x512xf32>
    %13 = arith.addf %12, %11 : vector<1x512xf32>
    %cst_7 = arith.constant 1.000000e+00 : f32
    %14 = vector.broadcast %cst_7 : f32 to vector<1x512xf32>
    %15 = arith.divf %14, %13 : vector<1x512xf32>
    %c1_i32_8 = arith.constant 1 : i32
    %16 = tpu.memref_slice %arg9[%c1_i32_8] : memref<2x!tpu.dma_semaphore, #tpu.memory_space<semaphore_mem>> -> memref<1x!tpu.dma_semaphore, #tpu.memory_space<semaphore_mem>>
    %17 = tpu.memref_squeeze %16 : memref<1x!tpu.dma_semaphore, #tpu.memory_space<semaphore_mem>> -> memref<!tpu.dma_semaphore, #tpu.memory_space<semaphore_mem>>
    tpu.wait_dma2 semaphore(%17 : memref<!tpu.dma_semaphore, #tpu.memory_space<semaphore_mem>>) src(%arg4 : memref<128x512xbf16, #tpu.memory_space<any>>) dst(%arg8 : memref<128x512xbf16, #tpu.memory_space<vmem>>)
    %c0_9 = arith.constant 0 : index
    %c0_10 = arith.constant 0 : index
    %18 = vector.load %arg8[%c0_9, %c0_10] : memref<128x512xbf16, #tpu.memory_space<vmem>>, vector<128x512xbf16>
    %19 = arith.extf %18 : vector<128x512xbf16> to vector<128x512xf32>
    %20 = vector.broadcast %15 : vector<1x512xf32> to vector<128x512xf32>
    %21 = arith.mulf %19, %20 : vector<128x512xf32>
    %c0_i32_11 = arith.constant 0 : i32
    %22 = tpu.memref_slice %arg9[%c0_i32_11] : memref<2x!tpu.dma_semaphore, #tpu.memory_space<semaphore_mem>> -> memref<1x!tpu.dma_semaphore, #tpu.memory_space<semaphore_mem>>
    %23 = tpu.memref_squeeze %22 : memref<1x!tpu.dma_semaphore, #tpu.memory_space<semaphore_mem>> -> memref<!tpu.dma_semaphore, #tpu.memory_space<semaphore_mem>>
    tpu.wait_dma2 semaphore(%23 : memref<!tpu.dma_semaphore, #tpu.memory_space<semaphore_mem>>) src(%arg3 : memref<512x196xbf16, #tpu.memory_space<any>>) dst(%arg7 : memref<512x196xbf16, #tpu.memory_space<vmem>>)
    %c0_12 = arith.constant 0 : index
    %c0_13 = arith.constant 0 : index
    %24 = vector.load %arg7[%c0_12, %c0_13] : memref<512x196xbf16, #tpu.memory_space<vmem>>, vector<512x196xbf16>
    %25 = arith.extf %24 : vector<512x196xbf16> to vector<512x196xf32>
    %cst_14 = arith.constant dense<0.000000e+00> : vector<128x196xf32>
    %26 = tpu.matmul %21, %25, %cst_14 {dimension_numbers = #tpu.dot_dimension_numbers<[1], [0], [0], [1], [0, 0, 1, 1], [], []>, precision = #tpu.contract_precision<fp32>} : vector<128x512xf32>, vector<512x196xf32>, vector<128x196xf32> -> vector<128x196xf32>
    %cst_15 = arith.constant dense<0.000000e+00> : vector<128xf32>
    %27 = vector.multi_reduction <add>, %26, %cst_15 [1] : vector<128x196xf32> to vector<128xf32>
    %28 = vector.shape_cast %27 : vector<128xf32> to vector<128x1xf32>
    %cst_16 = arith.constant 0.00510204071 : f32
    %29 = vector.broadcast %cst_16 : f32 to vector<128x1xf32>
    %30 = arith.mulf %28, %29 : vector<128x1xf32>
    %31 = vector.broadcast %30 : vector<128x1xf32> to vector<128x196xf32>
    %32 = arith.subf %26, %31 : vector<128x196xf32>
    %33 = arith.mulf %32, %32 : vector<128x196xf32>
    %cst_17 = arith.constant dense<0.000000e+00> : vector<128xf32>
    %34 = vector.multi_reduction <add>, %33, %cst_17 [1] : vector<128x196xf32> to vector<128xf32>
    %35 = vector.shape_cast %34 : vector<128xf32> to vector<128x1xf32>
    %cst_18 = arith.constant 0.00510204071 : f32
    %36 = vector.broadcast %cst_18 : f32 to vector<128x1xf32>
    %37 = arith.mulf %35, %36 : vector<128x1xf32>
    %cst_19 = arith.constant 0.000000e+00 : f32
    %38 = vector.broadcast %cst_19 : f32 to vector<128x1xf32>
    %39 = arith.maximumf %37, %38 : vector<128x1xf32>
    %c0_20 = arith.constant 0 : index
    %c0_21 = arith.constant 0 : index
    %40 = vector.load %arg5[%c0_20, %c0_21] : memref<128x2xf32, #tpu.memory_space<vmem>>, vector<128x2xf32>
    %41 = vector.extract_strided_slice %40 {offsets = [0, 0], sizes = [128, 1], strides = [1, 1]} : vector<128x2xf32> to vector<128x1xf32>
    %42 = vector.extract_strided_slice %40 {offsets = [0, 1], sizes = [128, 1], strides = [1, 1]} : vector<128x2xf32> to vector<128x1xf32>
    %cst_22 = arith.constant 1.000000e-03 : f32
    %43 = vector.broadcast %cst_22 : f32 to vector<128x1xf32>
    %44 = arith.addf %39, %43 : vector<128x1xf32>
    %45 = math.rsqrt %44 : vector<128x1xf32>
    %46 = arith.mulf %45, %41 : vector<128x1xf32>
    %47 = vector.broadcast %46 : vector<128x1xf32> to vector<128x196xf32>
    %48 = arith.mulf %32, %47 : vector<128x196xf32>
    %49 = vector.broadcast %42 : vector<128x1xf32> to vector<128x196xf32>
    %50 = arith.addf %48, %49 : vector<128x196xf32>
    %c0_23 = arith.constant 0 : index
    %c0_24 = arith.constant 0 : index
    %51 = vector.load %arg6[%c0_23, %c0_24] : memref<128x196xf32, #tpu.memory_space<vmem>>, vector<128x196xf32>
    tpu.vector_store %arg6[%c0_23, %c0_24], %50 {strides = array<i32>} : memref<128x196xf32, #tpu.memory_space<vmem>>, vector<128x196xf32>,
    return
  }
}

</mosaic_0001>

<llo_original>
// kernel: tpu_custom_call.1
$region0: #{tpu_custom_call.1}
  #allocation0 [shape = 'u32[]', space=smem, size = 0x4, offset = 0x4, fixed_abs, tag = 'smem constant byte address 0x4 - core index']
  #allocation1 [shape = 'u32[144,128]{1,0:T(1,128)}', space=vmem, size = 0x12000, scoped, tag = 'internal scratch']
  #allocation2 [shape = 'bf16[512,196]{1,0:T(16,128)(2,1)}', space=vmem, size = 0x40000, scoped, tag = 'scratch operand']
  #allocation3 [shape = 'bf16[128,512]{1,0:T(16,128)(2,1)}', space=vmem, size = 0x20000, scoped, tag = 'scratch operand']
  #allocation4 [shape = 's32[2]{0}', space=sflag, size = 0x8, scoped, tag = 'scratch operand']
  #allocation5 [shape = 's32[]', space=sflag, size = 0x4, offset = 0, fixed_abs, tag = 'sflag constant byte address 0x0 - dummy sync flag']
  #allocation6 [shape = 's32[]', space=sflag, size = 0x4, offset = 0, fixed_abs, tag = 'sflag constant byte address 0x0 - dummy sync flag']
  %s0 = inlined_call_operand.vmem [shape: f32[1,32], index: 0, kind: input, shape index: {}]
  %s1 = inlined_call_operand.vmem [shape: f32[32,512], index: 1, kind: input, shape index: {}]
  %s2 = inlined_call_operand.vmem [shape: f32[1,512], index: 2, kind: input, shape index: {}]
  %s3 = inlined_call_operand.vmem [shape: bf16[512,196], index: 3, kind: input, shape index: {}]
  %s4 = inlined_call_operand.vmem [shape: bf16[128,512], index: 4, kind: input, shape index: {}]
  %s5 = inlined_call_operand.vmem [shape: f32[128,2], index: 5, kind: input, shape index: {}]
  %s6 = inlined_call_operand.vmem [shape: f32[128,196], index: 6, kind: output, shape index: {}]
  %s7 = sld [smem:[#allocation0]]
  $region100: #{tpu_custom_call.1} parent=0
    _
  %s9 = ssub.s32 1, %s7
  %s10 = scalar_select 0, %s9, %s7
  // Predicated region
  $region2: #{tpu_custom_call.1} parent=0 // pred_check
    _
  $region3: #{tpu_custom_call.1} parent=0 // pred_check_branch
    %12 = sbr.rel (0) target = $region5
  $region4: #{tpu_custom_call.1} parent=0 // pred_region
    _
  $region5: #{tpu_custom_call.1} parent=0 // pred_fallthru
    _
  // Predicated region
  $region6: #{tpu_custom_call.1} parent=0 // pred_check
    _
  $region7: #{tpu_custom_call.1} parent=0 // pred_check_branch
    %14 = sbr.rel (0) target = $region9
  $region8: #{tpu_custom_call.1} parent=0 // pred_region
    _
  $region9: #{tpu_custom_call.1} parent=0 // pred_fallthru
    _
  // Predicated region
  $region10: #{tpu_custom_call.1} parent=0 // pred_check
    _
  $region11: #{tpu_custom_call.1} parent=0 // pred_check_branch
    %16 = sbr.rel (0) target = $region13
  $region12: #{tpu_custom_call.1} parent=0 // pred_region
    _
  $region13: #{tpu_custom_call.1} parent=0 // pred_fallthru
    _
  // Predicated region
  $region14: #{tpu_custom_call.1} parent=0 // pred_check
    _
  $region15: #{tpu_custom_call.1} parent=0 // pred_check_branch
    %18 = sbr.rel (0) target = $region17
  $region16: #{tpu_custom_call.1} parent=0 // pred_region
    _
  $region17: #{tpu_custom_call.1} parent=0 // pred_fallthru
    _
  %p20 = scmp.lt.u32.totalorder 4, 8
  %p21 = pneg %p20
  // Predicated region
  $region18: #{tpu_custom_call.1} parent=0 // pred_check
    _
  $region19: #{tpu_custom_call.1} parent=0 // pred_check_branch
    %23 = sbr.rel (%p20) target = $region21
  $region20: #{tpu_custom_call.1} parent=0 // pred_region
    %s292 = sand.u32 4, 7
    %p293 = scmp.eq.s32.totalorder %s292, 0
    %p294 = pneg %p293
    // Predicated region
    $region33: #{tpu_custom_call.1} parent=20 // pred_check
      _
    $region34: #{tpu_custom_call.1} parent=20 // pred_check_branch
      %296 = sbr.rel (%p293) target = $region36
    $region35: #{tpu_custom_call.1} parent=20 // pred_region
      %s297 = sand.u32 4, 7
      %s298 = ssub.s32 4, %s297
      %s299 = scalar_lea.vmem %s3, %s298
      %s300 = ssub.s32 4, %s297
      %s301 = scalar_lea.vmem [#allocation2], %s300
      loop: start=0, step=1, limit=1
      $region37: #{tpu_custom_call.1} parent=35 // loop_pre_header
        _
      $region38: #{tpu_custom_call.1} parent=35 // loop_header
        %s303 = sphi 0, %s307
        %p304 = scmp.ge.s32.totalorder %s303, 1
        %s308 = sphi %s3, %s3
        %s309 = sphi [#allocation2], [#allocation2]
      $region39: #{tpu_custom_call.1} parent=35 // loop_header_branch
        %306 = sbr.rel (%p304) target = $region43
      $region40: #{tpu_custom_call.1} parent=35 // loop_body
        _
      $region41: #{tpu_custom_call.1} parent=35 // loop_footer
        %s307 = sadd.s32 1, %s303
      $region42: #{tpu_custom_call.1} parent=35 // loop_footer_branch
        %302 = sbr.rel target = $region38
      $region43: #{tpu_custom_call.1} parent=35 // loop_exit
        _
      %s310 = sshllo.u32 0, %s297
      loop: start=0, step=1, limit=1
      $region44: #{tpu_custom_call.1} parent=35 // loop_pre_header
        _
      $region45: #{tpu_custom_call.1} parent=35 // loop_header
        %s312 = sphi 0, %s316
        %p313 = scmp.ge.s32.totalorder %s312, 1
        %s317 = sphi %s299, %s299
        %s318 = sphi %s301, %s301
      $region46: #{tpu_custom_call.1} parent=35 // loop_header_branch
        %315 = sbr.rel (%p313) target = $region50
      $region47: #{tpu_custom_call.1} parent=35 // loop_body
        %v319 = vld [vmem:[%s317] sm:%s310]
        %320 = vst [vmem:[%s318] sm:%s310] %v319
        %v321 = vld [vmem:[%s317 + $0x8] sm:%s310]
        %322 = vst [vmem:[%s318 + $0x4] sm:%s310] %v321
        %v323 = vld [vmem:[%s317 + $0x4] sm:%s310]
        %324 = vst [vmem:[%s318 + $0x8] sm:%s310] %v323
        %v325 = vld [vmem:[%s317 + $0xc] sm:%s310]
        %326 = vst [vmem:[%s318 + $0xc] sm:%s310] %v325
        %v327 = vld [vmem:[%s317 + $0x10] sm:%s310]
        %328 = vst [vmem:[%s318 + $0x10] sm:%s310] %v327
        %v329 = vld [vmem:[%s317 + $0x18] sm:%s310]
        %330 = vst [vmem:[%s318 + $0x14] sm:%s310] %v329
        %v331 = vld [vmem:[%s317 + $0x14] sm:%s310]
        %332 = vst [vmem:[%s318 + $0x18] sm:%s310] %v331
        %v333 = vld [vmem:[%s317 + $0x1c] sm:%s310]
        %334 = vst [vmem:[%s318 + $0x1c] sm:%s310] %v333
        %v335 = vld [vmem:[%s317 + $0x20] sm:%s310]
        %336 = vst [vmem:[%s318 + $0x20] sm:%s310] %v335
        %v337 = vld [vmem:[%s317 + $0x28] sm:%s310]
        %338 = vst [vmem:[%s318 + $0x24] sm:%s310] %v337
        %v339 = vld [vmem:[%s317 + $0x24] sm:%s310]
        %340 = vst [vmem:[%s318 + $0x28] sm:%s310] %v339
        %v341 = vld [vmem:[%s317 + $0x2c] sm:%s310]
        %342 = vst [vmem:[%s318 + $0x2c] sm:%s310] %v341
        %v343 = vld [vmem:[%s317 + $0x30] sm:%s310]
        %344 = vst [vmem:[%s318 + $0x30] sm:%s310] %v343
        %v345 = vld [vmem:[%s317 + $0x38] sm:%s310]
        %346 = vst [vmem:[%s318 + $0x34] sm:%s310] %v345
        %v347 = vld [vmem:[%s317 + $0x34] sm:%s310]
        %348 = vst [vmem:[%s318 + $0x38] sm:%s310] %v347
        %v349 = vld [vmem:[%s317 + $0x3c] sm:%s310]
        %350 = vst [vmem:[%s318 + $0x3c] sm:%s310] %v349
        %v351 = vld [vmem:[%s317 + $0x40] sm:%s310]
        %352 = vst [vmem:[%s318 + $0x40] sm:%s310] %v351
        %v353 = vld [vmem:[%s317 + $0x48] sm:%s310]
        %354 = vst [vmem:[%s318 + $0x44] sm:%s310] %v353
        %v355 = vld [vmem:[%s317 + $0x44] sm:%s310]
        %356 = vst [vmem:[%s318 + $0x48] sm:%s310] %v355
        %v357 = vld [vmem:[%s317 + $0x4c] sm:%s310]
        %358 = vst [vmem:[%s318 + $0x4c] sm:%s310] %v357
        %v359 = vld [vmem:[%s317 + $0x50] sm:%s310]
        %360 = vst [vmem:[%s318 + $0x50] sm:%s310] %v359
        %v361 = vld [vmem:[%s317 + $0x58] sm:%s310]
        %362 = vst [vmem:[%s318 + $0x54] sm:%s310] %v361
        %v363 = vld [vmem:[%s317 + $0x54] sm:%s310]
        %364 = vst [vmem:[%s318 + $0x58] sm:%s310] %v363
        %v365 = vld [vmem:[%s317 + $0x5c] sm:%s310]
        %366 = vst [vmem:[%s318 + $0x5c] sm:%s310] %v365
        %v367 = vld [vmem:[%s317 + $0x60] sm:%s310]
        %368 = vst [vmem:[%s318 + $0x60] sm:%s310] %v367
        %v369 = vld [vmem:[%s317 + $0x68] sm:%s310]
        %370 = vst [vmem:[%s318 + $0x64] sm:%s310] %v369
        %v371 = vld [vmem:[%s317 + $0x64] sm:%s310]
        %372 = vst [vmem:[%s318 + $0x68] sm:%s310] %v371
        %v373 = vld [vmem:[%s317 + $0x6c] sm:%s310]
        %374 = vst [vmem:[%s318 + $0x6c] sm:%s310] %v373
        %v375 = vld [vmem:[%s317 + $0x70] sm:%s310]
        %376 = vst [vmem:[%s318 + $0x70] sm:%s310] %v375
        %v377 = vld [vmem:[%s317 + $0x78] sm:%s310]
        %378 = vst [vmem:[%s318 + $0x74] sm:%s310] %v377
        %v379 = vld [vmem:[%s317 + $0x74] sm:%s310]
        %380 = vst [vmem:[%s318 + $0x78] sm:%s310] %v379
        %v381 = vld [vmem:[%s317 + $0x7c] sm:%s310]
        %382 = vst [vmem:[%s318 + $0x7c] sm:%s310] %v381
        %v383 = vld [vmem:[%s317 + $0x80] sm:%s310]
        %384 = vst [vmem:[%s318 + $0x80] sm:%s310] %v383
        %v385 = vld [vmem:[%s317 + $0x88] sm:%s310]
        %386 = vst [vmem:[%s318 + $0x84] sm:%s310] %v385
        %v387 = vld [vmem:[%s317 + $0x84] sm:%s310]
        %388 = vst [vmem:[%s318 + $0x88] sm:%s310] %v387
        %v389 = vld [vmem:[%s317 + $0x8c] sm:%s310]
        %390 = vst [vmem:[%s318 + $0x8c] sm:%s310] %v389
        %v391 = vld [vmem:[%s317 + $0x90] sm:%s310]
        %392 = vst [vmem:[%s318 + $0x90] sm:%s310] %v391
        %v393 = vld [vmem:[%s317 + $0x98] sm:%s310]
        %394 = vst [vmem:[%s318 + $0x94] sm:%s310] %v393
        %v395 = vld [vmem:[%s317 + $0x94] sm:%s310]
        %396 = vst [vmem:[%s318 + $0x98] sm:%s310] %v395
        %v397 = vld [vmem:[%s317 + $0x9c] sm:%s310]
        %398 = vst [vmem:[%s318 + $0x9c] sm:%s310] %v397
        %v399 = vld [vmem:[%s317 + $0xa0] sm:%s310]
        %400 = vst [vmem:[%s318 + $0xa0] sm:%s310] %v399
        %v401 = vld [vmem:[%s317 + $0xa8] sm:%s310]
        %402 = vst [vmem:[%s318 + $0xa4] sm:%s310] %v401
        %v403 = vld [vmem:[%s317 + $0xa4] sm:%s310]
        %404 = vst [vmem:[%s318 + $0xa8] sm:%s310] %v403
        %v405 = vld [vmem:[%s317 + $0xac] sm:%s310]
        %406 = vst [vmem:[%s318 + $0xac] sm:%s310] %v405
        %v407 = vld [vmem:[%s317 + $0xb0] sm:%s310]
        %408 = vst [vmem:[%s318 + $0xb0] sm:%s310] %v407
        %v409 = vld [vmem:[%s317 + $0xb8] sm:%s310]
        %410 = vst [vmem:[%s318 + $0xb4] sm:%s310] %v409
        %v411 = vld [vmem:[%s317 + $0xb4] sm:%s310]
        %412 = vst [vmem:[%s318 + $0xb8] sm:%s310] %v411
        %v413 = vld [vmem:[%s317 + $0xbc] sm:%s310]
        %414 = vst [vmem:[%s318 + $0xbc] sm:%s310] %v413
        %v415 = vld [vmem:[%s317 + $0xc0] sm:%s310]
        %416 = vst [vmem:[%s318 + $0xc0] sm:%s310] %v415
        %v417 = vld [vmem:[%s317 + $0xc8] sm:%s310]
        %418 = vst [vmem:[%s318 + $0xc4] sm:%s310] %v417
        %v419 = vld [vmem:[%s317 + $0xc4] sm:%s310]
        %420 = vst [vmem:[%s318 + $0xc8] sm:%s310] %v419
        %v421 = vld [vmem:[%s317 + $0xcc] sm:%s310]
        %422 = vst [vmem:[%s318 + $0xcc] sm:%s310] %v421
        %v423 = vld [vmem:[%s317 + $0xd0] sm:%s310]
        %424 = vst [vmem:[%s318 + $0xd0] sm:%s310] %v423
        %v425 = vld [vmem:[%s317 + $0xd8] sm:%s310]
        %426 = vst [vmem:[%s318 + $0xd4] sm:%s310] %v425
        %v427 = vld [vmem:[%s317 + $0xd4] sm:%s310]
        %428 = vst [vmem:[%s318 + $0xd8] sm:%s310] %v427
        %v429 = vld [vmem:[%s317 + $0xdc] sm:%s310]
        %430 = vst [vmem:[%s318 + $0xdc] sm:%s310] %v429
        %v431 = vld [vmem:[%s317 + $0xe0] sm:%s310]
        %432 = vst [vmem:[%s318 + $0xe0] sm:%s310] %v431
        %v433 = vld [vmem:[%s317 + $0xe8] sm:%s310]
        %434 = vst [vmem:[%s318 + $0xe4] sm:%s310] %v433
        %v435 = vld [vmem:[%s317 + $0xe4] sm:%s310]
        %436 = vst [vmem:[%s318 + $0xe8] sm:%s310] %v435
        %v437 = vld [vmem:[%s317 + $0xec] sm:%s310]
        %438 = vst [vmem:[%s318 + $0xec] sm:%s310] %v437
        %v439 = vld [vmem:[%s317 + $0xf0] sm:%s310]
        %440 = vst [vmem:[%s318 + $0xf0] sm:%s310] %v439
        %v441 = vld [vmem:[%s317 + $0xf8] sm:%s310]
        %442 = vst [vmem:[%s318 + $0xf4] sm:%s310] %v441
        %v443 = vld [vmem:[%s317 + $0xf4] sm:%s310]
        %444 = vst [vmem:[%s318 + $0xf8] sm:%s310] %v443
        %v445 = vld [vmem:[%s317 + $0xfc] sm:%s310]
        %446 = vst [vmem:[%s318 + $0xfc] sm:%s310] %v445
        %v447 = vld [vmem:[%s317 + $0x100] sm:%s310]
        %448 = vst [vmem:[%s318 + $0x100] sm:%s310] %v447
        %v449 = vld [vmem:[%s317 + $0x108] sm:%s310]
        %450 = vst [vmem:[%s318 + $0x104] sm:%s310] %v449
        %v451 = vld [vmem:[%s317 + $0x104] sm:%s310]
        %452 = vst [vmem:[%s318 + $0x108] sm:%s310] %v451
        %v453 = vld [vmem:[%s317 + $0x10c] sm:%s310]
        %454 = vst [vmem:[%s318 + $0x10c] sm:%s310] %v453
        %v455 = vld [vmem:[%s317 + $0x110] sm:%s310]
        %456 = vst [vmem:[%s318 + $0x110] sm:%s310] %v455
        %v457 = vld [vmem:[%s317 + $0x118] sm:%s310]
        %458 = vst [vmem:[%s318 + $0x114] sm:%s310] %v457
        %v459 = vld [vmem:[%s317 + $0x114] sm:%s310]
        %460 = vst [vmem:[%s318 + $0x118] sm:%s310] %v459
        %v461 = vld [vmem:[%s317 + $0x11c] sm:%s310]
        %462 = vst [vmem:[%s318 + $0x11c] sm:%s310] %v461
        %v463 = vld [vmem:[%s317 + $0x120] sm:%s310]
        %464 = vst [vmem:[%s318 + $0x120] sm:%s310] %v463
        %v465 = vld [vmem:[%s317 + $0x128] sm:%s310]
        %466 = vst [vmem:[%s318 + $0x124] sm:%s310] %v465
        %v467 = vld [vmem:[%s317 + $0x124] sm:%s310]
        %468 = vst [vmem:[%s318 + $0x128] sm:%s310] %v467
        %v469 = vld [vmem:[%s317 + $0x12c] sm:%s310]
        %470 = vst [vmem:[%s318 + $0x12c] sm:%s310] %v469
        %v471 = vld [vmem:[%s317 + $0x130] sm:%s310]
        %472 = vst [vmem:[%s318 + $0x130] sm:%s310] %v471
        %v473 = vld [vmem:[%s317 + $0x138] sm:%s310]
        %474 = vst [vmem:[%s318 + $0x134] sm:%s310] %v473
        %v475 = vld [vmem:[%s317 + $0x134] sm:%s310]
        %476 = vst [vmem:[%s318 + $0x138] sm:%s310] %v475
        %v477 = vld [vmem:[%s317 + $0x13c] sm:%s310]
        %478 = vst [vmem:[%s318 + $0x13c] sm:%s310] %v477
        %v479 = vld [vmem:[%s317 + $0x140] sm:%s310]
        %480 = vst [vmem:[%s318 + $0x140] sm:%s310] %v479
        %v481 = vld [vmem:[%s317 + $0x148] sm:%s310]
        %482 = vst [vmem:[%s318 + $0x144] sm:%s310] %v481
        %v483 = vld [vmem:[%s317 + $0x144] sm:%s310]
        %484 = vst [vmem:[%s318 + $0x148] sm:%s310] %v483
        %v485 = vld [vmem:[%s317 + $0x14c] sm:%s310]
        %486 = vst [vmem:[%s318 + $0x14c] sm:%s310] %v485
        %v487 = vld [vmem:[%s317 + $0x150] sm:%s310]
        %488 = vst [vmem:[%s318 + $0x150] sm:%s310] %v487
        %v489 = vld [vmem:[%s317 + $0x158] sm:%s310]
        %490 = vst [vmem:[%s318 + $0x154] sm:%s310] %v489
        %v491 = vld [vmem:[%s317 + $0x154] sm:%s310]
        %492 = vst [vmem:[%s318 + $0x158] sm:%s310] %v491
        %v493 = vld [vmem:[%s317 + $0x15c] sm:%s310]
        %494 = vst [vmem:[%s318 + $0x15c] sm:%s310] %v493
        %v495 = vld [vmem:[%s317 + $0x160] sm:%s310]
        %496 = vst [vmem:[%s318 + $0x160] sm:%s310] %v495
        %v497 = vld [vmem:[%s317 + $0x168] sm:%s310]
        %498 = vst [vmem:[%s318 + $0x164] sm:%s310] %v497
        %v499 = vld [vmem:[%s317 + $0x164] sm:%s310]
        %500 = vst [vmem:[%s318 + $0x168] sm:%s310] %v499
        %v501 = vld [vmem:[%s317 + $0x16c] sm:%s310]
        %502 = vst [vmem:[%s318 + $0x16c] sm:%s310] %v501
        %v503 = vld [vmem:[%s317 + $0x170] sm:%s310]
        %504 = vst [vmem:[%s318 + $0x170] sm:%s310] %v503
        %v505 = vld [vmem:[%s317 + $0x178] sm:%s310]
        %506 = vst [vmem:[%s318 + $0x174] sm:%s310] %v505
        %v507 = vld [vmem:[%s317 + $0x174] sm:%s310]
        %508 = vst [vmem:[%s318 + $0x178] sm:%s310] %v507
        %v509 = vld [vmem:[%s317 + $0x17c] sm:%s310]
        %510 = vst [vmem:[%s318 + $0x17c] sm:%s310] %v509
        %v511 = vld [vmem:[%s317 + $0x180] sm:%s310]
        %512 = vst [vmem:[%s318 + $0x180] sm:%s310] %v511
        %v513 = vld [vmem:[%s317 + $0x188] sm:%s310]
        %514 = vst [vmem:[%s318 + $0x184] sm:%s310] %v513
        %v515 = vld [vmem:[%s317 + $0x184] sm:%s310]
        %516 = vst [vmem:[%s318 + $0x188] sm:%s310] %v515
        %v517 = vld [vmem:[%s317 + $0x18c] sm:%s310]
        %518 = vst [vmem:[%s318 + $0x18c] sm:%s310] %v517
        %v519 = vld [vmem:[%s317 + $0x190] sm:%s310]
        %520 = vst [vmem:[%s318 + $0x190] sm:%s310] %v519
        %v521 = vld [vmem:[%s317 + $0x198] sm:%s310]
        %522 = vst [vmem:[%s318 + $0x194] sm:%s310] %v521
        %v523 = vld [vmem:[%s317 + $0x194] sm:%s310]
        %524 = vst [vmem:[%s318 + $0x198] sm:%s310] %v523
        %v525 = vld [vmem:[%s317 + $0x19c] sm:%s310]
        %526 = vst [vmem:[%s318 + $0x19c] sm:%s310] %v525
        %v527 = vld [vmem:[%s317 + $0x1a0] sm:%s310]
        %528 = vst [vmem:[%s318 + $0x1a0] sm:%s310] %v527
        %v529 = vld [vmem:[%s317 + $0x1a8] sm:%s310]
        %530 = vst [vmem:[%s318 + $0x1a4] sm:%s310] %v529
        %v531 = vld [vmem:[%s317 + $0x1a4] sm:%s310]
        %532 = vst [vmem:[%s318 + $0x1a8] sm:%s310] %v531
        %v533 = vld [vmem:[%s317 + $0x1ac] sm:%s310]
        %534 = vst [vmem:[%s318 + $0x1ac] sm:%s310] %v533
        %v535 = vld [vmem:[%s317 + $0x1b0] sm:%s310]
        %536 = vst [vmem:[%s318 + $0x1b0] sm:%s310] %v535
        %v537 = vld [vmem:[%s317 + $0x1b8] sm:%s310]
        %538 = vst [vmem:[%s318 + $0x1b4] sm:%s310] %v537
        %v539 = vld [vmem:[%s317 + $0x1b4] sm:%s310]
        %540 = vst [vmem:[%s318 + $0x1b8] sm:%s310] %v539
        %v541 = vld [vmem:[%s317 + $0x1bc] sm:%s310]
        %542 = vst [vmem:[%s318 + $0x1bc] sm:%s310] %v541
        %v543 = vld [vmem:[%s317 + $0x1c0] sm:%s310]
        %544 = vst [vmem:[%s318 + $0x1c0] sm:%s310] %v543
        %v545 = vld [vmem:[%s317 + $0x1c8] sm:%s310]
        %546 = vst [vmem:[%s318 + $0x1c4] sm:%s310] %v545
        %v547 = vld [vmem:[%s317 + $0x1c4] sm:%s310]
        %548 = vst [vmem:[%s318 + $0x1c8] sm:%s310] %v547
        %v549 = vld [vmem:[%s317 + $0x1cc] sm:%s310]
        %550 = vst [vmem:[%s318 + $0x1cc] sm:%s310] %v549
        %v551 = vld [vmem:[%s317 + $0x1d0] sm:%s310]
        %552 = vst [vmem:[%s318 + $0x1d0] sm:%s310] %v551
        %v553 = vld [vmem:[%s317 + $0x1d8] sm:%s310]
        %554 = vst [vmem:[%s318 + $0x1d4] sm:%s310] %v553
        %v555 = vld [vmem:[%s317 + $0x1d4] sm:%s310]
        %556 = vst [vmem:[%s318 + $0x1d8] sm:%s310] %v555
        %v557 = vld [vmem:[%s317 + $0x1dc] sm:%s310]
        %558 = vst [vmem:[%s318 + $0x1dc] sm:%s310] %v557
        %v559 = vld [vmem:[%s317 + $0x1e0] sm:%s310]
        %560 = vst [vmem:[%s318 + $0x1e0] sm:%s310] %v559
        %v561 = vld [vmem:[%s317 + $0x1e8] sm:%s310]
        %562 = vst [vmem:[%s318 + $0x1e4] sm:%s310] %v561
        %v563 = vld [vmem:[%s317 + $0x1e4] sm:%s310]
        %564 = vst [vmem:[%s318 + $0x1e8] sm:%s310] %v563
        %v565 = vld [vmem:[%s317 + $0x1ec] sm:%s310]
        %566 = vst [vmem:[%s318 + $0x1ec] sm:%s310] %v565
        %v567 = vld [vmem:[%s317 + $0x1f0] sm:%s310]
        %568 = vst [vmem:[%s318 + $0x1f0] sm:%s310] %v567
        %v569 = vld [vmem:[%s317 + $0x1f8] sm:%s310]
        %570 = vst [vmem:[%s318 + $0x1f4] sm:%s310] %v569
        %v571 = vld [vmem:[%s317 + $0x1f4] sm:%s310]
        %572 = vst [vmem:[%s318 + $0x1f8] sm:%s310] %v571
        %v573 = vld [vmem:[%s317 + $0x1fc] sm:%s310]
        %574 = vst [vmem:[%s318 + $0x1fc] sm:%s310] %v573
      $region48: #{tpu_custom_call.1} parent=35 // loop_footer
        %s316 = sadd.s32 1, %s312
      $region49: #{tpu_custom_call.1} parent=35 // loop_footer_branch
        %311 = sbr.rel target = $region45
      $region50: #{tpu_custom_call.1} parent=35 // loop_exit
        _
    $region36: #{tpu_custom_call.1} parent=20 // pred_fallthru
      _
  $region21: #{tpu_custom_call.1} parent=0 // pred_fallthru
    _
  // Predicated region
  $region22: #{tpu_custom_call.1} parent=0 // pred_check
    %p24 = pneg %p20
  $region23: #{tpu_custom_call.1} parent=0 // pred_check_branch
    %26 = sbr.rel (%p24) target = $region25
  $region24: #{tpu_custom_call.1} parent=0 // pred_region
    %s27 = sshllo.u32 0, 4
    loop: start=0, step=1, limit=1
    $region26: #{tpu_custom_call.1} parent=24 // loop_pre_header
      _
    $region27: #{tpu_custom_call.1} parent=24 // loop_header
      %s29 = sphi 0, %s33
      %p30 = scmp.ge.s32.totalorder %s29, 1
      %s34 = sphi %s3, %s3
      %s35 = sphi [#allocation2], [#allocation2]
    $region28: #{tpu_custom_call.1} parent=24 // loop_header_branch
      %32 = sbr.rel (%p30) target = $region32
    $region29: #{tpu_custom_call.1} parent=24 // loop_body
      %v36 = vld [vmem:[%s34] sm:%s27]
      %37 = vst [vmem:[%s35] sm:%s27] %v36
      %v38 = vld [vmem:[%s34 + $0x8] sm:%s27]
      %39 = vst [vmem:[%s35 + $0x4] sm:%s27] %v38
      %v40 = vld [vmem:[%s34 + $0x4] sm:%s27]
      %41 = vst [vmem:[%s35 + $0x8] sm:%s27] %v40
      %v42 = vld [vmem:[%s34 + $0xc] sm:%s27]
      %43 = vst [vmem:[%s35 + $0xc] sm:%s27] %v42
      %v44 = vld [vmem:[%s34 + $0x10] sm:%s27]
      %45 = vst [vmem:[%s35 + $0x10] sm:%s27] %v44
      %v46 = vld [vmem:[%s34 + $0x18] sm:%s27]
      %47 = vst [vmem:[%s35 + $0x14] sm:%s27] %v46
      %v48 = vld [vmem:[%s34 + $0x14] sm:%s27]
      %49 = vst [vmem:[%s35 + $0x18] sm:%s27] %v48
      %v50 = vld [vmem:[%s34 + $0x1c] sm:%s27]
      %51 = vst [vmem:[%s35 + $0x1c] sm:%s27] %v50
      %v52 = vld [vmem:[%s34 + $0x20] sm:%s27]
      %53 = vst [vmem:[%s35 + $0x20] sm:%s27] %v52
      %v54 = vld [vmem:[%s34 + $0x28] sm:%s27]
      %55 = vst [vmem:[%s35 + $0x24] sm:%s27] %v54
      %v56 = vld [vmem:[%s34 + $0x24] sm:%s27]
      %57 = vst [vmem:[%s35 + $0x28] sm:%s27] %v56
      %v58 = vld [vmem:[%s34 + $0x2c] sm:%s27]
      %59 = vst [vmem:[%s35 + $0x2c] sm:%s27] %v58
      %v60 = vld [vmem:[%s34 + $0x30] sm:%s27]
      %61 = vst [vmem:[%s35 + $0x30] sm:%s27] %v60
      %v62 = vld [vmem:[%s34 + $0x38] sm:%s27]
      %63 = vst [vmem:[%s35 + $0x34] sm:%s27] %v62
      %v64 = vld [vmem:[%s34 + $0x34] sm:%s27]
      %65 = vst [vmem:[%s35 + $0x38] sm:%s27] %v64
      %v66 = vld [vmem:[%s34 + $0x3c] sm:%s27]
      %67 = vst [vmem:[%s35 + $0x3c] sm:%s27] %v66
      %v68 = vld [vmem:[%s34 + $0x40] sm:%s27]
      %69 = vst [vmem:[%s35 + $0x40] sm:%s27] %v68
      %v70 = vld [vmem:[%s34 + $0x48] sm:%s27]
      %71 = vst [vmem:[%s35 + $0x44] sm:%s27] %v70
      %v72 = vld [vmem:[%s34 + $0x44] sm:%s27]
      %73 = vst [vmem:[%s35 + $0x48] sm:%s27] %v72
      %v74 = vld [vmem:[%s34 + $0x4c] sm:%s27]
      %75 = vst [vmem:[%s35 + $0x4c] sm:%s27] %v74
      %v76 = vld [vmem:[%s34 + $0x50] sm:%s27]
      %77 = vst [vmem:[%s35 + $0x50] sm:%s27] %v76
      %v78 = vld [vmem:[%s34 + $0x58] sm:%s27]
      %79 = vst [vmem:[%s35 + $0x54] sm:%s27] %v78
      %v80 = vld [vmem:[%s34 + $0x54] sm:%s27]
      %81 = vst [vmem:[%s35 + $0x58] sm:%s27] %v80
      %v82 = vld [vmem:[%s34 + $0x5c] sm:%s27]
      %83 = vst [vmem:[%s35 + $0x5c] sm:%s27] %v82
      %v84 = vld [vmem:[%s34 + $0x60] sm:%s27]
      %85 = vst [vmem:[%s35 + $0x60] sm:%s27] %v84
      %v86 = vld [vmem:[%s34 + $0x68] sm:%s27]
      %87 = vst [vmem:[%s35 + $0x64] sm:%s27] %v86
      %v88 = vld [vmem:[%s34 + $0x64] sm:%s27]
      %89 = vst [vmem:[%s35 + $0x68] sm:%s27] %v88
      %v90 = vld [vmem:[%s34 + $0x6c] sm:%s27]
      %91 = vst [vmem:[%s35 + $0x6c] sm:%s27] %v90
      %v92 = vld [vmem:[%s34 + $0x70] sm:%s27]
      %93 = vst [vmem:[%s35 + $0x70] sm:%s27] %v92
      %v94 = vld [vmem:[%s34 + $0x78] sm:%s27]
      %95 = vst [vmem:[%s35 + $0x74] sm:%s27] %v94
      %v96 = vld [vmem:[%s34 + $0x74] sm:%s27]
      %97 = vst [vmem:[%s35 + $0x78] sm:%s27] %v96
      %v98 = vld [vmem:[%s34 + $0x7c] sm:%s27]
      %99 = vst [vmem:[%s35 + $0x7c] sm:%s27] %v98
      %v100 = vld [vmem:[%s34 + $0x80] sm:%s27]
      %101 = vst [vmem:[%s35 + $0x80] sm:%s27] %v100
      %v102 = vld [vmem:[%s34 + $0x88] sm:%s27]
      %103 = vst [vmem:[%s35 + $0x84] sm:%s27] %v102
      %v104 = vld [vmem:[%s34 + $0x84] sm:%s27]
      %105 = vst [vmem:[%s35 + $0x88] sm:%s27] %v104
      %v106 = vld [vmem:[%s34 + $0x8c] sm:%s27]
      %107 = vst [vmem:[%s35 + $0x8c] sm:%s27] %v106
      %v108 = vld [vmem:[%s34 + $0x90] sm:%s27]
      %109 = vst [vmem:[%s35 + $0x90] sm:%s27] %v108
      %v110 = vld [vmem:[%s34 + $0x98] sm:%s27]
      %111 = vst [vmem:[%s35 + $0x94] sm:%s27] %v110
      %v112 = vld [vmem:[%s34 + $0x94] sm:%s27]
      %113 = vst [vmem:[%s35 + $0x98] sm:%s27] %v112
      %v114 = vld [vmem:[%s34 + $0x9c] sm:%s27]
      %115 = vst [vmem:[%s35 + $0x9c] sm:%s27] %v114
      %v116 = vld [vmem:[%s34 + $0xa0] sm:%s27]
      %117 = vst [vmem:[%s35 + $0xa0] sm:%s27] %v116
      %v118 = vld [vmem:[%s34 + $0xa8] sm:%s27]
      %119 = vst [vmem:[%s35 + $0xa4] sm:%s27] %v118
      %v120 = vld [vmem:[%s34 + $0xa4] sm:%s27]
      %121 = vst [vmem:[%s35 + $0xa8] sm:%s27] %v120
      %v122 = vld [vmem:[%s34 + $0xac] sm:%s27]
      %123 = vst [vmem:[%s35 + $0xac] sm:%s27] %v122
      %v124 = vld [vmem:[%s34 + $0xb0] sm:%s27]
      %125 = vst [vmem:[%s35 + $0xb0] sm:%s27] %v124
      %v126 = vld [vmem:[%s34 + $0xb8] sm:%s27]
      %127 = vst [vmem:[%s35 + $0xb4] sm:%s27] %v126
      %v128 = vld [vmem:[%s34 + $0xb4] sm:%s27]
      %129 = vst [vmem:[%s35 + $0xb8] sm:%s27] %v128
      %v130 = vld [vmem:[%s34 + $0xbc] sm:%s27]
      %131 = vst [vmem:[%s35 + $0xbc] sm:%s27] %v130
      %v132 = vld [vmem:[%s34 + $0xc0] sm:%s27]
      %133 = vst [vmem:[%s35 + $0xc0] sm:%s27] %v132
      %v134 = vld [vmem:[%s34 + $0xc8] sm:%s27]
      %135 = vst [vmem:[%s35 + $0xc4] sm:%s27] %v134
      %v136 = vld [vmem:[%s34 + $0xc4] sm:%s27]
      %137 = vst [vmem:[%s35 + $0xc8] sm:%s27] %v136
      %v138 = vld [vmem:[%s34 + $0xcc] sm:%s27]
      %139 = vst [vmem:[%s35 + $0xcc] sm:%s27] %v138
      %v140 = vld [vmem:[%s34 + $0xd0] sm:%s27]
      %141 = vst [vmem:[%s35 + $0xd0] sm:%s27] %v140
      %v142 = vld [vmem:[%s34 + $0xd8] sm:%s27]
      %143 = vst [vmem:[%s35 + $0xd4] sm:%s27] %v142
      %v144 = vld [vmem:[%s34 + $0xd4] sm:%s27]
      %145 = vst [vmem:[%s35 + $0xd8] sm:%s27] %v144
      %v146 = vld [vmem:[%s34 + $0xdc] sm:%s27]
      %147 = vst [vmem:[%s35 + $0xdc] sm:%s27] %v146
      %v148 = vld [vmem:[%s34 + $0xe0] sm:%s27]
      %149 = vst [vmem:[%s35 + $0xe0] sm:%s27] %v148
      %v150 = vld [vmem:[%s34 + $0xe8] sm:%s27]
      %151 = vst [vmem:[%s35 + $0xe4] sm:%s27] %v150
      %v152 = vld [vmem:[%s34 + $0xe4] sm:%s27]
      %153 = vst [vmem:[%s35 + $0xe8] sm:%s27] %v152
      %v154 = vld [vmem:[%s34 + $0xec] sm:%s27]
      %155 = vst [vmem:[%s35 + $0xec] sm:%s27] %v154
      %v156 = vld [vmem:[%s34 + $0xf0] sm:%s27]
      %157 = vst [vmem:[%s35 + $0xf0] sm:%s27] %v156
      %v158 = vld [vmem:[%s34 + $0xf8] sm:%s27]
      %159 = vst [vmem:[%s35 + $0xf4] sm:%s27] %v158
      %v160 = vld [vmem:[%s34 + $0xf4] sm:%s27]
      %161 = vst [vmem:[%s35 + $0xf8] sm:%s27] %v160
      %v162 = vld [vmem:[%s34 + $0xfc] sm:%s27]
      %163 = vst [vmem:[%s35 + $0xfc] sm:%s27] %v162
      %v164 = vld [vmem:[%s34 + $0x100] sm:%s27]
      %165 = vst [vmem:[%s35 + $0x100] sm:%s27] %v164
      %v166 = vld [vmem:[%s34 + $0x108] sm:%s27]
      %167 = vst [vmem:[%s35 + $0x104] sm:%s27] %v166
      %v168 = vld [vmem:[%s34 + $0x104] sm:%s27]
      %169 = vst [vmem:[%s35 + $0x108] sm:%s27] %v168
      %v170 = vld [vmem:[%s34 + $0x10c] sm:%s27]
      %171 = vst [vmem:[%s35 + $0x10c] sm:%s27] %v170
      %v172 = vld [vmem:[%s34 + $0x110] sm:%s27]
      %173 = vst [vmem:[%s35 + $0x110] sm:%s27] %v172
      %v174 = vld [vmem:[%s34 + $0x118] sm:%s27]
      %175 = vst [vmem:[%s35 + $0x114] sm:%s27] %v174
      %v176 = vld [vmem:[%s34 + $0x114] sm:%s27]
      %177 = vst [vmem:[%s35 + $0x118] sm:%s27] %v176
      %v178 = vld [vmem:[%s34 + $0x11c] sm:%s27]
      %179 = vst [vmem:[%s35 + $0x11c] sm:%s27] %v178
      %v180 = vld [vmem:[%s34 + $0x120] sm:%s27]
      %181 = vst [vmem:[%s35 + $0x120] sm:%s27] %v180
      %v182 = vld [vmem:[%s34 + $0x128] sm:%s27]
      %183 = vst [vmem:[%s35 + $0x124] sm:%s27] %v182
      %v184 = vld [vmem:[%s34 + $0x124] sm:%s27]
      %185 = vst [vmem:[%s35 + $0x128] sm:%s27] %v184
      %v186 = vld [vmem:[%s34 + $0x12c] sm:%s27]
      %187 = vst [vmem:[%s35 + $0x12c] sm:%s27] %v186
      %v188 = vld [vmem:[%s34 + $0x130] sm:%s27]
      %189 = vst [vmem:[%s35 + $0x130] sm:%s27] %v188
      %v190 = vld [vmem:[%s34 + $0x138] sm:%s27]
      %191 = vst [vmem:[%s35 + $0x134] sm:%s27] %v190
      %v192 = vld [vmem:[%s34 + $0x134] sm:%s27]
      %193 = vst [vmem:[%s35 + $0x138] sm:%s27] %v192
      %v194 = vld [vmem:[%s34 + $0x13c] sm:%s27]
      %195 = vst [vmem:[%s35 + $0x13c] sm:%s27] %v194
      %v196 = vld [vmem:[%s34 + $0x140] sm:%s27]
      %197 = vst [vmem:[%s35 + $0x140] sm:%s27] %v196
      %v198 = vld [vmem:[%s34 + $0x148] sm:%s27]
      %199 = vst [vmem:[%s35 + $0x144] sm:%s27] %v198
      %v200 = vld [vmem:[%s34 + $0x144] sm:%s27]
      %201 = vst [vmem:[%s35 + $0x148] sm:%s27] %v200
      %v202 = vld [vmem:[%s34 + $0x14c] sm:%s27]
      %203 = vst [vmem:[%s35 + $0x14c] sm:%s27] %v202
      %v204 = vld [vmem:[%s34 + $0x150] sm:%s27]
      %205 = vst [vmem:[%s35 + $0x150] sm:%s27] %v204
      %v206 = vld [vmem:[%s34 + $0x158] sm:%s27]
      %207 = vst [vmem:[%s35 + $0x154] sm:%s27] %v206
      %v208 = vld [vmem:[%s34 + $0x154] sm:%s27]
      %209 = vst [vmem:[%s35 + $0x158] sm:%s27] %v208
      %v210 = vld [vmem:[%s34 + $0x15c] sm:%s27]
      %211 = vst [vmem:[%s35 + $0x15c] sm:%s27] %v210
      %v212 = vld [vmem:[%s34 + $0x160] sm:%s27]
      %213 = vst [vmem:[%s35 + $0x160] sm:%s27] %v212
      %v214 = vld [vmem:[%s34 + $0x168] sm:%s27]
      %215 = vst [vmem:[%s35 + $0x164] sm:%s27] %v214
      %v216 = vld [vmem:[%s34 + $0x164] sm:%s27]
      %217 = vst [vmem:[%s35 + $0x168] sm:%s27] %v216
      %v218 = vld [vmem:[%s34 + $0x16c] sm:%s27]
      %219 = vst [vmem:[%s35 + $0x16c] sm:%s27] %v218
      %v220 = vld [vmem:[%s34 + $0x170] sm:%s27]
      %221 = vst [vmem:[%s35 + $0x170] sm:%s27] %v220
      %v222 = vld [vmem:[%s34 + $0x178] sm:%s27]
      %223 = vst [vmem:[%s35 + $0x174] sm:%s27] %v222
      %v224 = vld [vmem:[%s34 + $0x174] sm:%s27]
      %225 = vst [vmem:[%s35 + $0x178] sm:%s27] %v224
      %v226 = vld [vmem:[%s34 + $0x17c] sm:%s27]
      %227 = vst [vmem:[%s35 + $0x17c] sm:%s27] %v226
      %v228 = vld [vmem:[%s34 + $0x180] sm:%s27]
      %229 = vst [vmem:[%s35 + $0x180] sm:%s27] %v228
      %v230 = vld [vmem:[%s34 + $0x188] sm:%s27]
      %231 = vst [vmem:[%s35 + $0x184] sm:%s27] %v230
      %v232 = vld [vmem:[%s34 + $0x184] sm:%s27]
      %233 = vst [vmem:[%s35 + $0x188] sm:%s27] %v232
      %v234 = vld [vmem:[%s34 + $0x18c] sm:%s27]
      %235 = vst [vmem:[%s35 + $0x18c] sm:%s27] %v234
      %v236 = vld [vmem:[%s34 + $0x190] sm:%s27]
      %237 = vst [vmem:[%s35 + $0x190] sm:%s27] %v236
      %v238 = vld [vmem:[%s34 + $0x198] sm:%s27]
      %239 = vst [vmem:[%s35 + $0x194] sm:%s27] %v238
      %v240 = vld [vmem:[%s34 + $0x194] sm:%s27]
      %241 = vst [vmem:[%s35 + $0x198] sm:%s27] %v240
      %v242 = vld [vmem:[%s34 + $0x19c] sm:%s27]
      %243 = vst [vmem:[%s35 + $0x19c] sm:%s27] %v242
      %v244 = vld [vmem:[%s34 + $0x1a0] sm:%s27]
      %245 = vst [vmem:[%s35 + $0x1a0] sm:%s27] %v244
      %v246 = vld [vmem:[%s34 + $0x1a8] sm:%s27]
      %247 = vst [vmem:[%s35 + $0x1a4] sm:%s27] %v246
      %v248 = vld [vmem:[%s34 + $0x1a4] sm:%s27]
      %249 = vst [vmem:[%s35 + $0x1a8] sm:%s27] %v248
      %v250 = vld [vmem:[%s34 + $0x1ac] sm:%s27]
      %251 = vst [vmem:[%s35 + $0x1ac] sm:%s27] %v250
      %v252 = vld [vmem:[%s34 + $0x1b0] sm:%s27]
      %253 = vst [vmem:[%s35 + $0x1b0] sm:%s27] %v252
      %v254 = vld [vmem:[%s34 + $0x1b8] sm:%s27]
      %255 = vst [vmem:[%s35 + $0x1b4] sm:%s27] %v254
      %v256 = vld [vmem:[%s34 + $0x1b4] sm:%s27]
      %257 = vst [vmem:[%s35 + $0x1b8] sm:%s27] %v256
      %v258 = vld [vmem:[%s34 + $0x1bc] sm:%s27]
      %259 = vst [vmem:[%s35 + $0x1bc] sm:%s27] %v258
      %v260 = vld [vmem:[%s34 + $0x1c0] sm:%s27]
      %261 = vst [vmem:[%s35 + $0x1c0] sm:%s27] %v260
      %v262 = vld [vmem:[%s34 + $0x1c8] sm:%s27]
      %263 = vst [vmem:[%s35 + $0x1c4] sm:%s27] %v262
      %v264 = vld [vmem:[%s34 + $0x1c4] sm:%s27]
      %265 = vst [vmem:[%s35 + $0x1c8] sm:%s27] %v264
      %v266 = vld [vmem:[%s34 + $0x1cc] sm:%s27]
      %267 = vst [vmem:[%s35 + $0x1cc] sm:%s27] %v266
      %v268 = vld [vmem:[%s34 + $0x1d0] sm:%s27]
      %269 = vst [vmem:[%s35 + $0x1d0] sm:%s27] %v268
      %v270 = vld [vmem:[%s34 + $0x1d8] sm:%s27]
      %271 = vst [vmem:[%s35 + $0x1d4] sm:%s27] %v270
      %v272 = vld [vmem:[%s34 + $0x1d4] sm:%s27]
      %273 = vst [vmem:[%s35 + $0x1d8] sm:%s27] %v272
      %v274 = vld [vmem:[%s34 + $0x1dc] sm:%s27]
      %275 = vst [vmem:[%s35 + $0x1dc] sm:%s27] %v274
      %v276 = vld [vmem:[%s34 + $0x1e0] sm:%s27]
      %277 = vst [vmem:[%s35 + $0x1e0] sm:%s27] %v276
      %v278 = vld [vmem:[%s34 + $0x1e8] sm:%s27]
      %279 = vst [vmem:[%s35 + $0x1e4] sm:%s27] %v278
      %v280 = vld [vmem:[%s34 + $0x1e4] sm:%s27]
      %281 = vst [vmem:[%s35 + $0x1e8] sm:%s27] %v280
      %v282 = vld [vmem:[%s34 + $0x1ec] sm:%s27]
      %283 = vst [vmem:[%s35 + $0x1ec] sm:%s27] %v282
      %v284 = vld [vmem:[%s34 + $0x1f0] sm:%s27]
      %285 = vst [vmem:[%s35 + $0x1f0] sm:%s27] %v284
      %v286 = vld [vmem:[%s34 + $0x1f8] sm:%s27]
      %287 = vst [vmem:[%s35 + $0x1f4] sm:%s27] %v286
      %v288 = vld [vmem:[%s34 + $0x1f4] sm:%s27]
      %289 = vst [vmem:[%s35 + $0x1f8] sm:%s27] %v288
      %v290 = vld [vmem:[%s34 + $0x1fc] sm:%s27]
      %291 = vst [vmem:[%s35 + $0x1fc] sm:%s27] %v290
    $region30: #{tpu_custom_call.1} parent=24 // loop_footer
      %s33 = sadd.s32 1, %s29
    $region31: #{tpu_custom_call.1} parent=24 // loop_footer_branch
      %28 = sbr.rel target = $region27
    $region32: #{tpu_custom_call.1} parent=24 // loop_exit
      _
  $region25: #{tpu_custom_call.1} parent=0 // pred_fallthru
    _
  // Predicated region
  $region51: #{tpu_custom_call.1} parent=0 // pred_check
    _
  $region52: #{tpu_custom_call.1} parent=0 // pred_check_branch
    %577 = sbr.rel (0) target = $region54
  $region53: #{tpu_custom_call.1} parent=0 // pred_region
    %578 = vsyncadd [#allocation4], 8192
  $region54: #{tpu_custom_call.1} parent=0 // pred_fallthru
    _
  %s579 = scalar_lea.sflag [#allocation4], 1
  %p581 = scmp.lt.u32.totalorder 4, 8
  %p582 = pneg %p581
  // Predicated region
  $region55: #{tpu_custom_call.1} parent=0 // pred_check
    _
  $region56: #{tpu_custom_call.1} parent=0 // pred_check_branch
    %584 = sbr.rel (%p581) target = $region58
  $region57: #{tpu_custom_call.1} parent=0 // pred_region
    %s725 = sand.u32 4, 7
    %p726 = scmp.eq.s32.totalorder %s725, 0
    %p727 = pneg %p726
    // Predicated region
    $region70: #{tpu_custom_call.1} parent=57 // pred_check
      _
    $region71: #{tpu_custom_call.1} parent=57 // pred_check_branch
      %729 = sbr.rel (%p726) target = $region73
    $region72: #{tpu_custom_call.1} parent=57 // pred_region
      %s730 = sand.u32 4, 7
      %s731 = ssub.s32 4, %s730
      %s732 = scalar_lea.vmem %s4, %s731
      %s733 = ssub.s32 4, %s730
      %s734 = scalar_lea.vmem [#allocation3], %s733
      loop: start=0, step=1, limit=1
      $region74: #{tpu_custom_call.1} parent=72 // loop_pre_header
        _
      $region75: #{tpu_custom_call.1} parent=72 // loop_header
        %s736 = sphi 0, %s740
        %p737 = scmp.ge.s32.totalorder %s736, 1
        %s741 = sphi %s4, %s4
        %s742 = sphi [#allocation3], [#allocation3]
      $region76: #{tpu_custom_call.1} parent=72 // loop_header_branch
        %739 = sbr.rel (%p737) target = $region80
      $region77: #{tpu_custom_call.1} parent=72 // loop_body
        _
      $region78: #{tpu_custom_call.1} parent=72 // loop_footer
        %s740 = sadd.s32 1, %s736
      $region79: #{tpu_custom_call.1} parent=72 // loop_footer_branch
        %735 = sbr.rel target = $region75
      $region80: #{tpu_custom_call.1} parent=72 // loop_exit
        _
      %s743 = sshllo.u32 0, %s730
      loop: start=0, step=1, limit=1
      $region81: #{tpu_custom_call.1} parent=72 // loop_pre_header
        _
      $region82: #{tpu_custom_call.1} parent=72 // loop_header
        %s745 = sphi 0, %s749
        %p746 = scmp.ge.s32.totalorder %s745, 1
        %s750 = sphi %s732, %s732
        %s751 = sphi %s734, %s734
      $region83: #{tpu_custom_call.1} parent=72 // loop_header_branch
        %748 = sbr.rel (%p746) target = $region87
      $region84: #{tpu_custom_call.1} parent=72 // loop_body
        %v752 = vld [vmem:[%s750] sm:%s743]
        %753 = vst [vmem:[%s751] sm:%s743] %v752
        %v754 = vld [vmem:[%s750 + $0x10] sm:%s743]
        %755 = vst [vmem:[%s751 + $0x4] sm:%s743] %v754
        %v756 = vld [vmem:[%s750 + $0x4] sm:%s743]
        %757 = vst [vmem:[%s751 + $0x8] sm:%s743] %v756
        %v758 = vld [vmem:[%s750 + $0x14] sm:%s743]
        %759 = vst [vmem:[%s751 + $0xc] sm:%s743] %v758
        %v760 = vld [vmem:[%s750 + $0x8] sm:%s743]
        %761 = vst [vmem:[%s751 + $0x10] sm:%s743] %v760
        %v762 = vld [vmem:[%s750 + $0x18] sm:%s743]
        %763 = vst [vmem:[%s751 + $0x14] sm:%s743] %v762
        %v764 = vld [vmem:[%s750 + $0xc] sm:%s743]
        %765 = vst [vmem:[%s751 + $0x18] sm:%s743] %v764
        %v766 = vld [vmem:[%s750 + $0x1c] sm:%s743]
        %767 = vst [vmem:[%s751 + $0x1c] sm:%s743] %v766
        %v768 = vld [vmem:[%s750 + $0x20] sm:%s743]
        %769 = vst [vmem:[%s751 + $0x20] sm:%s743] %v768
        %v770 = vld [vmem:[%s750 + $0x30] sm:%s743]
        %771 = vst [vmem:[%s751 + $0x24] sm:%s743] %v770
        %v772 = vld [vmem:[%s750 + $0x24] sm:%s743]
        %773 = vst [vmem:[%s751 + $0x28] sm:%s743] %v772
        %v774 = vld [vmem:[%s750 + $0x34] sm:%s743]
        %775 = vst [vmem:[%s751 + $0x2c] sm:%s743] %v774
        %v776 = vld [vmem:[%s750 + $0x28] sm:%s743]
        %777 = vst [vmem:[%s751 + $0x30] sm:%s743] %v776
        %v778 = vld [vmem:[%s750 + $0x38] sm:%s743]
        %779 = vst [vmem:[%s751 + $0x34] sm:%s743] %v778
        %v780 = vld [vmem:[%s750 + $0x2c] sm:%s743]
        %781 = vst [vmem:[%s751 + $0x38] sm:%s743] %v780
        %v782 = vld [vmem:[%s750 + $0x3c] sm:%s743]
        %783 = vst [vmem:[%s751 + $0x3c] sm:%s743] %v782
        %v784 = vld [vmem:[%s750 + $0x40] sm:%s743]
        %785 = vst [vmem:[%s751 + $0x40] sm:%s743] %v784
        %v786 = vld [vmem:[%s750 + $0x50] sm:%s743]
        %787 = vst [vmem:[%s751 + $0x44] sm:%s743] %v786
        %v788 = vld [vmem:[%s750 + $0x44] sm:%s743]
        %789 = vst [vmem:[%s751 + $0x48] sm:%s743] %v788
        %v790 = vld [vmem:[%s750 + $0x54] sm:%s743]
        %791 = vst [vmem:[%s751 + $0x4c] sm:%s743] %v790
        %v792 = vld [vmem:[%s750 + $0x48] sm:%s743]
        %793 = vst [vmem:[%s751 + $0x50] sm:%s743] %v792
        %v794 = vld [vmem:[%s750 + $0x58] sm:%s743]
        %795 = vst [vmem:[%s751 + $0x54] sm:%s743] %v794
        %v796 = vld [vmem:[%s750 + $0x4c] sm:%s743]
        %797 = vst [vmem:[%s751 + $0x58] sm:%s743] %v796
        %v798 = vld [vmem:[%s750 + $0x5c] sm:%s743]
        %799 = vst [vmem:[%s751 + $0x5c] sm:%s743] %v798
        %v800 = vld [vmem:[%s750 + $0x60] sm:%s743]
        %801 = vst [vmem:[%s751 + $0x60] sm:%s743] %v800
        %v802 = vld [vmem:[%s750 + $0x70] sm:%s743]
        %803 = vst [vmem:[%s751 + $0x64] sm:%s743] %v802
        %v804 = vld [vmem:[%s750 + $0x64] sm:%s743]
        %805 = vst [vmem:[%s751 + $0x68] sm:%s743] %v804
        %v806 = vld [vmem:[%s750 + $0x74] sm:%s743]
        %807 = vst [vmem:[%s751 + $0x6c] sm:%s743] %v806
        %v808 = vld [vmem:[%s750 + $0x68] sm:%s743]
        %809 = vst [vmem:[%s751 + $0x70] sm:%s743] %v808
        %v810 = vld [vmem:[%s750 + $0x78] sm:%s743]
        %811 = vst [vmem:[%s751 + $0x74] sm:%s743] %v810
        %v812 = vld [vmem:[%s750 + $0x6c] sm:%s743]
        %813 = vst [vmem:[%s751 + $0x78] sm:%s743] %v812
        %v814 = vld [vmem:[%s750 + $0x7c] sm:%s743]
        %815 = vst [vmem:[%s751 + $0x7c] sm:%s743] %v814
        %v816 = vld [vmem:[%s750 + $0x80] sm:%s743]
        %817 = vst [vmem:[%s751 + $0x80] sm:%s743] %v816
        %v818 = vld [vmem:[%s750 + $0x90] sm:%s743]
        %819 = vst [vmem:[%s751 + $0x84] sm:%s743] %v818
        %v820 = vld [vmem:[%s750 + $0x84] sm:%s743]
        %821 = vst [vmem:[%s751 + $0x88] sm:%s743] %v820
        %v822 = vld [vmem:[%s750 + $0x94] sm:%s743]
        %823 = vst [vmem:[%s751 + $0x8c] sm:%s743] %v822
        %v824 = vld [vmem:[%s750 + $0x88] sm:%s743]
        %825 = vst [vmem:[%s751 + $0x90] sm:%s743] %v824
        %v826 = vld [vmem:[%s750 + $0x98] sm:%s743]
        %827 = vst [vmem:[%s751 + $0x94] sm:%s743] %v826
        %v828 = vld [vmem:[%s750 + $0x8c] sm:%s743]
        %829 = vst [vmem:[%s751 + $0x98] sm:%s743] %v828
        %v830 = vld [vmem:[%s750 + $0x9c] sm:%s743]
        %831 = vst [vmem:[%s751 + $0x9c] sm:%s743] %v830
        %v832 = vld [vmem:[%s750 + $0xa0] sm:%s743]
        %833 = vst [vmem:[%s751 + $0xa0] sm:%s743] %v832
        %v834 = vld [vmem:[%s750 + $0xb0] sm:%s743]
        %835 = vst [vmem:[%s751 + $0xa4] sm:%s743] %v834
        %v836 = vld [vmem:[%s750 + $0xa4] sm:%s743]
        %837 = vst [vmem:[%s751 + $0xa8] sm:%s743] %v836
        %v838 = vld [vmem:[%s750 + $0xb4] sm:%s743]
        %839 = vst [vmem:[%s751 + $0xac] sm:%s743] %v838
        %v840 = vld [vmem:[%s750 + $0xa8] sm:%s743]
        %841 = vst [vmem:[%s751 + $0xb0] sm:%s743] %v840
        %v842 = vld [vmem:[%s750 + $0xb8] sm:%s743]
        %843 = vst [vmem:[%s751 + $0xb4] sm:%s743] %v842
        %v844 = vld [vmem:[%s750 + $0xac] sm:%s743]
        %845 = vst [vmem:[%s751 + $0xb8] sm:%s743] %v844
        %v846 = vld [vmem:[%s750 + $0xbc] sm:%s743]
        %847 = vst [vmem:[%s751 + $0xbc] sm:%s743] %v846
        %v848 = vld [vmem:[%s750 + $0xc0] sm:%s743]
        %849 = vst [vmem:[%s751 + $0xc0] sm:%s743] %v848
        %v850 = vld [vmem:[%s750 + $0xd0] sm:%s743]
        %851 = vst [vmem:[%s751 + $0xc4] sm:%s743] %v850
        %v852 = vld [vmem:[%s750 + $0xc4] sm:%s743]
        %853 = vst [vmem:[%s751 + $0xc8] sm:%s743] %v852
        %v854 = vld [vmem:[%s750 + $0xd4] sm:%s743]
        %855 = vst [vmem:[%s751 + $0xcc] sm:%s743] %v854
        %v856 = vld [vmem:[%s750 + $0xc8] sm:%s743]
        %857 = vst [vmem:[%s751 + $0xd0] sm:%s743] %v856
        %v858 = vld [vmem:[%s750 + $0xd8] sm:%s743]
        %859 = vst [vmem:[%s751 + $0xd4] sm:%s743] %v858
        %v860 = vld [vmem:[%s750 + $0xcc] sm:%s743]
        %861 = vst [vmem:[%s751 + $0xd8] sm:%s743] %v860
        %v862 = vld [vmem:[%s750 + $0xdc] sm:%s743]
        %863 = vst [vmem:[%s751 + $0xdc] sm:%s743] %v862
        %v864 = vld [vmem:[%s750 + $0xe0] sm:%s743]
        %865 = vst [vmem:[%s751 + $0xe0] sm:%s743] %v864
        %v866 = vld [vmem:[%s750 + $0xf0] sm:%s743]
        %867 = vst [vmem:[%s751 + $0xe4] sm:%s743] %v866
        %v868 = vld [vmem:[%s750 + $0xe4] sm:%s743]
        %869 = vst [vmem:[%s751 + $0xe8] sm:%s743] %v868
        %v870 = vld [vmem:[%s750 + $0xf4] sm:%s743]
        %871 = vst [vmem:[%s751 + $0xec] sm:%s743] %v870
        %v872 = vld [vmem:[%s750 + $0xe8] sm:%s743]
        %873 = vst [vmem:[%s751 + $0xf0] sm:%s743] %v872
        %v874 = vld [vmem:[%s750 + $0xf8] sm:%s743]
        %875 = vst [vmem:[%s751 + $0xf4] sm:%s743] %v874
        %v876 = vld [vmem:[%s750 + $0xec] sm:%s743]
        %877 = vst [vmem:[%s751 + $0xf8] sm:%s743] %v876
        %v878 = vld [vmem:[%s750 + $0xfc] sm:%s743]
        %879 = vst [vmem:[%s751 + $0xfc] sm:%s743] %v878
      $region85: #{tpu_custom_call.1} parent=72 // loop_footer
        %s749 = sadd.s32 1, %s745
      $region86: #{tpu_custom_call.1} parent=72 // loop_footer_branch
        %744 = sbr.rel target = $region82
      $region87: #{tpu_custom_call.1} parent=72 // loop_exit
        _
    $region73: #{tpu_custom_call.1} parent=57 // pred_fallthru
      _
  $region58: #{tpu_custom_call.1} parent=0 // pred_fallthru
    _
  // Predicated region
  $region59: #{tpu_custom_call.1} parent=0 // pred_check
    %p585 = pneg %p581
  $region60: #{tpu_custom_call.1} parent=0 // pred_check_branch
    %587 = sbr.rel (%p585) target = $region62
  $region61: #{tpu_custom_call.1} parent=0 // pred_region
    %s588 = sshllo.u32 0, 4
    loop: start=0, step=1, limit=1
    $region63: #{tpu_custom_call.1} parent=61 // loop_pre_header
      _
    $region64: #{tpu_custom_call.1} parent=61 // loop_header
      %s590 = sphi 0, %s594
      %p591 = scmp.ge.s32.totalorder %s590, 1
      %s595 = sphi %s4, %s4
      %s596 = sphi [#allocation3], [#allocation3]
    $region65: #{tpu_custom_call.1} parent=61 // loop_header_branch
      %593 = sbr.rel (%p591) target = $region69
    $region66: #{tpu_custom_call.1} parent=61 // loop_body
      %v597 = vld [vmem:[%s595] sm:%s588]
      %598 = vst [vmem:[%s596] sm:%s588] %v597
      %v599 = vld [vmem:[%s595 + $0x10] sm:%s588]
      %600 = vst [vmem:[%s596 + $0x4] sm:%s588] %v599
      %v601 = vld [vmem:[%s595 + $0x4] sm:%s588]
      %602 = vst [vmem:[%s596 + $0x8] sm:%s588] %v601
      %v603 = vld [vmem:[%s595 + $0x14] sm:%s588]
      %604 = vst [vmem:[%s596 + $0xc] sm:%s588] %v603
      %v605 = vld [vmem:[%s595 + $0x8] sm:%s588]
      %606 = vst [vmem:[%s596 + $0x10] sm:%s588] %v605
      %v607 = vld [vmem:[%s595 + $0x18] sm:%s588]
      %608 = vst [vmem:[%s596 + $0x14] sm:%s588] %v607
      %v609 = vld [vmem:[%s595 + $0xc] sm:%s588]
      %610 = vst [vmem:[%s596 + $0x18] sm:%s588] %v609
      %v611 = vld [vmem:[%s595 + $0x1c] sm:%s588]
      %612 = vst [vmem:[%s596 + $0x1c] sm:%s588] %v611
      %v613 = vld [vmem:[%s595 + $0x20] sm:%s588]
      %614 = vst [vmem:[%s596 + $0x20] sm:%s588] %v613
      %v615 = vld [vmem:[%s595 + $0x30] sm:%s588]
      %616 = vst [vmem:[%s596 + $0x24] sm:%s588] %v615
      %v617 = vld [vmem:[%s595 + $0x24] sm:%s588]
      %618 = vst [vmem:[%s596 + $0x28] sm:%s588] %v617
      %v619 = vld [vmem:[%s595 + $0x34] sm:%s588]
      %620 = vst [vmem:[%s596 + $0x2c] sm:%s588] %v619
      %v621 = vld [vmem:[%s595 + $0x28] sm:%s588]
      %622 = vst [vmem:[%s596 + $0x30] sm:%s588] %v621
      %v623 = vld [vmem:[%s595 + $0x38] sm:%s588]
      %624 = vst [vmem:[%s596 + $0x34] sm:%s588] %v623
      %v625 = vld [vmem:[%s595 + $0x2c] sm:%s588]
      %626 = vst [vmem:[%s596 + $0x38] sm:%s588] %v625
      %v627 = vld [vmem:[%s595 + $0x3c] sm:%s588]
      %628 = vst [vmem:[%s596 + $0x3c] sm:%s588] %v627
      %v629 = vld [vmem:[%s595 + $0x40] sm:%s588]
      %630 = vst [vmem:[%s596 + $0x40] sm:%s588] %v629
      %v631 = vld [vmem:[%s595 + $0x50] sm:%s588]
      %632 = vst [vmem:[%s596 + $0x44] sm:%s588] %v631
      %v633 = vld [vmem:[%s595 + $0x44] sm:%s588]
      %634 = vst [vmem:[%s596 + $0x48] sm:%s588] %v633
      %v635 = vld [vmem:[%s595 + $0x54] sm:%s588]
      %636 = vst [vmem:[%s596 + $0x4c] sm:%s588] %v635
      %v637 = vld [vmem:[%s595 + $0x48] sm:%s588]
      %638 = vst [vmem:[%s596 + $0x50] sm:%s588] %v637
      %v639 = vld [vmem:[%s595 + $0x58] sm:%s588]
      %640 = vst [vmem:[%s596 + $0x54] sm:%s588] %v639
      %v641 = vld [vmem:[%s595 + $0x4c] sm:%s588]
      %642 = vst [vmem:[%s596 + $0x58] sm:%s588] %v641
      %v643 = vld [vmem:[%s595 + $0x5c] sm:%s588]
      %644 = vst [vmem:[%s596 + $0x5c] sm:%s588] %v643
      %v645 = vld [vmem:[%s595 + $0x60] sm:%s588]
      %646 = vst [vmem:[%s596 + $0x60] sm:%s588] %v645
      %v647 = vld [vmem:[%s595 + $0x70] sm:%s588]
      %648 = vst [vmem:[%s596 + $0x64] sm:%s588] %v647
      %v649 = vld [vmem:[%s595 + $0x64] sm:%s588]
      %650 = vst [vmem:[%s596 + $0x68] sm:%s588] %v649
      %v651 = vld [vmem:[%s595 + $0x74] sm:%s588]
      %652 = vst [vmem:[%s596 + $0x6c] sm:%s588] %v651
      %v653 = vld [vmem:[%s595 + $0x68] sm:%s588]
      %654 = vst [vmem:[%s596 + $0x70] sm:%s588] %v653
      %v655 = vld [vmem:[%s595 + $0x78] sm:%s588]
      %656 = vst [vmem:[%s596 + $0x74] sm:%s588] %v655
      %v657 = vld [vmem:[%s595 + $0x6c] sm:%s588]
      %658 = vst [vmem:[%s596 + $0x78] sm:%s588] %v657
      %v659 = vld [vmem:[%s595 + $0x7c] sm:%s588]
      %660 = vst [vmem:[%s596 + $0x7c] sm:%s588] %v659
      %v661 = vld [vmem:[%s595 + $0x80] sm:%s588]
      %662 = vst [vmem:[%s596 + $0x80] sm:%s588] %v661
      %v663 = vld [vmem:[%s595 + $0x90] sm:%s588]
      %664 = vst [vmem:[%s596 + $0x84] sm:%s588] %v663
      %v665 = vld [vmem:[%s595 + $0x84] sm:%s588]
      %666 = vst [vmem:[%s596 + $0x88] sm:%s588] %v665
      %v667 = vld [vmem:[%s595 + $0x94] sm:%s588]
      %668 = vst [vmem:[%s596 + $0x8c] sm:%s588] %v667
      %v669 = vld [vmem:[%s595 + $0x88] sm:%s588]
      %670 = vst [vmem:[%s596 + $0x90] sm:%s588] %v669
      %v671 = vld [vmem:[%s595 + $0x98] sm:%s588]
      %672 = vst [vmem:[%s596 + $0x94] sm:%s588] %v671
      %v673 = vld [vmem:[%s595 + $0x8c] sm:%s588]
      %674 = vst [vmem:[%s596 + $0x98] sm:%s588] %v673
      %v675 = vld [vmem:[%s595 + $0x9c] sm:%s588]
      %676 = vst [vmem:[%s596 + $0x9c] sm:%s588] %v675
      %v677 = vld [vmem:[%s595 + $0xa0] sm:%s588]
      %678 = vst [vmem:[%s596 + $0xa0] sm:%s588] %v677
      %v679 = vld [vmem:[%s595 + $0xb0] sm:%s588]
      %680 = vst [vmem:[%s596 + $0xa4] sm:%s588] %v679
      %v681 = vld [vmem:[%s595 + $0xa4] sm:%s588]
      %682 = vst [vmem:[%s596 + $0xa8] sm:%s588] %v681
      %v683 = vld [vmem:[%s595 + $0xb4] sm:%s588]
      %684 = vst [vmem:[%s596 + $0xac] sm:%s588] %v683
      %v685 = vld [vmem:[%s595 + $0xa8] sm:%s588]
      %686 = vst [vmem:[%s596 + $0xb0] sm:%s588] %v685
      %v687 = vld [vmem:[%s595 + $0xb8] sm:%s588]
      %688 = vst [vmem:[%s596 + $0xb4] sm:%s588] %v687
      %v689 = vld [vmem:[%s595 + $0xac] sm:%s588]
      %690 = vst [vmem:[%s596 + $0xb8] sm:%s588] %v689
      %v691 = vld [vmem:[%s595 + $0xbc] sm:%s588]
      %692 = vst [vmem:[%s596 + $0xbc] sm:%s588] %v691
      %v693 = vld [vmem:[%s595 + $0xc0] sm:%s588]
      %694 = vst [vmem:[%s596 + $0xc0] sm:%s588] %v693
      %v695 = vld [vmem:[%s595 + $0xd0] sm:%s588]
      %696 = vst [vmem:[%s596 + $0xc4] sm:%s588] %v695
      %v697 = vld [vmem:[%s595 + $0xc4] sm:%s588]
      %698 = vst [vmem:[%s596 + $0xc8] sm:%s588] %v697
      %v699 = vld [vmem:[%s595 + $0xd4] sm:%s588]
      %700 = vst [vmem:[%s596 + $0xcc] sm:%s588] %v699
      %v701 = vld [vmem:[%s595 + $0xc8] sm:%s588]
      %702 = vst [vmem:[%s596 + $0xd0] sm:%s588] %v701
      %v703 = vld [vmem:[%s595 + $0xd8] sm:%s588]
      %704 = vst [vmem:[%s596 + $0xd4] sm:%s588] %v703
      %v705 = vld [vmem:[%s595 + $0xcc] sm:%s588]
      %706 = vst [vmem:[%s596 + $0xd8] sm:%s588] %v705
      %v707 = vld [vmem:[%s595 + $0xdc] sm:%s588]
      %708 = vst [vmem:[%s596 + $0xdc] sm:%s588] %v707
      %v709 = vld [vmem:[%s595 + $0xe0] sm:%s588]
      %710 = vst [vmem:[%s596 + $0xe0] sm:%s588] %v709
      %v711 = vld [vmem:[%s595 + $0xf0] sm:%s588]
      %712 = vst [vmem:[%s596 + $0xe4] sm:%s588] %v711
      %v713 = vld [vmem:[%s595 + $0xe4] sm:%s588]
      %714 = vst [vmem:[%s596 + $0xe8] sm:%s588] %v713
      %v715 = vld [vmem:[%s595 + $0xf4] sm:%s588]
      %716 = vst [vmem:[%s596 + $0xec] sm:%s588] %v715
      %v717 = vld [vmem:[%s595 + $0xe8] sm:%s588]
      %718 = vst [vmem:[%s596 + $0xf0] sm:%s588] %v717
      %v719 = vld [vmem:[%s595 + $0xf8] sm:%s588]
      %720 = vst [vmem:[%s596 + $0xf4] sm:%s588] %v719
      %v721 = vld [vmem:[%s595 + $0xec] sm:%s588]
      %722 = vst [vmem:[%s596 + $0xf8] sm:%s588] %v721
      %v723 = vld [vmem:[%s595 + $0xfc] sm:%s588]
      %724 = vst [vmem:[%s596 + $0xfc] sm:%s588] %v723
    $region67: #{tpu_custom_call.1} parent=61 // loop_footer
      %s594 = sadd.s32 1, %s590
    $region68: #{tpu_custom_call.1} parent=61 // loop_footer_branch
      %589 = sbr.rel target = $region64
    $region69: #{tpu_custom_call.1} parent=61 // loop_exit
      _
  $region62: #{tpu_custom_call.1} parent=0 // pred_fallthru
    _
  // Predicated region
  $region88: #{tpu_custom_call.1} parent=0 // pred_check
    _
  $region89: #{tpu_custom_call.1} parent=0 // pred_check_branch
    %882 = sbr.rel (0) target = $region91
  $region90: #{tpu_custom_call.1} parent=0 // pred_region
    %883 = vsyncadd %s579, 4096
  $region91: #{tpu_custom_call.1} parent=0 // pred_fallthru
    _
  %v884 = vld [vmem:[%s0] sm:$0x1]
  %v885 = vld [vmem:[%s1] sm:$0xff]
  %v886 = vld [vmem:[%s1 + $0x8] sm:$0xff]
  %v887 = vld [vmem:[%s1 + $0x10] sm:$0xff]
  %v888 = vld [vmem:[%s1 + $0x18] sm:$0xff]
  %v889 = vld [vmem:[%s1 + $0x20] sm:$0xff]
  %v890 = vld [vmem:[%s1 + $0x28] sm:$0xff]
  %v891 = vld [vmem:[%s1 + $0x30] sm:$0xff]
  %v892 = vld [vmem:[%s1 + $0x38] sm:$0xff]
  %v893 = vld [vmem:[%s1 + $0x40] sm:$0xff]
  %v894 = vld [vmem:[%s1 + $0x48] sm:$0xff]
  %v895 = vld [vmem:[%s1 + $0x50] sm:$0xff]
  %v896 = vld [vmem:[%s1 + $0x58] sm:$0xff]
  %v897 = vld [vmem:[%s1 + $0x60] sm:$0xff]
  %v898 = vld [vmem:[%s1 + $0x68] sm:$0xff]
  %v899 = vld [vmem:[%s1 + $0x70] sm:$0xff]
  %v900 = vld [vmem:[%s1 + $0x78] sm:$0xff]
  %v901 = vld [vmem:[%s2] sm:$0xf]
  %v903 = vlaneseq
  %v904 = vshrl.u32 %v903, 7
  %v905 = vsub.s32 0, %v904
  %v906 = vrot.slane %v901, %v905
  %v907 = vlaneseq
  %v908 = vshrl.u32 %v907, 7
  %v909 = vsub.s32 1, %v908
  %v910 = vrot.slane %v901, %v909
  %v911 = vlaneseq
  %v912 = vshrl.u32 %v911, 7
  %v913 = vsub.s32 2, %v912
  %v914 = vrot.slane %v901, %v913
  %v915 = vlaneseq
  %v916 = vshrl.u32 %v915, 7
  %v917 = vsub.s32 3, %v916
  %v918 = vrot.slane %v901, %v917
  %vm923 = vcmask 261120
  %v925 = vsel %vm923, %v884, 0
  %v927 = vand.u32 %v886, 4294901760
  %928 = vmatprep.subr.mxu0 %v927
  %v929 = vand.u32 %v885, 4294901760
  %930 = vmatpush1.msra.mxu0 %v929
  %v931 = vand.u32 %v890, 4294901760
  %932 = vmatprep.subr.mxu0 %v931
  %v933 = vand.u32 %v889, 4294901760
  %934 = vmatpush1.msra.mxu0 %v933
  %v935 = vand.u32 %v894, 4294901760
  %936 = vmatprep.subr.mxu0 %v935
  %v937 = vand.u32 %v893, 4294901760
  %938 = vmatpush1.msra.mxu0 %v937
  %v939 = vand.u32 %v898, 4294901760
  %940 = vmatprep.subr.mxu0 %v939
  %v941 = vand.u32 %v897, 4294901760
  %942 = vmatpush1.msra.mxu0 %v941
  %943 = vmatprep.subr.mxu0 0.0
  %944 = vmatpush1.msra.mxu0 0.0
  %945 = vmatprep.subr.mxu0 0.0
  %946 = vmatpush1.msra.mxu0 0.0
  %947 = vmatprep.subr.mxu0 0.0
  %948 = vmatpush1.msra.mxu0 0.0
  %949 = vmatprep.subr.mxu0 0.0
  %950 = vmatpush1.msra.mxu0 0.0
  %951 = vmatprep.subr.mxu0 0.0
  %952 = vmatpush1.msra.mxu0 0.0
  %953 = vmatprep.subr.mxu0 0.0
  %954 = vmatpush1.msra.mxu0 0.0
  %955 = vmatprep.subr.mxu0 0.0
  %956 = vmatpush1.msra.mxu0 0.0
  %957 = vmatprep.subr.mxu0 0.0
  %958 = vmatpush1.msra.mxu0 0.0
  %959 = vmatprep.subr.mxu0 0.0
  %960 = vmatpush1.msra.mxu0 0.0
  %961 = vmatprep.subr.mxu0 0.0
  %962 = vmatpush1.msra.mxu0 0.0
  %963 = vmatprep.subr.mxu0 0.0
  %964 = vmatpush1.msra.mxu0 0.0
  %965 = vmatprep.subr.mxu0 0.0
  %966 = vmatpush1.msra.mxu0 0.0
  %967 = vmatprep.subr.mxu0 0.0
  %968 = vmatpush1.msra.mxu0 0.0
  %969 = vmatprep.subr.mxu0 0.0
  %970 = vmatpush1.msra.mxu0 0.0
  %971 = vmatprep.subr.mxu0 0.0
  %972 = vmatpush1.msra.mxu0 0.0
  %973 = vmatprep.subr.mxu0 0.0
  %974 = vmatpush1.msra.mxu0 0.0
  %975 = vmatprep.subr.mxu0 0.0
  %976 = vmatpush1.msra.mxu0 0.0
  %977 = vmatprep.subr.mxu0 0.0
  %978 = vmatpush1.msra.mxu0 0.0
  %979 = vmatprep.subr.mxu0 0.0
  %980 = vmatpush1.msra.mxu0 0.0
  %981 = vmatprep.subr.mxu0 0.0
  %982 = vmatpush1.msra.mxu0 0.0
  %983 = vmatprep.subr.mxu0 0.0
  %984 = vmatpush1.msra.mxu0 0.0
  %985 = vmatprep.subr.mxu0 0.0
  %986 = vmatpush1.msra.mxu0 0.0
  %987 = vmatprep.subr.mxu0 0.0
  %988 = vmatpush1.msra.mxu0 0.0
  %989 = vmatprep.subr.mxu0 0.0
  %990 = vmatpush1.msra.mxu0 0.0
  %991 = vmatprep.subr.mxu0 0.0
  %992 = vmatpush1.msra.mxu0 0.0
  %993 = vmatprep.subr.mxu0 0.0
  %994 = vmatpush1.msra.mxu0 0.0
  %995 = vmatprep.subr.mxu0 0.0
  %996 = vmatpush1.msra.mxu0 0.0
  %997 = vmatprep.subr.mxu0 0.0
  %998 = vmatpush1.msra.mxu0 0.0
  %999 = vmatprep.mubr.f32.mxu0 0.0
  %v1000 = vand.u32 %v925, 4294901760
  %v1001 = vsub.f32 %v925, %v1000
  %v1002 = vand.u32 %v1001, 4294901760
  %v1003 = vsub.f32 %v1001, %v1002
  %v1004 = vand.u32 %v1003, 4294901760
  %1005 = vmatmul.mubr.f32.gmra.mrb[0].mxu0 %v1004
  %v1006 = vpop.f32.mrb[0].mxu0
  %v1007 = vadd.f32 %v906, %v1006
  %v1008 = vpop.f32.mrb[0].mxu0
  %v1009 = vadd.f32 %v910, %v1008
  %1010 = vdwg.mxu0
  %v1011 = vand.u32 %v886, 4294901760
  %v1012 = vsub.f32 %v886, %v1011
  %v1013 = vand.u32 %v1012, 4294901760
  %v1014 = vsub.f32 %v1012, %v1013
  %v1015 = vand.u32 %v1014, 4294901760
  %1016 = vmatprep.subr.mxu0 %v1015
  %v1017 = vand.u32 %v885, 4294901760
  %v1018 = vsub.f32 %v885, %v1017
  %v1019 = vand.u32 %v1018, 4294901760
  %v1020 = vsub.f32 %v1018, %v1019
  %v1021 = vand.u32 %v1020, 4294901760
  %1022 = vmatpush1.msra.mxu0 %v1021
  %v1023 = vand.u32 %v890, 4294901760
  %v1024 = vsub.f32 %v890, %v1023
  %v1025 = vand.u32 %v1024, 4294901760
  %v1026 = vsub.f32 %v1024, %v1025
  %v1027 = vand.u32 %v1026, 4294901760
  %1028 = vmatprep.subr.mxu0 %v1027
  %v1029 = vand.u32 %v889, 4294901760
  %v1030 = vsub.f32 %v889, %v1029
  %v1031 = vand.u32 %v1030, 4294901760
  %v1032 = vsub.f32 %v1030, %v1031
  %v1033 = vand.u32 %v1032, 4294901760
  %1034 = vmatpush1.msra.mxu0 %v1033
  %v1035 = vand.u32 %v894, 4294901760
  %v1036 = vsub.f32 %v894, %v1035
  %v1037 = vand.u32 %v1036, 4294901760
  %v1038 = vsub.f32 %v1036, %v1037
  %v1039 = vand.u32 %v1038, 4294901760
  %1040 = vmatprep.subr.mxu0 %v1039
  %v1041 = vand.u32 %v893, 4294901760
  %v1042 = vsub.f32 %v893, %v1041
  %v1043 = vand.u32 %v1042, 4294901760
  %v1044 = vsub.f32 %v1042, %v1043
  %v1045 = vand.u32 %v1044, 4294901760
  %1046 = vmatpush1.msra.mxu0 %v1045
  %v1047 = vand.u32 %v898, 4294901760
  %v1048 = vsub.f32 %v898, %v1047
  %v1049 = vand.u32 %v1048, 4294901760
  %v1050 = vsub.f32 %v1048, %v1049
  %v1051 = vand.u32 %v1050, 4294901760
  %1052 = vmatprep.subr.mxu0 %v1051
  %v1053 = vand.u32 %v897, 4294901760
  %v1054 = vsub.f32 %v897, %v1053
  %v1055 = vand.u32 %v1054, 4294901760
  %v1056 = vsub.f32 %v1054, %v1055
  %v1057 = vand.u32 %v1056, 4294901760
  %1058 = vmatpush1.msra.mxu0 %v1057
  %1059 = vmatprep.subr.mxu0 0.0
  %1060 = vmatpush1.msra.mxu0 0.0
  %1061 = vmatprep.subr.mxu0 0.0
  %1062 = vmatpush1.msra.mxu0 0.0
  %1063 = vmatprep.subr.mxu0 0.0
  %1064 = vmatpush1.msra.mxu0 0.0
  %1065 = vmatprep.subr.mxu0 0.0
  %1066 = vmatpush1.msra.mxu0 0.0
  %1067 = vmatprep.subr.mxu0 0.0
  %1068 = vmatpush1.msra.mxu0 0.0
  %1069 = vmatprep.subr.mxu0 0.0
  %1070 = vmatpush1.msra.mxu0 0.0
  %1071 = vmatprep.subr.mxu0 0.0
  %1072 = vmatpush1.msra.mxu0 0.0
  %1073 = vmatprep.subr.mxu0 0.0
  %1074 = vmatpush1.msra.mxu0 0.0
  %1075 = vmatprep.subr.mxu0 0.0
  %1076 = vmatpush1.msra.mxu0 0.0
  %1077 = vmatprep.subr.mxu0 0.0
  %1078 = vmatpush1.msra.mxu0 0.0
  %1079 = vmatprep.subr.mxu0 0.0
  %1080 = vmatpush1.msra.mxu0 0.0
  %1081 = vmatprep.subr.mxu0 0.0
  %1082 = vmatpush1.msra.mxu0 0.0
  %1083 = vmatprep.subr.mxu0 0.0
  %1084 = vmatpush1.msra.mxu0 0.0
  %1085 = vmatprep.subr.mxu0 0.0
  %1086 = vmatpush1.msra.mxu0 0.0
  %1087 = vmatprep.subr.mxu0 0.0
  %1088 = vmatpush1.msra.mxu0 0.0
  %1089 = vmatprep.subr.mxu0 0.0
  %1090 = vmatpush1.msra.mxu0 0.0
  %1091 = vmatprep.subr.mxu0 0.0
  %1092 = vmatpush1.msra.mxu0 0.0
  %1093 = vmatprep.subr.mxu0 0.0
  %1094 = vmatpush1.msra.mxu0 0.0
  %1095 = vmatprep.subr.mxu0 0.0
  %1096 = vmatpush1.msra.mxu0 0.0
  %1097 = vmatprep.subr.mxu0 0.0
  %1098 = vmatpush1.msra.mxu0 0.0
  %1099 = vmatprep.subr.mxu0 0.0
  %1100 = vmatpush1.msra.mxu0 0.0
  %1101 = vmatprep.subr.mxu0 0.0
  %1102 = vmatpush1.msra.mxu0 0.0
  %1103 = vmatprep.subr.mxu0 0.0
  %1104 = vmatpush1.msra.mxu0 0.0
  %1105 = vmatprep.subr.mxu0 0.0
  %1106 = vmatpush1.msra.mxu0 0.0
  %1107 = vmatprep.subr.mxu0 0.0
  %1108 = vmatpush1.msra.mxu0 0.0
  %1109 = vmatprep.subr.mxu0 0.0
  %1110 = vmatpush1.msra.mxu0 0.0
  %1111 = vmatprep.subr.mxu0 0.0
  %1112 = vmatpush1.msra.mxu0 0.0
  %1113 = vmatprep.subr.mxu0 0.0
  %1114 = vmatpush1.msra.mxu0 0.0
  %1115 = vmatprep.mubr.f32.mxu0 0.0
  %v1116 = vand.u32 %v925, 4294901760
  %1117 = vmatmul.mubr.f32.gmra.mrb[0].mxu0 %v1116
  %v1118 = vpop.f32.mrb[0].mxu0
  %v1119 = vadd.f32 %v1007, %v1118
  %v1120 = vpop.f32.mrb[0].mxu0
  %v1121 = vadd.f32 %v1009, %v1120
  %1122 = vdwg.mxu0
  %v1123 = vand.u32 %v886, 4294901760
  %v1124 = vsub.f32 %v886, %v1123
  %1125 = vmatprep.subr.mxu0 %v1124
  %v1126 = vand.u32 %v885, 4294901760
  %v1127 = vsub.f32 %v885, %v1126
  %1128 = vmatpush1.msra.mxu0 %v1127
  %v1129 = vand.u32 %v890, 4294901760
  %v1130 = vsub.f32 %v890, %v1129
  %1131 = vmatprep.subr.mxu0 %v1130
  %v1132 = vand.u32 %v889, 4294901760
  %v1133 = vsub.f32 %v889, %v1132
  %1134 = vmatpush1.msra.mxu0 %v1133
  %v1135 = vand.u32 %v894, 4294901760
  %v1136 = vsub.f32 %v894, %v1135
  %1137 = vmatprep.subr.mxu0 %v1136
  %v1138 = vand.u32 %v893, 4294901760
  %v1139 = vsub.f32 %v893, %v1138
  %1140 = vmatpush1.msra.mxu0 %v1139
  %v1141 = vand.u32 %v898, 4294901760
  %v1142 = vsub.f32 %v898, %v1141
  %1143 = vmatprep.subr.mxu0 %v1142
  %v1144 = vand.u32 %v897, 4294901760
  %v1145 = vsub.f32 %v897, %v1144
  %1146 = vmatpush1.msra.mxu0 %v1145
  %1147 = vmatprep.subr.mxu0 0.0
  %1148 = vmatpush1.msra.mxu0 0.0
  %1149 = vmatprep.subr.mxu0 0.0
  %1150 = vmatpush1.msra.mxu0 0.0
  %1151 = vmatprep.subr.mxu0 0.0
  %1152 = vmatpush1.msra.mxu0 0.0
  %1153 = vmatprep.subr.mxu0 0.0
  %1154 = vmatpush1.msra.mxu0 0.0
  %1155 = vmatprep.subr.mxu0 0.0
  %1156 = vmatpush1.msra.mxu0 0.0
  %1157 = vmatprep.subr.mxu0 0.0
  %1158 = vmatpush1.msra.mxu0 0.0
  %1159 = vmatprep.subr.mxu0 0.0
  %1160 = vmatpush1.msra.mxu0 0.0
  %1161 = vmatprep.subr.mxu0 0.0
  %1162 = vmatpush1.msra.mxu0 0.0
  %1163 = vmatprep.subr.mxu0 0.0
  %1164 = vmatpush1.msra.mxu0 0.0
  %1165 = vmatprep.subr.mxu0 0.0
  %1166 = vmatpush1.msra.mxu0 0.0
  %1167 = vmatprep.subr.mxu0 0.0
  %1168 = vmatpush1.msra.mxu0 0.0
  %1169 = vmatprep.subr.mxu0 0.0
  %1170 = vmatpush1.msra.mxu0 0.0
  %1171 = vmatprep.subr.mxu0 0.0
  %1172 = vmatpush1.msra.mxu0 0.0
  %1173 = vmatprep.subr.mxu0 0.0
  %1174 = vmatpush1.msra.mxu0 0.0
  %1175 = vmatprep.subr.mxu0 0.0
  %1176 = vmatpush1.msra.mxu0 0.0
  %1177 = vmatprep.subr.mxu0 0.0
  %1178 = vmatpush1.msra.mxu0 0.0
  %1179 = vmatprep.subr.mxu0 0.0
  %1180 = vmatpush1.msra.mxu0 0.0
  %1181 = vmatprep.subr.mxu0 0.0
  %1182 = vmatpush1.msra.mxu0 0.0
  %1183 = vmatprep.subr.mxu0 0.0
  %1184 = vmatpush1.msra.mxu0 0.0
  %1185 = vmatprep.subr.mxu0 0.0
  %1186 = vmatpush1.msra.mxu0 0.0
  %1187 = vmatprep.subr.mxu0 0.0
  %1188 = vmatpush1.msra.mxu0 0.0
  %1189 = vmatprep.subr.mxu0 0.0
  %1190 = vmatpush1.msra.mxu0 0.0
  %1191 = vmatprep.subr.mxu0 0.0
  %1192 = vmatpush1.msra.mxu0 0.0
  %1193 = vmatprep.subr.mxu0 0.0
  %1194 = vmatpush1.msra.mxu0 0.0
  %1195 = vmatprep.subr.mxu0 0.0
  %1196 = vmatpush1.msra.mxu0 0.0
  %1197 = vmatprep.subr.mxu0 0.0
  %1198 = vmatpush1.msra.mxu0 0.0
  %1199 = vmatprep.subr.mxu0 0.0
  %1200 = vmatpush1.msra.mxu0 0.0
  %1201 = vmatprep.subr.mxu0 0.0
  %1202 = vmatpush1.msra.mxu0 0.0
  %1203 = vmatprep.mubr.f32.mxu0 0.0
  %v1204 = vand.u32 %v925, 4294901760
  %v1205 = vsub.f32 %v925, %v1204
  %1206 = vmatmul.mubr.f32.gmra.mrb[0].mxu0 %v1205
  %v1207 = vpop.f32.mrb[0].mxu0
  %v1208 = vadd.f32 %v1119, %v1207
  %v1209 = vpop.f32.mrb[0].mxu0
  %v1210 = vadd.f32 %v1121, %v1209
  %1211 = vdwg.mxu0
  %v1212 = vand.u32 %v886, 4294901760
  %1213 = vmatprep.subr.mxu0 %v1212
  %v1214 = vand.u32 %v885, 4294901760
  %1215 = vmatpush1.msra.mxu0 %v1214
  %v1216 = vand.u32 %v890, 4294901760
  %1217 = vmatprep.subr.mxu0 %v1216
  %v1218 = vand.u32 %v889, 4294901760
  %1219 = vmatpush1.msra.mxu0 %v1218
  %v1220 = vand.u32 %v894, 4294901760
  %1221 = vmatprep.subr.mxu0 %v1220
  %v1222 = vand.u32 %v893, 4294901760
  %1223 = vmatpush1.msra.mxu0 %v1222
  %v1224 = vand.u32 %v898, 4294901760
  %1225 = vmatprep.subr.mxu0 %v1224
  %v1226 = vand.u32 %v897, 4294901760
  %1227 = vmatpush1.msra.mxu0 %v1226
  %1228 = vmatprep.subr.mxu0 0.0
  %1229 = vmatpush1.msra.mxu0 0.0
  %1230 = vmatprep.subr.mxu0 0.0
  %1231 = vmatpush1.msra.mxu0 0.0
  %1232 = vmatprep.subr.mxu0 0.0
  %1233 = vmatpush1.msra.mxu0 0.0
  %1234 = vmatprep.subr.mxu0 0.0
  %1235 = vmatpush1.msra.mxu0 0.0
  %1236 = vmatprep.subr.mxu0 0.0
  %1237 = vmatpush1.msra.mxu0 0.0
  %1238 = vmatprep.subr.mxu0 0.0
  %1239 = vmatpush1.msra.mxu0 0.0
  %1240 = vmatprep.subr.mxu0 0.0
  %1241 = vmatpush1.msra.mxu0 0.0
  %1242 = vmatprep.subr.mxu0 0.0
  %1243 = vmatpush1.msra.mxu0 0.0
  %1244 = vmatprep.subr.mxu0 0.0
  %1245 = vmatpush1.msra.mxu0 0.0
  %1246 = vmatprep.subr.mxu0 0.0
  %1247 = vmatpush1.msra.mxu0 0.0
  %1248 = vmatprep.subr.mxu0 0.0
  %1249 = vmatpush1.msra.mxu0 0.0
  %1250 = vmatprep.subr.mxu0 0.0
  %1251 = vmatpush1.msra.mxu0 0.0
  %1252 = vmatprep.subr.mxu0 0.0
  %1253 = vmatpush1.msra.mxu0 0.0
  %1254 = vmatprep.subr.mxu0 0.0
  %1255 = vmatpush1.msra.mxu0 0.0
  %1256 = vmatprep.subr.mxu0 0.0
  %1257 = vmatpush1.msra.mxu0 0.0
  %1258 = vmatprep.subr.mxu0 0.0
  %1259 = vmatpush1.msra.mxu0 0.0
  %1260 = vmatprep.subr.mxu0 0.0
  %1261 = vmatpush1.msra.mxu0 0.0
  %1262 = vmatprep.subr.mxu0 0.0
  %1263 = vmatpush1.msra.mxu0 0.0
  %1264 = vmatprep.subr.mxu0 0.0
  %1265 = vmatpush1.msra.mxu0 0.0
  %1266 = vmatprep.subr.mxu0 0.0
  %1267 = vmatpush1.msra.mxu0 0.0
  %1268 = vmatprep.subr.mxu0 0.0
  %1269 = vmatpush1.msra.mxu0 0.0
  %1270 = vmatprep.subr.mxu0 0.0
  %1271 = vmatpush1.msra.mxu0 0.0
  %1272 = vmatprep.subr.mxu0 0.0
  %1273 = vmatpush1.msra.mxu0 0.0
  %1274 = vmatprep.subr.mxu0 0.0
  %1275 = vmatpush1.msra.mxu0 0.0
  %1276 = vmatprep.subr.mxu0 0.0
  %1277 = vmatpush1.msra.mxu0 0.0
  %1278 = vmatprep.subr.mxu0 0.0
  %1279 = vmatpush1.msra.mxu0 0.0
  %1280 = vmatprep.subr.mxu0 0.0
  %1281 = vmatpush1.msra.mxu0 0.0
  %1282 = vmatprep.subr.mxu0 0.0
  %1283 = vmatpush1.msra.mxu0 0.0
  %1284 = vmatprep.mubr.f32.mxu0 0.0
  %v1285 = vand.u32 %v925, 4294901760
  %v1286 = vsub.f32 %v925, %v1285
  %v1287 = vand.u32 %v1286, 4294901760
  %1288 = vmatmul.mubr.f32.gmra.mrb[0].mxu0 %v1287
  %v1289 = vpop.f32.mrb[0].mxu0
  %v1290 = vadd.f32 %v1208, %v1289
  %v1291 = vpop.f32.mrb[0].mxu0
  %v1292 = vadd.f32 %v1210, %v1291
  %1293 = vdwg.mxu0
  %v1294 = vand.u32 %v886, 4294901760
  %v1295 = vsub.f32 %v886, %v1294
  %v1296 = vand.u32 %v1295, 4294901760
  %1297 = vmatprep.subr.mxu0 %v1296
  %v1298 = vand.u32 %v885, 4294901760
  %v1299 = vsub.f32 %v885, %v1298
  %v1300 = vand.u32 %v1299, 4294901760
  %1301 = vmatpush1.msra.mxu0 %v1300
  %v1302 = vand.u32 %v890, 4294901760
  %v1303 = vsub.f32 %v890, %v1302
  %v1304 = vand.u32 %v1303, 4294901760
  %1305 = vmatprep.subr.mxu0 %v1304
  %v1306 = vand.u32 %v889, 4294901760
  %v1307 = vsub.f32 %v889, %v1306
  %v1308 = vand.u32 %v1307, 4294901760
  %1309 = vmatpush1.msra.mxu0 %v1308
  %v1310 = vand.u32 %v894, 4294901760
  %v1311 = vsub.f32 %v894, %v1310
  %v1312 = vand.u32 %v1311, 4294901760
  %1313 = vmatprep.subr.mxu0 %v1312
  %v1314 = vand.u32 %v893, 4294901760
  %v1315 = vsub.f32 %v893, %v1314
  %v1316 = vand.u32 %v1315, 4294901760
  %1317 = vmatpush1.msra.mxu0 %v1316
  %v1318 = vand.u32 %v898, 4294901760
  %v1319 = vsub.f32 %v898, %v1318
  %v1320 = vand.u32 %v1319, 4294901760
  %1321 = vmatprep.subr.mxu0 %v1320
  %v1322 = vand.u32 %v897, 4294901760
  %v1323 = vsub.f32 %v897, %v1322
  %v1324 = vand.u32 %v1323, 4294901760
  %1325 = vmatpush1.msra.mxu0 %v1324
  %1326 = vmatprep.subr.mxu0 0.0
  %1327 = vmatpush1.msra.mxu0 0.0
  %1328 = vmatprep.subr.mxu0 0.0
  %1329 = vmatpush1.msra.mxu0 0.0
  %1330 = vmatprep.subr.mxu0 0.0
  %1331 = vmatpush1.msra.mxu0 0.0
  %1332 = vmatprep.subr.mxu0 0.0
  %1333 = vmatpush1.msra.mxu0 0.0
  %1334 = vmatprep.subr.mxu0 0.0
  %1335 = vmatpush1.msra.mxu0 0.0
  %1336 = vmatprep.subr.mxu0 0.0
  %1337 = vmatpush1.msra.mxu0 0.0
  %1338 = vmatprep.subr.mxu0 0.0
  %1339 = vmatpush1.msra.mxu0 0.0
  %1340 = vmatprep.subr.mxu0 0.0
  %1341 = vmatpush1.msra.mxu0 0.0
  %1342 = vmatprep.subr.mxu0 0.0
  %1343 = vmatpush1.msra.mxu0 0.0
  %1344 = vmatprep.subr.mxu0 0.0
  %1345 = vmatpush1.msra.mxu0 0.0
  %1346 = vmatprep.subr.mxu0 0.0
  %1347 = vmatpush1.msra.mxu0 0.0
  %1348 = vmatprep.subr.mxu0 0.0
  %1349 = vmatpush1.msra.mxu0 0.0
  %1350 = vmatprep.subr.mxu0 0.0
  %1351 = vmatpush1.msra.mxu0 0.0
  %1352 = vmatprep.subr.mxu0 0.0
  %1353 = vmatpush1.msra.mxu0 0.0
  %1354 = vmatprep.subr.mxu0 0.0
  %1355 = vmatpush1.msra.mxu0 0.0
  %1356 = vmatprep.subr.mxu0 0.0
  %1357 = vmatpush1.msra.mxu0 0.0
  %1358 = vmatprep.subr.mxu0 0.0
  %1359 = vmatpush1.msra.mxu0 0.0
  %1360 = vmatprep.subr.mxu0 0.0
  %1361 = vmatpush1.msra.mxu0 0.0
  %1362 = vmatprep.subr.mxu0 0.0
  %1363 = vmatpush1.msra.mxu0 0.0
  %1364 = vmatprep.subr.mxu0 0.0
  %1365 = vmatpush1.msra.mxu0 0.0
  %1366 = vmatprep.subr.mxu0 0.0
  %1367 = vmatpush1.msra.mxu0 0.0
  %1368 = vmatprep.subr.mxu0 0.0
  %1369 = vmatpush1.msra.mxu0 0.0
  %1370 = vmatprep.subr.mxu0 0.0
  %1371 = vmatpush1.msra.mxu0 0.0
  %1372 = vmatprep.subr.mxu0 0.0
  %1373 = vmatpush1.msra.mxu0 0.0
  %1374 = vmatprep.subr.mxu0 0.0
  %1375 = vmatpush1.msra.mxu0 0.0
  %1376 = vmatprep.subr.mxu0 0.0
  %1377 = vmatpush1.msra.mxu0 0.0
  %1378 = vmatprep.subr.mxu0 0.0
  %1379 = vmatpush1.msra.mxu0 0.0
  %1380 = vmatprep.subr.mxu0 0.0
  %1381 = vmatpush1.msra.mxu0 0.0
  %1382 = vmatprep.mubr.f32.mxu0 0.0
  %v1383 = vand.u32 %v925, 4294901760
  %1384 = vmatmul.mubr.f32.gmra.mrb[0].mxu0 %v1383
  %v1385 = vpop.f32.mrb[0].mxu0
  %v1386 = vadd.f32 %v1290, %v1385
  %v1387 = vpop.f32.mrb[0].mxu0
  %v1388 = vadd.f32 %v1292, %v1387
  %1389 = vdwg.mxu0
  %v1390 = vand.u32 %v886, 4294901760
  %1391 = vmatprep.subr.mxu0 %v1390
  %v1392 = vand.u32 %v885, 4294901760
  %1393 = vmatpush1.msra.mxu0 %v1392
  %v1394 = vand.u32 %v890, 4294901760
  %1395 = vmatprep.subr.mxu0 %v1394
  %v1396 = vand.u32 %v889, 4294901760
  %1397 = vmatpush1.msra.mxu0 %v1396
  %v1398 = vand.u32 %v894, 4294901760
  %1399 = vmatprep.subr.mxu0 %v1398
  %v1400 = vand.u32 %v893, 4294901760
  %1401 = vmatpush1.msra.mxu0 %v1400
  %v1402 = vand.u32 %v898, 4294901760
  %1403 = vmatprep.subr.mxu0 %v1402
  %v1404 = vand.u32 %v897, 4294901760
  %1405 = vmatpush1.msra.mxu0 %v1404
  %1406 = vmatprep.subr.mxu0 0.0
  %1407 = vmatpush1.msra.mxu0 0.0
  %1408 = vmatprep.subr.mxu0 0.0
  %1409 = vmatpush1.msra.mxu0 0.0
  %1410 = vmatprep.subr.mxu0 0.0
  %1411 = vmatpush1.msra.mxu0 0.0
  %1412 = vmatprep.subr.mxu0 0.0
  %1413 = vmatpush1.msra.mxu0 0.0
  %1414 = vmatprep.subr.mxu0 0.0
  %1415 = vmatpush1.msra.mxu0 0.0
  %1416 = vmatprep.subr.mxu0 0.0
  %1417 = vmatpush1.msra.mxu0 0.0
  %1418 = vmatprep.subr.mxu0 0.0
  %1419 = vmatpush1.msra.mxu0 0.0
  %1420 = vmatprep.subr.mxu0 0.0
  %1421 = vmatpush1.msra.mxu0 0.0
  %1422 = vmatprep.subr.mxu0 0.0
  %1423 = vmatpush1.msra.mxu0 0.0
  %1424 = vmatprep.subr.mxu0 0.0
  %1425 = vmatpush1.msra.mxu0 0.0
  %1426 = vmatprep.subr.mxu0 0.0
  %1427 = vmatpush1.msra.mxu0 0.0
  %1428 = vmatprep.subr.mxu0 0.0
  %1429 = vmatpush1.msra.mxu0 0.0
  %1430 = vmatprep.subr.mxu0 0.0
  %1431 = vmatpush1.msra.mxu0 0.0
  %1432 = vmatprep.subr.mxu0 0.0
  %1433 = vmatpush1.msra.mxu0 0.0
  %1434 = vmatprep.subr.mxu0 0.0
  %1435 = vmatpush1.msra.mxu0 0.0
  %1436 = vmatprep.subr.mxu0 0.0
  %1437 = vmatpush1.msra.mxu0 0.0
  %1438 = vmatprep.subr.mxu0 0.0
  %1439 = vmatpush1.msra.mxu0 0.0
  %1440 = vmatprep.subr.mxu0 0.0
  %1441 = vmatpush1.msra.mxu0 0.0
  %1442 = vmatprep.subr.mxu0 0.0
  %1443 = vmatpush1.msra.mxu0 0.0
  %1444 = vmatprep.subr.mxu0 0.0
  %1445 = vmatpush1.msra.mxu0 0.0
  %1446 = vmatprep.subr.mxu0 0.0
  %1447 = vmatpush1.msra.mxu0 0.0
  %1448 = vmatprep.subr.mxu0 0.0
  %1449 = vmatpush1.msra.mxu0 0.0
  %1450 = vmatprep.subr.mxu0 0.0
  %1451 = vmatpush1.msra.mxu0 0.0
  %1452 = vmatprep.subr.mxu0 0.0
  %1453 = vmatpush1.msra.mxu0 0.0
  %1454 = vmatprep.subr.mxu0 0.0
  %1455 = vmatpush1.msra.mxu0 0.0
  %1456 = vmatprep.subr.mxu0 0.0
  %1457 = vmatpush1.msra.mxu0 0.0
  %1458 = vmatprep.subr.mxu0 0.0
  %1459 = vmatpush1.msra.mxu0 0.0
  %1460 = vmatprep.subr.mxu0 0.0
  %1461 = vmatpush1.msra.mxu0 0.0
  %1462 = vmatprep.mubr.f32.mxu0 0.0
  %v1463 = vand.u32 %v925, 4294901760
  %1464 = vmatmul.mubr.f32.gmra.mrb[0].mxu0 %v1463
  %v1465 = vpop.f32.mrb[0].mxu0
  %v1466 = vadd.f32 %v1386, %v1465
  %v1467 = vpop.f32.mrb[0].mxu0
  %v1468 = vadd.f32 %v1388, %v1467
  %1469 = vdwg.mxu0
  %v1470 = vand.u32 %v888, 4294901760
  %1471 = vmatprep.subr.mxu0 %v1470
  %v1472 = vand.u32 %v887, 4294901760
  %1473 = vmatpush1.msra.mxu0 %v1472
  %v1474 = vand.u32 %v892, 4294901760
  %1475 = vmatprep.subr.mxu0 %v1474
  %v1476 = vand.u32 %v891, 4294901760
  %1477 = vmatpush1.msra.mxu0 %v1476
  %v1478 = vand.u32 %v896, 4294901760
  %1479 = vmatprep.subr.mxu0 %v1478
  %v1480 = vand.u32 %v895, 4294901760
  %1481 = vmatpush1.msra.mxu0 %v1480
  %v1482 = vand.u32 %v900, 4294901760
  %1483 = vmatprep.subr.mxu0 %v1482
  %v1484 = vand.u32 %v899, 4294901760
  %1485 = vmatpush1.msra.mxu0 %v1484
  %1486 = vmatprep.subr.mxu0 0.0
  %1487 = vmatpush1.msra.mxu0 0.0
  %1488 = vmatprep.subr.mxu0 0.0
  %1489 = vmatpush1.msra.mxu0 0.0
  %1490 = vmatprep.subr.mxu0 0.0
  %1491 = vmatpush1.msra.mxu0 0.0
  %1492 = vmatprep.subr.mxu0 0.0
  %1493 = vmatpush1.msra.mxu0 0.0
  %1494 = vmatprep.subr.mxu0 0.0
  %1495 = vmatpush1.msra.mxu0 0.0
  %1496 = vmatprep.subr.mxu0 0.0
  %1497 = vmatpush1.msra.mxu0 0.0
  %1498 = vmatprep.subr.mxu0 0.0
  %1499 = vmatpush1.msra.mxu0 0.0
  %1500 = vmatprep.subr.mxu0 0.0
  %1501 = vmatpush1.msra.mxu0 0.0
  %1502 = vmatprep.subr.mxu0 0.0
  %1503 = vmatpush1.msra.mxu0 0.0
  %1504 = vmatprep.subr.mxu0 0.0
  %1505 = vmatpush1.msra.mxu0 0.0
  %1506 = vmatprep.subr.mxu0 0.0
  %1507 = vmatpush1.msra.mxu0 0.0
  %1508 = vmatprep.subr.mxu0 0.0
  %1509 = vmatpush1.msra.mxu0 0.0
  %1510 = vmatprep.subr.mxu0 0.0
  %1511 = vmatpush1.msra.mxu0 0.0
  %1512 = vmatprep.subr.mxu0 0.0
  %1513 = vmatpush1.msra.mxu0 0.0
  %1514 = vmatprep.subr.mxu0 0.0
  %1515 = vmatpush1.msra.mxu0 0.0
  %1516 = vmatprep.subr.mxu0 0.0
  %1517 = vmatpush1.msra.mxu0 0.0
  %1518 = vmatprep.subr.mxu0 0.0
  %1519 = vmatpush1.msra.mxu0 0.0
  %1520 = vmatprep.subr.mxu0 0.0
  %1521 = vmatpush1.msra.mxu0 0.0
  %1522 = vmatprep.subr.mxu0 0.0
  %1523 = vmatpush1.msra.mxu0 0.0
  %1524 = vmatprep.subr.mxu0 0.0
  %1525 = vmatpush1.msra.mxu0 0.0
  %1526 = vmatprep.subr.mxu0 0.0
  %1527 = vmatpush1.msra.mxu0 0.0
  %1528 = vmatprep.subr.mxu0 0.0
  %1529 = vmatpush1.msra.mxu0 0.0
  %1530 = vmatprep.subr.mxu0 0.0
  %1531 = vmatpush1.msra.mxu0 0.0
  %1532 = vmatprep.subr.mxu0 0.0
  %1533 = vmatpush1.msra.mxu0 0.0
  %1534 = vmatprep.subr.mxu0 0.0
  %1535 = vmatpush1.msra.mxu0 0.0
  %1536 = vmatprep.subr.mxu0 0.0
  %1537 = vmatpush1.msra.mxu0 0.0
  %1538 = vmatprep.subr.mxu0 0.0
  %1539 = vmatpush1.msra.mxu0 0.0
  %1540 = vmatprep.subr.mxu0 0.0
  %1541 = vmatpush1.msra.mxu0 0.0
  %1542 = vmatprep.mubr.f32.mxu0 0.0
  %v1543 = vand.u32 %v925, 4294901760
  %v1544 = vsub.f32 %v925, %v1543
  %v1545 = vand.u32 %v1544, 4294901760
  %v1546 = vsub.f32 %v1544, %v1545
  %v1547 = vand.u32 %v1546, 4294901760
  %1548 = vmatmul.mubr.f32.gmra.mrb[0].mxu0 %v1547
  %v1549 = vpop.f32.mrb[0].mxu0
  %v1550 = vadd.f32 %v914, %v1549
  %v1551 = vpop.f32.mrb[0].mxu0
  %v1552 = vadd.f32 %v918, %v1551
  %1553 = vdwg.mxu0
  %v1554 = vand.u32 %v888, 4294901760
  %v1555 = vsub.f32 %v888, %v1554
  %v1556 = vand.u32 %v1555, 4294901760
  %v1557 = vsub.f32 %v1555, %v1556
  %v1558 = vand.u32 %v1557, 4294901760
  %1559 = vmatprep.subr.mxu0 %v1558
  %v1560 = vand.u32 %v887, 4294901760
  %v1561 = vsub.f32 %v887, %v1560
  %v1562 = vand.u32 %v1561, 4294901760
  %v1563 = vsub.f32 %v1561, %v1562
  %v1564 = vand.u32 %v1563, 4294901760
  %1565 = vmatpush1.msra.mxu0 %v1564
  %v1566 = vand.u32 %v892, 4294901760
  %v1567 = vsub.f32 %v892, %v1566
  %v1568 = vand.u32 %v1567, 4294901760
  %v1569 = vsub.f32 %v1567, %v1568
  %v1570 = vand.u32 %v1569, 4294901760
  %1571 = vmatprep.subr.mxu0 %v1570
  %v1572 = vand.u32 %v891, 4294901760
  %v1573 = vsub.f32 %v891, %v1572
  %v1574 = vand.u32 %v1573, 4294901760
  %v1575 = vsub.f32 %v1573, %v1574
  %v1576 = vand.u32 %v1575, 4294901760
  %1577 = vmatpush1.msra.mxu0 %v1576
  %v1578 = vand.u32 %v896, 4294901760
  %v1579 = vsub.f32 %v896, %v1578
  %v1580 = vand.u32 %v1579, 4294901760
  %v1581 = vsub.f32 %v1579, %v1580
  %v1582 = vand.u32 %v1581, 4294901760
  %1583 = vmatprep.subr.mxu0 %v1582
  %v1584 = vand.u32 %v895, 4294901760
  %v1585 = vsub.f32 %v895, %v1584
  %v1586 = vand.u32 %v1585, 4294901760
  %v1587 = vsub.f32 %v1585, %v1586
  %v1588 = vand.u32 %v1587, 4294901760
  %1589 = vmatpush1.msra.mxu0 %v1588
  %v1590 = vand.u32 %v900, 4294901760
  %v1591 = vsub.f32 %v900, %v1590
  %v1592 = vand.u32 %v1591, 4294901760
  %v1593 = vsub.f32 %v1591, %v1592
  %v1594 = vand.u32 %v1593, 4294901760
  %1595 = vmatprep.subr.mxu0 %v1594
  %v1596 = vand.u32 %v899, 4294901760
  %v1597 = vsub.f32 %v899, %v1596
  %v1598 = vand.u32 %v1597, 4294901760
  %v1599 = vsub.f32 %v1597, %v1598
  %v1600 = vand.u32 %v1599, 4294901760
  %1601 = vmatpush1.msra.mxu0 %v1600
  %1602 = vmatprep.subr.mxu0 0.0
  %1603 = vmatpush1.msra.mxu0 0.0
  %1604 = vmatprep.subr.mxu0 0.0
  %1605 = vmatpush1.msra.mxu0 0.0
  %1606 = vmatprep.subr.mxu0 0.0
  %1607 = vmatpush1.msra.mxu0 0.0
  %1608 = vmatprep.subr.mxu0 0.0
  %1609 = vmatpush1.msra.mxu0 0.0
  %1610 = vmatprep.subr.mxu0 0.0
  %1611 = vmatpush1.msra.mxu0 0.0
  %1612 = vmatprep.subr.mxu0 0.0
  %1613 = vmatpush1.msra.mxu0 0.0
  %1614 = vmatprep.subr.mxu0 0.0
  %1615 = vmatpush1.msra.mxu0 0.0
  %1616 = vmatprep.subr.mxu0 0.0
  %1617 = vmatpush1.msra.mxu0 0.0
  %1618 = vmatprep.subr.mxu0 0.0
  %1619 = vmatpush1.msra.mxu0 0.0
  %1620 = vmatprep.subr.mxu0 0.0
  %1621 = vmatpush1.msra.mxu0 0.0
  %1622 = vmatprep.subr.mxu0 0.0
  %1623 = vmatpush1.msra.mxu0 0.0
  %1624 = vmatprep.subr.mxu0 0.0
  %1625 = vmatpush1.msra.mxu0 0.0
  %1626 = vmatprep.subr.mxu0 0.0
  %1627 = vmatpush1.msra.mxu0 0.0
  %1628 = vmatprep.subr.mxu0 0.0
  %1629 = vmatpush1.msra.mxu0 0.0
  %1630 = vmatprep.subr.mxu0 0.0
  %1631 = vmatpush1.msra.mxu0 0.0
  %1632 = vmatprep.subr.mxu0 0.0
  %1633 = vmatpush1.msra.mxu0 0.0
  %1634 = vmatprep.subr.mxu0 0.0
  %1635 = vmatpush1.msra.mxu0 0.0
  %1636 = vmatprep.subr.mxu0 0.0
  %1637 = vmatpush1.msra.mxu0 0.0
  %1638 = vmatprep.subr.mxu0 0.0
  %1639 = vmatpush1.msra.mxu0 0.0
  %1640 = vmatprep.subr.mxu0 0.0
  %1641 = vmatpush1.msra.mxu0 0.0
  %1642 = vmatprep.subr.mxu0 0.0
  %1643 = vmatpush1.msra.mxu0 0.0
  %1644 = vmatprep.subr.mxu0 0.0
  %1645 = vmatpush1.msra.mxu0 0.0
  %1646 = vmatprep.subr.mxu0 0.0
  %1647 = vmatpush1.msra.mxu0 0.0
  %1648 = vmatprep.subr.mxu0 0.0
  %1649 = vmatpush1.msra.mxu0 0.0
  %1650 = vmatprep.subr.mxu0 0.0
  %1651 = vmatpush1.msra.mxu0 0.0
  %1652 = vmatprep.subr.mxu0 0.0
  %1653 = vmatpush1.msra.mxu0 0.0
  %1654 = vmatprep.subr.mxu0 0.0
  %1655 = vmatpush1.msra.mxu0 0.0
  %1656 = vmatprep.subr.mxu0 0.0
  %1657 = vmatpush1.msra.mxu0 0.0
  %1658 = vmatprep.mubr.f32.mxu0 0.0
  %v1659 = vand.u32 %v925, 4294901760
  %1660 = vmatmul.mubr.f32.gmra.mrb[0].mxu0 %v1659
  %v1661 = vpop.f32.mrb[0].mxu0
  %v1662 = vadd.f32 %v1550, %v1661
  %v1663 = vpop.f32.mrb[0].mxu0
  %v1664 = vadd.f32 %v1552, %v1663
  %1665 = vdwg.mxu0
  %v1666 = vand.u32 %v888, 4294901760
  %v1667 = vsub.f32 %v888, %v1666
  %1668 = vmatprep.subr.mxu0 %v1667
  %v1669 = vand.u32 %v887, 4294901760
  %v1670 = vsub.f32 %v887, %v1669
  %1671 = vmatpush1.msra.mxu0 %v1670
  %v1672 = vand.u32 %v892, 4294901760
  %v1673 = vsub.f32 %v892, %v1672
  %1674 = vmatprep.subr.mxu0 %v1673
  %v1675 = vand.u32 %v891, 4294901760
  %v1676 = vsub.f32 %v891, %v1675
  %1677 = vmatpush1.msra.mxu0 %v1676
  %v1678 = vand.u32 %v896, 4294901760
  %v1679 = vsub.f32 %v896, %v1678
  %1680 = vmatprep.subr.mxu0 %v1679
  %v1681 = vand.u32 %v895, 4294901760
  %v1682 = vsub.f32 %v895, %v1681
  %1683 = vmatpush1.msra.mxu0 %v1682
  %v1684 = vand.u32 %v900, 4294901760
  %v1685 = vsub.f32 %v900, %v1684
  %1686 = vmatprep.subr.mxu0 %v1685
  %v1687 = vand.u32 %v899, 4294901760
  %v1688 = vsub.f32 %v899, %v1687
  %1689 = vmatpush1.msra.mxu0 %v1688
  %1690 = vmatprep.subr.mxu0 0.0
  %1691 = vmatpush1.msra.mxu0 0.0
  %1692 = vmatprep.subr.mxu0 0.0
  %1693 = vmatpush1.msra.mxu0 0.0
  %1694 = vmatprep.subr.mxu0 0.0
  %1695 = vmatpush1.msra.mxu0 0.0
  %1696 = vmatprep.subr.mxu0 0.0
  %1697 = vmatpush1.msra.mxu0 0.0
  %1698 = vmatprep.subr.mxu0 0.0
  %1699 = vmatpush1.msra.mxu0 0.0
  %1700 = vmatprep.subr.mxu0 0.0
  %1701 = vmatpush1.msra.mxu0 0.0
  %1702 = vmatprep.subr.mxu0 0.0
  %1703 = vmatpush1.msra.mxu0 0.0
  %1704 = vmatprep.subr.mxu0 0.0
  %1705 = vmatpush1.msra.mxu0 0.0
  %1706 = vmatprep.subr.mxu0 0.0
  %1707 = vmatpush1.msra.mxu0 0.0
  %1708 = vmatprep.subr.mxu0 0.0
  %1709 = vmatpush1.msra.mxu0 0.0
  %1710 = vmatprep.subr.mxu0 0.0
  %1711 = vmatpush1.msra.mxu0 0.0
  %1712 = vmatprep.subr.mxu0 0.0
  %1713 = vmatpush1.msra.mxu0 0.0
  %1714 = vmatprep.subr.mxu0 0.0
  %1715 = vmatpush1.msra.mxu0 0.0
  %1716 = vmatprep.subr.mxu0 0.0
  %1717 = vmatpush1.msra.mxu0 0.0
  %1718 = vmatprep.subr.mxu0 0.0
  %1719 = vmatpush1.msra.mxu0 0.0
  %1720 = vmatprep.subr.mxu0 0.0
  %1721 = vmatpush1.msra.mxu0 0.0
  %1722 = vmatprep.subr.mxu0 0.0
  %1723 = vmatpush1.msra.mxu0 0.0
  %1724 = vmatprep.subr.mxu0 0.0
  %1725 = vmatpush1.msra.mxu0 0.0
  %1726 = vmatprep.subr.mxu0 0.0
  %1727 = vmatpush1.msra.mxu0 0.0
  %1728 = vmatprep.subr.mxu0 0.0
  %1729 = vmatpush1.msra.mxu0 0.0
  %1730 = vmatprep.subr.mxu0 0.0
  %1731 = vmatpush1.msra.mxu0 0.0
  %1732 = vmatprep.subr.mxu0 0.0
  %1733 = vmatpush1.msra.mxu0 0.0
  %1734 = vmatprep.subr.mxu0 0.0
  %1735 = vmatpush1.msra.mxu0 0.0
  %1736 = vmatprep.subr.mxu0 0.0
  %1737 = vmatpush1.msra.mxu0 0.0
  %1738 = vmatprep.subr.mxu0 0.0
  %1739 = vmatpush1.msra.mxu0 0.0
  %1740 = vmatprep.subr.mxu0 0.0
  %1741 = vmatpush1.msra.mxu0 0.0
  %1742 = vmatprep.subr.mxu0 0.0
  %1743 = vmatpush1.msra.mxu0 0.0
  %1744 = vmatprep.subr.mxu0 0.0
  %1745 = vmatpush1.msra.mxu0 0.0
  %1746 = vmatprep.mubr.f32.mxu0 0.0
  %v1747 = vand.u32 %v925, 4294901760
  %v1748 = vsub.f32 %v925, %v1747
  %1749 = vmatmul.mubr.f32.gmra.mrb[0].mxu0 %v1748
  %v1750 = vpop.f32.mrb[0].mxu0
  %v1751 = vadd.f32 %v1662, %v1750
  %v1752 = vpop.f32.mrb[0].mxu0
  %v1753 = vadd.f32 %v1664, %v1752
  %1754 = vdwg.mxu0
  %v1755 = vand.u32 %v888, 4294901760
  %1756 = vmatprep.subr.mxu0 %v1755
  %v1757 = vand.u32 %v887, 4294901760
  %1758 = vmatpush1.msra.mxu0 %v1757
  %v1759 = vand.u32 %v892, 4294901760
  %1760 = vmatprep.subr.mxu0 %v1759
  %v1761 = vand.u32 %v891, 4294901760
  %1762 = vmatpush1.msra.mxu0 %v1761
  %v1763 = vand.u32 %v896, 4294901760
  %1764 = vmatprep.subr.mxu0 %v1763
  %v1765 = vand.u32 %v895, 4294901760
  %1766 = vmatpush1.msra.mxu0 %v1765
  %v1767 = vand.u32 %v900, 4294901760
  %1768 = vmatprep.subr.mxu0 %v1767
  %v1769 = vand.u32 %v899, 4294901760
  %1770 = vmatpush1.msra.mxu0 %v1769
  %1771 = vmatprep.subr.mxu0 0.0
  %1772 = vmatpush1.msra.mxu0 0.0
  %1773 = vmatprep.subr.mxu0 0.0
  %1774 = vmatpush1.msra.mxu0 0.0
  %1775 = vmatprep.subr.mxu0 0.0
  %1776 = vmatpush1.msra.mxu0 0.0
  %1777 = vmatprep.subr.mxu0 0.0
  %1778 = vmatpush1.msra.mxu0 0.0
  %1779 = vmatprep.subr.mxu0 0.0
  %1780 = vmatpush1.msra.mxu0 0.0
  %1781 = vmatprep.subr.mxu0 0.0
  %1782 = vmatpush1.msra.mxu0 0.0
  %1783 = vmatprep.subr.mxu0 0.0
  %1784 = vmatpush1.msra.mxu0 0.0
  %1785 = vmatprep.subr.mxu0 0.0
  %1786 = vmatpush1.msra.mxu0 0.0
  %1787 = vmatprep.subr.mxu0 0.0
  %1788 = vmatpush1.msra.mxu0 0.0
  %1789 = vmatprep.subr.mxu0 0.0
  %1790 = vmatpush1.msra.mxu0 0.0
  %1791 = vmatprep.subr.mxu0 0.0
  %1792 = vmatpush1.msra.mxu0 0.0
  %1793 = vmatprep.subr.mxu0 0.0
  %1794 = vmatpush1.msra.mxu0 0.0
  %1795 = vmatprep.subr.mxu0 0.0
  %1796 = vmatpush1.msra.mxu0 0.0
  %1797 = vmatprep.subr.mxu0 0.0
  %1798 = vmatpush1.msra.mxu0 0.0
  %1799 = vmatprep.subr.mxu0 0.0
  %1800 = vmatpush1.msra.mxu0 0.0
  %1801 = vmatprep.subr.mxu0 0.0
  %1802 = vmatpush1.msra.mxu0 0.0
  %1803 = vmatprep.subr.mxu0 0.0
  %1804 = vmatpush1.msra.mxu0 0.0
  %1805 = vmatprep.subr.mxu0 0.0
  %1806 = vmatpush1.msra.mxu0 0.0
  %1807 = vmatprep.subr.mxu0 0.0
  %1808 = vmatpush1.msra.mxu0 0.0
  %1809 = vmatprep.subr.mxu0 0.0
  %1810 = vmatpush1.msra.mxu0 0.0
  %1811 = vmatprep.subr.mxu0 0.0
  %1812 = vmatpush1.msra.mxu0 0.0
  %1813 = vmatprep.subr.mxu0 0.0
  %1814 = vmatpush1.msra.mxu0 0.0
  %1815 = vmatprep.subr.mxu0 0.0
  %1816 = vmatpush1.msra.mxu0 0.0
  %1817 = vmatprep.subr.mxu0 0.0
  %1818 = vmatpush1.msra.mxu0 0.0
  %1819 = vmatprep.subr.mxu0 0.0
  %1820 = vmatpush1.msra.mxu0 0.0
  %1821 = vmatprep.subr.mxu0 0.0
  %1822 = vmatpush1.msra.mxu0 0.0
  %1823 = vmatprep.subr.mxu0 0.0
  %1824 = vmatpush1.msra.mxu0 0.0
  %1825 = vmatprep.subr.mxu0 0.0
  %1826 = vmatpush1.msra.mxu0 0.0
  %1827 = vmatprep.mubr.f32.mxu0 0.0
  %v1828 = vand.u32 %v925, 4294901760
  %v1829 = vsub.f32 %v925, %v1828
  %v1830 = vand.u32 %v1829, 4294901760
  %1831 = vmatmul.mubr.f32.gmra.mrb[0].mxu0 %v1830
  %v1832 = vpop.f32.mrb[0].mxu0
  %v1833 = vadd.f32 %v1751, %v1832
  %v1834 = vpop.f32.mrb[0].mxu0
  %v1835 = vadd.f32 %v1753, %v1834
  %1836 = vdwg.mxu0
  %v1837 = vand.u32 %v888, 4294901760
  %v1838 = vsub.f32 %v888, %v1837
  %v1839 = vand.u32 %v1838, 4294901760
  %1840 = vmatprep.subr.mxu0 %v1839
  %v1841 = vand.u32 %v887, 4294901760
  %v1842 = vsub.f32 %v887, %v1841
  %v1843 = vand.u32 %v1842, 4294901760
  %1844 = vmatpush1.msra.mxu0 %v1843
  %v1845 = vand.u32 %v892, 4294901760
  %v1846 = vsub.f32 %v892, %v1845
  %v1847 = vand.u32 %v1846, 4294901760
  %1848 = vmatprep.subr.mxu0 %v1847
  %v1849 = vand.u32 %v891, 4294901760
  %v1850 = vsub.f32 %v891, %v1849
  %v1851 = vand.u32 %v1850, 4294901760
  %1852 = vmatpush1.msra.mxu0 %v1851
  %v1853 = vand.u32 %v896, 4294901760
  %v1854 = vsub.f32 %v896, %v1853
  %v1855 = vand.u32 %v1854, 4294901760
  %1856 = vmatprep.subr.mxu0 %v1855
  %v1857 = vand.u32 %v895, 4294901760
  %v1858 = vsub.f32 %v895, %v1857
  %v1859 = vand.u32 %v1858, 4294901760
  %1860 = vmatpush1.msra.mxu0 %v1859
  %v1861 = vand.u32 %v900, 4294901760
  %v1862 = vsub.f32 %v900, %v1861
  %v1863 = vand.u32 %v1862, 4294901760
  %1864 = vmatprep.subr.mxu0 %v1863
  %v1865 = vand.u32 %v899, 4294901760
  %v1866 = vsub.f32 %v899, %v1865
  %v1867 = vand.u32 %v1866, 4294901760
  %1868 = vmatpush1.msra.mxu0 %v1867
  %1869 = vmatprep.subr.mxu0 0.0
  %1870 = vmatpush1.msra.mxu0 0.0
  %1871 = vmatprep.subr.mxu0 0.0
  %1872 = vmatpush1.msra.mxu0 0.0
  %1873 = vmatprep.subr.mxu0 0.0
  %1874 = vmatpush1.msra.mxu0 0.0
  %1875 = vmatprep.subr.mxu0 0.0
  %1876 = vmatpush1.msra.mxu0 0.0
  %1877 = vmatprep.subr.mxu0 0.0
  %1878 = vmatpush1.msra.mxu0 0.0
  %1879 = vmatprep.subr.mxu0 0.0
  %1880 = vmatpush1.msra.mxu0 0.0
  %1881 = vmatprep.subr.mxu0 0.0
  %1882 = vmatpush1.msra.mxu0 0.0
  %1883 = vmatprep.subr.mxu0 0.0
  %1884 = vmatpush1.msra.mxu0 0.0
  %1885 = vmatprep.subr.mxu0 0.0
  %1886 = vmatpush1.msra.mxu0 0.0
  %1887 = vmatprep.subr.mxu0 0.0
  %1888 = vmatpush1.msra.mxu0 0.0
  %1889 = vmatprep.subr.mxu0 0.0
  %1890 = vmatpush1.msra.mxu0 0.0
  %1891 = vmatprep.subr.mxu0 0.0
  %1892 = vmatpush1.msra.mxu0 0.0
  %1893 = vmatprep.subr.mxu0 0.0
  %1894 = vmatpush1.msra.mxu0 0.0
  %1895 = vmatprep.subr.mxu0 0.0
  %1896 = vmatpush1.msra.mxu0 0.0
  %1897 = vmatprep.subr.mxu0 0.0
  %1898 = vmatpush1.msra.mxu0 0.0
  %1899 = vmatprep.subr.mxu0 0.0
  %1900 = vmatpush1.msra.mxu0 0.0
  %1901 = vmatprep.subr.mxu0 0.0
  %1902 = vmatpush1.msra.mxu0 0.0
  %1903 = vmatprep.subr.mxu0 0.0
  %1904 = vmatpush1.msra.mxu0 0.0
  %1905 = vmatprep.subr.mxu0 0.0
  %1906 = vmatpush1.msra.mxu0 0.0
  %1907 = vmatprep.subr.mxu0 0.0
  %1908 = vmatpush1.msra.mxu0 0.0
  %1909 = vmatprep.subr.mxu0 0.0
  %1910 = vmatpush1.msra.mxu0 0.0
  %1911 = vmatprep.subr.mxu0 0.0
  %1912 = vmatpush1.msra.mxu0 0.0
  %1913 = vmatprep.subr.mxu0 0.0
  %1914 = vmatpush1.msra.mxu0 0.0
  %1915 = vmatprep.subr.mxu0 0.0
  %1916 = vmatpush1.msra.mxu0 0.0
  %1917 = vmatprep.subr.mxu0 0.0
  %1918 = vmatpush1.msra.mxu0 0.0
  %1919 = vmatprep.subr.mxu0 0.0
  %1920 = vmatpush1.msra.mxu0 0.0
  %1921 = vmatprep.subr.mxu0 0.0
  %1922 = vmatpush1.msra.mxu0 0.0
  %1923 = vmatprep.subr.mxu0 0.0
  %1924 = vmatpush1.msra.mxu0 0.0
  %1925 = vmatprep.mubr.f32.mxu0 0.0
  %v1926 = vand.u32 %v925, 4294901760
  %1927 = vmatmul.mubr.f32.gmra.mrb[0].mxu0 %v1926
  %v1928 = vpop.f32.mrb[0].mxu0
  %v1929 = vadd.f32 %v1833, %v1928
  %v1930 = vpop.f32.mrb[0].mxu0
  %v1931 = vadd.f32 %v1835, %v1930
  %1932 = vdwg.mxu0
  %v1933 = vand.u32 %v888, 4294901760
  %1934 = vmatprep.subr.mxu0 %v1933
  %v1935 = vand.u32 %v887, 4294901760
  %1936 = vmatpush1.msra.mxu0 %v1935
  %v1937 = vand.u32 %v892, 4294901760
  %1938 = vmatprep.subr.mxu0 %v1937
  %v1939 = vand.u32 %v891, 4294901760
  %1940 = vmatpush1.msra.mxu0 %v1939
  %v1941 = vand.u32 %v896, 4294901760
  %1942 = vmatprep.subr.mxu0 %v1941
  %v1943 = vand.u32 %v895, 4294901760
  %1944 = vmatpush1.msra.mxu0 %v1943
  %v1945 = vand.u32 %v900, 4294901760
  %1946 = vmatprep.subr.mxu0 %v1945
  %v1947 = vand.u32 %v899, 4294901760
  %1948 = vmatpush1.msra.mxu0 %v1947
  %1949 = vmatprep.subr.mxu0 0.0
  %1950 = vmatpush1.msra.mxu0 0.0
  %1951 = vmatprep.subr.mxu0 0.0
  %1952 = vmatpush1.msra.mxu0 0.0
  %1953 = vmatprep.subr.mxu0 0.0
  %1954 = vmatpush1.msra.mxu0 0.0
  %1955 = vmatprep.subr.mxu0 0.0
  %1956 = vmatpush1.msra.mxu0 0.0
  %1957 = vmatprep.subr.mxu0 0.0
  %1958 = vmatpush1.msra.mxu0 0.0
  %1959 = vmatprep.subr.mxu0 0.0
  %1960 = vmatpush1.msra.mxu0 0.0
  %1961 = vmatprep.subr.mxu0 0.0
  %1962 = vmatpush1.msra.mxu0 0.0
  %1963 = vmatprep.subr.mxu0 0.0
  %1964 = vmatpush1.msra.mxu0 0.0
  %1965 = vmatprep.subr.mxu0 0.0
  %1966 = vmatpush1.msra.mxu0 0.0
  %1967 = vmatprep.subr.mxu0 0.0
  %1968 = vmatpush1.msra.mxu0 0.0
  %1969 = vmatprep.subr.mxu0 0.0
  %1970 = vmatpush1.msra.mxu0 0.0
  %1971 = vmatprep.subr.mxu0 0.0
  %1972 = vmatpush1.msra.mxu0 0.0
  %1973 = vmatprep.subr.mxu0 0.0
  %1974 = vmatpush1.msra.mxu0 0.0
  %1975 = vmatprep.subr.mxu0 0.0
  %1976 = vmatpush1.msra.mxu0 0.0
  %1977 = vmatprep.subr.mxu0 0.0
  %1978 = vmatpush1.msra.mxu0 0.0
  %1979 = vmatprep.subr.mxu0 0.0
  %1980 = vmatpush1.msra.mxu0 0.0
  %1981 = vmatprep.subr.mxu0 0.0
  %1982 = vmatpush1.msra.mxu0 0.0
  %1983 = vmatprep.subr.mxu0 0.0
  %1984 = vmatpush1.msra.mxu0 0.0
  %1985 = vmatprep.subr.mxu0 0.0
  %1986 = vmatpush1.msra.mxu0 0.0
  %1987 = vmatprep.subr.mxu0 0.0
  %1988 = vmatpush1.msra.mxu0 0.0
  %1989 = vmatprep.subr.mxu0 0.0
  %1990 = vmatpush1.msra.mxu0 0.0
  %1991 = vmatprep.subr.mxu0 0.0
  %1992 = vmatpush1.msra.mxu0 0.0
  %1993 = vmatprep.subr.mxu0 0.0
  %1994 = vmatpush1.msra.mxu0 0.0
  %1995 = vmatprep.subr.mxu0 0.0
  %1996 = vmatpush1.msra.mxu0 0.0
  %1997 = vmatprep.subr.mxu0 0.0
  %1998 = vmatpush1.msra.mxu0 0.0
  %1999 = vmatprep.subr.mxu0 0.0
  %2000 = vmatpush1.msra.mxu0 0.0
  %2001 = vmatprep.subr.mxu0 0.0
  %2002 = vmatpush1.msra.mxu0 0.0
  %2003 = vmatprep.subr.mxu0 0.0
  %2004 = vmatpush1.msra.mxu0 0.0
  %2005 = vmatprep.mubr.f32.mxu0 0.0
  %v2006 = vand.u32 %v925, 4294901760
  %2007 = vmatmul.mubr.f32.gmra.mrb[0].mxu0 %v2006
  %v2008 = vpop.f32.mrb[0].mxu0
  %v2009 = vadd.f32 %v1929, %v2008
  %v2010 = vpop.f32.mrb[0].mxu0
  %v2011 = vadd.f32 %v1931, %v2010
  %2012 = vdwg.mxu0
  %v2013 = vsub.f32 0.0, %v1466
  %v2014 = vsub.f32 0.0, %v1468
  %v2015 = vsub.f32 0.0, %v2009
  %v2016 = vsub.f32 0.0, %v2011
  %v2017 = vmul.f32 %v2013, 1.442695
  %v2018 = vpow.pop %v2017
  %v2019 = vmul.f32 %v2014, 1.442695
  %v2020 = vpow.pop %v2019
  %v2021 = vmul.f32 %v2015, 1.442695
  %v2022 = vpow.pop %v2021
  %v2023 = vmul.f32 %v2016, 1.442695
  %v2024 = vpow.pop %v2023
  %v2025 = vadd.f32 %v2018, 1.0
  %v2026 = vadd.f32 %v2020, 1.0
  %v2027 = vadd.f32 %v2022, 1.0
  %v2028 = vadd.f32 %v2024, 1.0
  %v2029 = vrcp.pop %v2025
  %v2030 = vmul.f32 1.0, %v2029
  %v2031 = vrcp.pop %v2026
  %v2032 = vmul.f32 1.0, %v2031
  %v2033 = vrcp.pop %v2027
  %v2034 = vmul.f32 1.0, %v2033
  %v2035 = vrcp.pop %v2028
  %v2036 = vmul.f32 1.0, %v2035
  %s2037 = smul.u32 4, 16
  %s2038 = smul.u32 %s2037, 4
  %s2039 = sshll.u32 %s2038, 4
  %2040 = dma.done %s579, %s2039
  %v2041 = vld [vmem:[#allocation3] sm:$0xff]
  %v2042 = vld [vmem:[#allocation3 + $0x8] sm:$0xff]
  %v2043 = vld [vmem:[#allocation3 + $0x10] sm:$0xff]
  %v2044 = vld [vmem:[#allocation3 + $0x18] sm:$0xff]
  %v2045 = vld [vmem:[#allocation3 + $0x20] sm:$0xff]
  %v2046 = vld [vmem:[#allocation3 + $0x28] sm:$0xff]
  %v2047 = vld [vmem:[#allocation3 + $0x30] sm:$0xff]
  %v2048 = vld [vmem:[#allocation3 + $0x38] sm:$0xff]
  %v2049 = vld [vmem:[#allocation3 + $0x40] sm:$0xff]
  %v2050 = vld [vmem:[#allocation3 + $0x48] sm:$0xff]
  %v2051 = vld [vmem:[#allocation3 + $0x50] sm:$0xff]
  %v2052 = vld [vmem:[#allocation3 + $0x58] sm:$0xff]
  %v2053 = vld [vmem:[#allocation3 + $0x60] sm:$0xff]
  %v2054 = vld [vmem:[#allocation3 + $0x68] sm:$0xff]
  %v2055 = vld [vmem:[#allocation3 + $0x70] sm:$0xff]
  %v2056 = vld [vmem:[#allocation3 + $0x78] sm:$0xff]
  %v2057 = vld [vmem:[#allocation3 + $0x80] sm:$0xff]
  %v2058 = vld [vmem:[#allocation3 + $0x88] sm:$0xff]
  %v2059 = vld [vmem:[#allocation3 + $0x90] sm:$0xff]
  %v2060 = vld [vmem:[#allocation3 + $0x98] sm:$0xff]
  %v2061 = vld [vmem:[#allocation3 + $0xa0] sm:$0xff]
  %v2062 = vld [vmem:[#allocation3 + $0xa8] sm:$0xff]
  %v2063 = vld [vmem:[#allocation3 + $0xb0] sm:$0xff]
  %v2064 = vld [vmem:[#allocation3 + $0xb8] sm:$0xff]
  %v2065 = vld [vmem:[#allocation3 + $0xc0] sm:$0xff]
  %v2066 = vld [vmem:[#allocation3 + $0xc8] sm:$0xff]
  %v2067 = vld [vmem:[#allocation3 + $0xd0] sm:$0xff]
  %v2068 = vld [vmem:[#allocation3 + $0xd8] sm:$0xff]
  %v2069 = vld [vmem:[#allocation3 + $0xe0] sm:$0xff]
  %v2070 = vld [vmem:[#allocation3 + $0xe8] sm:$0xff]
  %v2071 = vld [vmem:[#allocation3 + $0xf0] sm:$0xff]
  %v2072 = vld [vmem:[#allocation3 + $0xf8] sm:$0xff]
  %v2073 = vunpack.c.l.bf16 %v2041
  %v2074 = vunpack.c.l.bf16 %v2042
  %v2075 = vunpack.c.l.bf16 %v2043
  %v2076 = vunpack.c.l.bf16 %v2044
  %v2077 = vunpack.c.h.bf16 %v2041
  %v2078 = vunpack.c.h.bf16 %v2042
  %v2079 = vunpack.c.h.bf16 %v2043
  %v2080 = vunpack.c.h.bf16 %v2044
  %v2081 = vunpack.c.l.bf16 %v2045
  %v2082 = vunpack.c.l.bf16 %v2046
  %v2083 = vunpack.c.l.bf16 %v2047
  %v2084 = vunpack.c.l.bf16 %v2048
  %v2085 = vunpack.c.h.bf16 %v2045
  %v2086 = vunpack.c.h.bf16 %v2046
  %v2087 = vunpack.c.h.bf16 %v2047
  %v2088 = vunpack.c.h.bf16 %v2048
  %v2089 = vunpack.c.l.bf16 %v2049
  %v2090 = vunpack.c.l.bf16 %v2050
  %v2091 = vunpack.c.l.bf16 %v2051
  %v2092 = vunpack.c.l.bf16 %v2052
  %v2093 = vunpack.c.h.bf16 %v2049
  %v2094 = vunpack.c.h.bf16 %v2050
  %v2095 = vunpack.c.h.bf16 %v2051
  %v2096 = vunpack.c.h.bf16 %v2052
  %v2097 = vunpack.c.l.bf16 %v2053
  %v2098 = vunpack.c.l.bf16 %v2054
  %v2099 = vunpack.c.l.bf16 %v2055
  %v2100 = vunpack.c.l.bf16 %v2056
  %v2101 = vunpack.c.h.bf16 %v2053
  %v2102 = vunpack.c.h.bf16 %v2054
  %v2103 = vunpack.c.h.bf16 %v2055
  %v2104 = vunpack.c.h.bf16 %v2056
  %v2105 = vunpack.c.l.bf16 %v2057
  %v2106 = vunpack.c.l.bf16 %v2058
  %v2107 = vunpack.c.l.bf16 %v2059
  %v2108 = vunpack.c.l.bf16 %v2060
  %v2109 = vunpack.c.h.bf16 %v2057
  %v2110 = vunpack.c.h.bf16 %v2058
  %v2111 = vunpack.c.h.bf16 %v2059
  %v2112 = vunpack.c.h.bf16 %v2060
  %v2113 = vunpack.c.l.bf16 %v2061
  %v2114 = vunpack.c.l.bf16 %v2062
  %v2115 = vunpack.c.l.bf16 %v2063
  %v2116 = vunpack.c.l.bf16 %v2064
  %v2117 = vunpack.c.h.bf16 %v2061
  %v2118 = vunpack.c.h.bf16 %v2062
  %v2119 = vunpack.c.h.bf16 %v2063
  %v2120 = vunpack.c.h.bf16 %v2064
  %v2121 = vunpack.c.l.bf16 %v2065
  %v2122 = vunpack.c.l.bf16 %v2066
  %v2123 = vunpack.c.l.bf16 %v2067
  %v2124 = vunpack.c.l.bf16 %v2068
  %v2125 = vunpack.c.h.bf16 %v2065
  %v2126 = vunpack.c.h.bf16 %v2066
  %v2127 = vunpack.c.h.bf16 %v2067
  %v2128 = vunpack.c.h.bf16 %v2068
  %v2129 = vunpack.c.l.bf16 %v2069
  %v2130 = vunpack.c.l.bf16 %v2070
  %v2131 = vunpack.c.l.bf16 %v2071
  %v2132 = vunpack.c.l.bf16 %v2072
  %v2133 = vunpack.c.h.bf16 %v2069
  %v2134 = vunpack.c.h.bf16 %v2070
  %v2135 = vunpack.c.h.bf16 %v2071
  %v2136 = vunpack.c.h.bf16 %v2072
  %v2137 = vlaneseq
  %v2138 = vshrl.u32 %v2137, 7
  %v2139 = vsub.s32 0, %v2138
  %v2140 = vrot.slane %v2030, %v2139
  %v2141 = vlaneseq
  %v2142 = vshrl.u32 %v2141, 7
  %v2143 = vsub.s32 0, %v2142
  %v2144 = vrot.slane %v2032, %v2143
  %v2145 = vlaneseq
  %v2146 = vshrl.u32 %v2145, 7
  %v2147 = vsub.s32 0, %v2146
  %v2148 = vrot.slane %v2034, %v2147
  %v2149 = vlaneseq
  %v2150 = vshrl.u32 %v2149, 7
  %v2151 = vsub.s32 0, %v2150
  %v2152 = vrot.slane %v2036, %v2151
  %v2153 = vmul.f32 %v2073, %v2140
  %v2154 = vmul.f32 %v2074, %v2144
  %v2155 = vmul.f32 %v2075, %v2148
  %v2156 = vmul.f32 %v2076, %v2152
  %v2157 = vmul.f32 %v2077, %v2140
  %v2158 = vmul.f32 %v2078, %v2144
  %v2159 = vmul.f32 %v2079, %v2148
  %v2160 = vmul.f32 %v2080, %v2152
  %v2161 = vmul.f32 %v2081, %v2140
  %v2162 = vmul.f32 %v2082, %v2144
  %v2163 = vmul.f32 %v2083, %v2148
  %v2164 = vmul.f32 %v2084, %v2152
  %v2165 = vmul.f32 %v2085, %v2140
  %v2166 = vmul.f32 %v2086, %v2144
  %v2167 = vmul.f32 %v2087, %v2148
  %v2168 = vmul.f32 %v2088, %v2152
  %v2169 = vmul.f32 %v2089, %v2140
  %v2170 = vmul.f32 %v2090, %v2144
  %v2171 = vmul.f32 %v2091, %v2148
  %v2172 = vmul.f32 %v2092, %v2152
  %v2173 = vmul.f32 %v2093, %v2140
  %v2174 = vmul.f32 %v2094, %v2144
  %v2175 = vmul.f32 %v2095, %v2148
  %v2176 = vmul.f32 %v2096, %v2152
  %v2177 = vmul.f32 %v2097, %v2140
  %v2178 = vmul.f32 %v2098, %v2144
  %v2179 = vmul.f32 %v2099, %v2148
  %v2180 = vmul.f32 %v2100, %v2152
  %v2181 = vmul.f32 %v2101, %v2140
  %v2182 = vmul.f32 %v2102, %v2144
  %v2183 = vmul.f32 %v2103, %v2148
  %v2184 = vmul.f32 %v2104, %v2152
  %v2185 = vmul.f32 %v2105, %v2140
  %v2186 = vmul.f32 %v2106, %v2144
  %v2187 = vmul.f32 %v2107, %v2148
  %v2188 = vmul.f32 %v2108, %v2152
  %v2189 = vmul.f32 %v2109, %v2140
  %v2190 = vmul.f32 %v2110, %v2144
  %v2191 = vmul.f32 %v2111, %v2148
  %v2192 = vmul.f32 %v2112, %v2152
  %v2193 = vmul.f32 %v2113, %v2140
  %v2194 = vmul.f32 %v2114, %v2144
  %v2195 = vmul.f32 %v2115, %v2148
  %v2196 = vmul.f32 %v2116, %v2152
  %v2197 = vmul.f32 %v2117, %v2140
  %v2198 = vmul.f32 %v2118, %v2144
  %v2199 = vmul.f32 %v2119, %v2148
  %v2200 = vmul.f32 %v2120, %v2152
  %v2201 = vmul.f32 %v2121, %v2140
  %v2202 = vmul.f32 %v2122, %v2144
  %v2203 = vmul.f32 %v2123, %v2148
  %v2204 = vmul.f32 %v2124, %v2152
  %v2205 = vmul.f32 %v2125, %v2140
  %v2206 = vmul.f32 %v2126, %v2144
  %v2207 = vmul.f32 %v2127, %v2148
  %v2208 = vmul.f32 %v2128, %v2152
  %v2209 = vmul.f32 %v2129, %v2140
  %v2210 = vmul.f32 %v2130, %v2144
  %v2211 = vmul.f32 %v2131, %v2148
  %v2212 = vmul.f32 %v2132, %v2152
  %v2213 = vmul.f32 %v2133, %v2140
  %v2214 = vmul.f32 %v2134, %v2144
  %v2215 = vmul.f32 %v2135, %v2148
  %v2216 = vmul.f32 %v2136, %v2152
  %s2217 = smul.u32 4, 64
  %s2218 = smul.u32 %s2217, 2
  %s2219 = sshll.u32 %s2218, 4
  %2220 = dma.done [#allocation4], %s2219
  %v2221 = vld [vmem:[#allocation2] sm:$0xff]
  %v2222 = vld [vmem:[#allocation2 + $0x8] sm:$0xff]
  %v2223 = vld [vmem:[#allocation2 + $0x10] sm:$0xff]
  %v2224 = vld [vmem:[#allocation2 + $0x18] sm:$0xff]
  %v2225 = vld [vmem:[#allocation2 + $0x20] sm:$0xff]
  %v2226 = vld [vmem:[#allocation2 + $0x28] sm:$0xff]
  %v2227 = vld [vmem:[#allocation2 + $0x30] sm:$0xff]
  %v2228 = vld [vmem:[#allocation2 + $0x38] sm:$0xff]
  %v2229 = vld [vmem:[#allocation2 + $0x40] sm:$0xff]
  %v2230 = vld [vmem:[#allocation2 + $0x48] sm:$0xff]
  %v2231 = vld [vmem:[#allocation2 + $0x50] sm:$0xff]
  %v2232 = vld [vmem:[#allocation2 + $0x58] sm:$0xff]
  %v2233 = vld [vmem:[#allocation2 + $0x60] sm:$0xff]
  %v2234 = vld [vmem:[#allocation2 + $0x68] sm:$0xff]
  %v2235 = vld [vmem:[#allocation2 + $0x70] sm:$0xff]
  %v2236 = vld [vmem:[#allocation2 + $0x78] sm:$0xff]
  %v2237 = vld [vmem:[#allocation2 + $0x80] sm:$0xff]
  %v2238 = vld [vmem:[#allocation2 + $0x88] sm:$0xff]
  %v2239 = vld [vmem:[#allocation2 + $0x90] sm:$0xff]
  %v2240 = vld [vmem:[#allocation2 + $0x98] sm:$0xff]
  %v2241 = vld [vmem:[#allocation2 + $0xa0] sm:$0xff]
  %v2242 = vld [vmem:[#allocation2 + $0xa8] sm:$0xff]
  %v2243 = vld [vmem:[#allocation2 + $0xb0] sm:$0xff]
  %v2244 = vld [vmem:[#allocation2 + $0xb8] sm:$0xff]
  %v2245 = vld [vmem:[#allocation2 + $0xc0] sm:$0xff]
  %v2246 = vld [vmem:[#allocation2 + $0xc8] sm:$0xff]
  %v2247 = vld [vmem:[#allocation2 + $0xd0] sm:$0xff]
  %v2248 = vld [vmem:[#allocation2 + $0xd8] sm:$0xff]
  %v2249 = vld [vmem:[#allocation2 + $0xe0] sm:$0xff]
  %v2250 = vld [vmem:[#allocation2 + $0xe8] sm:$0xff]
  %v2251 = vld [vmem:[#allocation2 + $0xf0] sm:$0xff]
  %v2252 = vld [vmem:[#allocation2 + $0xf8] sm:$0xff]
  %v2253 = vld [vmem:[#allocation2 + $0x100] sm:$0xff]
  %v2254 = vld [vmem:[#allocation2 + $0x108] sm:$0xff]
  %v2255 = vld [vmem:[#allocation2 + $0x110] sm:$0xff]
  %v2256 = vld [vmem:[#allocation2 + $0x118] sm:$0xff]
  %v2257 = vld [vmem:[#allocation2 + $0x120] sm:$0xff]
  %v2258 = vld [vmem:[#allocation2 + $0x128] sm:$0xff]
  %v2259 = vld [vmem:[#allocation2 + $0x130] sm:$0xff]
  %v2260 = vld [vmem:[#allocation2 + $0x138] sm:$0xff]
  %v2261 = vld [vmem:[#allocation2 + $0x140] sm:$0xff]
  %v2262 = vld [vmem:[#allocation2 + $0x148] sm:$0xff]
  %v2263 = vld [vmem:[#allocation2 + $0x150] sm:$0xff]
  %v2264 = vld [vmem:[#allocation2 + $0x158] sm:$0xff]
  %v2265 = vld [vmem:[#allocation2 + $0x160] sm:$0xff]
  %v2266 = vld [vmem:[#allocation2 + $0x168] sm:$0xff]
  %v2267 = vld [vmem:[#allocation2 + $0x170] sm:$0xff]
  %v2268 = vld [vmem:[#allocation2 + $0x178] sm:$0xff]
  %v2269 = vld [vmem:[#allocation2 + $0x180] sm:$0xff]
  %v2270 = vld [vmem:[#allocation2 + $0x188] sm:$0xff]
  %v2271 = vld [vmem:[#allocation2 + $0x190] sm:$0xff]
  %v2272 = vld [vmem:[#allocation2 + $0x198] sm:$0xff]
  %v2273 = vld [vmem:[#allocation2 + $0x1a0] sm:$0xff]
  %v2274 = vld [vmem:[#allocation2 + $0x1a8] sm:$0xff]
  %v2275 = vld [vmem:[#allocation2 + $0x1b0] sm:$0xff]
  %v2276 = vld [vmem:[#allocation2 + $0x1b8] sm:$0xff]
  %v2277 = vld [vmem:[#allocation2 + $0x1c0] sm:$0xff]
  %v2278 = vld [vmem:[#allocation2 + $0x1c8] sm:$0xff]
  %v2279 = vld [vmem:[#allocation2 + $0x1d0] sm:$0xff]
  %v2280 = vld [vmem:[#allocation2 + $0x1d8] sm:$0xff]
  %v2281 = vld [vmem:[#allocation2 + $0x1e0] sm:$0xff]
  %v2282 = vld [vmem:[#allocation2 + $0x1e8] sm:$0xff]
  %v2283 = vld [vmem:[#allocation2 + $0x1f0] sm:$0xff]
  %v2284 = vld [vmem:[#allocation2 + $0x1f8] sm:$0xff]
  %v2285 = vunpack.c.l.bf16 %v2221
  %v2286 = vunpack.c.l.bf16 %v2222
  %v2287 = vunpack.c.h.bf16 %v2221
  %v2288 = vunpack.c.h.bf16 %v2222
  %v2289 = vunpack.c.l.bf16 %v2223
  %v2290 = vunpack.c.l.bf16 %v2224
  %v2291 = vunpack.c.h.bf16 %v2223
  %v2292 = vunpack.c.h.bf16 %v2224
  %v2293 = vunpack.c.l.bf16 %v2225
  %v2294 = vunpack.c.l.bf16 %v2226
  %v2295 = vunpack.c.h.bf16 %v2225
  %v2296 = vunpack.c.h.bf16 %v2226
  %v2297 = vunpack.c.l.bf16 %v2227
  %v2298 = vunpack.c.l.bf16 %v2228
  %v2299 = vunpack.c.h.bf16 %v2227
  %v2300 = vunpack.c.h.bf16 %v2228
  %v2301 = vunpack.c.l.bf16 %v2229
  %v2302 = vunpack.c.l.bf16 %v2230
  %v2303 = vunpack.c.h.bf16 %v2229
  %v2304 = vunpack.c.h.bf16 %v2230
  %v2305 = vunpack.c.l.bf16 %v2231
  %v2306 = vunpack.c.l.bf16 %v2232
  %v2307 = vunpack.c.h.bf16 %v2231
  %v2308 = vunpack.c.h.bf16 %v2232
  %v2309 = vunpack.c.l.bf16 %v2233
  %v2310 = vunpack.c.l.bf16 %v2234
  %v2311 = vunpack.c.h.bf16 %v2233
  %v2312 = vunpack.c.h.bf16 %v2234
  %v2313 = vunpack.c.l.bf16 %v2235
  %v2314 = vunpack.c.l.bf16 %v2236
  %v2315 = vunpack.c.h.bf16 %v2235
  %v2316 = vunpack.c.h.bf16 %v2236
  %v2317 = vunpack.c.l.bf16 %v2237
  %v2318 = vunpack.c.l.bf16 %v2238
  %v2319 = vunpack.c.h.bf16 %v2237
  %v2320 = vunpack.c.h.bf16 %v2238
  %v2321 = vunpack.c.l.bf16 %v2239
  %v2322 = vunpack.c.l.bf16 %v2240
  %v2323 = vunpack.c.h.bf16 %v2239
  %v2324 = vunpack.c.h.bf16 %v2240
  %v2325 = vunpack.c.l.bf16 %v2241
  %v2326 = vunpack.c.l.bf16 %v2242
  %v2327 = vunpack.c.h.bf16 %v2241
  %v2328 = vunpack.c.h.bf16 %v2242
  %v2329 = vunpack.c.l.bf16 %v2243
  %v2330 = vunpack.c.l.bf16 %v2244
  %v2331 = vunpack.c.h.bf16 %v2243
  %v2332 = vunpack.c.h.bf16 %v2244
  %v2333 = vunpack.c.l.bf16 %v2245
  %v2334 = vunpack.c.l.bf16 %v2246
  %v2335 = vunpack.c.h.bf16 %v2245
  %v2336 = vunpack.c.h.bf16 %v2246
  %v2337 = vunpack.c.l.bf16 %v2247
  %v2338 = vunpack.c.l.bf16 %v2248
  %v2339 = vunpack.c.h.bf16 %v2247
  %v2340 = vunpack.c.h.bf16 %v2248
  %v2341 = vunpack.c.l.bf16 %v2249
  %v2342 = vunpack.c.l.bf16 %v2250
  %v2343 = vunpack.c.h.bf16 %v2249
  %v2344 = vunpack.c.h.bf16 %v2250
  %v2345 = vunpack.c.l.bf16 %v2251
  %v2346 = vunpack.c.l.bf16 %v2252
  %v2347 = vunpack.c.h.bf16 %v2251
  %v2348 = vunpack.c.h.bf16 %v2252
  %v2349 = vunpack.c.l.bf16 %v2253
  %v2350 = vunpack.c.l.bf16 %v2254
  %v2351 = vunpack.c.h.bf16 %v2253
  %v2352 = vunpack.c.h.bf16 %v2254
  %v2353 = vunpack.c.l.bf16 %v2255
  %v2354 = vunpack.c.l.bf16 %v2256
  %v2355 = vunpack.c.h.bf16 %v2255
  %v2356 = vunpack.c.h.bf16 %v2256
  %v2357 = vunpack.c.l.bf16 %v2257
  %v2358 = vunpack.c.l.bf16 %v2258
  %v2359 = vunpack.c.h.bf16 %v2257
  %v2360 = vunpack.c.h.bf16 %v2258
  %v2361 = vunpack.c.l.bf16 %v2259
  %v2362 = vunpack.c.l.bf16 %v2260
  %v2363 = vunpack.c.h.bf16 %v2259
  %v2364 = vunpack.c.h.bf16 %v2260
  %v2365 = vunpack.c.l.bf16 %v2261
  %v2366 = vunpack.c.l.bf16 %v2262
  %v2367 = vunpack.c.h.bf16 %v2261
  %v2368 = vunpack.c.h.bf16 %v2262
  %v2369 = vunpack.c.l.bf16 %v2263
  %v2370 = vunpack.c.l.bf16 %v2264
  %v2371 = vunpack.c.h.bf16 %v2263
  %v2372 = vunpack.c.h.bf16 %v2264
  %v2373 = vunpack.c.l.bf16 %v2265
  %v2374 = vunpack.c.l.bf16 %v2266
  %v2375 = vunpack.c.h.bf16 %v2265
  %v2376 = vunpack.c.h.bf16 %v2266
  %v2377 = vunpack.c.l.bf16 %v2267
  %v2378 = vunpack.c.l.bf16 %v2268
  %v2379 = vunpack.c.h.bf16 %v2267
  %v2380 = vunpack.c.h.bf16 %v2268
  %v2381 = vunpack.c.l.bf16 %v2269
  %v2382 = vunpack.c.l.bf16 %v2270
  %v2383 = vunpack.c.h.bf16 %v2269
  %v2384 = vunpack.c.h.bf16 %v2270
  %v2385 = vunpack.c.l.bf16 %v2271
  %v2386 = vunpack.c.l.bf16 %v2272
  %v2387 = vunpack.c.h.bf16 %v2271
  %v2388 = vunpack.c.h.bf16 %v2272
  %v2389 = vunpack.c.l.bf16 %v2273
  %v2390 = vunpack.c.l.bf16 %v2274
  %v2391 = vunpack.c.h.bf16 %v2273
  %v2392 = vunpack.c.h.bf16 %v2274
  %v2393 = vunpack.c.l.bf16 %v2275
  %v2394 = vunpack.c.l.bf16 %v2276
  %v2395 = vunpack.c.h.bf16 %v2275
  %v2396 = vunpack.c.h.bf16 %v2276
  %v2397 = vunpack.c.l.bf16 %v2277
  %v2398 = vunpack.c.l.bf16 %v2278
  %v2399 = vunpack.c.h.bf16 %v2277
  %v2400 = vunpack.c.h.bf16 %v2278
  %v2401 = vunpack.c.l.bf16 %v2279
  %v2402 = vunpack.c.l.bf16 %v2280
  %v2403 = vunpack.c.h.bf16 %v2279
  %v2404 = vunpack.c.h.bf16 %v2280
  %v2405 = vunpack.c.l.bf16 %v2281
  %v2406 = vunpack.c.l.bf16 %v2282
  %v2407 = vunpack.c.h.bf16 %v2281
  %v2408 = vunpack.c.h.bf16 %v2282
  %v2409 = vunpack.c.l.bf16 %v2283
  %v2410 = vunpack.c.l.bf16 %v2284
  %v2411 = vunpack.c.h.bf16 %v2283
  %v2412 = vunpack.c.h.bf16 %v2284
  %2413 = vmatprep.subr.mxu0 %v2286
  %2414 = vmatpush1.msra.mxu0 %v2285
  %2415 = vmatprep.subr.mxu0 %v2288
  %2416 = vmatpush1.msra.mxu0 %v2287
  %2417 = vmatprep.subr.mxu0 %v2290
  %2418 = vmatpush1.msra.mxu0 %v2289
  %2419 = vmatprep.subr.mxu0 %v2292
  %2420 = vmatpush1.msra.mxu0 %v2291
  %2421 = vmatprep.subr.mxu0 %v2294
  %2422 = vmatpush1.msra.mxu0 %v2293
  %2423 = vmatprep.subr.mxu0 %v2296
  %2424 = vmatpush1.msra.mxu0 %v2295
  %2425 = vmatprep.subr.mxu0 %v2298
  %2426 = vmatpush1.msra.mxu0 %v2297
  %2427 = vmatprep.subr.mxu0 %v2300
  %2428 = vmatpush1.msra.mxu0 %v2299
  %2429 = vmatprep.subr.mxu0 %v2302
  %2430 = vmatpush1.msra.mxu0 %v2301
  %2431 = vmatprep.subr.mxu0 %v2304
  %2432 = vmatpush1.msra.mxu0 %v2303
  %2433 = vmatprep.subr.mxu0 %v2306
  %2434 = vmatpush1.msra.mxu0 %v2305
  %2435 = vmatprep.subr.mxu0 %v2308
  %2436 = vmatpush1.msra.mxu0 %v2307
  %2437 = vmatprep.subr.mxu0 %v2310
  %2438 = vmatpush1.msra.mxu0 %v2309
  %2439 = vmatprep.subr.mxu0 %v2312
  %2440 = vmatpush1.msra.mxu0 %v2311
  %2441 = vmatprep.subr.mxu0 %v2314
  %2442 = vmatpush1.msra.mxu0 %v2313
  %2443 = vmatprep.subr.mxu0 %v2316
  %2444 = vmatpush1.msra.mxu0 %v2315
  %2445 = vmatprep.subr.mxu0 %v2318
  %2446 = vmatpush1.msra.mxu0 %v2317
  %2447 = vmatprep.subr.mxu0 %v2320
  %2448 = vmatpush1.msra.mxu0 %v2319
  %2449 = vmatprep.subr.mxu0 %v2322
  %2450 = vmatpush1.msra.mxu0 %v2321
  %2451 = vmatprep.subr.mxu0 %v2324
  %2452 = vmatpush1.msra.mxu0 %v2323
  %2453 = vmatprep.subr.mxu0 %v2326
  %2454 = vmatpush1.msra.mxu0 %v2325
  %2455 = vmatprep.subr.mxu0 %v2328
  %2456 = vmatpush1.msra.mxu0 %v2327
  %2457 = vmatprep.subr.mxu0 %v2330
  %2458 = vmatpush1.msra.mxu0 %v2329
  %2459 = vmatprep.subr.mxu0 %v2332
  %2460 = vmatpush1.msra.mxu0 %v2331
  %2461 = vmatprep.subr.mxu0 %v2334
  %2462 = vmatpush1.msra.mxu0 %v2333
  %2463 = vmatprep.subr.mxu0 %v2336
  %2464 = vmatpush1.msra.mxu0 %v2335
  %2465 = vmatprep.subr.mxu0 %v2338
  %2466 = vmatpush1.msra.mxu0 %v2337
  %2467 = vmatprep.subr.mxu0 %v2340
  %2468 = vmatpush1.msra.mxu0 %v2339
  %2469 = vmatprep.subr.mxu0 %v2342
  %2470 = vmatpush1.msra.mxu0 %v2341
  %2471 = vmatprep.subr.mxu0 %v2344
  %2472 = vmatpush1.msra.mxu0 %v2343
  %2473 = vmatprep.subr.mxu0 %v2346
  %2474 = vmatpush1.msra.mxu0 %v2345
  %2475 = vmatprep.subr.mxu0 %v2348
  %2476 = vmatpush1.msra.mxu0 %v2347
  %v2477 = vand.u32 %v2154, 4294901760
  %v2478 = vsub.f32 %v2154, %v2477
  %v2479 = vand.u32 %v2478, 4294901760
  %v2480 = vsub.f32 %v2478, %v2479
  %v2481 = vand.u32 %v2480, 4294901760
  %2482 = vmatprep.mubr.f32.mxu0 %v2481
  %v2483 = vand.u32 %v2153, 4294901760
  %v2484 = vsub.f32 %v2153, %v2483
  %v2485 = vand.u32 %v2484, 4294901760
  %v2486 = vsub.f32 %v2484, %v2485
  %v2487 = vand.u32 %v2486, 4294901760
  %2488 = vmatmul.mubr.f32.gmra.mrb[0].mxu0 %v2487
  %v2489 = vpop.f32.mrb[0].mxu0
  %v2490 = vadd.f32 0.0, %v2489
  %v2491 = vpop.f32.mrb[0].mxu0
  %v2492 = vadd.f32 0.0, %v2491
  %v2493 = vand.u32 %v2158, 4294901760
  %v2494 = vsub.f32 %v2158, %v2493
  %v2495 = vand.u32 %v2494, 4294901760
  %v2496 = vsub.f32 %v2494, %v2495
  %v2497 = vand.u32 %v2496, 4294901760
  %2498 = vmatprep.mubr.f32.mxu0 %v2497
  %v2499 = vand.u32 %v2157, 4294901760
  %v2500 = vsub.f32 %v2157, %v2499
  %v2501 = vand.u32 %v2500, 4294901760
  %v2502 = vsub.f32 %v2500, %v2501
  %v2503 = vand.u32 %v2502, 4294901760
  %2504 = vmatmul.mubr.f32.gmra.mrb[0].mxu0 %v2503
  %v2505 = vpop.f32.mrb[0].mxu0
  %v2506 = vadd.f32 0.0, %v2505
  %v2507 = vpop.f32.mrb[0].mxu0
  %v2508 = vadd.f32 0.0, %v2507
  %v2509 = vand.u32 %v2162, 4294901760
  %v2510 = vsub.f32 %v2162, %v2509
  %v2511 = vand.u32 %v2510, 4294901760
  %v2512 = vsub.f32 %v2510, %v2511
  %v2513 = vand.u32 %v2512, 4294901760
  %2514 = vmatprep.mubr.f32.mxu0 %v2513
  %v2515 = vand.u32 %v2161, 4294901760
  %v2516 = vsub.f32 %v2161, %v2515
  %v2517 = vand.u32 %v2516, 4294901760
  %v2518 = vsub.f32 %v2516, %v2517
  %v2519 = vand.u32 %v2518, 4294901760
  %2520 = vmatmul.mubr.f32.gmra.mrb[0].mxu0 %v2519
  %v2521 = vpop.f32.mrb[0].mxu0
  %v2522 = vadd.f32 0.0, %v2521
  %v2523 = vpop.f32.mrb[0].mxu0
  %v2524 = vadd.f32 0.0, %v2523
  %v2525 = vand.u32 %v2166, 4294901760
  %v2526 = vsub.f32 %v2166, %v2525
  %v2527 = vand.u32 %v2526, 4294901760
  %v2528 = vsub.f32 %v2526, %v2527
  %v2529 = vand.u32 %v2528, 4294901760
  %2530 = vmatprep.mubr.f32.mxu0 %v2529
  %v2531 = vand.u32 %v2165, 4294901760
  %v2532 = vsub.f32 %v2165, %v2531
  %v2533 = vand.u32 %v2532, 4294901760
  %v2534 = vsub.f32 %v2532, %v2533
  %v2535 = vand.u32 %v2534, 4294901760
  %2536 = vmatmul.mubr.f32.gmra.mrb[0].mxu0 %v2535
  %v2537 = vpop.f32.mrb[0].mxu0
  %v2538 = vadd.f32 0.0, %v2537
  %v2539 = vpop.f32.mrb[0].mxu0
  %v2540 = vadd.f32 0.0, %v2539
  %v2541 = vand.u32 %v2170, 4294901760
  %v2542 = vsub.f32 %v2170, %v2541
  %v2543 = vand.u32 %v2542, 4294901760
  %v2544 = vsub.f32 %v2542, %v2543
  %v2545 = vand.u32 %v2544, 4294901760
  %2546 = vmatprep.mubr.f32.mxu0 %v2545
  %v2547 = vand.u32 %v2169, 4294901760
  %v2548 = vsub.f32 %v2169, %v2547
  %v2549 = vand.u32 %v2548, 4294901760
  %v2550 = vsub.f32 %v2548, %v2549
  %v2551 = vand.u32 %v2550, 4294901760
  %2552 = vmatmul.mubr.f32.gmra.mrb[0].mxu0 %v2551
  %v2553 = vpop.f32.mrb[0].mxu0
  %v2554 = vadd.f32 0.0, %v2553
  %v2555 = vpop.f32.mrb[0].mxu0
  %v2556 = vadd.f32 0.0, %v2555
  %v2557 = vand.u32 %v2174, 4294901760
  %v2558 = vsub.f32 %v2174, %v2557
  %v2559 = vand.u32 %v2558, 4294901760
  %v2560 = vsub.f32 %v2558, %v2559
  %v2561 = vand.u32 %v2560, 4294901760
  %2562 = vmatprep.mubr.f32.mxu0 %v2561
  %v2563 = vand.u32 %v2173, 4294901760
  %v2564 = vsub.f32 %v2173, %v2563
  %v2565 = vand.u32 %v2564, 4294901760
  %v2566 = vsub.f32 %v2564, %v2565
  %v2567 = vand.u32 %v2566, 4294901760
  %2568 = vmatmul.mubr.f32.gmra.mrb[0].mxu0 %v2567
  %v2569 = vpop.f32.mrb[0].mxu0
  %v2570 = vadd.f32 0.0, %v2569
  %v2571 = vpop.f32.mrb[0].mxu0
  %v2572 = vadd.f32 0.0, %v2571
  %v2573 = vand.u32 %v2178, 4294901760
  %v2574 = vsub.f32 %v2178, %v2573
  %v2575 = vand.u32 %v2574, 4294901760
  %v2576 = vsub.f32 %v2574, %v2575
  %v2577 = vand.u32 %v2576, 4294901760
  %2578 = vmatprep.mubr.f32.mxu0 %v2577
  %v2579 = vand.u32 %v2177, 4294901760
  %v2580 = vsub.f32 %v2177, %v2579
  %v2581 = vand.u32 %v2580, 4294901760
  %v2582 = vsub.f32 %v2580, %v2581
  %v2583 = vand.u32 %v2582, 4294901760
  %2584 = vmatmul.mubr.f32.gmra.mrb[0].mxu0 %v2583
  %v2585 = vpop.f32.mrb[0].mxu0
  %v2586 = vadd.f32 0.0, %v2585
  %v2587 = vpop.f32.mrb[0].mxu0
  %v2588 = vadd.f32 0.0, %v2587
  %v2589 = vand.u32 %v2182, 4294901760
  %v2590 = vsub.f32 %v2182, %v2589
  %v2591 = vand.u32 %v2590, 4294901760
  %v2592 = vsub.f32 %v2590, %v2591
  %v2593 = vand.u32 %v2592, 4294901760
  %2594 = vmatprep.mubr.f32.mxu0 %v2593
  %v2595 = vand.u32 %v2181, 4294901760
  %v2596 = vsub.f32 %v2181, %v2595
  %v2597 = vand.u32 %v2596, 4294901760
  %v2598 = vsub.f32 %v2596, %v2597
  %v2599 = vand.u32 %v2598, 4294901760
  %2600 = vmatmul.mubr.f32.gmra.mrb[0].mxu0 %v2599
  %v2601 = vpop.f32.mrb[0].mxu0
  %v2602 = vadd.f32 0.0, %v2601
  %v2603 = vpop.f32.mrb[0].mxu0
  %v2604 = vadd.f32 0.0, %v2603
  %v2605 = vand.u32 %v2186, 4294901760
  %v2606 = vsub.f32 %v2186, %v2605
  %v2607 = vand.u32 %v2606, 4294901760
  %v2608 = vsub.f32 %v2606, %v2607
  %v2609 = vand.u32 %v2608, 4294901760
  %2610 = vmatprep.mubr.f32.mxu0 %v2609
  %v2611 = vand.u32 %v2185, 4294901760
  %v2612 = vsub.f32 %v2185, %v2611
  %v2613 = vand.u32 %v2612, 4294901760
  %v2614 = vsub.f32 %v2612, %v2613
  %v2615 = vand.u32 %v2614, 4294901760
  %2616 = vmatmul.mubr.f32.gmra.mrb[0].mxu0 %v2615
  %v2617 = vpop.f32.mrb[0].mxu0
  %v2618 = vadd.f32 0.0, %v2617
  %v2619 = vpop.f32.mrb[0].mxu0
  %v2620 = vadd.f32 0.0, %v2619
  %v2621 = vand.u32 %v2190, 4294901760
  %v2622 = vsub.f32 %v2190, %v2621
  %v2623 = vand.u32 %v2622, 4294901760
  %v2624 = vsub.f32 %v2622, %v2623
  %v2625 = vand.u32 %v2624, 4294901760
  %2626 = vmatprep.mubr.f32.mxu0 %v2625
  %v2627 = vand.u32 %v2189, 4294901760
  %v2628 = vsub.f32 %v2189, %v2627
  %v2629 = vand.u32 %v2628, 4294901760
  %v2630 = vsub.f32 %v2628, %v2629
  %v2631 = vand.u32 %v2630, 4294901760
  %2632 = vmatmul.mubr.f32.gmra.mrb[0].mxu0 %v2631
  %v2633 = vpop.f32.mrb[0].mxu0
  %v2634 = vadd.f32 0.0, %v2633
  %v2635 = vpop.f32.mrb[0].mxu0
  %v2636 = vadd.f32 0.0, %v2635
  %v2637 = vand.u32 %v2194, 4294901760
  %v2638 = vsub.f32 %v2194, %v2637
  %v2639 = vand.u32 %v2638, 4294901760
  %v2640 = vsub.f32 %v2638, %v2639
  %v2641 = vand.u32 %v2640, 4294901760
  %2642 = vmatprep.mubr.f32.mxu0 %v2641
  %v2643 = vand.u32 %v2193, 4294901760
  %v2644 = vsub.f32 %v2193, %v2643
  %v2645 = vand.u32 %v2644, 4294901760
  %v2646 = vsub.f32 %v2644, %v2645
  %v2647 = vand.u32 %v2646, 4294901760
  %2648 = vmatmul.mubr.f32.gmra.mrb[0].mxu0 %v2647
  %v2649 = vpop.f32.mrb[0].mxu0
  %v2650 = vadd.f32 0.0, %v2649
  %v2651 = vpop.f32.mrb[0].mxu0
  %v2652 = vadd.f32 0.0, %v2651
  %v2653 = vand.u32 %v2198, 4294901760
  %v2654 = vsub.f32 %v2198, %v2653
  %v2655 = vand.u32 %v2654, 4294901760
  %v2656 = vsub.f32 %v2654, %v2655
  %v2657 = vand.u32 %v2656, 4294901760
  %2658 = vmatprep.mubr.f32.mxu0 %v2657
  %v2659 = vand.u32 %v2197, 4294901760
  %v2660 = vsub.f32 %v2197, %v2659
  %v2661 = vand.u32 %v2660, 4294901760
  %v2662 = vsub.f32 %v2660, %v2661
  %v2663 = vand.u32 %v2662, 4294901760
  %2664 = vmatmul.mubr.f32.gmra.mrb[0].mxu0 %v2663
  %v2665 = vpop.f32.mrb[0].mxu0
  %v2666 = vadd.f32 0.0, %v2665
  %v2667 = vpop.f32.mrb[0].mxu0
  %v2668 = vadd.f32 0.0, %v2667
  %v2669 = vand.u32 %v2202, 4294901760
  %v2670 = vsub.f32 %v2202, %v2669
  %v2671 = vand.u32 %v2670, 4294901760
  %v2672 = vsub.f32 %v2670, %v2671
  %v2673 = vand.u32 %v2672, 4294901760
  %2674 = vmatprep.mubr.f32.mxu0 %v2673
  %v2675 = vand.u32 %v2201, 4294901760
  %v2676 = vsub.f32 %v2201, %v2675
  %v2677 = vand.u32 %v2676, 4294901760
  %v2678 = vsub.f32 %v2676, %v2677
  %v2679 = vand.u32 %v2678, 4294901760
  %2680 = vmatmul.mubr.f32.gmra.mrb[0].mxu0 %v2679
  %v2681 = vpop.f32.mrb[0].mxu0
  %v2682 = vadd.f32 0.0, %v2681
  %v2683 = vpop.f32.mrb[0].mxu0
  %v2684 = vadd.f32 0.0, %v2683
  %v2685 = vand.u32 %v2206, 4294901760
  %v2686 = vsub.f32 %v2206, %v2685
  %v2687 = vand.u32 %v2686, 4294901760
  %v2688 = vsub.f32 %v2686, %v2687
  %v2689 = vand.u32 %v2688, 4294901760
  %2690 = vmatprep.mubr.f32.mxu0 %v2689
  %v2691 = vand.u32 %v2205, 4294901760
  %v2692 = vsub.f32 %v2205, %v2691
  %v2693 = vand.u32 %v2692, 4294901760
  %v2694 = vsub.f32 %v2692, %v2693
  %v2695 = vand.u32 %v2694, 4294901760
  %2696 = vmatmul.mubr.f32.gmra.mrb[0].mxu0 %v2695
  %v2697 = vpop.f32.mrb[0].mxu0
  %v2698 = vadd.f32 0.0, %v2697
  %v2699 = vpop.f32.mrb[0].mxu0
  %v2700 = vadd.f32 0.0, %v2699
  %v2701 = vand.u32 %v2210, 4294901760
  %v2702 = vsub.f32 %v2210, %v2701
  %v2703 = vand.u32 %v2702, 4294901760
  %v2704 = vsub.f32 %v2702, %v2703
  %v2705 = vand.u32 %v2704, 4294901760
  %2706 = vmatprep.mubr.f32.mxu0 %v2705
  %v2707 = vand.u32 %v2209, 4294901760
  %v2708 = vsub.f32 %v2209, %v2707
  %v2709 = vand.u32 %v2708, 4294901760
  %v2710 = vsub.f32 %v2708, %v2709
  %v2711 = vand.u32 %v2710, 4294901760
  %2712 = vmatmul.mubr.f32.gmra.mrb[0].mxu0 %v2711
  %v2713 = vpop.f32.mrb[0].mxu0
  %v2714 = vadd.f32 0.0, %v2713
  %v2715 = vpop.f32.mrb[0].mxu0
  %v2716 = vadd.f32 0.0, %v2715
  %v2717 = vand.u32 %v2214, 4294901760
  %v2718 = vsub.f32 %v2214, %v2717
  %v2719 = vand.u32 %v2718, 4294901760
  %v2720 = vsub.f32 %v2718, %v2719
  %v2721 = vand.u32 %v2720, 4294901760
  %2722 = vmatprep.mubr.f32.mxu0 %v2721
  %v2723 = vand.u32 %v2213, 4294901760
  %v2724 = vsub.f32 %v2213, %v2723
  %v2725 = vand.u32 %v2724, 4294901760
  %v2726 = vsub.f32 %v2724, %v2725
  %v2727 = vand.u32 %v2726, 4294901760
  %2728 = vmatmul.mubr.f32.gmra.mrb[0].mxu0 %v2727
  %v2729 = vpop.f32.mrb[0].mxu0
  %v2730 = vadd.f32 0.0, %v2729
  %v2731 = vpop.f32.mrb[0].mxu0
  %v2732 = vadd.f32 0.0, %v2731
  %2733 = vdwg.mxu0
  %v2734 = vsub.f32 %v2286, %v2286
  %v2735 = vand.u32 %v2734, 4294901760
  %v2736 = vsub.f32 %v2734, %v2735
  %v2737 = vand.u32 %v2736, 4294901760
  %2738 = vmatprep.subr.mxu0 %v2737
  %v2739 = vsub.f32 %v2285, %v2285
  %v2740 = vand.u32 %v2739, 4294901760
  %v2741 = vsub.f32 %v2739, %v2740
  %v2742 = vand.u32 %v2741, 4294901760
  %2743 = vmatpush1.msra.mxu0 %v2742
  %v2744 = vsub.f32 %v2288, %v2288
  %v2745 = vand.u32 %v2744, 4294901760
  %v2746 = vsub.f32 %v2744, %v2745
  %v2747 = vand.u32 %v2746, 4294901760
  %2748 = vmatprep.subr.mxu0 %v2747
  %v2749 = vsub.f32 %v2287, %v2287
  %v2750 = vand.u32 %v2749, 4294901760
  %v2751 = vsub.f32 %v2749, %v2750
  %v2752 = vand.u32 %v2751, 4294901760
  %2753 = vmatpush1.msra.mxu0 %v2752
  %v2754 = vsub.f32 %v2290, %v2290
  %v2755 = vand.u32 %v2754, 4294901760
  %v2756 = vsub.f32 %v2754, %v2755
  %v2757 = vand.u32 %v2756, 4294901760
  %2758 = vmatprep.subr.mxu0 %v2757
  %v2759 = vsub.f32 %v2289, %v2289
  %v2760 = vand.u32 %v2759, 4294901760
  %v2761 = vsub.f32 %v2759, %v2760
  %v2762 = vand.u32 %v2761, 4294901760
  %2763 = vmatpush1.msra.mxu0 %v2762
  %v2764 = vsub.f32 %v2292, %v2292
  %v2765 = vand.u32 %v2764, 4294901760
  %v2766 = vsub.f32 %v2764, %v2765
  %v2767 = vand.u32 %v2766, 4294901760
  %2768 = vmatprep.subr.mxu0 %v2767
  %v2769 = vsub.f32 %v2291, %v2291
  %v2770 = vand.u32 %v2769, 4294901760
  %v2771 = vsub.f32 %v2769, %v2770
  %v2772 = vand.u32 %v2771, 4294901760
  %2773 = vmatpush1.msra.mxu0 %v2772
  %v2774 = vsub.f32 %v2294, %v2294
  %v2775 = vand.u32 %v2774, 4294901760
  %v2776 = vsub.f32 %v2774, %v2775
  %v2777 = vand.u32 %v2776, 4294901760
  %2778 = vmatprep.subr.mxu0 %v2777
  %v2779 = vsub.f32 %v2293, %v2293
  %v2780 = vand.u32 %v2779, 4294901760
  %v2781 = vsub.f32 %v2779, %v2780
  %v2782 = vand.u32 %v2781, 4294901760
  %2783 = vmatpush1.msra.mxu0 %v2782
  %v2784 = vsub.f32 %v2296, %v2296
  %v2785 = vand.u32 %v2784, 4294901760
  %v2786 = vsub.f32 %v2784, %v2785
  %v2787 = vand.u32 %v2786, 4294901760
  %2788 = vmatprep.subr.mxu0 %v2787
  %v2789 = vsub.f32 %v2295, %v2295
  %v2790 = vand.u32 %v2789, 4294901760
  %v2791 = vsub.f32 %v2789, %v2790
  %v2792 = vand.u32 %v2791, 4294901760
  %2793 = vmatpush1.msra.mxu0 %v2792
  %v2794 = vsub.f32 %v2298, %v2298
  %v2795 = vand.u32 %v2794, 4294901760
  %v2796 = vsub.f32 %v2794, %v2795
  %v2797 = vand.u32 %v2796, 4294901760
  %2798 = vmatprep.subr.mxu0 %v2797
  %v2799 = vsub.f32 %v2297, %v2297
  %v2800 = vand.u32 %v2799, 4294901760
  %v2801 = vsub.f32 %v2799, %v2800
  %v2802 = vand.u32 %v2801, 4294901760
  %2803 = vmatpush1.msra.mxu0 %v2802
  %v2804 = vsub.f32 %v2300, %v2300
  %v2805 = vand.u32 %v2804, 4294901760
  %v2806 = vsub.f32 %v2804, %v2805
  %v2807 = vand.u32 %v2806, 4294901760
  %2808 = vmatprep.subr.mxu0 %v2807
  %v2809 = vsub.f32 %v2299, %v2299
  %v2810 = vand.u32 %v2809, 4294901760
  %v2811 = vsub.f32 %v2809, %v2810
  %v2812 = vand.u32 %v2811, 4294901760
  %2813 = vmatpush1.msra.mxu0 %v2812
  %v2814 = vsub.f32 %v2302, %v2302
  %v2815 = vand.u32 %v2814, 4294901760
  %v2816 = vsub.f32 %v2814, %v2815
  %v2817 = vand.u32 %v2816, 4294901760
  %2818 = vmatprep.subr.mxu0 %v2817
  %v2819 = vsub.f32 %v2301, %v2301
  %v2820 = vand.u32 %v2819, 4294901760
  %v2821 = vsub.f32 %v2819, %v2820
  %v2822 = vand.u32 %v2821, 4294901760
  %2823 = vmatpush1.msra.mxu0 %v2822
  %v2824 = vsub.f32 %v2304, %v2304
  %v2825 = vand.u32 %v2824, 4294901760
  %v2826 = vsub.f32 %v2824, %v2825
  %v2827 = vand.u32 %v2826, 4294901760
  %2828 = vmatprep.subr.mxu0 %v2827
  %v2829 = vsub.f32 %v2303, %v2303
  %v2830 = vand.u32 %v2829, 4294901760
  %v2831 = vsub.f32 %v2829, %v2830
  %v2832 = vand.u32 %v2831, 4294901760
  %2833 = vmatpush1.msra.mxu0 %v2832
  %v2834 = vsub.f32 %v2306, %v2306
  %v2835 = vand.u32 %v2834, 4294901760
  %v2836 = vsub.f32 %v2834, %v2835
  %v2837 = vand.u32 %v2836, 4294901760
  %2838 = vmatprep.subr.mxu0 %v2837
  %v2839 = vsub.f32 %v2305, %v2305
  %v2840 = vand.u32 %v2839, 4294901760
  %v2841 = vsub.f32 %v2839, %v2840
  %v2842 = vand.u32 %v2841, 4294901760
  %2843 = vmatpush1.msra.mxu0 %v2842
  %v2844 = vsub.f32 %v2308, %v2308
  %v2845 = vand.u32 %v2844, 4294901760
  %v2846 = vsub.f32 %v2844, %v2845
  %v2847 = vand.u32 %v2846, 4294901760
  %2848 = vmatprep.subr.mxu0 %v2847
  %v2849 = vsub.f32 %v2307, %v2307
  %v2850 = vand.u32 %v2849, 4294901760
  %v2851 = vsub.f32 %v2849, %v2850
  %v2852 = vand.u32 %v2851, 4294901760
  %2853 = vmatpush1.msra.mxu0 %v2852
  %v2854 = vsub.f32 %v2310, %v2310
  %v2855 = vand.u32 %v2854, 4294901760
  %v2856 = vsub.f32 %v2854, %v2855
  %v2857 = vand.u32 %v2856, 4294901760
  %2858 = vmatprep.subr.mxu0 %v2857
  %v2859 = vsub.f32 %v2309, %v2309
  %v2860 = vand.u32 %v2859, 4294901760
  %v2861 = vsub.f32 %v2859, %v2860
  %v2862 = vand.u32 %v2861, 4294901760
  %2863 = vmatpush1.msra.mxu0 %v2862
  %v2864 = vsub.f32 %v2312, %v2312
  %v2865 = vand.u32 %v2864, 4294901760
  %v2866 = vsub.f32 %v2864, %v2865
  %v2867 = vand.u32 %v2866, 4294901760
  %2868 = vmatprep.subr.mxu0 %v2867
  %v2869 = vsub.f32 %v2311, %v2311
  %v2870 = vand.u32 %v2869, 4294901760
  %v2871 = vsub.f32 %v2869, %v2870
  %v2872 = vand.u32 %v2871, 4294901760
  %2873 = vmatpush1.msra.mxu0 %v2872
  %v2874 = vsub.f32 %v2314, %v2314
  %v2875 = vand.u32 %v2874, 4294901760
  %v2876 = vsub.f32 %v2874, %v2875
  %v2877 = vand.u32 %v2876, 4294901760
  %2878 = vmatprep.subr.mxu0 %v2877
  %v2879 = vsub.f32 %v2313, %v2313
  %v2880 = vand.u32 %v2879, 4294901760
  %v2881 = vsub.f32 %v2879, %v2880
  %v2882 = vand.u32 %v2881, 4294901760
  %2883 = vmatpush1.msra.mxu0 %v2882
  %v2884 = vsub.f32 %v2316, %v2316
  %v2885 = vand.u32 %v2884, 4294901760
  %v2886 = vsub.f32 %v2884, %v2885
  %v2887 = vand.u32 %v2886, 4294901760
  %2888 = vmatprep.subr.mxu0 %v2887
  %v2889 = vsub.f32 %v2315, %v2315
  %v2890 = vand.u32 %v2889, 4294901760
  %v2891 = vsub.f32 %v2889, %v2890
  %v2892 = vand.u32 %v2891, 4294901760
  %2893 = vmatpush1.msra.mxu0 %v2892
  %v2894 = vsub.f32 %v2318, %v2318
  %v2895 = vand.u32 %v2894, 4294901760
  %v2896 = vsub.f32 %v2894, %v2895
  %v2897 = vand.u32 %v2896, 4294901760
  %2898 = vmatprep.subr.mxu0 %v2897
  %v2899 = vsub.f32 %v2317, %v2317
  %v2900 = vand.u32 %v2899, 4294901760
  %v2901 = vsub.f32 %v2899, %v2900
  %v2902 = vand.u32 %v2901, 4294901760
  %2903 = vmatpush1.msra.mxu0 %v2902
  %v2904 = vsub.f32 %v2320, %v2320
  %v2905 = vand.u32 %v2904, 4294901760
  %v2906 = vsub.f32 %v2904, %v2905
  %v2907 = vand.u32 %v2906, 4294901760
  %2908 = vmatprep.subr.mxu0 %v2907
  %v2909 = vsub.f32 %v2319, %v2319
  %v2910 = vand.u32 %v2909, 4294901760
  %v2911 = vsub.f32 %v2909, %v2910
  %v2912 = vand.u32 %v2911, 4294901760
  %2913 = vmatpush1.msra.mxu0 %v2912
  %v2914 = vsub.f32 %v2322, %v2322
  %v2915 = vand.u32 %v2914, 4294901760
  %v2916 = vsub.f32 %v2914, %v2915
  %v2917 = vand.u32 %v2916, 4294901760
  %2918 = vmatprep.subr.mxu0 %v2917
  %v2919 = vsub.f32 %v2321, %v2321
  %v2920 = vand.u32 %v2919, 4294901760
  %v2921 = vsub.f32 %v2919, %v2920
  %v2922 = vand.u32 %v2921, 4294901760
  %2923 = vmatpush1.msra.mxu0 %v2922
  %v2924 = vsub.f32 %v2324, %v2324
  %v2925 = vand.u32 %v2924, 4294901760
  %v2926 = vsub.f32 %v2924, %v2925
  %v2927 = vand.u32 %v2926, 4294901760
  %2928 = vmatprep.subr.mxu0 %v2927
  %v2929 = vsub.f32 %v2323, %v2323
  %v2930 = vand.u32 %v2929, 4294901760
  %v2931 = vsub.f32 %v2929, %v2930
  %v2932 = vand.u32 %v2931, 4294901760
  %2933 = vmatpush1.msra.mxu0 %v2932
  %v2934 = vsub.f32 %v2326, %v2326
  %v2935 = vand.u32 %v2934, 4294901760
  %v2936 = vsub.f32 %v2934, %v2935
  %v2937 = vand.u32 %v2936, 4294901760
  %2938 = vmatprep.subr.mxu0 %v2937
  %v2939 = vsub.f32 %v2325, %v2325
  %v2940 = vand.u32 %v2939, 4294901760
  %v2941 = vsub.f32 %v2939, %v2940
  %v2942 = vand.u32 %v2941, 4294901760
  %2943 = vmatpush1.msra.mxu0 %v2942
  %v2944 = vsub.f32 %v2328, %v2328
  %v2945 = vand.u32 %v2944, 4294901760
  %v2946 = vsub.f32 %v2944, %v2945
  %v2947 = vand.u32 %v2946, 4294901760
  %2948 = vmatprep.subr.mxu0 %v2947
  %v2949 = vsub.f32 %v2327, %v2327
  %v2950 = vand.u32 %v2949, 4294901760
  %v2951 = vsub.f32 %v2949, %v2950
  %v2952 = vand.u32 %v2951, 4294901760
  %2953 = vmatpush1.msra.mxu0 %v2952
  %v2954 = vsub.f32 %v2330, %v2330
  %v2955 = vand.u32 %v2954, 4294901760
  %v2956 = vsub.f32 %v2954, %v2955
  %v2957 = vand.u32 %v2956, 4294901760
  %2958 = vmatprep.subr.mxu0 %v2957
  %v2959 = vsub.f32 %v2329, %v2329
  %v2960 = vand.u32 %v2959, 4294901760
  %v2961 = vsub.f32 %v2959, %v2960
  %v2962 = vand.u32 %v2961, 4294901760
  %2963 = vmatpush1.msra.mxu0 %v2962
  %v2964 = vsub.f32 %v2332, %v2332
  %v2965 = vand.u32 %v2964, 4294901760
  %v2966 = vsub.f32 %v2964, %v2965
  %v2967 = vand.u32 %v2966, 4294901760
  %2968 = vmatprep.subr.mxu0 %v2967
  %v2969 = vsub.f32 %v2331, %v2331
  %v2970 = vand.u32 %v2969, 4294901760
  %v2971 = vsub.f32 %v2969, %v2970
  %v2972 = vand.u32 %v2971, 4294901760
  %2973 = vmatpush1.msra.mxu0 %v2972
  %v2974 = vsub.f32 %v2334, %v2334
  %v2975 = vand.u32 %v2974, 4294901760
  %v2976 = vsub.f32 %v2974, %v2975
  %v2977 = vand.u32 %v2976, 4294901760
  %2978 = vmatprep.subr.mxu0 %v2977
  %v2979 = vsub.f32 %v2333, %v2333
  %v2980 = vand.u32 %v2979, 4294901760
  %v2981 = vsub.f32 %v2979, %v2980
  %v2982 = vand.u32 %v2981, 4294901760
  %2983 = vmatpush1.msra.mxu0 %v2982
  %v2984 = vsub.f32 %v2336, %v2336
  %v2985 = vand.u32 %v2984, 4294901760
  %v2986 = vsub.f32 %v2984, %v2985
  %v2987 = vand.u32 %v2986, 4294901760
  %2988 = vmatprep.subr.mxu0 %v2987
  %v2989 = vsub.f32 %v2335, %v2335
  %v2990 = vand.u32 %v2989, 4294901760
  %v2991 = vsub.f32 %v2989, %v2990
  %v2992 = vand.u32 %v2991, 4294901760
  %2993 = vmatpush1.msra.mxu0 %v2992
  %v2994 = vsub.f32 %v2338, %v2338
  %v2995 = vand.u32 %v2994, 4294901760
  %v2996 = vsub.f32 %v2994, %v2995
  %v2997 = vand.u32 %v2996, 4294901760
  %2998 = vmatprep.subr.mxu0 %v2997
  %v2999 = vsub.f32 %v2337, %v2337
  %v3000 = vand.u32 %v2999, 4294901760
  %v3001 = vsub.f32 %v2999, %v3000
  %v3002 = vand.u32 %v3001, 4294901760
  %3003 = vmatpush1.msra.mxu0 %v3002
  %v3004 = vsub.f32 %v2340, %v2340
  %v3005 = vand.u32 %v3004, 4294901760
  %v3006 = vsub.f32 %v3004, %v3005
  %v3007 = vand.u32 %v3006, 4294901760
  %3008 = vmatprep.subr.mxu0 %v3007
  %v3009 = vsub.f32 %v2339, %v2339
  %v3010 = vand.u32 %v3009, 4294901760
  %v3011 = vsub.f32 %v3009, %v3010
  %v3012 = vand.u32 %v3011, 4294901760
  %3013 = vmatpush1.msra.mxu0 %v3012
  %v3014 = vsub.f32 %v2342, %v2342
  %v3015 = vand.u32 %v3014, 4294901760
  %v3016 = vsub.f32 %v3014, %v3015
  %v3017 = vand.u32 %v3016, 4294901760
  %3018 = vmatprep.subr.mxu0 %v3017
  %v3019 = vsub.f32 %v2341, %v2341
  %v3020 = vand.u32 %v3019, 4294901760
  %v3021 = vsub.f32 %v3019, %v3020
  %v3022 = vand.u32 %v3021, 4294901760
  %3023 = vmatpush1.msra.mxu0 %v3022
  %v3024 = vsub.f32 %v2344, %v2344
  %v3025 = vand.u32 %v3024, 4294901760
  %v3026 = vsub.f32 %v3024, %v3025
  %v3027 = vand.u32 %v3026, 4294901760
  %3028 = vmatprep.subr.mxu0 %v3027
  %v3029 = vsub.f32 %v2343, %v2343
  %v3030 = vand.u32 %v3029, 4294901760
  %v3031 = vsub.f32 %v3029, %v3030
  %v3032 = vand.u32 %v3031, 4294901760
  %3033 = vmatpush1.msra.mxu0 %v3032
  %v3034 = vsub.f32 %v2346, %v2346
  %v3035 = vand.u32 %v3034, 4294901760
  %v3036 = vsub.f32 %v3034, %v3035
  %v3037 = vand.u32 %v3036, 4294901760
  %3038 = vmatprep.subr.mxu0 %v3037
  %v3039 = vsub.f32 %v2345, %v2345
  %v3040 = vand.u32 %v3039, 4294901760
  %v3041 = vsub.f32 %v3039, %v3040
  %v3042 = vand.u32 %v3041, 4294901760
  %3043 = vmatpush1.msra.mxu0 %v3042
  %v3044 = vsub.f32 %v2348, %v2348
  %v3045 = vand.u32 %v3044, 4294901760
  %v3046 = vsub.f32 %v3044, %v3045
  %v3047 = vand.u32 %v3046, 4294901760
  %3048 = vmatprep.subr.mxu0 %v3047
  %v3049 = vsub.f32 %v2347, %v2347
  %v3050 = vand.u32 %v3049, 4294901760
  %v3051 = vsub.f32 %v3049, %v3050
  %v3052 = vand.u32 %v3051, 4294901760
  %3053 = vmatpush1.msra.mxu0 %v3052
  %v3054 = vand.u32 %v2154, 4294901760
  %3055 = vmatprep.mubr.f32.mxu0 %v3054
  %v3056 = vand.u32 %v2153, 4294901760
  %3057 = vmatmul.mubr.f32.gmra.mrb[0].mxu0 %v3056
  %v3058 = vpop.f32.mrb[0].mxu0
  %v3059 = vadd.f32 %v2490, %v3058
  %v3060 = vpop.f32.mrb[0].mxu0
  %v3061 = vadd.f32 %v2492, %v3060
  %v3062 = vand.u32 %v2158, 4294901760
  %3063 = vmatprep.mubr.f32.mxu0 %v3062
  %v3064 = vand.u32 %v2157, 4294901760
  %3065 = vmatmul.mubr.f32.gmra.mrb[0].mxu0 %v3064
  %v3066 = vpop.f32.mrb[0].mxu0
  %v3067 = vadd.f32 %v2506, %v3066
  %v3068 = vpop.f32.mrb[0].mxu0
  %v3069 = vadd.f32 %v2508, %v3068
  %v3070 = vand.u32 %v2162, 4294901760
  %3071 = vmatprep.mubr.f32.mxu0 %v3070
  %v3072 = vand.u32 %v2161, 4294901760
  %3073 = vmatmul.mubr.f32.gmra.mrb[0].mxu0 %v3072
  %v3074 = vpop.f32.mrb[0].mxu0
  %v3075 = vadd.f32 %v2522, %v3074
  %v3076 = vpop.f32.mrb[0].mxu0
  %v3077 = vadd.f32 %v2524, %v3076
  %v3078 = vand.u32 %v2166, 4294901760
  %3079 = vmatprep.mubr.f32.mxu0 %v3078
  %v3080 = vand.u32 %v2165, 4294901760
  %3081 = vmatmul.mubr.f32.gmra.mrb[0].mxu0 %v3080
  %v3082 = vpop.f32.mrb[0].mxu0
  %v3083 = vadd.f32 %v2538, %v3082
  %v3084 = vpop.f32.mrb[0].mxu0
  %v3085 = vadd.f32 %v2540, %v3084
  %v3086 = vand.u32 %v2170, 4294901760
  %3087 = vmatprep.mubr.f32.mxu0 %v3086
  %v3088 = vand.u32 %v2169, 4294901760
  %3089 = vmatmul.mubr.f32.gmra.mrb[0].mxu0 %v3088
  %v3090 = vpop.f32.mrb[0].mxu0
  %v3091 = vadd.f32 %v2554, %v3090
  %v3092 = vpop.f32.mrb[0].mxu0
  %v3093 = vadd.f32 %v2556, %v3092
  %v3094 = vand.u32 %v2174, 4294901760
  %3095 = vmatprep.mubr.f32.mxu0 %v3094
  %v3096 = vand.u32 %v2173, 4294901760
  %3097 = vmatmul.mubr.f32.gmra.mrb[0].mxu0 %v3096
  %v3098 = vpop.f32.mrb[0].mxu0
  %v3099 = vadd.f32 %v2570, %v3098
  %v3100 = vpop.f32.mrb[0].mxu0
  %v3101 = vadd.f32 %v2572, %v3100
  %v3102 = vand.u32 %v2178, 4294901760
  %3103 = vmatprep.mubr.f32.mxu0 %v3102
  %v3104 = vand.u32 %v2177, 4294901760
  %3105 = vmatmul.mubr.f32.gmra.mrb[0].mxu0 %v3104
  %v3106 = vpop.f32.mrb[0].mxu0
  %v3107 = vadd.f32 %v2586, %v3106
  %v3108 = vpop.f32.mrb[0].mxu0
  %v3109 = vadd.f32 %v2588, %v3108
  %v3110 = vand.u32 %v2182, 4294901760
  %3111 = vmatprep.mubr.f32.mxu0 %v3110
  %v3112 = vand.u32 %v2181, 4294901760
  %3113 = vmatmul.mubr.f32.gmra.mrb[0].mxu0 %v3112
  %v3114 = vpop.f32.mrb[0].mxu0
  %v3115 = vadd.f32 %v2602, %v3114
  %v3116 = vpop.f32.mrb[0].mxu0
  %v3117 = vadd.f32 %v2604, %v3116
  %v3118 = vand.u32 %v2186, 4294901760
  %3119 = vmatprep.mubr.f32.mxu0 %v3118
  %v3120 = vand.u32 %v2185, 4294901760
  %3121 = vmatmul.mubr.f32.gmra.mrb[0].mxu0 %v3120
  %v3122 = vpop.f32.mrb[0].mxu0
  %v3123 = vadd.f32 %v2618, %v3122
  %v3124 = vpop.f32.mrb[0].mxu0
  %v3125 = vadd.f32 %v2620, %v3124
  %v3126 = vand.u32 %v2190, 4294901760
  %3127 = vmatprep.mubr.f32.mxu0 %v3126
  %v3128 = vand.u32 %v2189, 4294901760
  %3129 = vmatmul.mubr.f32.gmra.mrb[0].mxu0 %v3128
  %v3130 = vpop.f32.mrb[0].mxu0
  %v3131 = vadd.f32 %v2634, %v3130
  %v3132 = vpop.f32.mrb[0].mxu0
  %v3133 = vadd.f32 %v2636, %v3132
  %v3134 = vand.u32 %v2194, 4294901760
  %3135 = vmatprep.mubr.f32.mxu0 %v3134
  %v3136 = vand.u32 %v2193, 4294901760
  %3137 = vmatmul.mubr.f32.gmra.mrb[0].mxu0 %v3136
  %v3138 = vpop.f32.mrb[0].mxu0
  %v3139 = vadd.f32 %v2650, %v3138
  %v3140 = vpop.f32.mrb[0].mxu0
  %v3141 = vadd.f32 %v2652, %v3140
  %v3142 = vand.u32 %v2198, 4294901760
  %3143 = vmatprep.mubr.f32.mxu0 %v3142
  %v3144 = vand.u32 %v2197, 4294901760
  %3145 = vmatmul.mubr.f32.gmra.mrb[0].mxu0 %v3144
  %v3146 = vpop.f32.mrb[0].mxu0
  %v3147 = vadd.f32 %v2666, %v3146
  %v3148 = vpop.f32.mrb[0].mxu0
  %v3149 = vadd.f32 %v2668, %v3148
  %v3150 = vand.u32 %v2202, 4294901760
  %3151 = vmatprep.mubr.f32.mxu0 %v3150
  %v3152 = vand.u32 %v2201, 4294901760
  %3153 = vmatmul.mubr.f32.gmra.mrb[0].mxu0 %v3152
  %v3154 = vpop.f32.mrb[0].mxu0
  %v3155 = vadd.f32 %v2682, %v3154
  %v3156 = vpop.f32.mrb[0].mxu0
  %v3157 = vadd.f32 %v2684, %v3156
  %v3158 = vand.u32 %v2206, 4294901760
  %3159 = vmatprep.mubr.f32.mxu0 %v3158
  %v3160 = vand.u32 %v2205, 4294901760
  %3161 = vmatmul.mubr.f32.gmra.mrb[0].mxu0 %v3160
  %v3162 = vpop.f32.mrb[0].mxu0
  %v3163 = vadd.f32 %v2698, %v3162
  %v3164 = vpop.f32.mrb[0].mxu0
  %v3165 = vadd.f32 %v2700, %v3164
  %v3166 = vand.u32 %v2210, 4294901760
  %3167 = vmatprep.mubr.f32.mxu0 %v3166
  %v3168 = vand.u32 %v2209, 4294901760
  %3169 = vmatmul.mubr.f32.gmra.mrb[0].mxu0 %v3168
  %v3170 = vpop.f32.mrb[0].mxu0
  %v3171 = vadd.f32 %v2714, %v3170
  %v3172 = vpop.f32.mrb[0].mxu0
  %v3173 = vadd.f32 %v2716, %v3172
  %v3174 = vand.u32 %v2214, 4294901760
  %3175 = vmatprep.mubr.f32.mxu0 %v3174
  %v3176 = vand.u32 %v2213, 4294901760
  %3177 = vmatmul.mubr.f32.gmra.mrb[0].mxu0 %v3176
  %v3178 = vpop.f32.mrb[0].mxu0
  %v3179 = vadd.f32 %v2730, %v3178
  %v3180 = vpop.f32.mrb[0].mxu0
  %v3181 = vadd.f32 %v2732, %v3180
  %3182 = vdwg.mxu0
  %v3183 = vsub.f32 %v2286, %v2286
  %3184 = vmatprep.subr.mxu0 %v3183
  %v3185 = vsub.f32 %v2285, %v2285
  %3186 = vmatpush1.msra.mxu0 %v3185
  %v3187 = vsub.f32 %v2288, %v2288
  %3188 = vmatprep.subr.mxu0 %v3187
  %v3189 = vsub.f32 %v2287, %v2287
  %3190 = vmatpush1.msra.mxu0 %v3189
  %v3191 = vsub.f32 %v2290, %v2290
  %3192 = vmatprep.subr.mxu0 %v3191
  %v3193 = vsub.f32 %v2289, %v2289
  %3194 = vmatpush1.msra.mxu0 %v3193
  %v3195 = vsub.f32 %v2292, %v2292
  %3196 = vmatprep.subr.mxu0 %v3195
  %v3197 = vsub.f32 %v2291, %v2291
  %3198 = vmatpush1.msra.mxu0 %v3197
  %v3199 = vsub.f32 %v2294, %v2294
  %3200 = vmatprep.subr.mxu0 %v3199
  %v3201 = vsub.f32 %v2293, %v2293
  %3202 = vmatpush1.msra.mxu0 %v3201
  %v3203 = vsub.f32 %v2296, %v2296
  %3204 = vmatprep.subr.mxu0 %v3203
  %v3205 = vsub.f32 %v2295, %v2295
  %3206 = vmatpush1.msra.mxu0 %v3205
  %v3207 = vsub.f32 %v2298, %v2298
  %3208 = vmatprep.subr.mxu0 %v3207
  %v3209 = vsub.f32 %v2297, %v2297
  %3210 = vmatpush1.msra.mxu0 %v3209
  %v3211 = vsub.f32 %v2300, %v2300
  %3212 = vmatprep.subr.mxu0 %v3211
  %v3213 = vsub.f32 %v2299, %v2299
  %3214 = vmatpush1.msra.mxu0 %v3213
  %v3215 = vsub.f32 %v2302, %v2302
  %3216 = vmatprep.subr.mxu0 %v3215
  %v3217 = vsub.f32 %v2301, %v2301
  %3218 = vmatpush1.msra.mxu0 %v3217
  %v3219 = vsub.f32 %v2304, %v2304
  %3220 = vmatprep.subr.mxu0 %v3219
  %v3221 = vsub.f32 %v2303, %v2303
  %3222 = vmatpush1.msra.mxu0 %v3221
  %v3223 = vsub.f32 %v2306, %v2306
  %3224 = vmatprep.subr.mxu0 %v3223
  %v3225 = vsub.f32 %v2305, %v2305
  %3226 = vmatpush1.msra.mxu0 %v3225
  %v3227 = vsub.f32 %v2308, %v2308
  %3228 = vmatprep.subr.mxu0 %v3227
  %v3229 = vsub.f32 %v2307, %v2307
  %3230 = vmatpush1.msra.mxu0 %v3229
  %v3231 = vsub.f32 %v2310, %v2310
  %3232 = vmatprep.subr.mxu0 %v3231
  %v3233 = vsub.f32 %v2309, %v2309
  %3234 = vmatpush1.msra.mxu0 %v3233
  %v3235 = vsub.f32 %v2312, %v2312
  %3236 = vmatprep.subr.mxu0 %v3235
  %v3237 = vsub.f32 %v2311, %v2311
  %3238 = vmatpush1.msra.mxu0 %v3237
  %v3239 = vsub.f32 %v2314, %v2314
  %3240 = vmatprep.subr.mxu0 %v3239
  %v3241 = vsub.f32 %v2313, %v2313
  %3242 = vmatpush1.msra.mxu0 %v3241
  %v3243 = vsub.f32 %v2316, %v2316
  %3244 = vmatprep.subr.mxu0 %v3243
  %v3245 = vsub.f32 %v2315, %v2315
  %3246 = vmatpush1.msra.mxu0 %v3245
  %v3247 = vsub.f32 %v2318, %v2318
  %3248 = vmatprep.subr.mxu0 %v3247
  %v3249 = vsub.f32 %v2317, %v2317
  %3250 = vmatpush1.msra.mxu0 %v3249
  %v3251 = vsub.f32 %v2320, %v2320
  %3252 = vmatprep.subr.mxu0 %v3251
  %v3253 = vsub.f32 %v2319, %v2319
  %3254 = vmatpush1.msra.mxu0 %v3253
  %v3255 = vsub.f32 %v2322, %v2322
  %3256 = vmatprep.subr.mxu0 %v3255
  %v3257 = vsub.f32 %v2321, %v2321
  %3258 = vmatpush1.msra.mxu0 %v3257
  %v3259 = vsub.f32 %v2324, %v2324
  %3260 = vmatprep.subr.mxu0 %v3259
  %v3261 = vsub.f32 %v2323, %v2323
  %3262 = vmatpush1.msra.mxu0 %v3261
  %v3263 = vsub.f32 %v2326, %v2326
  %3264 = vmatprep.subr.mxu0 %v3263
  %v3265 = vsub.f32 %v2325, %v2325
  %3266 = vmatpush1.msra.mxu0 %v3265
  %v3267 = vsub.f32 %v2328, %v2328
  %3268 = vmatprep.subr.mxu0 %v3267
  %v3269 = vsub.f32 %v2327, %v2327
  %3270 = vmatpush1.msra.mxu0 %v3269
  %v3271 = vsub.f32 %v2330, %v2330
  %3272 = vmatprep.subr.mxu0 %v3271
  %v3273 = vsub.f32 %v2329, %v2329
  %3274 = vmatpush1.msra.mxu0 %v3273
  %v3275 = vsub.f32 %v2332, %v2332
  %3276 = vmatprep.subr.mxu0 %v3275
  %v3277 = vsub.f32 %v2331, %v2331
  %3278 = vmatpush1.msra.mxu0 %v3277
  %v3279 = vsub.f32 %v2334, %v2334
  %3280 = vmatprep.subr.mxu0 %v3279
  %v3281 = vsub.f32 %v2333, %v2333
  %3282 = vmatpush1.msra.mxu0 %v3281
  %v3283 = vsub.f32 %v2336, %v2336
  %3284 = vmatprep.subr.mxu0 %v3283
  %v3285 = vsub.f32 %v2335, %v2335
  %3286 = vmatpush1.msra.mxu0 %v3285
  %v3287 = vsub.f32 %v2338, %v2338
  %3288 = vmatprep.subr.mxu0 %v3287
  %v3289 = vsub.f32 %v2337, %v2337
  %3290 = vmatpush1.msra.mxu0 %v3289
  %v3291 = vsub.f32 %v2340, %v2340
  %3292 = vmatprep.subr.mxu0 %v3291
  %v3293 = vsub.f32 %v2339, %v2339
  %3294 = vmatpush1.msra.mxu0 %v3293
  %v3295 = vsub.f32 %v2342, %v2342
  %3296 = vmatprep.subr.mxu0 %v3295
  %v3297 = vsub.f32 %v2341, %v2341
  %3298 = vmatpush1.msra.mxu0 %v3297
  %v3299 = vsub.f32 %v2344, %v2344
  %3300 = vmatprep.subr.mxu0 %v3299
  %v3301 = vsub.f32 %v2343, %v2343
  %3302 = vmatpush1.msra.mxu0 %v3301
  %v3303 = vsub.f32 %v2346, %v2346
  %3304 = vmatprep.subr.mxu0 %v3303
  %v3305 = vsub.f32 %v2345, %v2345
  %3306 = vmatpush1.msra.mxu0 %v3305
  %v3307 = vsub.f32 %v2348, %v2348
  %3308 = vmatprep.subr.mxu0 %v3307
  %v3309 = vsub.f32 %v2347, %v2347
  %3310 = vmatpush1.msra.mxu0 %v3309
  %v3311 = vand.u32 %v2154, 4294901760
  %v3312 = vsub.f32 %v2154, %v3311
  %3313 = vmatprep.mubr.f32.mxu0 %v3312
  %v3314 = vand.u32 %v2153, 4294901760
  %v3315 = vsub.f32 %v2153, %v3314
  %3316 = vmatmul.mubr.f32.gmra.mrb[0].mxu0 %v3315
  %v3317 = vpop.f32.mrb[0].mxu0
  %v3318 = vadd.f32 %v3059, %v3317
  %v3319 = vpop.f32.mrb[0].mxu0
  %v3320 = vadd.f32 %v3061, %v3319
  %v3321 = vand.u32 %v2158, 4294901760
  %v3322 = vsub.f32 %v2158, %v3321
  %3323 = vmatprep.mubr.f32.mxu0 %v3322
  %v3324 = vand.u32 %v2157, 4294901760
  %v3325 = vsub.f32 %v2157, %v3324
  %3326 = vmatmul.mubr.f32.gmra.mrb[0].mxu0 %v3325
  %v3327 = vpop.f32.mrb[0].mxu0
  %v3328 = vadd.f32 %v3067, %v3327
  %v3329 = vpop.f32.mrb[0].mxu0
  %v3330 = vadd.f32 %v3069, %v3329
  %v3331 = vand.u32 %v2162, 4294901760
  %v3332 = vsub.f32 %v2162, %v3331
  %3333 = vmatprep.mubr.f32.mxu0 %v3332
  %v3334 = vand.u32 %v2161, 4294901760
  %v3335 = vsub.f32 %v2161, %v3334
  %3336 = vmatmul.mubr.f32.gmra.mrb[0].mxu0 %v3335
  %v3337 = vpop.f32.mrb[0].mxu0
  %v3338 = vadd.f32 %v3075, %v3337
  %v3339 = vpop.f32.mrb[0].mxu0
  %v3340 = vadd.f32 %v3077, %v3339
  %v3341 = vand.u32 %v2166, 4294901760
  %v3342 = vsub.f32 %v2166, %v3341
  %3343 = vmatprep.mubr.f32.mxu0 %v3342
  %v3344 = vand.u32 %v2165, 4294901760
  %v3345 = vsub.f32 %v2165, %v3344
  %3346 = vmatmul.mubr.f32.gmra.mrb[0].mxu0 %v3345
  %v3347 = vpop.f32.mrb[0].mxu0
  %v3348 = vadd.f32 %v3083, %v3347
  %v3349 = vpop.f32.mrb[0].mxu0
  %v3350 = vadd.f32 %v3085, %v3349
  %v3351 = vand.u32 %v2170, 4294901760
  %v3352 = vsub.f32 %v2170, %v3351
  %3353 = vmatprep.mubr.f32.mxu0 %v3352
  %v3354 = vand.u32 %v2169, 4294901760
  %v3355 = vsub.f32 %v2169, %v3354
  %3356 = vmatmul.mubr.f32.gmra.mrb[0].mxu0 %v3355
  %v3357 = vpop.f32.mrb[0].mxu0
  %v3358 = vadd.f32 %v3091, %v3357
  %v3359 = vpop.f32.mrb[0].mxu0
  %v3360 = vadd.f32 %v3093, %v3359
  %v3361 = vand.u32 %v2174, 4294901760
  %v3362 = vsub.f32 %v2174, %v3361
  %3363 = vmatprep.mubr.f32.mxu0 %v3362
  %v3364 = vand.u32 %v2173, 4294901760
  %v3365 = vsub.f32 %v2173, %v3364
  %3366 = vmatmul.mubr.f32.gmra.mrb[0].mxu0 %v3365
  %v3367 = vpop.f32.mrb[0].mxu0
  %v3368 = vadd.f32 %v3099, %v3367
  %v3369 = vpop.f32.mrb[0].mxu0
  %v3370 = vadd.f32 %v3101, %v3369
  %v3371 = vand.u32 %v2178, 4294901760
  %v3372 = vsub.f32 %v2178, %v3371
  %3373 = vmatprep.mubr.f32.mxu0 %v3372
  %v3374 = vand.u32 %v2177, 4294901760
  %v3375 = vsub.f32 %v2177, %v3374
  %3376 = vmatmul.mubr.f32.gmra.mrb[0].mxu0 %v3375
  %v3377 = vpop.f32.mrb[0].mxu0
  %v3378 = vadd.f32 %v3107, %v3377
  %v3379 = vpop.f32.mrb[0].mxu0
  %v3380 = vadd.f32 %v3109, %v3379
  %v3381 = vand.u32 %v2182, 4294901760
  %v3382 = vsub.f32 %v2182, %v3381
  %3383 = vmatprep.mubr.f32.mxu0 %v3382
  %v3384 = vand.u32 %v2181, 4294901760
  %v3385 = vsub.f32 %v2181, %v3384
  %3386 = vmatmul.mubr.f32.gmra.mrb[0].mxu0 %v3385
  %v3387 = vpop.f32.mrb[0].mxu0
  %v3388 = vadd.f32 %v3115, %v3387
  %v3389 = vpop.f32.mrb[0].mxu0
  %v3390 = vadd.f32 %v3117, %v3389
  %v3391 = vand.u32 %v2186, 4294901760
  %v3392 = vsub.f32 %v2186, %v3391
  %3393 = vmatprep.mubr.f32.mxu0 %v3392
  %v3394 = vand.u32 %v2185, 4294901760
  %v3395 = vsub.f32 %v2185, %v3394
  %3396 = vmatmul.mubr.f32.gmra.mrb[0].mxu0 %v3395
  %v3397 = vpop.f32.mrb[0].mxu0
  %v3398 = vadd.f32 %v3123, %v3397
  %v3399 = vpop.f32.mrb[0].mxu0
  %v3400 = vadd.f32 %v3125, %v3399
  %v3401 = vand.u32 %v2190, 4294901760
  %v3402 = vsub.f32 %v2190, %v3401
  %3403 = vmatprep.mubr.f32.mxu0 %v3402
  %v3404 = vand.u32 %v2189, 4294901760
  %v3405 = vsub.f32 %v2189, %v3404
  %3406 = vmatmul.mubr.f32.gmra.mrb[0].mxu0 %v3405
  %v3407 = vpop.f32.mrb[0].mxu0
  %v3408 = vadd.f32 %v3131, %v3407
  %v3409 = vpop.f32.mrb[0].mxu0
  %v3410 = vadd.f32 %v3133, %v3409
  %v3411 = vand.u32 %v2194, 4294901760
  %v3412 = vsub.f32 %v2194, %v3411
  %3413 = vmatprep.mubr.f32.mxu0 %v3412
  %v3414 = vand.u32 %v2193, 4294901760
  %v3415 = vsub.f32 %v2193, %v3414
  %3416 = vmatmul.mubr.f32.gmra.mrb[0].mxu0 %v3415
  %v3417 = vpop.f32.mrb[0].mxu0
  %v3418 = vadd.f32 %v3139, %v3417
  %v3419 = vpop.f32.mrb[0].mxu0
  %v3420 = vadd.f32 %v3141, %v3419
  %v3421 = vand.u32 %v2198, 4294901760
  %v3422 = vsub.f32 %v2198, %v3421
  %3423 = vmatprep.mubr.f32.mxu0 %v3422
  %v3424 = vand.u32 %v2197, 4294901760
  %v3425 = vsub.f32 %v2197, %v3424
  %3426 = vmatmul.mubr.f32.gmra.mrb[0].mxu0 %v3425
  %v3427 = vpop.f32.mrb[0].mxu0
  %v3428 = vadd.f32 %v3147, %v3427
  %v3429 = vpop.f32.mrb[0].mxu0
  %v3430 = vadd.f32 %v3149, %v3429
  %v3431 = vand.u32 %v2202, 4294901760
  %v3432 = vsub.f32 %v2202, %v3431
  %3433 = vmatprep.mubr.f32.mxu0 %v3432
  %v3434 = vand.u32 %v2201, 4294901760
  %v3435 = vsub.f32 %v2201, %v3434
  %3436 = vmatmul.mubr.f32.gmra.mrb[0].mxu0 %v3435
  %v3437 = vpop.f32.mrb[0].mxu0
  %v3438 = vadd.f32 %v3155, %v3437
  %v3439 = vpop.f32.mrb[0].mxu0
  %v3440 = vadd.f32 %v3157, %v3439
  %v3441 = vand.u32 %v2206, 4294901760
  %v3442 = vsub.f32 %v2206, %v3441
  %3443 = vmatprep.mubr.f32.mxu0 %v3442
  %v3444 = vand.u32 %v2205, 4294901760
  %v3445 = vsub.f32 %v2205, %v3444
  %3446 = vmatmul.mubr.f32.gmra.mrb[0].mxu0 %v3445
  %v3447 = vpop.f32.mrb[0].mxu0
  %v3448 = vadd.f32 %v3163, %v3447
  %v3449 = vpop.f32.mrb[0].mxu0
  %v3450 = vadd.f32 %v3165, %v3449
  %v3451 = vand.u32 %v2210, 4294901760
  %v3452 = vsub.f32 %v2210, %v3451
  %3453 = vmatprep.mubr.f32.mxu0 %v3452
  %v3454 = vand.u32 %v2209, 4294901760
  %v3455 = vsub.f32 %v2209, %v3454
  %3456 = vmatmul.mubr.f32.gmra.mrb[0].mxu0 %v3455
  %v3457 = vpop.f32.mrb[0].mxu0
  %v3458 = vadd.f32 %v3171, %v3457
  %v3459 = vpop.f32.mrb[0].mxu0
  %v3460 = vadd.f32 %v3173, %v3459
  %v3461 = vand.u32 %v2214, 4294901760
  %v3462 = vsub.f32 %v2214, %v3461
  %3463 = vmatprep.mubr.f32.mxu0 %v3462
  %v3464 = vand.u32 %v2213, 4294901760
  %v3465 = vsub.f32 %v2213, %v3464
  %3466 = vmatmul.mubr.f32.gmra.mrb[0].mxu0 %v3465
  %v3467 = vpop.f32.mrb[0].mxu0
  %v3468 = vadd.f32 %v3179, %v3467
  %v3469 = vpop.f32.mrb[0].mxu0
  %v3470 = vadd.f32 %v3181, %v3469
  %3471 = vdwg.mxu0
  %3472 = vmatprep.subr.mxu0 %v2286
  %3473 = vmatpush1.msra.mxu0 %v2285
  %3474 = vmatprep.subr.mxu0 %v2288
  %3475 = vmatpush1.msra.mxu0 %v2287
  %3476 = vmatprep.subr.mxu0 %v2290
  %3477 = vmatpush1.msra.mxu0 %v2289
  %3478 = vmatprep.subr.mxu0 %v2292
  %3479 = vmatpush1.msra.mxu0 %v2291
  %3480 = vmatprep.subr.mxu0 %v2294
  %3481 = vmatpush1.msra.mxu0 %v2293
  %3482 = vmatprep.subr.mxu0 %v2296
  %3483 = vmatpush1.msra.mxu0 %v2295
  %3484 = vmatprep.subr.mxu0 %v2298
  %3485 = vmatpush1.msra.mxu0 %v2297
  %3486 = vmatprep.subr.mxu0 %v2300
  %3487 = vmatpush1.msra.mxu0 %v2299
  %3488 = vmatprep.subr.mxu0 %v2302
  %3489 = vmatpush1.msra.mxu0 %v2301
  %3490 = vmatprep.subr.mxu0 %v2304
  %3491 = vmatpush1.msra.mxu0 %v2303
  %3492 = vmatprep.subr.mxu0 %v2306
  %3493 = vmatpush1.msra.mxu0 %v2305
  %3494 = vmatprep.subr.mxu0 %v2308
  %3495 = vmatpush1.msra.mxu0 %v2307
  %3496 = vmatprep.subr.mxu0 %v2310
  %3497 = vmatpush1.msra.mxu0 %v2309
  %3498 = vmatprep.subr.mxu0 %v2312
  %3499 = vmatpush1.msra.mxu0 %v2311
  %3500 = vmatprep.subr.mxu0 %v2314
  %3501 = vmatpush1.msra.mxu0 %v2313
  %3502 = vmatprep.subr.mxu0 %v2316
  %3503 = vmatpush1.msra.mxu0 %v2315
  %3504 = vmatprep.subr.mxu0 %v2318
  %3505 = vmatpush1.msra.mxu0 %v2317
  %3506 = vmatprep.subr.mxu0 %v2320
  %3507 = vmatpush1.msra.mxu0 %v2319
  %3508 = vmatprep.subr.mxu0 %v2322
  %3509 = vmatpush1.msra.mxu0 %v2321
  %3510 = vmatprep.subr.mxu0 %v2324
  %3511 = vmatpush1.msra.mxu0 %v2323
  %3512 = vmatprep.subr.mxu0 %v2326
  %3513 = vmatpush1.msra.mxu0 %v2325
  %3514 = vmatprep.subr.mxu0 %v2328
  %3515 = vmatpush1.msra.mxu0 %v2327
  %3516 = vmatprep.subr.mxu0 %v2330
  %3517 = vmatpush1.msra.mxu0 %v2329
  %3518 = vmatprep.subr.mxu0 %v2332
  %3519 = vmatpush1.msra.mxu0 %v2331
  %3520 = vmatprep.subr.mxu0 %v2334
  %3521 = vmatpush1.msra.mxu0 %v2333
  %3522 = vmatprep.subr.mxu0 %v2336
  %3523 = vmatpush1.msra.mxu0 %v2335
  %3524 = vmatprep.subr.mxu0 %v2338
  %3525 = vmatpush1.msra.mxu0 %v2337
  %3526 = vmatprep.subr.mxu0 %v2340
  %3527 = vmatpush1.msra.mxu0 %v2339
  %3528 = vmatprep.subr.mxu0 %v2342
  %3529 = vmatpush1.msra.mxu0 %v2341
  %3530 = vmatprep.subr.mxu0 %v2344
  %3531 = vmatpush1.msra.mxu0 %v2343
  %3532 = vmatprep.subr.mxu0 %v2346
  %3533 = vmatpush1.msra.mxu0 %v2345
  %3534 = vmatprep.subr.mxu0 %v2348
  %3535 = vmatpush1.msra.mxu0 %v2347
  %v3536 = vand.u32 %v2154, 4294901760
  %v3537 = vsub.f32 %v2154, %v3536
  %v3538 = vand.u32 %v3537, 4294901760
  %3539 = vmatprep.mubr.f32.mxu0 %v3538
  %v3540 = vand.u32 %v2153, 4294901760
  %v3541 = vsub.f32 %v2153, %v3540
  %v3542 = vand.u32 %v3541, 4294901760
  %3543 = vmatmul.mubr.f32.gmra.mrb[0].mxu0 %v3542
  %v3544 = vpop.f32.mrb[0].mxu0
  %v3545 = vadd.f32 %v3318, %v3544
  %v3546 = vpop.f32.mrb[0].mxu0
  %v3547 = vadd.f32 %v3320, %v3546
  %v3548 = vand.u32 %v2158, 4294901760
  %v3549 = vsub.f32 %v2158, %v3548
  %v3550 = vand.u32 %v3549, 4294901760
  %3551 = vmatprep.mubr.f32.mxu0 %v3550
  %v3552 = vand.u32 %v2157, 4294901760
  %v3553 = vsub.f32 %v2157, %v3552
  %v3554 = vand.u32 %v3553, 4294901760
  %3555 = vmatmul.mubr.f32.gmra.mrb[0].mxu0 %v3554
  %v3556 = vpop.f32.mrb[0].mxu0
  %v3557 = vadd.f32 %v3328, %v3556
  %v3558 = vpop.f32.mrb[0].mxu0
  %v3559 = vadd.f32 %v3330, %v3558
  %v3560 = vand.u32 %v2162, 4294901760
  %v3561 = vsub.f32 %v2162, %v3560
  %v3562 = vand.u32 %v3561, 4294901760
  %3563 = vmatprep.mubr.f32.mxu0 %v3562
  %v3564 = vand.u32 %v2161, 4294901760
  %v3565 = vsub.f32 %v2161, %v3564
  %v3566 = vand.u32 %v3565, 4294901760
  %3567 = vmatmul.mubr.f32.gmra.mrb[0].mxu0 %v3566
  %v3568 = vpop.f32.mrb[0].mxu0
  %v3569 = vadd.f32 %v3338, %v3568
  %v3570 = vpop.f32.mrb[0].mxu0
  %v3571 = vadd.f32 %v3340, %v3570
  %v3572 = vand.u32 %v2166, 4294901760
  %v3573 = vsub.f32 %v2166, %v3572
  %v3574 = vand.u32 %v3573, 4294901760
  %3575 = vmatprep.mubr.f32.mxu0 %v3574
  %v3576 = vand.u32 %v2165, 4294901760
  %v3577 = vsub.f32 %v2165, %v3576
  %v3578 = vand.u32 %v3577, 4294901760
  %3579 = vmatmul.mubr.f32.gmra.mrb[0].mxu0 %v3578
  %v3580 = vpop.f32.mrb[0].mxu0
  %v3581 = vadd.f32 %v3348, %v3580
  %v3582 = vpop.f32.mrb[0].mxu0
  %v3583 = vadd.f32 %v3350, %v3582
  %v3584 = vand.u32 %v2170, 4294901760
  %v3585 = vsub.f32 %v2170, %v3584
  %v3586 = vand.u32 %v3585, 4294901760
  %3587 = vmatprep.mubr.f32.mxu0 %v3586
  %v3588 = vand.u32 %v2169, 4294901760
  %v3589 = vsub.f32 %v2169, %v3588
  %v3590 = vand.u32 %v3589, 4294901760
  %3591 = vmatmul.mubr.f32.gmra.mrb[0].mxu0 %v3590
  %v3592 = vpop.f32.mrb[0].mxu0
  %v3593 = vadd.f32 %v3358, %v3592
  %v3594 = vpop.f32.mrb[0].mxu0
  %v3595 = vadd.f32 %v3360, %v3594
  %v3596 = vand.u32 %v2174, 4294901760
  %v3597 = vsub.f32 %v2174, %v3596
  %v3598 = vand.u32 %v3597, 4294901760
  %3599 = vmatprep.mubr.f32.mxu0 %v3598
  %v3600 = vand.u32 %v2173, 4294901760
  %v3601 = vsub.f32 %v2173, %v3600
  %v3602 = vand.u32 %v3601, 4294901760
  %3603 = vmatmul.mubr.f32.gmra.mrb[0].mxu0 %v3602
  %v3604 = vpop.f32.mrb[0].mxu0
  %v3605 = vadd.f32 %v3368, %v3604
  %v3606 = vpop.f32.mrb[0].mxu0
  %v3607 = vadd.f32 %v3370, %v3606
  %v3608 = vand.u32 %v2178, 4294901760
  %v3609 = vsub.f32 %v2178, %v3608
  %v3610 = vand.u32 %v3609, 4294901760
  %3611 = vmatprep.mubr.f32.mxu0 %v3610
  %v3612 = vand.u32 %v2177, 4294901760
  %v3613 = vsub.f32 %v2177, %v3612
  %v3614 = vand.u32 %v3613, 4294901760
  %3615 = vmatmul.mubr.f32.gmra.mrb[0].mxu0 %v3614
  %v3616 = vpop.f32.mrb[0].mxu0
  %v3617 = vadd.f32 %v3378, %v3616
  %v3618 = vpop.f32.mrb[0].mxu0
  %v3619 = vadd.f32 %v3380, %v3618
  %v3620 = vand.u32 %v2182, 4294901760
  %v3621 = vsub.f32 %v2182, %v3620
  %v3622 = vand.u32 %v3621, 4294901760
  %3623 = vmatprep.mubr.f32.mxu0 %v3622
  %v3624 = vand.u32 %v2181, 4294901760
  %v3625 = vsub.f32 %v2181, %v3624
  %v3626 = vand.u32 %v3625, 4294901760
  %3627 = vmatmul.mubr.f32.gmra.mrb[0].mxu0 %v3626
  %v3628 = vpop.f32.mrb[0].mxu0
  %v3629 = vadd.f32 %v3388, %v3628
  %v3630 = vpop.f32.mrb[0].mxu0
  %v3631 = vadd.f32 %v3390, %v3630
  %v3632 = vand.u32 %v2186, 4294901760
  %v3633 = vsub.f32 %v2186, %v3632
  %v3634 = vand.u32 %v3633, 4294901760
  %3635 = vmatprep.mubr.f32.mxu0 %v3634
  %v3636 = vand.u32 %v2185, 4294901760
  %v3637 = vsub.f32 %v2185, %v3636
  %v3638 = vand.u32 %v3637, 4294901760
  %3639 = vmatmul.mubr.f32.gmra.mrb[0].mxu0 %v3638
  %v3640 = vpop.f32.mrb[0].mxu0
  %v3641 = vadd.f32 %v3398, %v3640
  %v3642 = vpop.f32.mrb[0].mxu0
  %v3643 = vadd.f32 %v3400, %v3642
  %v3644 = vand.u32 %v2190, 4294901760
  %v3645 = vsub.f32 %v2190, %v3644
  %v3646 = vand.u32 %v3645, 4294901760
  %3647 = vmatprep.mubr.f32.mxu0 %v3646
  %v3648 = vand.u32 %v2189, 4294901760
  %v3649 = vsub.f32 %v2189, %v3648
  %v3650 = vand.u32 %v3649, 4294901760
  %3651 = vmatmul.mubr.f32.gmra.mrb[0].mxu0 %v3650
  %v3652 = vpop.f32.mrb[0].mxu0
  %v3653 = vadd.f32 %v3408, %v3652
  %v3654 = vpop.f32.mrb[0].mxu0
  %v3655 = vadd.f32 %v3410, %v3654
  %v3656 = vand.u32 %v2194, 4294901760
  %v3657 = vsub.f32 %v2194, %v3656
  %v3658 = vand.u32 %v3657, 4294901760
  %3659 = vmatprep.mubr.f32.mxu0 %v3658
  %v3660 = vand.u32 %v2193, 4294901760
  %v3661 = vsub.f32 %v2193, %v3660
  %v3662 = vand.u32 %v3661, 4294901760
  %3663 = vmatmul.mubr.f32.gmra.mrb[0].mxu0 %v3662
  %v3664 = vpop.f32.mrb[0].mxu0
  %v3665 = vadd.f32 %v3418, %v3664
  %v3666 = vpop.f32.mrb[0].mxu0
  %v3667 = vadd.f32 %v3420, %v3666
  %v3668 = vand.u32 %v2198, 4294901760
  %v3669 = vsub.f32 %v2198, %v3668
  %v3670 = vand.u32 %v3669, 4294901760
  %3671 = vmatprep.mubr.f32.mxu0 %v3670
  %v3672 = vand.u32 %v2197, 4294901760
  %v3673 = vsub.f32 %v2197, %v3672
  %v3674 = vand.u32 %v3673, 4294901760
  %3675 = vmatmul.mubr.f32.gmra.mrb[0].mxu0 %v3674
  %v3676 = vpop.f32.mrb[0].mxu0
  %v3677 = vadd.f32 %v3428, %v3676
  %v3678 = vpop.f32.mrb[0].mxu0
  %v3679 = vadd.f32 %v3430, %v3678
  %v3680 = vand.u32 %v2202, 4294901760
  %v3681 = vsub.f32 %v2202, %v3680
  %v3682 = vand.u32 %v3681, 4294901760
  %3683 = vmatprep.mubr.f32.mxu0 %v3682
  %v3684 = vand.u32 %v2201, 4294901760
  %v3685 = vsub.f32 %v2201, %v3684
  %v3686 = vand.u32 %v3685, 4294901760
  %3687 = vmatmul.mubr.f32.gmra.mrb[0].mxu0 %v3686
  %v3688 = vpop.f32.mrb[0].mxu0
  %v3689 = vadd.f32 %v3438, %v3688
  %v3690 = vpop.f32.mrb[0].mxu0
  %v3691 = vadd.f32 %v3440, %v3690
  %v3692 = vand.u32 %v2206, 4294901760
  %v3693 = vsub.f32 %v2206, %v3692
  %v3694 = vand.u32 %v3693, 4294901760
  %3695 = vmatprep.mubr.f32.mxu0 %v3694
  %v3696 = vand.u32 %v2205, 4294901760
  %v3697 = vsub.f32 %v2205, %v3696
  %v3698 = vand.u32 %v3697, 4294901760
  %3699 = vmatmul.mubr.f32.gmra.mrb[0].mxu0 %v3698
  %v3700 = vpop.f32.mrb[0].mxu0
  %v3701 = vadd.f32 %v3448, %v3700
  %v3702 = vpop.f32.mrb[0].mxu0
  %v3703 = vadd.f32 %v3450, %v3702
  %v3704 = vand.u32 %v2210, 4294901760
  %v3705 = vsub.f32 %v2210, %v3704
  %v3706 = vand.u32 %v3705, 4294901760
  %3707 = vmatprep.mubr.f32.mxu0 %v3706
  %v3708 = vand.u32 %v2209, 4294901760
  %v3709 = vsub.f32 %v2209, %v3708
  %v3710 = vand.u32 %v3709, 4294901760
  %3711 = vmatmul.mubr.f32.gmra.mrb[0].mxu0 %v3710
  %v3712 = vpop.f32.mrb[0].mxu0
  %v3713 = vadd.f32 %v3458, %v3712
  %v3714 = vpop.f32.mrb[0].mxu0
  %v3715 = vadd.f32 %v3460, %v3714
  %v3716 = vand.u32 %v2214, 4294901760
  %v3717 = vsub.f32 %v2214, %v3716
  %v3718 = vand.u32 %v3717, 4294901760
  %3719 = vmatprep.mubr.f32.mxu0 %v3718
  %v3720 = vand.u32 %v2213, 4294901760
  %v3721 = vsub.f32 %v2213, %v3720
  %v3722 = vand.u32 %v3721, 4294901760
  %3723 = vmatmul.mubr.f32.gmra.mrb[0].mxu0 %v3722
  %v3724 = vpop.f32.mrb[0].mxu0
  %v3725 = vadd.f32 %v3468, %v3724
  %v3726 = vpop.f32.mrb[0].mxu0
  %v3727 = vadd.f32 %v3470, %v3726
  %3728 = vdwg.mxu0
  %v3729 = vsub.f32 %v2286, %v2286
  %v3730 = vand.u32 %v3729, 4294901760
  %3731 = vmatprep.subr.mxu0 %v3730
  %v3732 = vsub.f32 %v2285, %v2285
  %v3733 = vand.u32 %v3732, 4294901760
  %3734 = vmatpush1.msra.mxu0 %v3733
  %v3735 = vsub.f32 %v2288, %v2288
  %v3736 = vand.u32 %v3735, 4294901760
  %3737 = vmatprep.subr.mxu0 %v3736
  %v3738 = vsub.f32 %v2287, %v2287
  %v3739 = vand.u32 %v3738, 4294901760
  %3740 = vmatpush1.msra.mxu0 %v3739
  %v3741 = vsub.f32 %v2290, %v2290
  %v3742 = vand.u32 %v3741, 4294901760
  %3743 = vmatprep.subr.mxu0 %v3742
  %v3744 = vsub.f32 %v2289, %v2289
  %v3745 = vand.u32 %v3744, 4294901760
  %3746 = vmatpush1.msra.mxu0 %v3745
  %v3747 = vsub.f32 %v2292, %v2292
  %v3748 = vand.u32 %v3747, 4294901760
  %3749 = vmatprep.subr.mxu0 %v3748
  %v3750 = vsub.f32 %v2291, %v2291
  %v3751 = vand.u32 %v3750, 4294901760
  %3752 = vmatpush1.msra.mxu0 %v3751
  %v3753 = vsub.f32 %v2294, %v2294
  %v3754 = vand.u32 %v3753, 4294901760
  %3755 = vmatprep.subr.mxu0 %v3754
  %v3756 = vsub.f32 %v2293, %v2293
  %v3757 = vand.u32 %v3756, 4294901760
  %3758 = vmatpush1.msra.mxu0 %v3757
  %v3759 = vsub.f32 %v2296, %v2296
  %v3760 = vand.u32 %v3759, 4294901760
  %3761 = vmatprep.subr.mxu0 %v3760
  %v3762 = vsub.f32 %v2295, %v2295
  %v3763 = vand.u32 %v3762, 4294901760
  %3764 = vmatpush1.msra.mxu0 %v3763
  %v3765 = vsub.f32 %v2298, %v2298
  %v3766 = vand.u32 %v3765, 4294901760
  %3767 = vmatprep.subr.mxu0 %v3766
  %v3768 = vsub.f32 %v2297, %v2297
  %v3769 = vand.u32 %v3768, 4294901760
  %3770 = vmatpush1.msra.mxu0 %v3769
  %v3771 = vsub.f32 %v2300, %v2300
  %v3772 = vand.u32 %v3771, 4294901760
  %3773 = vmatprep.subr.mxu0 %v3772
  %v3774 = vsub.f32 %v2299, %v2299
  %v3775 = vand.u32 %v3774, 4294901760
  %3776 = vmatpush1.msra.mxu0 %v3775
  %v3777 = vsub.f32 %v2302, %v2302
  %v3778 = vand.u32 %v3777, 4294901760
  %3779 = vmatprep.subr.mxu0 %v3778
  %v3780 = vsub.f32 %v2301, %v2301
  %v3781 = vand.u32 %v3780, 4294901760
  %3782 = vmatpush1.msra.mxu0 %v3781
  %v3783 = vsub.f32 %v2304, %v2304
  %v3784 = vand.u32 %v3783, 4294901760
  %3785 = vmatprep.subr.mxu0 %v3784
  %v3786 = vsub.f32 %v2303, %v2303
  %v3787 = vand.u32 %v3786, 4294901760
  %3788 = vmatpush1.msra.mxu0 %v3787
  %v3789 = vsub.f32 %v2306, %v2306
  %v3790 = vand.u32 %v3789, 4294901760
  %3791 = vmatprep.subr.mxu0 %v3790
  %v3792 = vsub.f32 %v2305, %v2305
  %v3793 = vand.u32 %v3792, 4294901760
  %3794 = vmatpush1.msra.mxu0 %v3793
  %v3795 = vsub.f32 %v2308, %v2308
  %v3796 = vand.u32 %v3795, 4294901760
  %3797 = vmatprep.subr.mxu0 %v3796
  %v3798 = vsub.f32 %v2307, %v2307
  %v3799 = vand.u32 %v3798, 4294901760
  %3800 = vmatpush1.msra.mxu0 %v3799
  %v3801 = vsub.f32 %v2310, %v2310
  %v3802 = vand.u32 %v3801, 4294901760
  %3803 = vmatprep.subr.mxu0 %v3802
  %v3804 = vsub.f32 %v2309, %v2309
  %v3805 = vand.u32 %v3804, 4294901760
  %3806 = vmatpush1.msra.mxu0 %v3805
  %v3807 = vsub.f32 %v2312, %v2312
  %v3808 = vand.u32 %v3807, 4294901760
  %3809 = vmatprep.subr.mxu0 %v3808
  %v3810 = vsub.f32 %v2311, %v2311
  %v3811 = vand.u32 %v3810, 4294901760
  %3812 = vmatpush1.msra.mxu0 %v3811
  %v3813 = vsub.f32 %v2314, %v2314
  %v3814 = vand.u32 %v3813, 4294901760
  %3815 = vmatprep.subr.mxu0 %v3814
  %v3816 = vsub.f32 %v2313, %v2313
  %v3817 = vand.u32 %v3816, 4294901760
  %3818 = vmatpush1.msra.mxu0 %v3817
  %v3819 = vsub.f32 %v2316, %v2316
  %v3820 = vand.u32 %v3819, 4294901760
  %3821 = vmatprep.subr.mxu0 %v3820
  %v3822 = vsub.f32 %v2315, %v2315
  %v3823 = vand.u32 %v3822, 4294901760
  %3824 = vmatpush1.msra.mxu0 %v3823
  %v3825 = vsub.f32 %v2318, %v2318
  %v3826 = vand.u32 %v3825, 4294901760
  %3827 = vmatprep.subr.mxu0 %v3826
  %v3828 = vsub.f32 %v2317, %v2317
  %v3829 = vand.u32 %v3828, 4294901760
  %3830 = vmatpush1.msra.mxu0 %v3829
  %v3831 = vsub.f32 %v2320, %v2320
  %v3832 = vand.u32 %v3831, 4294901760
  %3833 = vmatprep.subr.mxu0 %v3832
  %v3834 = vsub.f32 %v2319, %v2319
  %v3835 = vand.u32 %v3834, 4294901760
  %3836 = vmatpush1.msra.mxu0 %v3835
  %v3837 = vsub.f32 %v2322, %v2322
  %v3838 = vand.u32 %v3837, 4294901760
  %3839 = vmatprep.subr.mxu0 %v3838
  %v3840 = vsub.f32 %v2321, %v2321
  %v3841 = vand.u32 %v3840, 4294901760
  %3842 = vmatpush1.msra.mxu0 %v3841
  %v3843 = vsub.f32 %v2324, %v2324
  %v3844 = vand.u32 %v3843, 4294901760
  %3845 = vmatprep.subr.mxu0 %v3844
  %v3846 = vsub.f32 %v2323, %v2323
  %v3847 = vand.u32 %v3846, 4294901760
  %3848 = vmatpush1.msra.mxu0 %v3847
  %v3849 = vsub.f32 %v2326, %v2326
  %v3850 = vand.u32 %v3849, 4294901760
  %3851 = vmatprep.subr.mxu0 %v3850
  %v3852 = vsub.f32 %v2325, %v2325
  %v3853 = vand.u32 %v3852, 4294901760
  %3854 = vmatpush1.msra.mxu0 %v3853
  %v3855 = vsub.f32 %v2328, %v2328
  %v3856 = vand.u32 %v3855, 4294901760
  %3857 = vmatprep.subr.mxu0 %v3856
  %v3858 = vsub.f32 %v2327, %v2327
  %v3859 = vand.u32 %v3858, 4294901760
  %3860 = vmatpush1.msra.mxu0 %v3859
  %v3861 = vsub.f32 %v2330, %v2330
  %v3862 = vand.u32 %v3861, 4294901760
  %3863 = vmatprep.subr.mxu0 %v3862
  %v3864 = vsub.f32 %v2329, %v2329
  %v3865 = vand.u32 %v3864, 4294901760
  %3866 = vmatpush1.msra.mxu0 %v3865
  %v3867 = vsub.f32 %v2332, %v2332
  %v3868 = vand.u32 %v3867, 4294901760
  %3869 = vmatprep.subr.mxu0 %v3868
  %v3870 = vsub.f32 %v2331, %v2331
  %v3871 = vand.u32 %v3870, 4294901760
  %3872 = vmatpush1.msra.mxu0 %v3871
  %v3873 = vsub.f32 %v2334, %v2334
  %v3874 = vand.u32 %v3873, 4294901760
  %3875 = vmatprep.subr.mxu0 %v3874
  %v3876 = vsub.f32 %v2333, %v2333
  %v3877 = vand.u32 %v3876, 4294901760
  %3878 = vmatpush1.msra.mxu0 %v3877
  %v3879 = vsub.f32 %v2336, %v2336
  %v3880 = vand.u32 %v3879, 4294901760
  %3881 = vmatprep.subr.mxu0 %v3880
  %v3882 = vsub.f32 %v2335, %v2335
  %v3883 = vand.u32 %v3882, 4294901760
  %3884 = vmatpush1.msra.mxu0 %v3883
  %v3885 = vsub.f32 %v2338, %v2338
  %v3886 = vand.u32 %v3885, 4294901760
  %3887 = vmatprep.subr.mxu0 %v3886
  %v3888 = vsub.f32 %v2337, %v2337
  %v3889 = vand.u32 %v3888, 4294901760
  %3890 = vmatpush1.msra.mxu0 %v3889
  %v3891 = vsub.f32 %v2340, %v2340
  %v3892 = vand.u32 %v3891, 4294901760
  %3893 = vmatprep.subr.mxu0 %v3892
  %v3894 = vsub.f32 %v2339, %v2339
  %v3895 = vand.u32 %v3894, 4294901760
  %3896 = vmatpush1.msra.mxu0 %v3895
  %v3897 = vsub.f32 %v2342, %v2342
  %v3898 = vand.u32 %v3897, 4294901760
  %3899 = vmatprep.subr.mxu0 %v3898
  %v3900 = vsub.f32 %v2341, %v2341
  %v3901 = vand.u32 %v3900, 4294901760
  %3902 = vmatpush1.msra.mxu0 %v3901
  %v3903 = vsub.f32 %v2344, %v2344
  %v3904 = vand.u32 %v3903, 4294901760
  %3905 = vmatprep.subr.mxu0 %v3904
  %v3906 = vsub.f32 %v2343, %v2343
  %v3907 = vand.u32 %v3906, 4294901760
  %3908 = vmatpush1.msra.mxu0 %v3907
  %v3909 = vsub.f32 %v2346, %v2346
  %v3910 = vand.u32 %v3909, 4294901760
  %3911 = vmatprep.subr.mxu0 %v3910
  %v3912 = vsub.f32 %v2345, %v2345
  %v3913 = vand.u32 %v3912, 4294901760
  %3914 = vmatpush1.msra.mxu0 %v3913
  %v3915 = vsub.f32 %v2348, %v2348
  %v3916 = vand.u32 %v3915, 4294901760
  %3917 = vmatprep.subr.mxu0 %v3916
  %v3918 = vsub.f32 %v2347, %v2347
  %v3919 = vand.u32 %v3918, 4294901760
  %3920 = vmatpush1.msra.mxu0 %v3919
  %v3921 = vand.u32 %v2154, 4294901760
  %3922 = vmatprep.mubr.f32.mxu0 %v3921
  %v3923 = vand.u32 %v2153, 4294901760
  %3924 = vmatmul.mubr.f32.gmra.mrb[0].mxu0 %v3923
  %v3925 = vpop.f32.mrb[0].mxu0
  %v3926 = vadd.f32 %v3545, %v3925
  %v3927 = vpop.f32.mrb[0].mxu0
  %v3928 = vadd.f32 %v3547, %v3927
  %v3929 = vand.u32 %v2158, 4294901760
  %3930 = vmatprep.mubr.f32.mxu0 %v3929
  %v3931 = vand.u32 %v2157, 4294901760
  %3932 = vmatmul.mubr.f32.gmra.mrb[0].mxu0 %v3931
  %v3933 = vpop.f32.mrb[0].mxu0
  %v3934 = vadd.f32 %v3557, %v3933
  %v3935 = vpop.f32.mrb[0].mxu0
  %v3936 = vadd.f32 %v3559, %v3935
  %v3937 = vand.u32 %v2162, 4294901760
  %3938 = vmatprep.mubr.f32.mxu0 %v3937
  %v3939 = vand.u32 %v2161, 4294901760
  %3940 = vmatmul.mubr.f32.gmra.mrb[0].mxu0 %v3939
  %v3941 = vpop.f32.mrb[0].mxu0
  %v3942 = vadd.f32 %v3569, %v3941
  %v3943 = vpop.f32.mrb[0].mxu0
  %v3944 = vadd.f32 %v3571, %v3943
  %v3945 = vand.u32 %v2166, 4294901760
  %3946 = vmatprep.mubr.f32.mxu0 %v3945
  %v3947 = vand.u32 %v2165, 4294901760
  %3948 = vmatmul.mubr.f32.gmra.mrb[0].mxu0 %v3947
  %v3949 = vpop.f32.mrb[0].mxu0
  %v3950 = vadd.f32 %v3581, %v3949
  %v3951 = vpop.f32.mrb[0].mxu0
  %v3952 = vadd.f32 %v3583, %v3951
  %v3953 = vand.u32 %v2170, 4294901760
  %3954 = vmatprep.mubr.f32.mxu0 %v3953
  %v3955 = vand.u32 %v2169, 4294901760
  %3956 = vmatmul.mubr.f32.gmra.mrb[0].mxu0 %v3955
  %v3957 = vpop.f32.mrb[0].mxu0
  %v3958 = vadd.f32 %v3593, %v3957
  %v3959 = vpop.f32.mrb[0].mxu0
  %v3960 = vadd.f32 %v3595, %v3959
  %v3961 = vand.u32 %v2174, 4294901760
  %3962 = vmatprep.mubr.f32.mxu0 %v3961
  %v3963 = vand.u32 %v2173, 4294901760
  %3964 = vmatmul.mubr.f32.gmra.mrb[0].mxu0 %v3963
  %v3965 = vpop.f32.mrb[0].mxu0
  %v3966 = vadd.f32 %v3605, %v3965
  %v3967 = vpop.f32.mrb[0].mxu0
  %v3968 = vadd.f32 %v3607, %v3967
  %v3969 = vand.u32 %v2178, 4294901760
  %3970 = vmatprep.mubr.f32.mxu0 %v3969
  %v3971 = vand.u32 %v2177, 4294901760
  %3972 = vmatmul.mubr.f32.gmra.mrb[0].mxu0 %v3971
  %v3973 = vpop.f32.mrb[0].mxu0
  %v3974 = vadd.f32 %v3617, %v3973
  %v3975 = vpop.f32.mrb[0].mxu0
  %v3976 = vadd.f32 %v3619, %v3975
  %v3977 = vand.u32 %v2182, 4294901760
  %3978 = vmatprep.mubr.f32.mxu0 %v3977
  %v3979 = vand.u32 %v2181, 4294901760
  %3980 = vmatmul.mubr.f32.gmra.mrb[0].mxu0 %v3979
  %v3981 = vpop.f32.mrb[0].mxu0
  %v3982 = vadd.f32 %v3629, %v3981
  %v3983 = vpop.f32.mrb[0].mxu0
  %v3984 = vadd.f32 %v3631, %v3983
  %v3985 = vand.u32 %v2186, 4294901760
  %3986 = vmatprep.mubr.f32.mxu0 %v3985
  %v3987 = vand.u32 %v2185, 4294901760
  %3988 = vmatmul.mubr.f32.gmra.mrb[0].mxu0 %v3987
  %v3989 = vpop.f32.mrb[0].mxu0
  %v3990 = vadd.f32 %v3641, %v3989
  %v3991 = vpop.f32.mrb[0].mxu0
  %v3992 = vadd.f32 %v3643, %v3991
  %v3993 = vand.u32 %v2190, 4294901760
  %3994 = vmatprep.mubr.f32.mxu0 %v3993
  %v3995 = vand.u32 %v2189, 4294901760
  %3996 = vmatmul.mubr.f32.gmra.mrb[0].mxu0 %v3995
  %v3997 = vpop.f32.mrb[0].mxu0
  %v3998 = vadd.f32 %v3653, %v3997
  %v3999 = vpop.f32.mrb[0].mxu0
  %v4000 = vadd.f32 %v3655, %v3999
  %v4001 = vand.u32 %v2194, 4294901760
  %4002 = vmatprep.mubr.f32.mxu0 %v4001
  %v4003 = vand.u32 %v2193, 4294901760
  %4004 = vmatmul.mubr.f32.gmra.mrb[0].mxu0 %v4003
  %v4005 = vpop.f32.mrb[0].mxu0
  %v4006 = vadd.f32 %v3665, %v4005
  %v4007 = vpop.f32.mrb[0].mxu0
  %v4008 = vadd.f32 %v3667, %v4007
  %v4009 = vand.u32 %v2198, 4294901760
  %4010 = vmatprep.mubr.f32.mxu0 %v4009
  %v4011 = vand.u32 %v2197, 4294901760
  %4012 = vmatmul.mubr.f32.gmra.mrb[0].mxu0 %v4011
  %v4013 = vpop.f32.mrb[0].mxu0
  %v4014 = vadd.f32 %v3677, %v4013
  %v4015 = vpop.f32.mrb[0].mxu0
  %v4016 = vadd.f32 %v3679, %v4015
  %v4017 = vand.u32 %v2202, 4294901760
  %4018 = vmatprep.mubr.f32.mxu0 %v4017
  %v4019 = vand.u32 %v2201, 4294901760
  %4020 = vmatmul.mubr.f32.gmra.mrb[0].mxu0 %v4019
  %v4021 = vpop.f32.mrb[0].mxu0
  %v4022 = vadd.f32 %v3689, %v4021
  %v4023 = vpop.f32.mrb[0].mxu0
  %v4024 = vadd.f32 %v3691, %v4023
  %v4025 = vand.u32 %v2206, 4294901760
  %4026 = vmatprep.mubr.f32.mxu0 %v4025
  %v4027 = vand.u32 %v2205, 4294901760
  %4028 = vmatmul.mubr.f32.gmra.mrb[0].mxu0 %v4027
  %v4029 = vpop.f32.mrb[0].mxu0
  %v4030 = vadd.f32 %v3701, %v4029
  %v4031 = vpop.f32.mrb[0].mxu0
  %v4032 = vadd.f32 %v3703, %v4031
  %v4033 = vand.u32 %v2210, 4294901760
  %4034 = vmatprep.mubr.f32.mxu0 %v4033
  %v4035 = vand.u32 %v2209, 4294901760
  %4036 = vmatmul.mubr.f32.gmra.mrb[0].mxu0 %v4035
  %v4037 = vpop.f32.mrb[0].mxu0
  %v4038 = vadd.f32 %v3713, %v4037
  %v4039 = vpop.f32.mrb[0].mxu0
  %v4040 = vadd.f32 %v3715, %v4039
  %v4041 = vand.u32 %v2214, 4294901760
  %4042 = vmatprep.mubr.f32.mxu0 %v4041
  %v4043 = vand.u32 %v2213, 4294901760
  %4044 = vmatmul.mubr.f32.gmra.mrb[0].mxu0 %v4043
  %v4045 = vpop.f32.mrb[0].mxu0
  %v4046 = vadd.f32 %v3725, %v4045
  %v4047 = vpop.f32.mrb[0].mxu0
  %v4048 = vadd.f32 %v3727, %v4047
  %4049 = vdwg.mxu0
  %4050 = vmatprep.subr.mxu0 %v2286
  %4051 = vmatpush1.msra.mxu0 %v2285
  %4052 = vmatprep.subr.mxu0 %v2288
  %4053 = vmatpush1.msra.mxu0 %v2287
  %4054 = vmatprep.subr.mxu0 %v2290
  %4055 = vmatpush1.msra.mxu0 %v2289
  %4056 = vmatprep.subr.mxu0 %v2292
  %4057 = vmatpush1.msra.mxu0 %v2291
  %4058 = vmatprep.subr.mxu0 %v2294
  %4059 = vmatpush1.msra.mxu0 %v2293
  %4060 = vmatprep.subr.mxu0 %v2296
  %4061 = vmatpush1.msra.mxu0 %v2295
  %4062 = vmatprep.subr.mxu0 %v2298
  %4063 = vmatpush1.msra.mxu0 %v2297
  %4064 = vmatprep.subr.mxu0 %v2300
  %4065 = vmatpush1.msra.mxu0 %v2299
  %4066 = vmatprep.subr.mxu0 %v2302
  %4067 = vmatpush1.msra.mxu0 %v2301
  %4068 = vmatprep.subr.mxu0 %v2304
  %4069 = vmatpush1.msra.mxu0 %v2303
  %4070 = vmatprep.subr.mxu0 %v2306
  %4071 = vmatpush1.msra.mxu0 %v2305
  %4072 = vmatprep.subr.mxu0 %v2308
  %4073 = vmatpush1.msra.mxu0 %v2307
  %4074 = vmatprep.subr.mxu0 %v2310
  %4075 = vmatpush1.msra.mxu0 %v2309
  %4076 = vmatprep.subr.mxu0 %v2312
  %4077 = vmatpush1.msra.mxu0 %v2311
  %4078 = vmatprep.subr.mxu0 %v2314
  %4079 = vmatpush1.msra.mxu0 %v2313
  %4080 = vmatprep.subr.mxu0 %v2316
  %4081 = vmatpush1.msra.mxu0 %v2315
  %4082 = vmatprep.subr.mxu0 %v2318
  %4083 = vmatpush1.msra.mxu0 %v2317
  %4084 = vmatprep.subr.mxu0 %v2320
  %4085 = vmatpush1.msra.mxu0 %v2319
  %4086 = vmatprep.subr.mxu0 %v2322
  %4087 = vmatpush1.msra.mxu0 %v2321
  %4088 = vmatprep.subr.mxu0 %v2324
  %4089 = vmatpush1.msra.mxu0 %v2323
  %4090 = vmatprep.subr.mxu0 %v2326
  %4091 = vmatpush1.msra.mxu0 %v2325
  %4092 = vmatprep.subr.mxu0 %v2328
  %4093 = vmatpush1.msra.mxu0 %v2327
  %4094 = vmatprep.subr.mxu0 %v2330
  %4095 = vmatpush1.msra.mxu0 %v2329
  %4096 = vmatprep.subr.mxu0 %v2332
  %4097 = vmatpush1.msra.mxu0 %v2331
  %4098 = vmatprep.subr.mxu0 %v2334
  %4099 = vmatpush1.msra.mxu0 %v2333
  %4100 = vmatprep.subr.mxu0 %v2336
  %4101 = vmatpush1.msra.mxu0 %v2335
  %4102 = vmatprep.subr.mxu0 %v2338
  %4103 = vmatpush1.msra.mxu0 %v2337
  %4104 = vmatprep.subr.mxu0 %v2340
  %4105 = vmatpush1.msra.mxu0 %v2339
  %4106 = vmatprep.subr.mxu0 %v2342
  %4107 = vmatpush1.msra.mxu0 %v2341
  %4108 = vmatprep.subr.mxu0 %v2344
  %4109 = vmatpush1.msra.mxu0 %v2343
  %4110 = vmatprep.subr.mxu0 %v2346
  %4111 = vmatpush1.msra.mxu0 %v2345
  %4112 = vmatprep.subr.mxu0 %v2348
  %4113 = vmatpush1.msra.mxu0 %v2347
  %v4114 = vand.u32 %v2154, 4294901760
  %4115 = vmatprep.mubr.f32.mxu0 %v4114
  %v4116 = vand.u32 %v2153, 4294901760
  %4117 = vmatmul.mubr.f32.gmra.mrb[0].mxu0 %v4116
  %v4118 = vpop.f32.mrb[0].mxu0
  %v4119 = vadd.f32 %v3926, %v4118
  %v4120 = vpop.f32.mrb[0].mxu0
  %v4121 = vadd.f32 %v3928, %v4120
  %v4122 = vand.u32 %v2158, 4294901760
  %4123 = vmatprep.mubr.f32.mxu0 %v4122
  %v4124 = vand.u32 %v2157, 4294901760
  %4125 = vmatmul.mubr.f32.gmra.mrb[0].mxu0 %v4124
  %v4126 = vpop.f32.mrb[0].mxu0
  %v4127 = vadd.f32 %v3934, %v4126
  %v4128 = vpop.f32.mrb[0].mxu0
  %v4129 = vadd.f32 %v3936, %v4128
  %v4130 = vand.u32 %v2162, 4294901760
  %4131 = vmatprep.mubr.f32.mxu0 %v4130
  %v4132 = vand.u32 %v2161, 4294901760
  %4133 = vmatmul.mubr.f32.gmra.mrb[0].mxu0 %v4132
  %v4134 = vpop.f32.mrb[0].mxu0
  %v4135 = vadd.f32 %v3942, %v4134
  %v4136 = vpop.f32.mrb[0].mxu0
  %v4137 = vadd.f32 %v3944, %v4136
  %v4138 = vand.u32 %v2166, 4294901760
  %4139 = vmatprep.mubr.f32.mxu0 %v4138
  %v4140 = vand.u32 %v2165, 4294901760
  %4141 = vmatmul.mubr.f32.gmra.mrb[0].mxu0 %v4140
  %v4142 = vpop.f32.mrb[0].mxu0
  %v4143 = vadd.f32 %v3950, %v4142
  %v4144 = vpop.f32.mrb[0].mxu0
  %v4145 = vadd.f32 %v3952, %v4144
  %v4146 = vand.u32 %v2170, 4294901760
  %4147 = vmatprep.mubr.f32.mxu0 %v4146
  %v4148 = vand.u32 %v2169, 4294901760
  %4149 = vmatmul.mubr.f32.gmra.mrb[0].mxu0 %v4148
  %v4150 = vpop.f32.mrb[0].mxu0
  %v4151 = vadd.f32 %v3958, %v4150
  %v4152 = vpop.f32.mrb[0].mxu0
  %v4153 = vadd.f32 %v3960, %v4152
  %v4154 = vand.u32 %v2174, 4294901760
  %4155 = vmatprep.mubr.f32.mxu0 %v4154
  %v4156 = vand.u32 %v2173, 4294901760
  %4157 = vmatmul.mubr.f32.gmra.mrb[0].mxu0 %v4156
  %v4158 = vpop.f32.mrb[0].mxu0
  %v4159 = vadd.f32 %v3966, %v4158
  %v4160 = vpop.f32.mrb[0].mxu0
  %v4161 = vadd.f32 %v3968, %v4160
  %v4162 = vand.u32 %v2178, 4294901760
  %4163 = vmatprep.mubr.f32.mxu0 %v4162
  %v4164 = vand.u32 %v2177, 4294901760
  %4165 = vmatmul.mubr.f32.gmra.mrb[0].mxu0 %v4164
  %v4166 = vpop.f32.mrb[0].mxu0
  %v4167 = vadd.f32 %v3974, %v4166
  %v4168 = vpop.f32.mrb[0].mxu0
  %v4169 = vadd.f32 %v3976, %v4168
  %v4170 = vand.u32 %v2182, 4294901760
  %4171 = vmatprep.mubr.f32.mxu0 %v4170
  %v4172 = vand.u32 %v2181, 4294901760
  %4173 = vmatmul.mubr.f32.gmra.mrb[0].mxu0 %v4172
  %v4174 = vpop.f32.mrb[0].mxu0
  %v4175 = vadd.f32 %v3982, %v4174
  %v4176 = vpop.f32.mrb[0].mxu0
  %v4177 = vadd.f32 %v3984, %v4176
  %v4178 = vand.u32 %v2186, 4294901760
  %4179 = vmatprep.mubr.f32.mxu0 %v4178
  %v4180 = vand.u32 %v2185, 4294901760
  %4181 = vmatmul.mubr.f32.gmra.mrb[0].mxu0 %v4180
  %v4182 = vpop.f32.mrb[0].mxu0
  %v4183 = vadd.f32 %v3990, %v4182
  %v4184 = vpop.f32.mrb[0].mxu0
  %v4185 = vadd.f32 %v3992, %v4184
  %v4186 = vand.u32 %v2190, 4294901760
  %4187 = vmatprep.mubr.f32.mxu0 %v4186
  %v4188 = vand.u32 %v2189, 4294901760
  %4189 = vmatmul.mubr.f32.gmra.mrb[0].mxu0 %v4188
  %v4190 = vpop.f32.mrb[0].mxu0
  %v4191 = vadd.f32 %v3998, %v4190
  %v4192 = vpop.f32.mrb[0].mxu0
  %v4193 = vadd.f32 %v4000, %v4192
  %v4194 = vand.u32 %v2194, 4294901760
  %4195 = vmatprep.mubr.f32.mxu0 %v4194
  %v4196 = vand.u32 %v2193, 4294901760
  %4197 = vmatmul.mubr.f32.gmra.mrb[0].mxu0 %v4196
  %v4198 = vpop.f32.mrb[0].mxu0
  %v4199 = vadd.f32 %v4006, %v4198
  %v4200 = vpop.f32.mrb[0].mxu0
  %v4201 = vadd.f32 %v4008, %v4200
  %v4202 = vand.u32 %v2198, 4294901760
  %4203 = vmatprep.mubr.f32.mxu0 %v4202
  %v4204 = vand.u32 %v2197, 4294901760
  %4205 = vmatmul.mubr.f32.gmra.mrb[0].mxu0 %v4204
  %v4206 = vpop.f32.mrb[0].mxu0
  %v4207 = vadd.f32 %v4014, %v4206
  %v4208 = vpop.f32.mrb[0].mxu0
  %v4209 = vadd.f32 %v4016, %v4208
  %v4210 = vand.u32 %v2202, 4294901760
  %4211 = vmatprep.mubr.f32.mxu0 %v4210
  %v4212 = vand.u32 %v2201, 4294901760
  %4213 = vmatmul.mubr.f32.gmra.mrb[0].mxu0 %v4212
  %v4214 = vpop.f32.mrb[0].mxu0
  %v4215 = vadd.f32 %v4022, %v4214
  %v4216 = vpop.f32.mrb[0].mxu0
  %v4217 = vadd.f32 %v4024, %v4216
  %v4218 = vand.u32 %v2206, 4294901760
  %4219 = vmatprep.mubr.f32.mxu0 %v4218
  %v4220 = vand.u32 %v2205, 4294901760
  %4221 = vmatmul.mubr.f32.gmra.mrb[0].mxu0 %v4220
  %v4222 = vpop.f32.mrb[0].mxu0
  %v4223 = vadd.f32 %v4030, %v4222
  %v4224 = vpop.f32.mrb[0].mxu0
  %v4225 = vadd.f32 %v4032, %v4224
  %v4226 = vand.u32 %v2210, 4294901760
  %4227 = vmatprep.mubr.f32.mxu0 %v4226
  %v4228 = vand.u32 %v2209, 4294901760
  %4229 = vmatmul.mubr.f32.gmra.mrb[0].mxu0 %v4228
  %v4230 = vpop.f32.mrb[0].mxu0
  %v4231 = vadd.f32 %v4038, %v4230
  %v4232 = vpop.f32.mrb[0].mxu0
  %v4233 = vadd.f32 %v4040, %v4232
  %v4234 = vand.u32 %v2214, 4294901760
  %4235 = vmatprep.mubr.f32.mxu0 %v4234
  %v4236 = vand.u32 %v2213, 4294901760
  %4237 = vmatmul.mubr.f32.gmra.mrb[0].mxu0 %v4236
  %v4238 = vpop.f32.mrb[0].mxu0
  %v4239 = vadd.f32 %v4046, %v4238
  %v4240 = vpop.f32.mrb[0].mxu0
  %v4241 = vadd.f32 %v4048, %v4240
  %4242 = vdwg.mxu0
  %4243 = vmatprep.subr.mxu0 %v2350
  %4244 = vmatpush1.msra.mxu0 %v2349
  %4245 = vmatprep.subr.mxu0 %v2352
  %4246 = vmatpush1.msra.mxu0 %v2351
  %4247 = vmatprep.subr.mxu0 %v2354
  %4248 = vmatpush1.msra.mxu0 %v2353
  %4249 = vmatprep.subr.mxu0 %v2356
  %4250 = vmatpush1.msra.mxu0 %v2355
  %4251 = vmatprep.subr.mxu0 %v2358
  %4252 = vmatpush1.msra.mxu0 %v2357
  %4253 = vmatprep.subr.mxu0 %v2360
  %4254 = vmatpush1.msra.mxu0 %v2359
  %4255 = vmatprep.subr.mxu0 %v2362
  %4256 = vmatpush1.msra.mxu0 %v2361
  %4257 = vmatprep.subr.mxu0 %v2364
  %4258 = vmatpush1.msra.mxu0 %v2363
  %4259 = vmatprep.subr.mxu0 %v2366
  %4260 = vmatpush1.msra.mxu0 %v2365
  %4261 = vmatprep.subr.mxu0 %v2368
  %4262 = vmatpush1.msra.mxu0 %v2367
  %4263 = vmatprep.subr.mxu0 %v2370
  %4264 = vmatpush1.msra.mxu0 %v2369
  %4265 = vmatprep.subr.mxu0 %v2372
  %4266 = vmatpush1.msra.mxu0 %v2371
  %4267 = vmatprep.subr.mxu0 %v2374
  %4268 = vmatpush1.msra.mxu0 %v2373
  %4269 = vmatprep.subr.mxu0 %v2376
  %4270 = vmatpush1.msra.mxu0 %v2375
  %4271 = vmatprep.subr.mxu0 %v2378
  %4272 = vmatpush1.msra.mxu0 %v2377
  %4273 = vmatprep.subr.mxu0 %v2380
  %4274 = vmatpush1.msra.mxu0 %v2379
  %4275 = vmatprep.subr.mxu0 %v2382
  %4276 = vmatpush1.msra.mxu0 %v2381
  %4277 = vmatprep.subr.mxu0 %v2384
  %4278 = vmatpush1.msra.mxu0 %v2383
  %4279 = vmatprep.subr.mxu0 %v2386
  %4280 = vmatpush1.msra.mxu0 %v2385
  %4281 = vmatprep.subr.mxu0 %v2388
  %4282 = vmatpush1.msra.mxu0 %v2387
  %4283 = vmatprep.subr.mxu0 %v2390
  %4284 = vmatpush1.msra.mxu0 %v2389
  %4285 = vmatprep.subr.mxu0 %v2392
  %4286 = vmatpush1.msra.mxu0 %v2391
  %4287 = vmatprep.subr.mxu0 %v2394
  %4288 = vmatpush1.msra.mxu0 %v2393
  %4289 = vmatprep.subr.mxu0 %v2396
  %4290 = vmatpush1.msra.mxu0 %v2395
  %4291 = vmatprep.subr.mxu0 %v2398
  %4292 = vmatpush1.msra.mxu0 %v2397
  %4293 = vmatprep.subr.mxu0 %v2400
  %4294 = vmatpush1.msra.mxu0 %v2399
  %4295 = vmatprep.subr.mxu0 %v2402
  %4296 = vmatpush1.msra.mxu0 %v2401
  %4297 = vmatprep.subr.mxu0 %v2404
  %4298 = vmatpush1.msra.mxu0 %v2403
  %4299 = vmatprep.subr.mxu0 %v2406
  %4300 = vmatpush1.msra.mxu0 %v2405
  %4301 = vmatprep.subr.mxu0 %v2408
  %4302 = vmatpush1.msra.mxu0 %v2407
  %4303 = vmatprep.subr.mxu0 %v2410
  %4304 = vmatpush1.msra.mxu0 %v2409
  %4305 = vmatprep.subr.mxu0 %v2412
  %4306 = vmatpush1.msra.mxu0 %v2411
  %v4307 = vand.u32 %v2156, 4294901760
  %v4308 = vsub.f32 %v2156, %v4307
  %v4309 = vand.u32 %v4308, 4294901760
  %v4310 = vsub.f32 %v4308, %v4309
  %v4311 = vand.u32 %v4310, 4294901760
  %4312 = vmatprep.mubr.f32.mxu0 %v4311
  %v4313 = vand.u32 %v2155, 4294901760
  %v4314 = vsub.f32 %v2155, %v4313
  %v4315 = vand.u32 %v4314, 4294901760
  %v4316 = vsub.f32 %v4314, %v4315
  %v4317 = vand.u32 %v4316, 4294901760
  %4318 = vmatmul.mubr.f32.gmra.mrb[0].mxu0 %v4317
  %v4319 = vpop.f32.mrb[0].mxu0
  %v4320 = vadd.f32 %v4119, %v4319
  %v4321 = vpop.f32.mrb[0].mxu0
  %v4322 = vadd.f32 %v4121, %v4321
  %v4323 = vand.u32 %v2160, 4294901760
  %v4324 = vsub.f32 %v2160, %v4323
  %v4325 = vand.u32 %v4324, 4294901760
  %v4326 = vsub.f32 %v4324, %v4325
  %v4327 = vand.u32 %v4326, 4294901760
  %4328 = vmatprep.mubr.f32.mxu0 %v4327
  %v4329 = vand.u32 %v2159, 4294901760
  %v4330 = vsub.f32 %v2159, %v4329
  %v4331 = vand.u32 %v4330, 4294901760
  %v4332 = vsub.f32 %v4330, %v4331
  %v4333 = vand.u32 %v4332, 4294901760
  %4334 = vmatmul.mubr.f32.gmra.mrb[0].mxu0 %v4333
  %v4335 = vpop.f32.mrb[0].mxu0
  %v4336 = vadd.f32 %v4127, %v4335
  %v4337 = vpop.f32.mrb[0].mxu0
  %v4338 = vadd.f32 %v4129, %v4337
  %v4339 = vand.u32 %v2164, 4294901760
  %v4340 = vsub.f32 %v2164, %v4339
  %v4341 = vand.u32 %v4340, 4294901760
  %v4342 = vsub.f32 %v4340, %v4341
  %v4343 = vand.u32 %v4342, 4294901760
  %4344 = vmatprep.mubr.f32.mxu0 %v4343
  %v4345 = vand.u32 %v2163, 4294901760
  %v4346 = vsub.f32 %v2163, %v4345
  %v4347 = vand.u32 %v4346, 4294901760
  %v4348 = vsub.f32 %v4346, %v4347
  %v4349 = vand.u32 %v4348, 4294901760
  %4350 = vmatmul.mubr.f32.gmra.mrb[0].mxu0 %v4349
  %v4351 = vpop.f32.mrb[0].mxu0
  %v4352 = vadd.f32 %v4135, %v4351
  %v4353 = vpop.f32.mrb[0].mxu0
  %v4354 = vadd.f32 %v4137, %v4353
  %v4355 = vand.u32 %v2168, 4294901760
  %v4356 = vsub.f32 %v2168, %v4355
  %v4357 = vand.u32 %v4356, 4294901760
  %v4358 = vsub.f32 %v4356, %v4357
  %v4359 = vand.u32 %v4358, 4294901760
  %4360 = vmatprep.mubr.f32.mxu0 %v4359
  %v4361 = vand.u32 %v2167, 4294901760
  %v4362 = vsub.f32 %v2167, %v4361
  %v4363 = vand.u32 %v4362, 4294901760
  %v4364 = vsub.f32 %v4362, %v4363
  %v4365 = vand.u32 %v4364, 4294901760
  %4366 = vmatmul.mubr.f32.gmra.mrb[0].mxu0 %v4365
  %v4367 = vpop.f32.mrb[0].mxu0
  %v4368 = vadd.f32 %v4143, %v4367
  %v4369 = vpop.f32.mrb[0].mxu0
  %v4370 = vadd.f32 %v4145, %v4369
  %v4371 = vand.u32 %v2172, 4294901760
  %v4372 = vsub.f32 %v2172, %v4371
  %v4373 = vand.u32 %v4372, 4294901760
  %v4374 = vsub.f32 %v4372, %v4373
  %v4375 = vand.u32 %v4374, 4294901760
  %4376 = vmatprep.mubr.f32.mxu0 %v4375
  %v4377 = vand.u32 %v2171, 4294901760
  %v4378 = vsub.f32 %v2171, %v4377
  %v4379 = vand.u32 %v4378, 4294901760
  %v4380 = vsub.f32 %v4378, %v4379
  %v4381 = vand.u32 %v4380, 4294901760
  %4382 = vmatmul.mubr.f32.gmra.mrb[0].mxu0 %v4381
  %v4383 = vpop.f32.mrb[0].mxu0
  %v4384 = vadd.f32 %v4151, %v4383
  %v4385 = vpop.f32.mrb[0].mxu0
  %v4386 = vadd.f32 %v4153, %v4385
  %v4387 = vand.u32 %v2176, 4294901760
  %v4388 = vsub.f32 %v2176, %v4387
  %v4389 = vand.u32 %v4388, 4294901760
  %v4390 = vsub.f32 %v4388, %v4389
  %v4391 = vand.u32 %v4390, 4294901760
  %4392 = vmatprep.mubr.f32.mxu0 %v4391
  %v4393 = vand.u32 %v2175, 4294901760
  %v4394 = vsub.f32 %v2175, %v4393
  %v4395 = vand.u32 %v4394, 4294901760
  %v4396 = vsub.f32 %v4394, %v4395
  %v4397 = vand.u32 %v4396, 4294901760
  %4398 = vmatmul.mubr.f32.gmra.mrb[0].mxu0 %v4397
  %v4399 = vpop.f32.mrb[0].mxu0
  %v4400 = vadd.f32 %v4159, %v4399
  %v4401 = vpop.f32.mrb[0].mxu0
  %v4402 = vadd.f32 %v4161, %v4401
  %v4403 = vand.u32 %v2180, 4294901760
  %v4404 = vsub.f32 %v2180, %v4403
  %v4405 = vand.u32 %v4404, 4294901760
  %v4406 = vsub.f32 %v4404, %v4405
  %v4407 = vand.u32 %v4406, 4294901760
  %4408 = vmatprep.mubr.f32.mxu0 %v4407
  %v4409 = vand.u32 %v2179, 4294901760
  %v4410 = vsub.f32 %v2179, %v4409
  %v4411 = vand.u32 %v4410, 4294901760
  %v4412 = vsub.f32 %v4410, %v4411
  %v4413 = vand.u32 %v4412, 4294901760
  %4414 = vmatmul.mubr.f32.gmra.mrb[0].mxu0 %v4413
  %v4415 = vpop.f32.mrb[0].mxu0
  %v4416 = vadd.f32 %v4167, %v4415
  %v4417 = vpop.f32.mrb[0].mxu0
  %v4418 = vadd.f32 %v4169, %v4417
  %v4419 = vand.u32 %v2184, 4294901760
  %v4420 = vsub.f32 %v2184, %v4419
  %v4421 = vand.u32 %v4420, 4294901760
  %v4422 = vsub.f32 %v4420, %v4421
  %v4423 = vand.u32 %v4422, 4294901760
  %4424 = vmatprep.mubr.f32.mxu0 %v4423
  %v4425 = vand.u32 %v2183, 4294901760
  %v4426 = vsub.f32 %v2183, %v4425
  %v4427 = vand.u32 %v4426, 4294901760
  %v4428 = vsub.f32 %v4426, %v4427
  %v4429 = vand.u32 %v4428, 4294901760
  %4430 = vmatmul.mubr.f32.gmra.mrb[0].mxu0 %v4429
  %v4431 = vpop.f32.mrb[0].mxu0
  %v4432 = vadd.f32 %v4175, %v4431
  %v4433 = vpop.f32.mrb[0].mxu0
  %v4434 = vadd.f32 %v4177, %v4433
  %v4435 = vand.u32 %v2188, 4294901760
  %v4436 = vsub.f32 %v2188, %v4435
  %v4437 = vand.u32 %v4436, 4294901760
  %v4438 = vsub.f32 %v4436, %v4437
  %v4439 = vand.u32 %v4438, 4294901760
  %4440 = vmatprep.mubr.f32.mxu0 %v4439
  %v4441 = vand.u32 %v2187, 4294901760
  %v4442 = vsub.f32 %v2187, %v4441
  %v4443 = vand.u32 %v4442, 4294901760
  %v4444 = vsub.f32 %v4442, %v4443
  %v4445 = vand.u32 %v4444, 4294901760
  %4446 = vmatmul.mubr.f32.gmra.mrb[0].mxu0 %v4445
  %v4447 = vpop.f32.mrb[0].mxu0
  %v4448 = vadd.f32 %v4183, %v4447
  %v4449 = vpop.f32.mrb[0].mxu0
  %v4450 = vadd.f32 %v4185, %v4449
  %v4451 = vand.u32 %v2192, 4294901760
  %v4452 = vsub.f32 %v2192, %v4451
  %v4453 = vand.u32 %v4452, 4294901760
  %v4454 = vsub.f32 %v4452, %v4453
  %v4455 = vand.u32 %v4454, 4294901760
  %4456 = vmatprep.mubr.f32.mxu0 %v4455
  %v4457 = vand.u32 %v2191, 4294901760
  %v4458 = vsub.f32 %v2191, %v4457
  %v4459 = vand.u32 %v4458, 4294901760
  %v4460 = vsub.f32 %v4458, %v4459
  %v4461 = vand.u32 %v4460, 4294901760
  %4462 = vmatmul.mubr.f32.gmra.mrb[0].mxu0 %v4461
  %v4463 = vpop.f32.mrb[0].mxu0
  %v4464 = vadd.f32 %v4191, %v4463
  %v4465 = vpop.f32.mrb[0].mxu0
  %v4466 = vadd.f32 %v4193, %v4465
  %v4467 = vand.u32 %v2196, 4294901760
  %v4468 = vsub.f32 %v2196, %v4467
  %v4469 = vand.u32 %v4468, 4294901760
  %v4470 = vsub.f32 %v4468, %v4469
  %v4471 = vand.u32 %v4470, 4294901760
  %4472 = vmatprep.mubr.f32.mxu0 %v4471
  %v4473 = vand.u32 %v2195, 4294901760
  %v4474 = vsub.f32 %v2195, %v4473
  %v4475 = vand.u32 %v4474, 4294901760
  %v4476 = vsub.f32 %v4474, %v4475
  %v4477 = vand.u32 %v4476, 4294901760
  %4478 = vmatmul.mubr.f32.gmra.mrb[0].mxu0 %v4477
  %v4479 = vpop.f32.mrb[0].mxu0
  %v4480 = vadd.f32 %v4199, %v4479
  %v4481 = vpop.f32.mrb[0].mxu0
  %v4482 = vadd.f32 %v4201, %v4481
  %v4483 = vand.u32 %v2200, 4294901760
  %v4484 = vsub.f32 %v2200, %v4483
  %v4485 = vand.u32 %v4484, 4294901760
  %v4486 = vsub.f32 %v4484, %v4485
  %v4487 = vand.u32 %v4486, 4294901760
  %4488 = vmatprep.mubr.f32.mxu0 %v4487
  %v4489 = vand.u32 %v2199, 4294901760
  %v4490 = vsub.f32 %v2199, %v4489
  %v4491 = vand.u32 %v4490, 4294901760
  %v4492 = vsub.f32 %v4490, %v4491
  %v4493 = vand.u32 %v4492, 4294901760
  %4494 = vmatmul.mubr.f32.gmra.mrb[0].mxu0 %v4493
  %v4495 = vpop.f32.mrb[0].mxu0
  %v4496 = vadd.f32 %v4207, %v4495
  %v4497 = vpop.f32.mrb[0].mxu0
  %v4498 = vadd.f32 %v4209, %v4497
  %v4499 = vand.u32 %v2204, 4294901760
  %v4500 = vsub.f32 %v2204, %v4499
  %v4501 = vand.u32 %v4500, 4294901760
  %v4502 = vsub.f32 %v4500, %v4501
  %v4503 = vand.u32 %v4502, 4294901760
  %4504 = vmatprep.mubr.f32.mxu0 %v4503
  %v4505 = vand.u32 %v2203, 4294901760
  %v4506 = vsub.f32 %v2203, %v4505
  %v4507 = vand.u32 %v4506, 4294901760
  %v4508 = vsub.f32 %v4506, %v4507
  %v4509 = vand.u32 %v4508, 4294901760
  %4510 = vmatmul.mubr.f32.gmra.mrb[0].mxu0 %v4509
  %v4511 = vpop.f32.mrb[0].mxu0
  %v4512 = vadd.f32 %v4215, %v4511
  %v4513 = vpop.f32.mrb[0].mxu0
  %v4514 = vadd.f32 %v4217, %v4513
  %v4515 = vand.u32 %v2208, 4294901760
  %v4516 = vsub.f32 %v2208, %v4515
  %v4517 = vand.u32 %v4516, 4294901760
  %v4518 = vsub.f32 %v4516, %v4517
  %v4519 = vand.u32 %v4518, 4294901760
  %4520 = vmatprep.mubr.f32.mxu0 %v4519
  %v4521 = vand.u32 %v2207, 4294901760
  %v4522 = vsub.f32 %v2207, %v4521
  %v4523 = vand.u32 %v4522, 4294901760
  %v4524 = vsub.f32 %v4522, %v4523
  %v4525 = vand.u32 %v4524, 4294901760
  %4526 = vmatmul.mubr.f32.gmra.mrb[0].mxu0 %v4525
  %v4527 = vpop.f32.mrb[0].mxu0
  %v4528 = vadd.f32 %v4223, %v4527
  %v4529 = vpop.f32.mrb[0].mxu0
  %v4530 = vadd.f32 %v4225, %v4529
  %v4531 = vand.u32 %v2212, 4294901760
  %v4532 = vsub.f32 %v2212, %v4531
  %v4533 = vand.u32 %v4532, 4294901760
  %v4534 = vsub.f32 %v4532, %v4533
  %v4535 = vand.u32 %v4534, 4294901760
  %4536 = vmatprep.mubr.f32.mxu0 %v4535
  %v4537 = vand.u32 %v2211, 4294901760
  %v4538 = vsub.f32 %v2211, %v4537
  %v4539 = vand.u32 %v4538, 4294901760
  %v4540 = vsub.f32 %v4538, %v4539
  %v4541 = vand.u32 %v4540, 4294901760
  %4542 = vmatmul.mubr.f32.gmra.mrb[0].mxu0 %v4541
  %v4543 = vpop.f32.mrb[0].mxu0
  %v4544 = vadd.f32 %v4231, %v4543
  %v4545 = vpop.f32.mrb[0].mxu0
  %v4546 = vadd.f32 %v4233, %v4545
  %v4547 = vand.u32 %v2216, 4294901760
  %v4548 = vsub.f32 %v2216, %v4547
  %v4549 = vand.u32 %v4548, 4294901760
  %v4550 = vsub.f32 %v4548, %v4549
  %v4551 = vand.u32 %v4550, 4294901760
  %4552 = vmatprep.mubr.f32.mxu0 %v4551
  %v4553 = vand.u32 %v2215, 4294901760
  %v4554 = vsub.f32 %v2215, %v4553
  %v4555 = vand.u32 %v4554, 4294901760
  %v4556 = vsub.f32 %v4554, %v4555
  %v4557 = vand.u32 %v4556, 4294901760
  %4558 = vmatmul.mubr.f32.gmra.mrb[0].mxu0 %v4557
  %v4559 = vpop.f32.mrb[0].mxu0
  %v4560 = vadd.f32 %v4239, %v4559
  %v4561 = vpop.f32.mrb[0].mxu0
  %v4562 = vadd.f32 %v4241, %v4561
  %4563 = vdwg.mxu0
  %v4564 = vsub.f32 %v2350, %v2350
  %v4565 = vand.u32 %v4564, 4294901760
  %v4566 = vsub.f32 %v4564, %v4565
  %v4567 = vand.u32 %v4566, 4294901760
  %4568 = vmatprep.subr.mxu0 %v4567
  %v4569 = vsub.f32 %v2349, %v2349
  %v4570 = vand.u32 %v4569, 4294901760
  %v4571 = vsub.f32 %v4569, %v4570
  %v4572 = vand.u32 %v4571, 4294901760
  %4573 = vmatpush1.msra.mxu0 %v4572
  %v4574 = vsub.f32 %v2352, %v2352
  %v4575 = vand.u32 %v4574, 4294901760
  %v4576 = vsub.f32 %v4574, %v4575
  %v4577 = vand.u32 %v4576, 4294901760
  %4578 = vmatprep.subr.mxu0 %v4577
  %v4579 = vsub.f32 %v2351, %v2351
  %v4580 = vand.u32 %v4579, 4294901760
  %v4581 = vsub.f32 %v4579, %v4580
  %v4582 = vand.u32 %v4581, 4294901760
  %4583 = vmatpush1.msra.mxu0 %v4582
  %v4584 = vsub.f32 %v2354, %v2354
  %v4585 = vand.u32 %v4584, 4294901760
  %v4586 = vsub.f32 %v4584, %v4585
  %v4587 = vand.u32 %v4586, 4294901760
  %4588 = vmatprep.subr.mxu0 %v4587
  %v4589 = vsub.f32 %v2353, %v2353
  %v4590 = vand.u32 %v4589, 4294901760
  %v4591 = vsub.f32 %v4589, %v4590
  %v4592 = vand.u32 %v4591, 4294901760
  %4593 = vmatpush1.msra.mxu0 %v4592
  %v4594 = vsub.f32 %v2356, %v2356
  %v4595 = vand.u32 %v4594, 4294901760
  %v4596 = vsub.f32 %v4594, %v4595
  %v4597 = vand.u32 %v4596, 4294901760
  %4598 = vmatprep.subr.mxu0 %v4597
  %v4599 = vsub.f32 %v2355, %v2355
  %v4600 = vand.u32 %v4599, 4294901760
  %v4601 = vsub.f32 %v4599, %v4600
  %v4602 = vand.u32 %v4601, 4294901760
  %4603 = vmatpush1.msra.mxu0 %v4602
  %v4604 = vsub.f32 %v2358, %v2358
  %v4605 = vand.u32 %v4604, 4294901760
  %v4606 = vsub.f32 %v4604, %v4605
  %v4607 = vand.u32 %v4606, 4294901760
  %4608 = vmatprep.subr.mxu0 %v4607
  %v4609 = vsub.f32 %v2357, %v2357
  %v4610 = vand.u32 %v4609, 4294901760
  %v4611 = vsub.f32 %v4609, %v4610
  %v4612 = vand.u32 %v4611, 4294901760
  %4613 = vmatpush1.msra.mxu0 %v4612
  %v4614 = vsub.f32 %v2360, %v2360
  %v4615 = vand.u32 %v4614, 4294901760
  %v4616 = vsub.f32 %v4614, %v4615
  %v4617 = vand.u32 %v4616, 4294901760
  %4618 = vmatprep.subr.mxu0 %v4617
  %v4619 = vsub.f32 %v2359, %v2359
  %v4620 = vand.u32 %v4619, 4294901760
  %v4621 = vsub.f32 %v4619, %v4620
  %v4622 = vand.u32 %v4621, 4294901760
  %4623 = vmatpush1.msra.mxu0 %v4622
  %v4624 = vsub.f32 %v2362, %v2362
  %v4625 = vand.u32 %v4624, 4294901760
  %v4626 = vsub.f32 %v4624, %v4625
  %v4627 = vand.u32 %v4626, 4294901760
  %4628 = vmatprep.subr.mxu0 %v4627
  %v4629 = vsub.f32 %v2361, %v2361
  %v4630 = vand.u32 %v4629, 4294901760
  %v4631 = vsub.f32 %v4629, %v4630
  %v4632 = vand.u32 %v4631, 4294901760
  %4633 = vmatpush1.msra.mxu0 %v4632
  %v4634 = vsub.f32 %v2364, %v2364
  %v4635 = vand.u32 %v4634, 4294901760
  %v4636 = vsub.f32 %v4634, %v4635
  %v4637 = vand.u32 %v4636, 4294901760
  %4638 = vmatprep.subr.mxu0 %v4637
  %v4639 = vsub.f32 %v2363, %v2363
  %v4640 = vand.u32 %v4639, 4294901760
  %v4641 = vsub.f32 %v4639, %v4640
  %v4642 = vand.u32 %v4641, 4294901760
  %4643 = vmatpush1.msra.mxu0 %v4642
  %v4644 = vsub.f32 %v2366, %v2366
  %v4645 = vand.u32 %v4644, 4294901760
  %v4646 = vsub.f32 %v4644, %v4645
  %v4647 = vand.u32 %v4646, 4294901760
  %4648 = vmatprep.subr.mxu0 %v4647
  %v4649 = vsub.f32 %v2365, %v2365
  %v4650 = vand.u32 %v4649, 4294901760
  %v4651 = vsub.f32 %v4649, %v4650
  %v4652 = vand.u32 %v4651, 4294901760
  %4653 = vmatpush1.msra.mxu0 %v4652
  %v4654 = vsub.f32 %v2368, %v2368
  %v4655 = vand.u32 %v4654, 4294901760
  %v4656 = vsub.f32 %v4654, %v4655
  %v4657 = vand.u32 %v4656, 4294901760
  %4658 = vmatprep.subr.mxu0 %v4657
  %v4659 = vsub.f32 %v2367, %v2367
  %v4660 = vand.u32 %v4659, 4294901760
  %v4661 = vsub.f32 %v4659, %v4660
  %v4662 = vand.u32 %v4661, 4294901760
  %4663 = vmatpush1.msra.mxu0 %v4662
  %v4664 = vsub.f32 %v2370, %v2370
  %v4665 = vand.u32 %v4664, 4294901760
  %v4666 = vsub.f32 %v4664, %v4665
  %v4667 = vand.u32 %v4666, 4294901760
  %4668 = vmatprep.subr.mxu0 %v4667
  %v4669 = vsub.f32 %v2369, %v2369
  %v4670 = vand.u32 %v4669, 4294901760
  %v4671 = vsub.f32 %v4669, %v4670
  %v4672 = vand.u32 %v4671, 4294901760
  %4673 = vmatpush1.msra.mxu0 %v4672
  %v4674 = vsub.f32 %v2372, %v2372
  %v4675 = vand.u32 %v4674, 4294901760
  %v4676 = vsub.f32 %v4674, %v4675
  %v4677 = vand.u32 %v4676, 4294901760
  %4678 = vmatprep.subr.mxu0 %v4677
  %v4679 = vsub.f32 %v2371, %v2371
  %v4680 = vand.u32 %v4679, 4294901760
  %v4681 = vsub.f32 %v4679, %v4680
  %v4682 = vand.u32 %v4681, 4294901760
  %4683 = vmatpush1.msra.mxu0 %v4682
  %v4684 = vsub.f32 %v2374, %v2374
  %v4685 = vand.u32 %v4684, 4294901760
  %v4686 = vsub.f32 %v4684, %v4685
  %v4687 = vand.u32 %v4686, 4294901760
  %4688 = vmatprep.subr.mxu0 %v4687
  %v4689 = vsub.f32 %v2373, %v2373
  %v4690 = vand.u32 %v4689, 4294901760
  %v4691 = vsub.f32 %v4689, %v4690
  %v4692 = vand.u32 %v4691, 4294901760
  %4693 = vmatpush1.msra.mxu0 %v4692
  %v4694 = vsub.f32 %v2376, %v2376
  %v4695 = vand.u32 %v4694, 4294901760
  %v4696 = vsub.f32 %v4694, %v4695
  %v4697 = vand.u32 %v4696, 4294901760
  %4698 = vmatprep.subr.mxu0 %v4697
  %v4699 = vsub.f32 %v2375, %v2375
  %v4700 = vand.u32 %v4699, 4294901760
  %v4701 = vsub.f32 %v4699, %v4700
  %v4702 = vand.u32 %v4701, 4294901760
  %4703 = vmatpush1.msra.mxu0 %v4702
  %v4704 = vsub.f32 %v2378, %v2378
  %v4705 = vand.u32 %v4704, 4294901760
  %v4706 = vsub.f32 %v4704, %v4705
  %v4707 = vand.u32 %v4706, 4294901760
  %4708 = vmatprep.subr.mxu0 %v4707
  %v4709 = vsub.f32 %v2377, %v2377
  %v4710 = vand.u32 %v4709, 4294901760
  %v4711 = vsub.f32 %v4709, %v4710
  %v4712 = vand.u32 %v4711, 4294901760
  %4713 = vmatpush1.msra.mxu0 %v4712
  %v4714 = vsub.f32 %v2380, %v2380
  %v4715 = vand.u32 %v4714, 4294901760
  %v4716 = vsub.f32 %v4714, %v4715
  %v4717 = vand.u32 %v4716, 4294901760
  %4718 = vmatprep.subr.mxu0 %v4717
  %v4719 = vsub.f32 %v2379, %v2379
  %v4720 = vand.u32 %v4719, 4294901760
  %v4721 = vsub.f32 %v4719, %v4720
  %v4722 = vand.u32 %v4721, 4294901760
  %4723 = vmatpush1.msra.mxu0 %v4722
  %v4724 = vsub.f32 %v2382, %v2382
  %v4725 = vand.u32 %v4724, 4294901760
  %v4726 = vsub.f32 %v4724, %v4725
  %v4727 = vand.u32 %v4726, 4294901760
  %4728 = vmatprep.subr.mxu0 %v4727
  %v4729 = vsub.f32 %v2381, %v2381
  %v4730 = vand.u32 %v4729, 4294901760
  %v4731 = vsub.f32 %v4729, %v4730
  %v4732 = vand.u32 %v4731, 4294901760
  %4733 = vmatpush1.msra.mxu0 %v4732
  %v4734 = vsub.f32 %v2384, %v2384
  %v4735 = vand.u32 %v4734, 4294901760
  %v4736 = vsub.f32 %v4734, %v4735
  %v4737 = vand.u32 %v4736, 4294901760
  %4738 = vmatprep.subr.mxu0 %v4737
  %v4739 = vsub.f32 %v2383, %v2383
  %v4740 = vand.u32 %v4739, 4294901760
  %v4741 = vsub.f32 %v4739, %v4740
  %v4742 = vand.u32 %v4741, 4294901760
  %4743 = vmatpush1.msra.mxu0 %v4742
  %v4744 = vsub.f32 %v2386, %v2386
  %v4745 = vand.u32 %v4744, 4294901760
  %v4746 = vsub.f32 %v4744, %v4745
  %v4747 = vand.u32 %v4746, 4294901760
  %4748 = vmatprep.subr.mxu0 %v4747
  %v4749 = vsub.f32 %v2385, %v2385
  %v4750 = vand.u32 %v4749, 4294901760
  %v4751 = vsub.f32 %v4749, %v4750
  %v4752 = vand.u32 %v4751, 4294901760
  %4753 = vmatpush1.msra.mxu0 %v4752
  %v4754 = vsub.f32 %v2388, %v2388
  %v4755 = vand.u32 %v4754, 4294901760
  %v4756 = vsub.f32 %v4754, %v4755
  %v4757 = vand.u32 %v4756, 4294901760
  %4758 = vmatprep.subr.mxu0 %v4757
  %v4759 = vsub.f32 %v2387, %v2387
  %v4760 = vand.u32 %v4759, 4294901760
  %v4761 = vsub.f32 %v4759, %v4760
  %v4762 = vand.u32 %v4761, 4294901760
  %4763 = vmatpush1.msra.mxu0 %v4762
  %v4764 = vsub.f32 %v2390, %v2390
  %v4765 = vand.u32 %v4764, 4294901760
  %v4766 = vsub.f32 %v4764, %v4765
  %v4767 = vand.u32 %v4766, 4294901760
  %4768 = vmatprep.subr.mxu0 %v4767
  %v4769 = vsub.f32 %v2389, %v2389
  %v4770 = vand.u32 %v4769, 4294901760
  %v4771 = vsub.f32 %v4769, %v4770
  %v4772 = vand.u32 %v4771, 4294901760
  %4773 = vmatpush1.msra.mxu0 %v4772
  %v4774 = vsub.f32 %v2392, %v2392
  %v4775 = vand.u32 %v4774, 4294901760
  %v4776 = vsub.f32 %v4774, %v4775
  %v4777 = vand.u32 %v4776, 4294901760
  %4778 = vmatprep.subr.mxu0 %v4777
  %v4779 = vsub.f32 %v2391, %v2391
  %v4780 = vand.u32 %v4779, 4294901760
  %v4781 = vsub.f32 %v4779, %v4780
  %v4782 = vand.u32 %v4781, 4294901760
  %4783 = vmatpush1.msra.mxu0 %v4782
  %v4784 = vsub.f32 %v2394, %v2394
  %v4785 = vand.u32 %v4784, 4294901760
  %v4786 = vsub.f32 %v4784, %v4785
  %v4787 = vand.u32 %v4786, 4294901760
  %4788 = vmatprep.subr.mxu0 %v4787
  %v4789 = vsub.f32 %v2393, %v2393
  %v4790 = vand.u32 %v4789, 4294901760
  %v4791 = vsub.f32 %v4789, %v4790
  %v4792 = vand.u32 %v4791, 4294901760
  %4793 = vmatpush1.msra.mxu0 %v4792
  %v4794 = vsub.f32 %v2396, %v2396
  %v4795 = vand.u32 %v4794, 4294901760
  %v4796 = vsub.f32 %v4794, %v4795
  %v4797 = vand.u32 %v4796, 4294901760
  %4798 = vmatprep.subr.mxu0 %v4797
  %v4799 = vsub.f32 %v2395, %v2395
  %v4800 = vand.u32 %v4799, 4294901760
  %v4801 = vsub.f32 %v4799, %v4800
  %v4802 = vand.u32 %v4801, 4294901760
  %4803 = vmatpush1.msra.mxu0 %v4802
  %v4804 = vsub.f32 %v2398, %v2398
  %v4805 = vand.u32 %v4804, 4294901760
  %v4806 = vsub.f32 %v4804, %v4805
  %v4807 = vand.u32 %v4806, 4294901760
  %4808 = vmatprep.subr.mxu0 %v4807
  %v4809 = vsub.f32 %v2397, %v2397
  %v4810 = vand.u32 %v4809, 4294901760
  %v4811 = vsub.f32 %v4809, %v4810
  %v4812 = vand.u32 %v4811, 4294901760
  %4813 = vmatpush1.msra.mxu0 %v4812
  %v4814 = vsub.f32 %v2400, %v2400
  %v4815 = vand.u32 %v4814, 4294901760
  %v4816 = vsub.f32 %v4814, %v4815
  %v4817 = vand.u32 %v4816, 4294901760
  %4818 = vmatprep.subr.mxu0 %v4817
  %v4819 = vsub.f32 %v2399, %v2399
  %v4820 = vand.u32 %v4819, 4294901760
  %v4821 = vsub.f32 %v4819, %v4820
  %v4822 = vand.u32 %v4821, 4294901760
  %4823 = vmatpush1.msra.mxu0 %v4822
  %v4824 = vsub.f32 %v2402, %v2402
  %v4825 = vand.u32 %v4824, 4294901760
  %v4826 = vsub.f32 %v4824, %v4825
  %v4827 = vand.u32 %v4826, 4294901760
  %4828 = vmatprep.subr.mxu0 %v4827
  %v4829 = vsub.f32 %v2401, %v2401
  %v4830 = vand.u32 %v4829, 4294901760
  %v4831 = vsub.f32 %v4829, %v4830
  %v4832 = vand.u32 %v4831, 4294901760
  %4833 = vmatpush1.msra.mxu0 %v4832
  %v4834 = vsub.f32 %v2404, %v2404
  %v4835 = vand.u32 %v4834, 4294901760
  %v4836 = vsub.f32 %v4834, %v4835
  %v4837 = vand.u32 %v4836, 4294901760
  %4838 = vmatprep.subr.mxu0 %v4837
  %v4839 = vsub.f32 %v2403, %v2403
  %v4840 = vand.u32 %v4839, 4294901760
  %v4841 = vsub.f32 %v4839, %v4840
  %v4842 = vand.u32 %v4841, 4294901760
  %4843 = vmatpush1.msra.mxu0 %v4842
  %v4844 = vsub.f32 %v2406, %v2406
  %v4845 = vand.u32 %v4844, 4294901760
  %v4846 = vsub.f32 %v4844, %v4845
  %v4847 = vand.u32 %v4846, 4294901760
  %4848 = vmatprep.subr.mxu0 %v4847
  %v4849 = vsub.f32 %v2405, %v2405
  %v4850 = vand.u32 %v4849, 4294901760
  %v4851 = vsub.f32 %v4849, %v4850
  %v4852 = vand.u32 %v4851, 4294901760
  %4853 = vmatpush1.msra.mxu0 %v4852
  %v4854 = vsub.f32 %v2408, %v2408
  %v4855 = vand.u32 %v4854, 4294901760
  %v4856 = vsub.f32 %v4854, %v4855
  %v4857 = vand.u32 %v4856, 4294901760
  %4858 = vmatprep.subr.mxu0 %v4857
  %v4859 = vsub.f32 %v2407, %v2407
  %v4860 = vand.u32 %v4859, 4294901760
  %v4861 = vsub.f32 %v4859, %v4860
  %v4862 = vand.u32 %v4861, 4294901760
  %4863 = vmatpush1.msra.mxu0 %v4862
  %v4864 = vsub.f32 %v2410, %v2410
  %v4865 = vand.u32 %v4864, 4294901760
  %v4866 = vsub.f32 %v4864, %v4865
  %v4867 = vand.u32 %v4866, 4294901760
  %4868 = vmatprep.subr.mxu0 %v4867
  %v4869 = vsub.f32 %v2409, %v2409
  %v4870 = vand.u32 %v4869, 4294901760
  %v4871 = vsub.f32 %v4869, %v4870
  %v4872 = vand.u32 %v4871, 4294901760
  %4873 = vmatpush1.msra.mxu0 %v4872
  %v4874 = vsub.f32 %v2412, %v2412
  %v4875 = vand.u32 %v4874, 4294901760
  %v4876 = vsub.f32 %v4874, %v4875
  %v4877 = vand.u32 %v4876, 4294901760
  %4878 = vmatprep.subr.mxu0 %v4877
  %v4879 = vsub.f32 %v2411, %v2411
  %v4880 = vand.u32 %v4879, 4294901760
  %v4881 = vsub.f32 %v4879, %v4880
  %v4882 = vand.u32 %v4881, 4294901760
  %4883 = vmatpush1.msra.mxu0 %v4882
  %v4884 = vand.u32 %v2156, 4294901760
  %4885 = vmatprep.mubr.f32.mxu0 %v4884
  %v4886 = vand.u32 %v2155, 4294901760
  %4887 = vmatmul.mubr.f32.gmra.mrb[0].mxu0 %v4886
  %v4888 = vpop.f32.mrb[0].mxu0
  %v4889 = vadd.f32 %v4320, %v4888
  %v4890 = vpop.f32.mrb[0].mxu0
  %v4891 = vadd.f32 %v4322, %v4890
  %v4892 = vand.u32 %v2160, 4294901760
  %4893 = vmatprep.mubr.f32.mxu0 %v4892
  %v4894 = vand.u32 %v2159, 4294901760
  %4895 = vmatmul.mubr.f32.gmra.mrb[0].mxu0 %v4894
  %v4896 = vpop.f32.mrb[0].mxu0
  %v4897 = vadd.f32 %v4336, %v4896
  %v4898 = vpop.f32.mrb[0].mxu0
  %v4899 = vadd.f32 %v4338, %v4898
  %v4900 = vand.u32 %v2164, 4294901760
  %4901 = vmatprep.mubr.f32.mxu0 %v4900
  %v4902 = vand.u32 %v2163, 4294901760
  %4903 = vmatmul.mubr.f32.gmra.mrb[0].mxu0 %v4902
  %v4904 = vpop.f32.mrb[0].mxu0
  %v4905 = vadd.f32 %v4352, %v4904
  %v4906 = vpop.f32.mrb[0].mxu0
  %v4907 = vadd.f32 %v4354, %v4906
  %v4908 = vand.u32 %v2168, 4294901760
  %4909 = vmatprep.mubr.f32.mxu0 %v4908
  %v4910 = vand.u32 %v2167, 4294901760
  %4911 = vmatmul.mubr.f32.gmra.mrb[0].mxu0 %v4910
  %v4912 = vpop.f32.mrb[0].mxu0
  %v4913 = vadd.f32 %v4368, %v4912
  %v4914 = vpop.f32.mrb[0].mxu0
  %v4915 = vadd.f32 %v4370, %v4914
  %v4916 = vand.u32 %v2172, 4294901760
  %4917 = vmatprep.mubr.f32.mxu0 %v4916
  %v4918 = vand.u32 %v2171, 4294901760
  %4919 = vmatmul.mubr.f32.gmra.mrb[0].mxu0 %v4918
  %v4920 = vpop.f32.mrb[0].mxu0
  %v4921 = vadd.f32 %v4384, %v4920
  %v4922 = vpop.f32.mrb[0].mxu0
  %v4923 = vadd.f32 %v4386, %v4922
  %v4924 = vand.u32 %v2176, 4294901760
  %4925 = vmatprep.mubr.f32.mxu0 %v4924
  %v4926 = vand.u32 %v2175, 4294901760
  %4927 = vmatmul.mubr.f32.gmra.mrb[0].mxu0 %v4926
  %v4928 = vpop.f32.mrb[0].mxu0
  %v4929 = vadd.f32 %v4400, %v4928
  %v4930 = vpop.f32.mrb[0].mxu0
  %v4931 = vadd.f32 %v4402, %v4930
  %v4932 = vand.u32 %v2180, 4294901760
  %4933 = vmatprep.mubr.f32.mxu0 %v4932
  %v4934 = vand.u32 %v2179, 4294901760
  %4935 = vmatmul.mubr.f32.gmra.mrb[0].mxu0 %v4934
  %v4936 = vpop.f32.mrb[0].mxu0
  %v4937 = vadd.f32 %v4416, %v4936
  %v4938 = vpop.f32.mrb[0].mxu0
  %v4939 = vadd.f32 %v4418, %v4938
  %v4940 = vand.u32 %v2184, 4294901760
  %4941 = vmatprep.mubr.f32.mxu0 %v4940
  %v4942 = vand.u32 %v2183, 4294901760
  %4943 = vmatmul.mubr.f32.gmra.mrb[0].mxu0 %v4942
  %v4944 = vpop.f32.mrb[0].mxu0
  %v4945 = vadd.f32 %v4432, %v4944
  %v4946 = vpop.f32.mrb[0].mxu0
  %v4947 = vadd.f32 %v4434, %v4946
  %v4948 = vand.u32 %v2188, 4294901760
  %4949 = vmatprep.mubr.f32.mxu0 %v4948
  %v4950 = vand.u32 %v2187, 4294901760
  %4951 = vmatmul.mubr.f32.gmra.mrb[0].mxu0 %v4950
  %v4952 = vpop.f32.mrb[0].mxu0
  %v4953 = vadd.f32 %v4448, %v4952
  %v4954 = vpop.f32.mrb[0].mxu0
  %v4955 = vadd.f32 %v4450, %v4954
  %v4956 = vand.u32 %v2192, 4294901760
  %4957 = vmatprep.mubr.f32.mxu0 %v4956
  %v4958 = vand.u32 %v2191, 4294901760
  %4959 = vmatmul.mubr.f32.gmra.mrb[0].mxu0 %v4958
  %v4960 = vpop.f32.mrb[0].mxu0
  %v4961 = vadd.f32 %v4464, %v4960
  %v4962 = vpop.f32.mrb[0].mxu0
  %v4963 = vadd.f32 %v4466, %v4962
  %v4964 = vand.u32 %v2196, 4294901760
  %4965 = vmatprep.mubr.f32.mxu0 %v4964
  %v4966 = vand.u32 %v2195, 4294901760
  %4967 = vmatmul.mubr.f32.gmra.mrb[0].mxu0 %v4966
  %v4968 = vpop.f32.mrb[0].mxu0
  %v4969 = vadd.f32 %v4480, %v4968
  %v4970 = vpop.f32.mrb[0].mxu0
  %v4971 = vadd.f32 %v4482, %v4970
  %v4972 = vand.u32 %v2200, 4294901760
  %4973 = vmatprep.mubr.f32.mxu0 %v4972
  %v4974 = vand.u32 %v2199, 4294901760
  %4975 = vmatmul.mubr.f32.gmra.mrb[0].mxu0 %v4974
  %v4976 = vpop.f32.mrb[0].mxu0
  %v4977 = vadd.f32 %v4496, %v4976
  %v4978 = vpop.f32.mrb[0].mxu0
  %v4979 = vadd.f32 %v4498, %v4978
  %v4980 = vand.u32 %v2204, 4294901760
  %4981 = vmatprep.mubr.f32.mxu0 %v4980
  %v4982 = vand.u32 %v2203, 4294901760
  %4983 = vmatmul.mubr.f32.gmra.mrb[0].mxu0 %v4982
  %v4984 = vpop.f32.mrb[0].mxu0
  %v4985 = vadd.f32 %v4512, %v4984
  %v4986 = vpop.f32.mrb[0].mxu0
  %v4987 = vadd.f32 %v4514, %v4986
  %v4988 = vand.u32 %v2208, 4294901760
  %4989 = vmatprep.mubr.f32.mxu0 %v4988
  %v4990 = vand.u32 %v2207, 4294901760
  %4991 = vmatmul.mubr.f32.gmra.mrb[0].mxu0 %v4990
  %v4992 = vpop.f32.mrb[0].mxu0
  %v4993 = vadd.f32 %v4528, %v4992
  %v4994 = vpop.f32.mrb[0].mxu0
  %v4995 = vadd.f32 %v4530, %v4994
  %v4996 = vand.u32 %v2212, 4294901760
  %4997 = vmatprep.mubr.f32.mxu0 %v4996
  %v4998 = vand.u32 %v2211, 4294901760
  %4999 = vmatmul.mubr.f32.gmra.mrb[0].mxu0 %v4998
  %v5000 = vpop.f32.mrb[0].mxu0
  %v5001 = vadd.f32 %v4544, %v5000
  %v5002 = vpop.f32.mrb[0].mxu0
  %v5003 = vadd.f32 %v4546, %v5002
  %v5004 = vand.u32 %v2216, 4294901760
  %5005 = vmatprep.mubr.f32.mxu0 %v5004
  %v5006 = vand.u32 %v2215, 4294901760
  %5007 = vmatmul.mubr.f32.gmra.mrb[0].mxu0 %v5006
  %v5008 = vpop.f32.mrb[0].mxu0
  %v5009 = vadd.f32 %v4560, %v5008
  %v5010 = vpop.f32.mrb[0].mxu0
  %v5011 = vadd.f32 %v4562, %v5010
  %5012 = vdwg.mxu0
  %v5013 = vsub.f32 %v2350, %v2350
  %5014 = vmatprep.subr.mxu0 %v5013
  %v5015 = vsub.f32 %v2349, %v2349
  %5016 = vmatpush1.msra.mxu0 %v5015
  %v5017 = vsub.f32 %v2352, %v2352
  %5018 = vmatprep.subr.mxu0 %v5017
  %v5019 = vsub.f32 %v2351, %v2351
  %5020 = vmatpush1.msra.mxu0 %v5019
  %v5021 = vsub.f32 %v2354, %v2354
  %5022 = vmatprep.subr.mxu0 %v5021
  %v5023 = vsub.f32 %v2353, %v2353
  %5024 = vmatpush1.msra.mxu0 %v5023
  %v5025 = vsub.f32 %v2356, %v2356
  %5026 = vmatprep.subr.mxu0 %v5025
  %v5027 = vsub.f32 %v2355, %v2355
  %5028 = vmatpush1.msra.mxu0 %v5027
  %v5029 = vsub.f32 %v2358, %v2358
  %5030 = vmatprep.subr.mxu0 %v5029
  %v5031 = vsub.f32 %v2357, %v2357
  %5032 = vmatpush1.msra.mxu0 %v5031
  %v5033 = vsub.f32 %v2360, %v2360
  %5034 = vmatprep.subr.mxu0 %v5033
  %v5035 = vsub.f32 %v2359, %v2359
  %5036 = vmatpush1.msra.mxu0 %v5035
  %v5037 = vsub.f32 %v2362, %v2362
  %5038 = vmatprep.subr.mxu0 %v5037
  %v5039 = vsub.f32 %v2361, %v2361
  %5040 = vmatpush1.msra.mxu0 %v5039
  %v5041 = vsub.f32 %v2364, %v2364
  %5042 = vmatprep.subr.mxu0 %v5041
  %v5043 = vsub.f32 %v2363, %v2363
  %5044 = vmatpush1.msra.mxu0 %v5043
  %v5045 = vsub.f32 %v2366, %v2366
  %5046 = vmatprep.subr.mxu0 %v5045
  %v5047 = vsub.f32 %v2365, %v2365
  %5048 = vmatpush1.msra.mxu0 %v5047
  %v5049 = vsub.f32 %v2368, %v2368
  %5050 = vmatprep.subr.mxu0 %v5049
  %v5051 = vsub.f32 %v2367, %v2367
  %5052 = vmatpush1.msra.mxu0 %v5051
  %v5053 = vsub.f32 %v2370, %v2370
  %5054 = vmatprep.subr.mxu0 %v5053
  %v5055 = vsub.f32 %v2369, %v2369
  %5056 = vmatpush1.msra.mxu0 %v5055
  %v5057 = vsub.f32 %v2372, %v2372
  %5058 = vmatprep.subr.mxu0 %v5057
  %v5059 = vsub.f32 %v2371, %v2371
  %5060 = vmatpush1.msra.mxu0 %v5059
  %v5061 = vsub.f32 %v2374, %v2374
  %5062 = vmatprep.subr.mxu0 %v5061
  %v5063 = vsub.f32 %v2373, %v2373
  %5064 = vmatpush1.msra.mxu0 %v5063
  %v5065 = vsub.f32 %v2376, %v2376
  %5066 = vmatprep.subr.mxu0 %v5065
  %v5067 = vsub.f32 %v2375, %v2375
  %5068 = vmatpush1.msra.mxu0 %v5067
  %v5069 = vsub.f32 %v2378, %v2378
  %5070 = vmatprep.subr.mxu0 %v5069
  %v5071 = vsub.f32 %v2377, %v2377
  %5072 = vmatpush1.msra.mxu0 %v5071
  %v5073 = vsub.f32 %v2380, %v2380
  %5074 = vmatprep.subr.mxu0 %v5073
  %v5075 = vsub.f32 %v2379, %v2379
  %5076 = vmatpush1.msra.mxu0 %v5075
  %v5077 = vsub.f32 %v2382, %v2382
  %5078 = vmatprep.subr.mxu0 %v5077
  %v5079 = vsub.f32 %v2381, %v2381
  %5080 = vmatpush1.msra.mxu0 %v5079
  %v5081 = vsub.f32 %v2384, %v2384
  %5082 = vmatprep.subr.mxu0 %v5081
  %v5083 = vsub.f32 %v2383, %v2383
  %5084 = vmatpush1.msra.mxu0 %v5083
  %v5085 = vsub.f32 %v2386, %v2386
  %5086 = vmatprep.subr.mxu0 %v5085
  %v5087 = vsub.f32 %v2385, %v2385
  %5088 = vmatpush1.msra.mxu0 %v5087
  %v5089 = vsub.f32 %v2388, %v2388
  %5090 = vmatprep.subr.mxu0 %v5089
  %v5091 = vsub.f32 %v2387, %v2387
  %5092 = vmatpush1.msra.mxu0 %v5091
  %v5093 = vsub.f32 %v2390, %v2390
  %5094 = vmatprep.subr.mxu0 %v5093
  %v5095 = vsub.f32 %v2389, %v2389
  %5096 = vmatpush1.msra.mxu0 %v5095
  %v5097 = vsub.f32 %v2392, %v2392
  %5098 = vmatprep.subr.mxu0 %v5097
  %v5099 = vsub.f32 %v2391, %v2391
  %5100 = vmatpush1.msra.mxu0 %v5099
  %v5101 = vsub.f32 %v2394, %v2394
  %5102 = vmatprep.subr.mxu0 %v5101
  %v5103 = vsub.f32 %v2393, %v2393
  %5104 = vmatpush1.msra.mxu0 %v5103
  %v5105 = vsub.f32 %v2396, %v2396
  %5106 = vmatprep.subr.mxu0 %v5105
  %v5107 = vsub.f32 %v2395, %v2395
  %5108 = vmatpush1.msra.mxu0 %v5107
  %v5109 = vsub.f32 %v2398, %v2398
  %5110 = vmatprep.subr.mxu0 %v5109
  %v5111 = vsub.f32 %v2397, %v2397
  %5112 = vmatpush1.msra.mxu0 %v5111
  %v5113 = vsub.f32 %v2400, %v2400
  %5114 = vmatprep.subr.mxu0 %v5113
  %v5115 = vsub.f32 %v2399, %v2399
  %5116 = vmatpush1.msra.mxu0 %v5115
  %v5117 = vsub.f32 %v2402, %v2402
  %5118 = vmatprep.subr.mxu0 %v5117
  %v5119 = vsub.f32 %v2401, %v2401
  %5120 = vmatpush1.msra.mxu0 %v5119
  %v5121 = vsub.f32 %v2404, %v2404
  %5122 = vmatprep.subr.mxu0 %v5121
  %v5123 = vsub.f32 %v2403, %v2403
  %5124 = vmatpush1.msra.mxu0 %v5123
  %v5125 = vsub.f32 %v2406, %v2406
  %5126 = vmatprep.subr.mxu0 %v5125
  %v5127 = vsub.f32 %v2405, %v2405
  %5128 = vmatpush1.msra.mxu0 %v5127
  %v5129 = vsub.f32 %v2408, %v2408
  %5130 = vmatprep.subr.mxu0 %v5129
  %v5131 = vsub.f32 %v2407, %v2407
  %5132 = vmatpush1.msra.mxu0 %v5131
  %v5133 = vsub.f32 %v2410, %v2410
  %5134 = vmatprep.subr.mxu0 %v5133
  %v5135 = vsub.f32 %v2409, %v2409
  %5136 = vmatpush1.msra.mxu0 %v5135
  %v5137 = vsub.f32 %v2412, %v2412
  %5138 = vmatprep.subr.mxu0 %v5137
  %v5139 = vsub.f32 %v2411, %v2411
  %5140 = vmatpush1.msra.mxu0 %v5139
  %v5141 = vand.u32 %v2156, 4294901760
  %v5142 = vsub.f32 %v2156, %v5141
  %5143 = vmatprep.mubr.f32.mxu0 %v5142
  %v5144 = vand.u32 %v2155, 4294901760
  %v5145 = vsub.f32 %v2155, %v5144
  %5146 = vmatmul.mubr.f32.gmra.mrb[0].mxu0 %v5145
  %v5147 = vpop.f32.mrb[0].mxu0
  %v5148 = vadd.f32 %v4889, %v5147
  %v5149 = vpop.f32.mrb[0].mxu0
  %v5150 = vadd.f32 %v4891, %v5149
  %v5151 = vand.u32 %v2160, 4294901760
  %v5152 = vsub.f32 %v2160, %v5151
  %5153 = vmatprep.mubr.f32.mxu0 %v5152
  %v5154 = vand.u32 %v2159, 4294901760
  %v5155 = vsub.f32 %v2159, %v5154
  %5156 = vmatmul.mubr.f32.gmra.mrb[0].mxu0 %v5155
  %v5157 = vpop.f32.mrb[0].mxu0
  %v5158 = vadd.f32 %v4897, %v5157
  %v5159 = vpop.f32.mrb[0].mxu0
  %v5160 = vadd.f32 %v4899, %v5159
  %v5161 = vand.u32 %v2164, 4294901760
  %v5162 = vsub.f32 %v2164, %v5161
  %5163 = vmatprep.mubr.f32.mxu0 %v5162
  %v5164 = vand.u32 %v2163, 4294901760
  %v5165 = vsub.f32 %v2163, %v5164
  %5166 = vmatmul.mubr.f32.gmra.mrb[0].mxu0 %v5165
  %v5167 = vpop.f32.mrb[0].mxu0
  %v5168 = vadd.f32 %v4905, %v5167
  %v5169 = vpop.f32.mrb[0].mxu0
  %v5170 = vadd.f32 %v4907, %v5169
  %v5171 = vand.u32 %v2168, 4294901760
  %v5172 = vsub.f32 %v2168, %v5171
  %5173 = vmatprep.mubr.f32.mxu0 %v5172
  %v5174 = vand.u32 %v2167, 4294901760
  %v5175 = vsub.f32 %v2167, %v5174
  %5176 = vmatmul.mubr.f32.gmra.mrb[0].mxu0 %v5175
  %v5177 = vpop.f32.mrb[0].mxu0
  %v5178 = vadd.f32 %v4913, %v5177
  %v5179 = vpop.f32.mrb[0].mxu0
  %v5180 = vadd.f32 %v4915, %v5179
  %v5181 = vand.u32 %v2172, 4294901760
  %v5182 = vsub.f32 %v2172, %v5181
  %5183 = vmatprep.mubr.f32.mxu0 %v5182
  %v5184 = vand.u32 %v2171, 4294901760
  %v5185 = vsub.f32 %v2171, %v5184
  %5186 = vmatmul.mubr.f32.gmra.mrb[0].mxu0 %v5185
  %v5187 = vpop.f32.mrb[0].mxu0
  %v5188 = vadd.f32 %v4921, %v5187
  %v5189 = vpop.f32.mrb[0].mxu0
  %v5190 = vadd.f32 %v4923, %v5189
  %v5191 = vand.u32 %v2176, 4294901760
  %v5192 = vsub.f32 %v2176, %v5191
  %5193 = vmatprep.mubr.f32.mxu0 %v5192
  %v5194 = vand.u32 %v2175, 4294901760
  %v5195 = vsub.f32 %v2175, %v5194
  %5196 = vmatmul.mubr.f32.gmra.mrb[0].mxu0 %v5195
  %v5197 = vpop.f32.mrb[0].mxu0
  %v5198 = vadd.f32 %v4929, %v5197
  %v5199 = vpop.f32.mrb[0].mxu0
  %v5200 = vadd.f32 %v4931, %v5199
  %v5201 = vand.u32 %v2180, 4294901760
  %v5202 = vsub.f32 %v2180, %v5201
  %5203 = vmatprep.mubr.f32.mxu0 %v5202
  %v5204 = vand.u32 %v2179, 4294901760
  %v5205 = vsub.f32 %v2179, %v5204
  %5206 = vmatmul.mubr.f32.gmra.mrb[0].mxu0 %v5205
  %v5207 = vpop.f32.mrb[0].mxu0
  %v5208 = vadd.f32 %v4937, %v5207
  %v5209 = vpop.f32.mrb[0].mxu0
  %v5210 = vadd.f32 %v4939, %v5209
  %v5211 = vand.u32 %v2184, 4294901760
  %v5212 = vsub.f32 %v2184, %v5211
  %5213 = vmatprep.mubr.f32.mxu0 %v5212
  %v5214 = vand.u32 %v2183, 4294901760
  %v5215 = vsub.f32 %v2183, %v5214
  %5216 = vmatmul.mubr.f32.gmra.mrb[0].mxu0 %v5215
  %v5217 = vpop.f32.mrb[0].mxu0
  %v5218 = vadd.f32 %v4945, %v5217
  %v5219 = vpop.f32.mrb[0].mxu0
  %v5220 = vadd.f32 %v4947, %v5219
  %v5221 = vand.u32 %v2188, 4294901760
  %v5222 = vsub.f32 %v2188, %v5221
  %5223 = vmatprep.mubr.f32.mxu0 %v5222
  %v5224 = vand.u32 %v2187, 4294901760
  %v5225 = vsub.f32 %v2187, %v5224
  %5226 = vmatmul.mubr.f32.gmra.mrb[0].mxu0 %v5225
  %v5227 = vpop.f32.mrb[0].mxu0
  %v5228 = vadd.f32 %v4953, %v5227
  %v5229 = vpop.f32.mrb[0].mxu0
  %v5230 = vadd.f32 %v4955, %v5229
  %v5231 = vand.u32 %v2192, 4294901760
  %v5232 = vsub.f32 %v2192, %v5231
  %5233 = vmatprep.mubr.f32.mxu0 %v5232
  %v5234 = vand.u32 %v2191, 4294901760
  %v5235 = vsub.f32 %v2191, %v5234
  %5236 = vmatmul.mubr.f32.gmra.mrb[0].mxu0 %v5235
  %v5237 = vpop.f32.mrb[0].mxu0
  %v5238 = vadd.f32 %v4961, %v5237
  %v5239 = vpop.f32.mrb[0].mxu0
  %v5240 = vadd.f32 %v4963, %v5239
  %v5241 = vand.u32 %v2196, 4294901760
  %v5242 = vsub.f32 %v2196, %v5241
  %5243 = vmatprep.mubr.f32.mxu0 %v5242
  %v5244 = vand.u32 %v2195, 4294901760
  %v5245 = vsub.f32 %v2195, %v5244
  %5246 = vmatmul.mubr.f32.gmra.mrb[0].mxu0 %v5245
  %v5247 = vpop.f32.mrb[0].mxu0
  %v5248 = vadd.f32 %v4969, %v5247
  %v5249 = vpop.f32.mrb[0].mxu0
  %v5250 = vadd.f32 %v4971, %v5249
  %v5251 = vand.u32 %v2200, 4294901760
  %v5252 = vsub.f32 %v2200, %v5251
  %5253 = vmatprep.mubr.f32.mxu0 %v5252
  %v5254 = vand.u32 %v2199, 4294901760
  %v5255 = vsub.f32 %v2199, %v5254
  %5256 = vmatmul.mubr.f32.gmra.mrb[0].mxu0 %v5255
  %v5257 = vpop.f32.mrb[0].mxu0
  %v5258 = vadd.f32 %v4977, %v5257
  %v5259 = vpop.f32.mrb[0].mxu0
  %v5260 = vadd.f32 %v4979, %v5259
  %v5261 = vand.u32 %v2204, 4294901760
  %v5262 = vsub.f32 %v2204, %v5261
  %5263 = vmatprep.mubr.f32.mxu0 %v5262
  %v5264 = vand.u32 %v2203, 4294901760
  %v5265 = vsub.f32 %v2203, %v5264
  %5266 = vmatmul.mubr.f32.gmra.mrb[0].mxu0 %v5265
  %v5267 = vpop.f32.mrb[0].mxu0
  %v5268 = vadd.f32 %v4985, %v5267
  %v5269 = vpop.f32.mrb[0].mxu0
  %v5270 = vadd.f32 %v4987, %v5269
  %v5271 = vand.u32 %v2208, 4294901760
  %v5272 = vsub.f32 %v2208, %v5271
  %5273 = vmatprep.mubr.f32.mxu0 %v5272
  %v5274 = vand.u32 %v2207, 4294901760
  %v5275 = vsub.f32 %v2207, %v5274
  %5276 = vmatmul.mubr.f32.gmra.mrb[0].mxu0 %v5275
  %v5277 = vpop.f32.mrb[0].mxu0
  %v5278 = vadd.f32 %v4993, %v5277
  %v5279 = vpop.f32.mrb[0].mxu0
  %v5280 = vadd.f32 %v4995, %v5279
  %v5281 = vand.u32 %v2212, 4294901760
  %v5282 = vsub.f32 %v2212, %v5281
  %5283 = vmatprep.mubr.f32.mxu0 %v5282
  %v5284 = vand.u32 %v2211, 4294901760
  %v5285 = vsub.f32 %v2211, %v5284
  %5286 = vmatmul.mubr.f32.gmra.mrb[0].mxu0 %v5285
  %v5287 = vpop.f32.mrb[0].mxu0
  %v5288 = vadd.f32 %v5001, %v5287
  %v5289 = vpop.f32.mrb[0].mxu0
  %v5290 = vadd.f32 %v5003, %v5289
  %v5291 = vand.u32 %v2216, 4294901760
  %v5292 = vsub.f32 %v2216, %v5291
  %5293 = vmatprep.mubr.f32.mxu0 %v5292
  %v5294 = vand.u32 %v2215, 4294901760
  %v5295 = vsub.f32 %v2215, %v5294
  %5296 = vmatmul.mubr.f32.gmra.mrb[0].mxu0 %v5295
  %v5297 = vpop.f32.mrb[0].mxu0
  %v5298 = vadd.f32 %v5009, %v5297
  %v5299 = vpop.f32.mrb[0].mxu0
  %v5300 = vadd.f32 %v5011, %v5299
  %5301 = vdwg.mxu0
  %5302 = vmatprep.subr.mxu0 %v2350
  %5303 = vmatpush1.msra.mxu0 %v2349
  %5304 = vmatprep.subr.mxu0 %v2352
  %5305 = vmatpush1.msra.mxu0 %v2351
  %5306 = vmatprep.subr.mxu0 %v2354
  %5307 = vmatpush1.msra.mxu0 %v2353
  %5308 = vmatprep.subr.mxu0 %v2356
  %5309 = vmatpush1.msra.mxu0 %v2355
  %5310 = vmatprep.subr.mxu0 %v2358
  %5311 = vmatpush1.msra.mxu0 %v2357
  %5312 = vmatprep.subr.mxu0 %v2360
  %5313 = vmatpush1.msra.mxu0 %v2359
  %5314 = vmatprep.subr.mxu0 %v2362
  %5315 = vmatpush1.msra.mxu0 %v2361
  %5316 = vmatprep.subr.mxu0 %v2364
  %5317 = vmatpush1.msra.mxu0 %v2363
  %5318 = vmatprep.subr.mxu0 %v2366
  %5319 = vmatpush1.msra.mxu0 %v2365
  %5320 = vmatprep.subr.mxu0 %v2368
  %5321 = vmatpush1.msra.mxu0 %v2367
  %5322 = vmatprep.subr.mxu0 %v2370
  %5323 = vmatpush1.msra.mxu0 %v2369
  %5324 = vmatprep.subr.mxu0 %v2372
  %5325 = vmatpush1.msra.mxu0 %v2371
  %5326 = vmatprep.subr.mxu0 %v2374
  %5327 = vmatpush1.msra.mxu0 %v2373
  %5328 = vmatprep.subr.mxu0 %v2376
  %5329 = vmatpush1.msra.mxu0 %v2375
  %5330 = vmatprep.subr.mxu0 %v2378
  %5331 = vmatpush1.msra.mxu0 %v2377
  %5332 = vmatprep.subr.mxu0 %v2380
  %5333 = vmatpush1.msra.mxu0 %v2379
  %5334 = vmatprep.subr.mxu0 %v2382
  %5335 = vmatpush1.msra.mxu0 %v2381
  %5336 = vmatprep.subr.mxu0 %v2384
  %5337 = vmatpush1.msra.mxu0 %v2383
  %5338 = vmatprep.subr.mxu0 %v2386
  %5339 = vmatpush1.msra.mxu0 %v2385
  %5340 = vmatprep.subr.mxu0 %v2388
  %5341 = vmatpush1.msra.mxu0 %v2387
  %5342 = vmatprep.subr.mxu0 %v2390
  %5343 = vmatpush1.msra.mxu0 %v2389
  %5344 = vmatprep.subr.mxu0 %v2392
  %5345 = vmatpush1.msra.mxu0 %v2391
  %5346 = vmatprep.subr.mxu0 %v2394
  %5347 = vmatpush1.msra.mxu0 %v2393
  %5348 = vmatprep.subr.mxu0 %v2396
  %5349 = vmatpush1.msra.mxu0 %v2395
  %5350 = vmatprep.subr.mxu0 %v2398
  %5351 = vmatpush1.msra.mxu0 %v2397
  %5352 = vmatprep.subr.mxu0 %v2400
  %5353 = vmatpush1.msra.mxu0 %v2399
  %5354 = vmatprep.subr.mxu0 %v2402
  %5355 = vmatpush1.msra.mxu0 %v2401
  %5356 = vmatprep.subr.mxu0 %v2404
  %5357 = vmatpush1.msra.mxu0 %v2403
  %5358 = vmatprep.subr.mxu0 %v2406
  %5359 = vmatpush1.msra.mxu0 %v2405
  %5360 = vmatprep.subr.mxu0 %v2408
  %5361 = vmatpush1.msra.mxu0 %v2407
  %5362 = vmatprep.subr.mxu0 %v2410
  %5363 = vmatpush1.msra.mxu0 %v2409
  %5364 = vmatprep.subr.mxu0 %v2412
  %5365 = vmatpush1.msra.mxu0 %v2411
  %v5366 = vand.u32 %v2156, 4294901760
  %v5367 = vsub.f32 %v2156, %v5366
  %v5368 = vand.u32 %v5367, 4294901760
  %5369 = vmatprep.mubr.f32.mxu0 %v5368
  %v5370 = vand.u32 %v2155, 4294901760
  %v5371 = vsub.f32 %v2155, %v5370
  %v5372 = vand.u32 %v5371, 4294901760
  %5373 = vmatmul.mubr.f32.gmra.mrb[0].mxu0 %v5372
  %v5374 = vpop.f32.mrb[0].mxu0
  %v5375 = vadd.f32 %v5148, %v5374
  %v5376 = vpop.f32.mrb[0].mxu0
  %v5377 = vadd.f32 %v5150, %v5376
  %v5378 = vand.u32 %v2160, 4294901760
  %v5379 = vsub.f32 %v2160, %v5378
  %v5380 = vand.u32 %v5379, 4294901760
  %5381 = vmatprep.mubr.f32.mxu0 %v5380
  %v5382 = vand.u32 %v2159, 4294901760
  %v5383 = vsub.f32 %v2159, %v5382
  %v5384 = vand.u32 %v5383, 4294901760
  %5385 = vmatmul.mubr.f32.gmra.mrb[0].mxu0 %v5384
  %v5386 = vpop.f32.mrb[0].mxu0
  %v5387 = vadd.f32 %v5158, %v5386
  %v5388 = vpop.f32.mrb[0].mxu0
  %v5389 = vadd.f32 %v5160, %v5388
  %v5390 = vand.u32 %v2164, 4294901760
  %v5391 = vsub.f32 %v2164, %v5390
  %v5392 = vand.u32 %v5391, 4294901760
  %5393 = vmatprep.mubr.f32.mxu0 %v5392
  %v5394 = vand.u32 %v2163, 4294901760
  %v5395 = vsub.f32 %v2163, %v5394
  %v5396 = vand.u32 %v5395, 4294901760
  %5397 = vmatmul.mubr.f32.gmra.mrb[0].mxu0 %v5396
  %v5398 = vpop.f32.mrb[0].mxu0
  %v5399 = vadd.f32 %v5168, %v5398
  %v5400 = vpop.f32.mrb[0].mxu0
  %v5401 = vadd.f32 %v5170, %v5400
  %v5402 = vand.u32 %v2168, 4294901760
  %v5403 = vsub.f32 %v2168, %v5402
  %v5404 = vand.u32 %v5403, 4294901760
  %5405 = vmatprep.mubr.f32.mxu0 %v5404
  %v5406 = vand.u32 %v2167, 4294901760
  %v5407 = vsub.f32 %v2167, %v5406
  %v5408 = vand.u32 %v5407, 4294901760
  %5409 = vmatmul.mubr.f32.gmra.mrb[0].mxu0 %v5408
  %v5410 = vpop.f32.mrb[0].mxu0
  %v5411 = vadd.f32 %v5178, %v5410
  %v5412 = vpop.f32.mrb[0].mxu0
  %v5413 = vadd.f32 %v5180, %v5412
  %v5414 = vand.u32 %v2172, 4294901760
  %v5415 = vsub.f32 %v2172, %v5414
  %v5416 = vand.u32 %v5415, 4294901760
  %5417 = vmatprep.mubr.f32.mxu0 %v5416
  %v5418 = vand.u32 %v2171, 4294901760
  %v5419 = vsub.f32 %v2171, %v5418
  %v5420 = vand.u32 %v5419, 4294901760
  %5421 = vmatmul.mubr.f32.gmra.mrb[0].mxu0 %v5420
  %v5422 = vpop.f32.mrb[0].mxu0
  %v5423 = vadd.f32 %v5188, %v5422
  %v5424 = vpop.f32.mrb[0].mxu0
  %v5425 = vadd.f32 %v5190, %v5424
  %v5426 = vand.u32 %v2176, 4294901760
  %v5427 = vsub.f32 %v2176, %v5426
  %v5428 = vand.u32 %v5427, 4294901760
  %5429 = vmatprep.mubr.f32.mxu0 %v5428
  %v5430 = vand.u32 %v2175, 4294901760
  %v5431 = vsub.f32 %v2175, %v5430
  %v5432 = vand.u32 %v5431, 4294901760
  %5433 = vmatmul.mubr.f32.gmra.mrb[0].mxu0 %v5432
  %v5434 = vpop.f32.mrb[0].mxu0
  %v5435 = vadd.f32 %v5198, %v5434
  %v5436 = vpop.f32.mrb[0].mxu0
  %v5437 = vadd.f32 %v5200, %v5436
  %v5438 = vand.u32 %v2180, 4294901760
  %v5439 = vsub.f32 %v2180, %v5438
  %v5440 = vand.u32 %v5439, 4294901760
  %5441 = vmatprep.mubr.f32.mxu0 %v5440
  %v5442 = vand.u32 %v2179, 4294901760
  %v5443 = vsub.f32 %v2179, %v5442
  %v5444 = vand.u32 %v5443, 4294901760
  %5445 = vmatmul.mubr.f32.gmra.mrb[0].mxu0 %v5444
  %v5446 = vpop.f32.mrb[0].mxu0
  %v5447 = vadd.f32 %v5208, %v5446
  %v5448 = vpop.f32.mrb[0].mxu0
  %v5449 = vadd.f32 %v5210, %v5448
  %v5450 = vand.u32 %v2184, 4294901760
  %v5451 = vsub.f32 %v2184, %v5450
  %v5452 = vand.u32 %v5451, 4294901760
  %5453 = vmatprep.mubr.f32.mxu0 %v5452
  %v5454 = vand.u32 %v2183, 4294901760
  %v5455 = vsub.f32 %v2183, %v5454
  %v5456 = vand.u32 %v5455, 4294901760
  %5457 = vmatmul.mubr.f32.gmra.mrb[0].mxu0 %v5456
  %v5458 = vpop.f32.mrb[0].mxu0
  %v5459 = vadd.f32 %v5218, %v5458
  %v5460 = vpop.f32.mrb[0].mxu0
  %v5461 = vadd.f32 %v5220, %v5460
  %v5462 = vand.u32 %v2188, 4294901760
  %v5463 = vsub.f32 %v2188, %v5462
  %v5464 = vand.u32 %v5463, 4294901760
  %5465 = vmatprep.mubr.f32.mxu0 %v5464
  %v5466 = vand.u32 %v2187, 4294901760
  %v5467 = vsub.f32 %v2187, %v5466
  %v5468 = vand.u32 %v5467, 4294901760
  %5469 = vmatmul.mubr.f32.gmra.mrb[0].mxu0 %v5468
  %v5470 = vpop.f32.mrb[0].mxu0
  %v5471 = vadd.f32 %v5228, %v5470
  %v5472 = vpop.f32.mrb[0].mxu0
  %v5473 = vadd.f32 %v5230, %v5472
  %v5474 = vand.u32 %v2192, 4294901760
  %v5475 = vsub.f32 %v2192, %v5474
  %v5476 = vand.u32 %v5475, 4294901760
  %5477 = vmatprep.mubr.f32.mxu0 %v5476
  %v5478 = vand.u32 %v2191, 4294901760
  %v5479 = vsub.f32 %v2191, %v5478
  %v5480 = vand.u32 %v5479, 4294901760
  %5481 = vmatmul.mubr.f32.gmra.mrb[0].mxu0 %v5480
  %v5482 = vpop.f32.mrb[0].mxu0
  %v5483 = vadd.f32 %v5238, %v5482
  %v5484 = vpop.f32.mrb[0].mxu0
  %v5485 = vadd.f32 %v5240, %v5484
  %v5486 = vand.u32 %v2196, 4294901760
  %v5487 = vsub.f32 %v2196, %v5486
  %v5488 = vand.u32 %v5487, 4294901760
  %5489 = vmatprep.mubr.f32.mxu0 %v5488
  %v5490 = vand.u32 %v2195, 4294901760
  %v5491 = vsub.f32 %v2195, %v5490
  %v5492 = vand.u32 %v5491, 4294901760
  %5493 = vmatmul.mubr.f32.gmra.mrb[0].mxu0 %v5492
  %v5494 = vpop.f32.mrb[0].mxu0
  %v5495 = vadd.f32 %v5248, %v5494
  %v5496 = vpop.f32.mrb[0].mxu0
  %v5497 = vadd.f32 %v5250, %v5496
  %v5498 = vand.u32 %v2200, 4294901760
  %v5499 = vsub.f32 %v2200, %v5498
  %v5500 = vand.u32 %v5499, 4294901760
  %5501 = vmatprep.mubr.f32.mxu0 %v5500
  %v5502 = vand.u32 %v2199, 4294901760
  %v5503 = vsub.f32 %v2199, %v5502
  %v5504 = vand.u32 %v5503, 4294901760
  %5505 = vmatmul.mubr.f32.gmra.mrb[0].mxu0 %v5504
  %v5506 = vpop.f32.mrb[0].mxu0
  %v5507 = vadd.f32 %v5258, %v5506
  %v5508 = vpop.f32.mrb[0].mxu0
  %v5509 = vadd.f32 %v5260, %v5508
  %v5510 = vand.u32 %v2204, 4294901760
  %v5511 = vsub.f32 %v2204, %v5510
  %v5512 = vand.u32 %v5511, 4294901760
  %5513 = vmatprep.mubr.f32.mxu0 %v5512
  %v5514 = vand.u32 %v2203, 4294901760
  %v5515 = vsub.f32 %v2203, %v5514
  %v5516 = vand.u32 %v5515, 4294901760
  %5517 = vmatmul.mubr.f32.gmra.mrb[0].mxu0 %v5516
  %v5518 = vpop.f32.mrb[0].mxu0
  %v5519 = vadd.f32 %v5268, %v5518
  %v5520 = vpop.f32.mrb[0].mxu0
  %v5521 = vadd.f32 %v5270, %v5520
  %v5522 = vand.u32 %v2208, 4294901760
  %v5523 = vsub.f32 %v2208, %v5522
  %v5524 = vand.u32 %v5523, 4294901760
  %5525 = vmatprep.mubr.f32.mxu0 %v5524
  %v5526 = vand.u32 %v2207, 4294901760
  %v5527 = vsub.f32 %v2207, %v5526
  %v5528 = vand.u32 %v5527, 4294901760
  %5529 = vmatmul.mubr.f32.gmra.mrb[0].mxu0 %v5528
  %v5530 = vpop.f32.mrb[0].mxu0
  %v5531 = vadd.f32 %v5278, %v5530
  %v5532 = vpop.f32.mrb[0].mxu0
  %v5533 = vadd.f32 %v5280, %v5532
  %v5534 = vand.u32 %v2212, 4294901760
  %v5535 = vsub.f32 %v2212, %v5534
  %v5536 = vand.u32 %v5535, 4294901760
  %5537 = vmatprep.mubr.f32.mxu0 %v5536
  %v5538 = vand.u32 %v2211, 4294901760
  %v5539 = vsub.f32 %v2211, %v5538
  %v5540 = vand.u32 %v5539, 4294901760
  %5541 = vmatmul.mubr.f32.gmra.mrb[0].mxu0 %v5540
  %v5542 = vpop.f32.mrb[0].mxu0
  %v5543 = vadd.f32 %v5288, %v5542
  %v5544 = vpop.f32.mrb[0].mxu0
  %v5545 = vadd.f32 %v5290, %v5544
  %v5546 = vand.u32 %v2216, 4294901760
  %v5547 = vsub.f32 %v2216, %v5546
  %v5548 = vand.u32 %v5547, 4294901760
  %5549 = vmatprep.mubr.f32.mxu0 %v5548
  %v5550 = vand.u32 %v2215, 4294901760
  %v5551 = vsub.f32 %v2215, %v5550
  %v5552 = vand.u32 %v5551, 4294901760
  %5553 = vmatmul.mubr.f32.gmra.mrb[0].mxu0 %v5552
  %v5554 = vpop.f32.mrb[0].mxu0
  %v5555 = vadd.f32 %v5298, %v5554
  %v5556 = vpop.f32.mrb[0].mxu0
  %v5557 = vadd.f32 %v5300, %v5556
  %5558 = vdwg.mxu0
  %v5559 = vsub.f32 %v2350, %v2350
  %v5560 = vand.u32 %v5559, 4294901760
  %5561 = vmatprep.subr.mxu0 %v5560
  %v5562 = vsub.f32 %v2349, %v2349
  %v5563 = vand.u32 %v5562, 4294901760
  %5564 = vmatpush1.msra.mxu0 %v5563
  %v5565 = vsub.f32 %v2352, %v2352
  %v5566 = vand.u32 %v5565, 4294901760
  %5567 = vmatprep.subr.mxu0 %v5566
  %v5568 = vsub.f32 %v2351, %v2351
  %v5569 = vand.u32 %v5568, 4294901760
  %5570 = vmatpush1.msra.mxu0 %v5569
  %v5571 = vsub.f32 %v2354, %v2354
  %v5572 = vand.u32 %v5571, 4294901760
  %5573 = vmatprep.subr.mxu0 %v5572
  %v5574 = vsub.f32 %v2353, %v2353
  %v5575 = vand.u32 %v5574, 4294901760
  %5576 = vmatpush1.msra.mxu0 %v5575
  %v5577 = vsub.f32 %v2356, %v2356
  %v5578 = vand.u32 %v5577, 4294901760
  %5579 = vmatprep.subr.mxu0 %v5578
  %v5580 = vsub.f32 %v2355, %v2355
  %v5581 = vand.u32 %v5580, 4294901760
  %5582 = vmatpush1.msra.mxu0 %v5581
  %v5583 = vsub.f32 %v2358, %v2358
  %v5584 = vand.u32 %v5583, 4294901760
  %5585 = vmatprep.subr.mxu0 %v5584
  %v5586 = vsub.f32 %v2357, %v2357
  %v5587 = vand.u32 %v5586, 4294901760
  %5588 = vmatpush1.msra.mxu0 %v5587
  %v5589 = vsub.f32 %v2360, %v2360
  %v5590 = vand.u32 %v5589, 4294901760
  %5591 = vmatprep.subr.mxu0 %v5590
  %v5592 = vsub.f32 %v2359, %v2359
  %v5593 = vand.u32 %v5592, 4294901760
  %5594 = vmatpush1.msra.mxu0 %v5593
  %v5595 = vsub.f32 %v2362, %v2362
  %v5596 = vand.u32 %v5595, 4294901760
  %5597 = vmatprep.subr.mxu0 %v5596
  %v5598 = vsub.f32 %v2361, %v2361
  %v5599 = vand.u32 %v5598, 4294901760
  %5600 = vmatpush1.msra.mxu0 %v5599
  %v5601 = vsub.f32 %v2364, %v2364
  %v5602 = vand.u32 %v5601, 4294901760
  %5603 = vmatprep.subr.mxu0 %v5602
  %v5604 = vsub.f32 %v2363, %v2363
  %v5605 = vand.u32 %v5604, 4294901760
  %5606 = vmatpush1.msra.mxu0 %v5605
  %v5607 = vsub.f32 %v2366, %v2366
  %v5608 = vand.u32 %v5607, 4294901760
  %5609 = vmatprep.subr.mxu0 %v5608
  %v5610 = vsub.f32 %v2365, %v2365
  %v5611 = vand.u32 %v5610, 4294901760
  %5612 = vmatpush1.msra.mxu0 %v5611
  %v5613 = vsub.f32 %v2368, %v2368
  %v5614 = vand.u32 %v5613, 4294901760
  %5615 = vmatprep.subr.mxu0 %v5614
  %v5616 = vsub.f32 %v2367, %v2367
  %v5617 = vand.u32 %v5616, 4294901760
  %5618 = vmatpush1.msra.mxu0 %v5617
  %v5619 = vsub.f32 %v2370, %v2370
  %v5620 = vand.u32 %v5619, 4294901760
  %5621 = vmatprep.subr.mxu0 %v5620
  %v5622 = vsub.f32 %v2369, %v2369
  %v5623 = vand.u32 %v5622, 4294901760
  %5624 = vmatpush1.msra.mxu0 %v5623
  %v5625 = vsub.f32 %v2372, %v2372
  %v5626 = vand.u32 %v5625, 4294901760
  %5627 = vmatprep.subr.mxu0 %v5626
  %v5628 = vsub.f32 %v2371, %v2371
  %v5629 = vand.u32 %v5628, 4294901760
  %5630 = vmatpush1.msra.mxu0 %v5629
  %v5631 = vsub.f32 %v2374, %v2374
  %v5632 = vand.u32 %v5631, 4294901760
  %5633 = vmatprep.subr.mxu0 %v5632
  %v5634 = vsub.f32 %v2373, %v2373
  %v5635 = vand.u32 %v5634, 4294901760
  %5636 = vmatpush1.msra.mxu0 %v5635
  %v5637 = vsub.f32 %v2376, %v2376
  %v5638 = vand.u32 %v5637, 4294901760
  %5639 = vmatprep.subr.mxu0 %v5638
  %v5640 = vsub.f32 %v2375, %v2375
  %v5641 = vand.u32 %v5640, 4294901760
  %5642 = vmatpush1.msra.mxu0 %v5641
  %v5643 = vsub.f32 %v2378, %v2378
  %v5644 = vand.u32 %v5643, 4294901760
  %5645 = vmatprep.subr.mxu0 %v5644
  %v5646 = vsub.f32 %v2377, %v2377
  %v5647 = vand.u32 %v5646, 4294901760
  %5648 = vmatpush1.msra.mxu0 %v5647
  %v5649 = vsub.f32 %v2380, %v2380
  %v5650 = vand.u32 %v5649, 4294901760
  %5651 = vmatprep.subr.mxu0 %v5650
  %v5652 = vsub.f32 %v2379, %v2379
  %v5653 = vand.u32 %v5652, 4294901760
  %5654 = vmatpush1.msra.mxu0 %v5653
  %v5655 = vsub.f32 %v2382, %v2382
  %v5656 = vand.u32 %v5655, 4294901760
  %5657 = vmatprep.subr.mxu0 %v5656
  %v5658 = vsub.f32 %v2381, %v2381
  %v5659 = vand.u32 %v5658, 4294901760
  %5660 = vmatpush1.msra.mxu0 %v5659
  %v5661 = vsub.f32 %v2384, %v2384
  %v5662 = vand.u32 %v5661, 4294901760
  %5663 = vmatprep.subr.mxu0 %v5662
  %v5664 = vsub.f32 %v2383, %v2383
  %v5665 = vand.u32 %v5664, 4294901760
  %5666 = vmatpush1.msra.mxu0 %v5665
  %v5667 = vsub.f32 %v2386, %v2386
  %v5668 = vand.u32 %v5667, 4294901760
  %5669 = vmatprep.subr.mxu0 %v5668
  %v5670 = vsub.f32 %v2385, %v2385
  %v5671 = vand.u32 %v5670, 4294901760
  %5672 = vmatpush1.msra.mxu0 %v5671
  %v5673 = vsub.f32 %v2388, %v2388
  %v5674 = vand.u32 %v5673, 4294901760
  %5675 = vmatprep.subr.mxu0 %v5674
  %v5676 = vsub.f32 %v2387, %v2387
  %v5677 = vand.u32 %v5676, 4294901760
  %5678 = vmatpush1.msra.mxu0 %v5677
  %v5679 = vsub.f32 %v2390, %v2390
  %v5680 = vand.u32 %v5679, 4294901760
  %5681 = vmatprep.subr.mxu0 %v5680
  %v5682 = vsub.f32 %v2389, %v2389
  %v5683 = vand.u32 %v5682, 4294901760
  %5684 = vmatpush1.msra.mxu0 %v5683
  %v5685 = vsub.f32 %v2392, %v2392
  %v5686 = vand.u32 %v5685, 4294901760
  %5687 = vmatprep.subr.mxu0 %v5686
  %v5688 = vsub.f32 %v2391, %v2391
  %v5689 = vand.u32 %v5688, 4294901760
  %5690 = vmatpush1.msra.mxu0 %v5689
  %v5691 = vsub.f32 %v2394, %v2394
  %v5692 = vand.u32 %v5691, 4294901760
  %5693 = vmatprep.subr.mxu0 %v5692
  %v5694 = vsub.f32 %v2393, %v2393
  %v5695 = vand.u32 %v5694, 4294901760
  %5696 = vmatpush1.msra.mxu0 %v5695
  %v5697 = vsub.f32 %v2396, %v2396
  %v5698 = vand.u32 %v5697, 4294901760
  %5699 = vmatprep.subr.mxu0 %v5698
  %v5700 = vsub.f32 %v2395, %v2395
  %v5701 = vand.u32 %v5700, 4294901760
  %5702 = vmatpush1.msra.mxu0 %v5701
  %v5703 = vsub.f32 %v2398, %v2398
  %v5704 = vand.u32 %v5703, 4294901760
  %5705 = vmatprep.subr.mxu0 %v5704
  %v5706 = vsub.f32 %v2397, %v2397
  %v5707 = vand.u32 %v5706, 4294901760
  %5708 = vmatpush1.msra.mxu0 %v5707
  %v5709 = vsub.f32 %v2400, %v2400
  %v5710 = vand.u32 %v5709, 4294901760
  %5711 = vmatprep.subr.mxu0 %v5710
  %v5712 = vsub.f32 %v2399, %v2399
  %v5713 = vand.u32 %v5712, 4294901760
  %5714 = vmatpush1.msra.mxu0 %v5713
  %v5715 = vsub.f32 %v2402, %v2402
  %v5716 = vand.u32 %v5715, 4294901760
  %5717 = vmatprep.subr.mxu0 %v5716
  %v5718 = vsub.f32 %v2401, %v2401
  %v5719 = vand.u32 %v5718, 4294901760
  %5720 = vmatpush1.msra.mxu0 %v5719
  %v5721 = vsub.f32 %v2404, %v2404
  %v5722 = vand.u32 %v5721, 4294901760
  %5723 = vmatprep.subr.mxu0 %v5722
  %v5724 = vsub.f32 %v2403, %v2403
  %v5725 = vand.u32 %v5724, 4294901760
  %5726 = vmatpush1.msra.mxu0 %v5725
  %v5727 = vsub.f32 %v2406, %v2406
  %v5728 = vand.u32 %v5727, 4294901760
  %5729 = vmatprep.subr.mxu0 %v5728
  %v5730 = vsub.f32 %v2405, %v2405
  %v5731 = vand.u32 %v5730, 4294901760
  %5732 = vmatpush1.msra.mxu0 %v5731
  %v5733 = vsub.f32 %v2408, %v2408
  %v5734 = vand.u32 %v5733, 4294901760
  %5735 = vmatprep.subr.mxu0 %v5734
  %v5736 = vsub.f32 %v2407, %v2407
  %v5737 = vand.u32 %v5736, 4294901760
  %5738 = vmatpush1.msra.mxu0 %v5737
  %v5739 = vsub.f32 %v2410, %v2410
  %v5740 = vand.u32 %v5739, 4294901760
  %5741 = vmatprep.subr.mxu0 %v5740
  %v5742 = vsub.f32 %v2409, %v2409
  %v5743 = vand.u32 %v5742, 4294901760
  %5744 = vmatpush1.msra.mxu0 %v5743
  %v5745 = vsub.f32 %v2412, %v2412
  %v5746 = vand.u32 %v5745, 4294901760
  %5747 = vmatprep.subr.mxu0 %v5746
  %v5748 = vsub.f32 %v2411, %v2411
  %v5749 = vand.u32 %v5748, 4294901760
  %5750 = vmatpush1.msra.mxu0 %v5749
  %v5751 = vand.u32 %v2156, 4294901760
  %5752 = vmatprep.mubr.f32.mxu0 %v5751
  %v5753 = vand.u32 %v2155, 4294901760
  %5754 = vmatmul.mubr.f32.gmra.mrb[0].mxu0 %v5753
  %v5755 = vpop.f32.mrb[0].mxu0
  %v5756 = vadd.f32 %v5375, %v5755
  %v5757 = vpop.f32.mrb[0].mxu0
  %v5758 = vadd.f32 %v5377, %v5757
  %v5759 = vand.u32 %v2160, 4294901760
  %5760 = vmatprep.mubr.f32.mxu0 %v5759
  %v5761 = vand.u32 %v2159, 4294901760
  %5762 = vmatmul.mubr.f32.gmra.mrb[0].mxu0 %v5761
  %v5763 = vpop.f32.mrb[0].mxu0
  %v5764 = vadd.f32 %v5387, %v5763
  %v5765 = vpop.f32.mrb[0].mxu0
  %v5766 = vadd.f32 %v5389, %v5765
  %v5767 = vand.u32 %v2164, 4294901760
  %5768 = vmatprep.mubr.f32.mxu0 %v5767
  %v5769 = vand.u32 %v2163, 4294901760
  %5770 = vmatmul.mubr.f32.gmra.mrb[0].mxu0 %v5769
  %v5771 = vpop.f32.mrb[0].mxu0
  %v5772 = vadd.f32 %v5399, %v5771
  %v5773 = vpop.f32.mrb[0].mxu0
  %v5774 = vadd.f32 %v5401, %v5773
  %v5775 = vand.u32 %v2168, 4294901760
  %5776 = vmatprep.mubr.f32.mxu0 %v5775
  %v5777 = vand.u32 %v2167, 4294901760
  %5778 = vmatmul.mubr.f32.gmra.mrb[0].mxu0 %v5777
  %v5779 = vpop.f32.mrb[0].mxu0
  %v5780 = vadd.f32 %v5411, %v5779
  %v5781 = vpop.f32.mrb[0].mxu0
  %v5782 = vadd.f32 %v5413, %v5781
  %v5783 = vand.u32 %v2172, 4294901760
  %5784 = vmatprep.mubr.f32.mxu0 %v5783
  %v5785 = vand.u32 %v2171, 4294901760
  %5786 = vmatmul.mubr.f32.gmra.mrb[0].mxu0 %v5785
  %v5787 = vpop.f32.mrb[0].mxu0
  %v5788 = vadd.f32 %v5423, %v5787
  %v5789 = vpop.f32.mrb[0].mxu0
  %v5790 = vadd.f32 %v5425, %v5789
  %v5791 = vand.u32 %v2176, 4294901760
  %5792 = vmatprep.mubr.f32.mxu0 %v5791
  %v5793 = vand.u32 %v2175, 4294901760
  %5794 = vmatmul.mubr.f32.gmra.mrb[0].mxu0 %v5793
  %v5795 = vpop.f32.mrb[0].mxu0
  %v5796 = vadd.f32 %v5435, %v5795
  %v5797 = vpop.f32.mrb[0].mxu0
  %v5798 = vadd.f32 %v5437, %v5797
  %v5799 = vand.u32 %v2180, 4294901760
  %5800 = vmatprep.mubr.f32.mxu0 %v5799
  %v5801 = vand.u32 %v2179, 4294901760
  %5802 = vmatmul.mubr.f32.gmra.mrb[0].mxu0 %v5801
  %v5803 = vpop.f32.mrb[0].mxu0
  %v5804 = vadd.f32 %v5447, %v5803
  %v5805 = vpop.f32.mrb[0].mxu0
  %v5806 = vadd.f32 %v5449, %v5805
  %v5807 = vand.u32 %v2184, 4294901760
  %5808 = vmatprep.mubr.f32.mxu0 %v5807
  %v5809 = vand.u32 %v2183, 4294901760
  %5810 = vmatmul.mubr.f32.gmra.mrb[0].mxu0 %v5809
  %v5811 = vpop.f32.mrb[0].mxu0
  %v5812 = vadd.f32 %v5459, %v5811
  %v5813 = vpop.f32.mrb[0].mxu0
  %v5814 = vadd.f32 %v5461, %v5813
  %v5815 = vand.u32 %v2188, 4294901760
  %5816 = vmatprep.mubr.f32.mxu0 %v5815
  %v5817 = vand.u32 %v2187, 4294901760
  %5818 = vmatmul.mubr.f32.gmra.mrb[0].mxu0 %v5817
  %v5819 = vpop.f32.mrb[0].mxu0
  %v5820 = vadd.f32 %v5471, %v5819
  %v5821 = vpop.f32.mrb[0].mxu0
  %v5822 = vadd.f32 %v5473, %v5821
  %v5823 = vand.u32 %v2192, 4294901760
  %5824 = vmatprep.mubr.f32.mxu0 %v5823
  %v5825 = vand.u32 %v2191, 4294901760
  %5826 = vmatmul.mubr.f32.gmra.mrb[0].mxu0 %v5825
  %v5827 = vpop.f32.mrb[0].mxu0
  %v5828 = vadd.f32 %v5483, %v5827
  %v5829 = vpop.f32.mrb[0].mxu0
  %v5830 = vadd.f32 %v5485, %v5829
  %v5831 = vand.u32 %v2196, 4294901760
  %5832 = vmatprep.mubr.f32.mxu0 %v5831
  %v5833 = vand.u32 %v2195, 4294901760
  %5834 = vmatmul.mubr.f32.gmra.mrb[0].mxu0 %v5833
  %v5835 = vpop.f32.mrb[0].mxu0
  %v5836 = vadd.f32 %v5495, %v5835
  %v5837 = vpop.f32.mrb[0].mxu0
  %v5838 = vadd.f32 %v5497, %v5837
  %v5839 = vand.u32 %v2200, 4294901760
  %5840 = vmatprep.mubr.f32.mxu0 %v5839
  %v5841 = vand.u32 %v2199, 4294901760
  %5842 = vmatmul.mubr.f32.gmra.mrb[0].mxu0 %v5841
  %v5843 = vpop.f32.mrb[0].mxu0
  %v5844 = vadd.f32 %v5507, %v5843
  %v5845 = vpop.f32.mrb[0].mxu0
  %v5846 = vadd.f32 %v5509, %v5845
  %v5847 = vand.u32 %v2204, 4294901760
  %5848 = vmatprep.mubr.f32.mxu0 %v5847
  %v5849 = vand.u32 %v2203, 4294901760
  %5850 = vmatmul.mubr.f32.gmra.mrb[0].mxu0 %v5849
  %v5851 = vpop.f32.mrb[0].mxu0
  %v5852 = vadd.f32 %v5519, %v5851
  %v5853 = vpop.f32.mrb[0].mxu0
  %v5854 = vadd.f32 %v5521, %v5853
  %v5855 = vand.u32 %v2208, 4294901760
  %5856 = vmatprep.mubr.f32.mxu0 %v5855
  %v5857 = vand.u32 %v2207, 4294901760
  %5858 = vmatmul.mubr.f32.gmra.mrb[0].mxu0 %v5857
  %v5859 = vpop.f32.mrb[0].mxu0
  %v5860 = vadd.f32 %v5531, %v5859
  %v5861 = vpop.f32.mrb[0].mxu0
  %v5862 = vadd.f32 %v5533, %v5861
  %v5863 = vand.u32 %v2212, 4294901760
  %5864 = vmatprep.mubr.f32.mxu0 %v5863
  %v5865 = vand.u32 %v2211, 4294901760
  %5866 = vmatmul.mubr.f32.gmra.mrb[0].mxu0 %v5865
  %v5867 = vpop.f32.mrb[0].mxu0
  %v5868 = vadd.f32 %v5543, %v5867
  %v5869 = vpop.f32.mrb[0].mxu0
  %v5870 = vadd.f32 %v5545, %v5869
  %v5871 = vand.u32 %v2216, 4294901760
  %5872 = vmatprep.mubr.f32.mxu0 %v5871
  %v5873 = vand.u32 %v2215, 4294901760
  %5874 = vmatmul.mubr.f32.gmra.mrb[0].mxu0 %v5873
  %v5875 = vpop.f32.mrb[0].mxu0
  %v5876 = vadd.f32 %v5555, %v5875
  %v5877 = vpop.f32.mrb[0].mxu0
  %v5878 = vadd.f32 %v5557, %v5877
  %5879 = vdwg.mxu0
  %5880 = vmatprep.subr.mxu0 %v2350
  %5881 = vmatpush1.msra.mxu0 %v2349
  %5882 = vmatprep.subr.mxu0 %v2352
  %5883 = vmatpush1.msra.mxu0 %v2351
  %5884 = vmatprep.subr.mxu0 %v2354
  %5885 = vmatpush1.msra.mxu0 %v2353
  %5886 = vmatprep.subr.mxu0 %v2356
  %5887 = vmatpush1.msra.mxu0 %v2355
  %5888 = vmatprep.subr.mxu0 %v2358
  %5889 = vmatpush1.msra.mxu0 %v2357
  %5890 = vmatprep.subr.mxu0 %v2360
  %5891 = vmatpush1.msra.mxu0 %v2359
  %5892 = vmatprep.subr.mxu0 %v2362
  %5893 = vmatpush1.msra.mxu0 %v2361
  %5894 = vmatprep.subr.mxu0 %v2364
  %5895 = vmatpush1.msra.mxu0 %v2363
  %5896 = vmatprep.subr.mxu0 %v2366
  %5897 = vmatpush1.msra.mxu0 %v2365
  %5898 = vmatprep.subr.mxu0 %v2368
  %5899 = vmatpush1.msra.mxu0 %v2367
  %5900 = vmatprep.subr.mxu0 %v2370
  %5901 = vmatpush1.msra.mxu0 %v2369
  %5902 = vmatprep.subr.mxu0 %v2372
  %5903 = vmatpush1.msra.mxu0 %v2371
  %5904 = vmatprep.subr.mxu0 %v2374
  %5905 = vmatpush1.msra.mxu0 %v2373
  %5906 = vmatprep.subr.mxu0 %v2376
  %5907 = vmatpush1.msra.mxu0 %v2375
  %5908 = vmatprep.subr.mxu0 %v2378
  %5909 = vmatpush1.msra.mxu0 %v2377
  %5910 = vmatprep.subr.mxu0 %v2380
  %5911 = vmatpush1.msra.mxu0 %v2379
  %5912 = vmatprep.subr.mxu0 %v2382
  %5913 = vmatpush1.msra.mxu0 %v2381
  %5914 = vmatprep.subr.mxu0 %v2384
  %5915 = vmatpush1.msra.mxu0 %v2383
  %5916 = vmatprep.subr.mxu0 %v2386
  %5917 = vmatpush1.msra.mxu0 %v2385
  %5918 = vmatprep.subr.mxu0 %v2388
  %5919 = vmatpush1.msra.mxu0 %v2387
  %5920 = vmatprep.subr.mxu0 %v2390
  %5921 = vmatpush1.msra.mxu0 %v2389
  %5922 = vmatprep.subr.mxu0 %v2392
  %5923 = vmatpush1.msra.mxu0 %v2391
  %5924 = vmatprep.subr.mxu0 %v2394
  %5925 = vmatpush1.msra.mxu0 %v2393
  %5926 = vmatprep.subr.mxu0 %v2396
  %5927 = vmatpush1.msra.mxu0 %v2395
  %5928 = vmatprep.subr.mxu0 %v2398
  %5929 = vmatpush1.msra.mxu0 %v2397
  %5930 = vmatprep.subr.mxu0 %v2400
  %5931 = vmatpush1.msra.mxu0 %v2399
  %5932 = vmatprep.subr.mxu0 %v2402
  %5933 = vmatpush1.msra.mxu0 %v2401
  %5934 = vmatprep.subr.mxu0 %v2404
  %5935 = vmatpush1.msra.mxu0 %v2403
  %5936 = vmatprep.subr.mxu0 %v2406
  %5937 = vmatpush1.msra.mxu0 %v2405
  %5938 = vmatprep.subr.mxu0 %v2408
  %5939 = vmatpush1.msra.mxu0 %v2407
  %5940 = vmatprep.subr.mxu0 %v2410
  %5941 = vmatpush1.msra.mxu0 %v2409
  %5942 = vmatprep.subr.mxu0 %v2412
  %5943 = vmatpush1.msra.mxu0 %v2411
  %v5944 = vand.u32 %v2156, 4294901760
  %5945 = vmatprep.mubr.f32.mxu0 %v5944
  %v5946 = vand.u32 %v2155, 4294901760
  %5947 = vmatmul.mubr.f32.gmra.mrb[0].mxu0 %v5946
  %v5948 = vpop.f32.mrb[0].mxu0
  %v5949 = vadd.f32 %v5756, %v5948
  %v5950 = vpop.f32.mrb[0].mxu0
  %v5951 = vadd.f32 %v5758, %v5950
  %v5952 = vand.u32 %v2160, 4294901760
  %5953 = vmatprep.mubr.f32.mxu0 %v5952
  %v5954 = vand.u32 %v2159, 4294901760
  %5955 = vmatmul.mubr.f32.gmra.mrb[0].mxu0 %v5954
  %v5956 = vpop.f32.mrb[0].mxu0
  %v5957 = vadd.f32 %v5764, %v5956
  %v5958 = vpop.f32.mrb[0].mxu0
  %v5959 = vadd.f32 %v5766, %v5958
  %v5960 = vand.u32 %v2164, 4294901760
  %5961 = vmatprep.mubr.f32.mxu0 %v5960
  %v5962 = vand.u32 %v2163, 4294901760
  %5963 = vmatmul.mubr.f32.gmra.mrb[0].mxu0 %v5962
  %v5964 = vpop.f32.mrb[0].mxu0
  %v5965 = vadd.f32 %v5772, %v5964
  %v5966 = vpop.f32.mrb[0].mxu0
  %v5967 = vadd.f32 %v5774, %v5966
  %v5968 = vand.u32 %v2168, 4294901760
  %5969 = vmatprep.mubr.f32.mxu0 %v5968
  %v5970 = vand.u32 %v2167, 4294901760
  %5971 = vmatmul.mubr.f32.gmra.mrb[0].mxu0 %v5970
  %v5972 = vpop.f32.mrb[0].mxu0
  %v5973 = vadd.f32 %v5780, %v5972
  %v5974 = vpop.f32.mrb[0].mxu0
  %v5975 = vadd.f32 %v5782, %v5974
  %v5976 = vand.u32 %v2172, 4294901760
  %5977 = vmatprep.mubr.f32.mxu0 %v5976
  %v5978 = vand.u32 %v2171, 4294901760
  %5979 = vmatmul.mubr.f32.gmra.mrb[0].mxu0 %v5978
  %v5980 = vpop.f32.mrb[0].mxu0
  %v5981 = vadd.f32 %v5788, %v5980
  %v5982 = vpop.f32.mrb[0].mxu0
  %v5983 = vadd.f32 %v5790, %v5982
  %v5984 = vand.u32 %v2176, 4294901760
  %5985 = vmatprep.mubr.f32.mxu0 %v5984
  %v5986 = vand.u32 %v2175, 4294901760
  %5987 = vmatmul.mubr.f32.gmra.mrb[0].mxu0 %v5986
  %v5988 = vpop.f32.mrb[0].mxu0
  %v5989 = vadd.f32 %v5796, %v5988
  %v5990 = vpop.f32.mrb[0].mxu0
  %v5991 = vadd.f32 %v5798, %v5990
  %v5992 = vand.u32 %v2180, 4294901760
  %5993 = vmatprep.mubr.f32.mxu0 %v5992
  %v5994 = vand.u32 %v2179, 4294901760
  %5995 = vmatmul.mubr.f32.gmra.mrb[0].mxu0 %v5994
  %v5996 = vpop.f32.mrb[0].mxu0
  %v5997 = vadd.f32 %v5804, %v5996
  %v5998 = vpop.f32.mrb[0].mxu0
  %v5999 = vadd.f32 %v5806, %v5998
  %v6000 = vand.u32 %v2184, 4294901760
  %6001 = vmatprep.mubr.f32.mxu0 %v6000
  %v6002 = vand.u32 %v2183, 4294901760
  %6003 = vmatmul.mubr.f32.gmra.mrb[0].mxu0 %v6002
  %v6004 = vpop.f32.mrb[0].mxu0
  %v6005 = vadd.f32 %v5812, %v6004
  %v6006 = vpop.f32.mrb[0].mxu0
  %v6007 = vadd.f32 %v5814, %v6006
  %v6008 = vand.u32 %v2188, 4294901760
  %6009 = vmatprep.mubr.f32.mxu0 %v6008
  %v6010 = vand.u32 %v2187, 4294901760
  %6011 = vmatmul.mubr.f32.gmra.mrb[0].mxu0 %v6010
  %v6012 = vpop.f32.mrb[0].mxu0
  %v6013 = vadd.f32 %v5820, %v6012
  %v6014 = vpop.f32.mrb[0].mxu0
  %v6015 = vadd.f32 %v5822, %v6014
  %v6016 = vand.u32 %v2192, 4294901760
  %6017 = vmatprep.mubr.f32.mxu0 %v6016
  %v6018 = vand.u32 %v2191, 4294901760
  %6019 = vmatmul.mubr.f32.gmra.mrb[0].mxu0 %v6018
  %v6020 = vpop.f32.mrb[0].mxu0
  %v6021 = vadd.f32 %v5828, %v6020
  %v6022 = vpop.f32.mrb[0].mxu0
  %v6023 = vadd.f32 %v5830, %v6022
  %v6024 = vand.u32 %v2196, 4294901760
  %6025 = vmatprep.mubr.f32.mxu0 %v6024
  %v6026 = vand.u32 %v2195, 4294901760
  %6027 = vmatmul.mubr.f32.gmra.mrb[0].mxu0 %v6026
  %v6028 = vpop.f32.mrb[0].mxu0
  %v6029 = vadd.f32 %v5836, %v6028
  %v6030 = vpop.f32.mrb[0].mxu0
  %v6031 = vadd.f32 %v5838, %v6030
  %v6032 = vand.u32 %v2200, 4294901760
  %6033 = vmatprep.mubr.f32.mxu0 %v6032
  %v6034 = vand.u32 %v2199, 4294901760
  %6035 = vmatmul.mubr.f32.gmra.mrb[0].mxu0 %v6034
  %v6036 = vpop.f32.mrb[0].mxu0
  %v6037 = vadd.f32 %v5844, %v6036
  %v6038 = vpop.f32.mrb[0].mxu0
  %v6039 = vadd.f32 %v5846, %v6038
  %v6040 = vand.u32 %v2204, 4294901760
  %6041 = vmatprep.mubr.f32.mxu0 %v6040
  %v6042 = vand.u32 %v2203, 4294901760
  %6043 = vmatmul.mubr.f32.gmra.mrb[0].mxu0 %v6042
  %v6044 = vpop.f32.mrb[0].mxu0
  %v6045 = vadd.f32 %v5852, %v6044
  %v6046 = vpop.f32.mrb[0].mxu0
  %v6047 = vadd.f32 %v5854, %v6046
  %v6048 = vand.u32 %v2208, 4294901760
  %6049 = vmatprep.mubr.f32.mxu0 %v6048
  %v6050 = vand.u32 %v2207, 4294901760
  %6051 = vmatmul.mubr.f32.gmra.mrb[0].mxu0 %v6050
  %v6052 = vpop.f32.mrb[0].mxu0
  %v6053 = vadd.f32 %v5860, %v6052
  %v6054 = vpop.f32.mrb[0].mxu0
  %v6055 = vadd.f32 %v5862, %v6054
  %v6056 = vand.u32 %v2212, 4294901760
  %6057 = vmatprep.mubr.f32.mxu0 %v6056
  %v6058 = vand.u32 %v2211, 4294901760
  %6059 = vmatmul.mubr.f32.gmra.mrb[0].mxu0 %v6058
  %v6060 = vpop.f32.mrb[0].mxu0
  %v6061 = vadd.f32 %v5868, %v6060
  %v6062 = vpop.f32.mrb[0].mxu0
  %v6063 = vadd.f32 %v5870, %v6062
  %v6064 = vand.u32 %v2216, 4294901760
  %6065 = vmatprep.mubr.f32.mxu0 %v6064
  %v6066 = vand.u32 %v2215, 4294901760
  %6067 = vmatmul.mubr.f32.gmra.mrb[0].mxu0 %v6066
  %v6068 = vpop.f32.mrb[0].mxu0
  %v6069 = vadd.f32 %v5876, %v6068
  %v6070 = vpop.f32.mrb[0].mxu0
  %v6071 = vadd.f32 %v5878, %v6070
  %6072 = vdwg.mxu0
  %vm6073 = vcmask 556032
  %v6074 = vsel %vm6073, %v5951, 0.0
  %v6075 = vadd.f32 %v5949, %v6074
  %6076 = vadd.xlane.f32.xlu0 %v6075
  %v6077 = vpop.xlane.xlu0 %6076
  %v6078 = vsel %vm6073, %v5959, 0.0
  %v6079 = vadd.f32 %v5957, %v6078
  %6080 = vadd.xlane.f32.xlu0 %v6079
  %v6081 = vpop.xlane.xlu0 %6080
  %v6082 = vsel %vm6073, %v5967, 0.0
  %v6083 = vadd.f32 %v5965, %v6082
  %6084 = vadd.xlane.f32.xlu0 %v6083
  %v6085 = vpop.xlane.xlu0 %6084
  %v6086 = vsel %vm6073, %v5975, 0.0
  %v6087 = vadd.f32 %v5973, %v6086
  %6088 = vadd.xlane.f32.xlu0 %v6087
  %v6089 = vpop.xlane.xlu0 %6088
  %v6090 = vsel %vm6073, %v5983, 0.0
  %v6091 = vadd.f32 %v5981, %v6090
  %6092 = vadd.xlane.f32.xlu0 %v6091
  %v6093 = vpop.xlane.xlu0 %6092
  %v6094 = vsel %vm6073, %v5991, 0.0
  %v6095 = vadd.f32 %v5989, %v6094
  %6096 = vadd.xlane.f32.xlu0 %v6095
  %v6097 = vpop.xlane.xlu0 %6096
  %v6098 = vsel %vm6073, %v5999, 0.0
  %v6099 = vadd.f32 %v5997, %v6098
  %6100 = vadd.xlane.f32.xlu0 %v6099
  %v6101 = vpop.xlane.xlu0 %6100
  %v6102 = vsel %vm6073, %v6007, 0.0
  %v6103 = vadd.f32 %v6005, %v6102
  %6104 = vadd.xlane.f32.xlu0 %v6103
  %v6105 = vpop.xlane.xlu0 %6104
  %v6106 = vsel %vm6073, %v6015, 0.0
  %v6107 = vadd.f32 %v6013, %v6106
  %6108 = vadd.xlane.f32.xlu0 %v6107
  %v6109 = vpop.xlane.xlu0 %6108
  %v6110 = vsel %vm6073, %v6023, 0.0
  %v6111 = vadd.f32 %v6021, %v6110
  %6112 = vadd.xlane.f32.xlu0 %v6111
  %v6113 = vpop.xlane.xlu0 %6112
  %v6114 = vsel %vm6073, %v6031, 0.0
  %v6115 = vadd.f32 %v6029, %v6114
  %6116 = vadd.xlane.f32.xlu0 %v6115
  %v6117 = vpop.xlane.xlu0 %6116
  %v6118 = vsel %vm6073, %v6039, 0.0
  %v6119 = vadd.f32 %v6037, %v6118
  %6120 = vadd.xlane.f32.xlu0 %v6119
  %v6121 = vpop.xlane.xlu0 %6120
  %v6122 = vsel %vm6073, %v6047, 0.0
  %v6123 = vadd.f32 %v6045, %v6122
  %6124 = vadd.xlane.f32.xlu0 %v6123
  %v6125 = vpop.xlane.xlu0 %6124
  %v6126 = vsel %vm6073, %v6055, 0.0
  %v6127 = vadd.f32 %v6053, %v6126
  %6128 = vadd.xlane.f32.xlu0 %v6127
  %v6129 = vpop.xlane.xlu0 %6128
  %v6130 = vsel %vm6073, %v6063, 0.0
  %v6131 = vadd.f32 %v6061, %v6130
  %6132 = vadd.xlane.f32.xlu0 %v6131
  %v6133 = vpop.xlane.xlu0 %6132
  %v6134 = vsel %vm6073, %v6071, 0.0
  %v6135 = vadd.f32 %v6069, %v6134
  %6136 = vadd.xlane.f32.xlu0 %v6135
  %v6137 = vpop.xlane.xlu0 %6136
  %v6138 = vmul.f32 %v6077, 0.0051020407
  %v6139 = vmul.f32 %v6081, 0.0051020407
  %v6140 = vmul.f32 %v6085, 0.0051020407
  %v6141 = vmul.f32 %v6089, 0.0051020407
  %v6142 = vmul.f32 %v6093, 0.0051020407
  %v6143 = vmul.f32 %v6097, 0.0051020407
  %v6144 = vmul.f32 %v6101, 0.0051020407
  %v6145 = vmul.f32 %v6105, 0.0051020407
  %v6146 = vmul.f32 %v6109, 0.0051020407
  %v6147 = vmul.f32 %v6113, 0.0051020407
  %v6148 = vmul.f32 %v6117, 0.0051020407
  %v6149 = vmul.f32 %v6121, 0.0051020407
  %v6150 = vmul.f32 %v6125, 0.0051020407
  %v6151 = vmul.f32 %v6129, 0.0051020407
  %v6152 = vmul.f32 %v6133, 0.0051020407
  %v6153 = vmul.f32 %v6137, 0.0051020407
  %v6154 = vsub.f32 %v5949, %v6138
  %v6155 = vsub.f32 %v5951, %v6138
  %v6156 = vsub.f32 %v5957, %v6139
  %v6157 = vsub.f32 %v5959, %v6139
  %v6158 = vsub.f32 %v5965, %v6140
  %v6159 = vsub.f32 %v5967, %v6140
  %v6160 = vsub.f32 %v5973, %v6141
  %v6161 = vsub.f32 %v5975, %v6141
  %v6162 = vsub.f32 %v5981, %v6142
  %v6163 = vsub.f32 %v5983, %v6142
  %v6164 = vsub.f32 %v5989, %v6143
  %v6165 = vsub.f32 %v5991, %v6143
  %v6166 = vsub.f32 %v5997, %v6144
  %v6167 = vsub.f32 %v5999, %v6144
  %v6168 = vsub.f32 %v6005, %v6145
  %v6169 = vsub.f32 %v6007, %v6145
  %v6170 = vsub.f32 %v6013, %v6146
  %v6171 = vsub.f32 %v6015, %v6146
  %v6172 = vsub.f32 %v6021, %v6147
  %v6173 = vsub.f32 %v6023, %v6147
  %v6174 = vsub.f32 %v6029, %v6148
  %v6175 = vsub.f32 %v6031, %v6148
  %v6176 = vsub.f32 %v6037, %v6149
  %v6177 = vsub.f32 %v6039, %v6149
  %v6178 = vsub.f32 %v6045, %v6150
  %v6179 = vsub.f32 %v6047, %v6150
  %v6180 = vsub.f32 %v6053, %v6151
  %v6181 = vsub.f32 %v6055, %v6151
  %v6182 = vsub.f32 %v6061, %v6152
  %v6183 = vsub.f32 %v6063, %v6152
  %v6184 = vsub.f32 %v6069, %v6153
  %v6185 = vsub.f32 %v6071, %v6153
  %v6186 = vmul.f32 %v6154, %v6154
  %v6187 = vmul.f32 %v6155, %v6155
  %v6188 = vmul.f32 %v6156, %v6156
  %v6189 = vmul.f32 %v6157, %v6157
  %v6190 = vmul.f32 %v6158, %v6158
  %v6191 = vmul.f32 %v6159, %v6159
  %v6192 = vmul.f32 %v6160, %v6160
  %v6193 = vmul.f32 %v6161, %v6161
  %v6194 = vmul.f32 %v6162, %v6162
  %v6195 = vmul.f32 %v6163, %v6163
  %v6196 = vmul.f32 %v6164, %v6164
  %v6197 = vmul.f32 %v6165, %v6165
  %v6198 = vmul.f32 %v6166, %v6166
  %v6199 = vmul.f32 %v6167, %v6167
  %v6200 = vmul.f32 %v6168, %v6168
  %v6201 = vmul.f32 %v6169, %v6169
  %v6202 = vmul.f32 %v6170, %v6170
  %v6203 = vmul.f32 %v6171, %v6171
  %v6204 = vmul.f32 %v6172, %v6172
  %v6205 = vmul.f32 %v6173, %v6173
  %v6206 = vmul.f32 %v6174, %v6174
  %v6207 = vmul.f32 %v6175, %v6175
  %v6208 = vmul.f32 %v6176, %v6176
  %v6209 = vmul.f32 %v6177, %v6177
  %v6210 = vmul.f32 %v6178, %v6178
  %v6211 = vmul.f32 %v6179, %v6179
  %v6212 = vmul.f32 %v6180, %v6180
  %v6213 = vmul.f32 %v6181, %v6181
  %v6214 = vmul.f32 %v6182, %v6182
  %v6215 = vmul.f32 %v6183, %v6183
  %v6216 = vmul.f32 %v6184, %v6184
  %v6217 = vmul.f32 %v6185, %v6185
  %v6218 = vsel %vm6073, %v6187, 0.0
  %v6219 = vadd.f32 %v6186, %v6218
  %6220 = vadd.xlane.f32.xlu0 %v6219
  %v6221 = vpop.xlane.xlu0 %6220
  %v6222 = vsel %vm6073, %v6189, 0.0
  %v6223 = vadd.f32 %v6188, %v6222
  %6224 = vadd.xlane.f32.xlu0 %v6223
  %v6225 = vpop.xlane.xlu0 %6224
  %v6226 = vsel %vm6073, %v6191, 0.0
  %v6227 = vadd.f32 %v6190, %v6226
  %6228 = vadd.xlane.f32.xlu0 %v6227
  %v6229 = vpop.xlane.xlu0 %6228
  %v6230 = vsel %vm6073, %v6193, 0.0
  %v6231 = vadd.f32 %v6192, %v6230
  %6232 = vadd.xlane.f32.xlu0 %v6231
  %v6233 = vpop.xlane.xlu0 %6232
  %v6234 = vsel %vm6073, %v6195, 0.0
  %v6235 = vadd.f32 %v6194, %v6234
  %6236 = vadd.xlane.f32.xlu0 %v6235
  %v6237 = vpop.xlane.xlu0 %6236
  %v6238 = vsel %vm6073, %v6197, 0.0
  %v6239 = vadd.f32 %v6196, %v6238
  %6240 = vadd.xlane.f32.xlu0 %v6239
  %v6241 = vpop.xlane.xlu0 %6240
  %v6242 = vsel %vm6073, %v6199, 0.0
  %v6243 = vadd.f32 %v6198, %v6242
  %6244 = vadd.xlane.f32.xlu0 %v6243
  %v6245 = vpop.xlane.xlu0 %6244
  %v6246 = vsel %vm6073, %v6201, 0.0
  %v6247 = vadd.f32 %v6200, %v6246
  %6248 = vadd.xlane.f32.xlu0 %v6247
  %v6249 = vpop.xlane.xlu0 %6248
  %v6250 = vsel %vm6073, %v6203, 0.0
  %v6251 = vadd.f32 %v6202, %v6250
  %6252 = vadd.xlane.f32.xlu0 %v6251
  %v6253 = vpop.xlane.xlu0 %6252
  %v6254 = vsel %vm6073, %v6205, 0.0
  %v6255 = vadd.f32 %v6204, %v6254
  %6256 = vadd.xlane.f32.xlu0 %v6255
  %v6257 = vpop.xlane.xlu0 %6256
  %v6258 = vsel %vm6073, %v6207, 0.0
  %v6259 = vadd.f32 %v6206, %v6258
  %6260 = vadd.xlane.f32.xlu0 %v6259
  %v6261 = vpop.xlane.xlu0 %6260
  %v6262 = vsel %vm6073, %v6209, 0.0
  %v6263 = vadd.f32 %v6208, %v6262
  %6264 = vadd.xlane.f32.xlu0 %v6263
  %v6265 = vpop.xlane.xlu0 %6264
  %v6266 = vsel %vm6073, %v6211, 0.0
  %v6267 = vadd.f32 %v6210, %v6266
  %6268 = vadd.xlane.f32.xlu0 %v6267
  %v6269 = vpop.xlane.xlu0 %6268
  %v6270 = vsel %vm6073, %v6213, 0.0
  %v6271 = vadd.f32 %v6212, %v6270
  %6272 = vadd.xlane.f32.xlu0 %v6271
  %v6273 = vpop.xlane.xlu0 %6272
  %v6274 = vsel %vm6073, %v6215, 0.0
  %v6275 = vadd.f32 %v6214, %v6274
  %6276 = vadd.xlane.f32.xlu0 %v6275
  %v6277 = vpop.xlane.xlu0 %6276
  %v6278 = vsel %vm6073, %v6217, 0.0
  %v6279 = vadd.f32 %v6216, %v6278
  %6280 = vadd.xlane.f32.xlu0 %v6279
  %v6281 = vpop.xlane.xlu0 %6280
  %v6282 = vmul.f32 %v6221, 0.0051020407
  %v6283 = vmul.f32 %v6225, 0.0051020407
  %v6284 = vmul.f32 %v6229, 0.0051020407
  %v6285 = vmul.f32 %v6233, 0.0051020407
  %v6286 = vmul.f32 %v6237, 0.0051020407
  %v6287 = vmul.f32 %v6241, 0.0051020407
  %v6288 = vmul.f32 %v6245, 0.0051020407
  %v6289 = vmul.f32 %v6249, 0.0051020407
  %v6290 = vmul.f32 %v6253, 0.0051020407
  %v6291 = vmul.f32 %v6257, 0.0051020407
  %v6292 = vmul.f32 %v6261, 0.0051020407
  %v6293 = vmul.f32 %v6265, 0.0051020407
  %v6294 = vmul.f32 %v6269, 0.0051020407
  %v6295 = vmul.f32 %v6273, 0.0051020407
  %v6296 = vmul.f32 %v6277, 0.0051020407
  %v6297 = vmul.f32 %v6281, 0.0051020407
  %v6298 = vmax.f32 %v6282, 0.0
  %v6299 = vmax.f32 %v6283, 0.0
  %v6300 = vmax.f32 %v6284, 0.0
  %v6301 = vmax.f32 %v6285, 0.0
  %v6302 = vmax.f32 %v6286, 0.0
  %v6303 = vmax.f32 %v6287, 0.0
  %v6304 = vmax.f32 %v6288, 0.0
  %v6305 = vmax.f32 %v6289, 0.0
  %v6306 = vmax.f32 %v6290, 0.0
  %v6307 = vmax.f32 %v6291, 0.0
  %v6308 = vmax.f32 %v6292, 0.0
  %v6309 = vmax.f32 %v6293, 0.0
  %v6310 = vmax.f32 %v6294, 0.0
  %v6311 = vmax.f32 %v6295, 0.0
  %v6312 = vmax.f32 %v6296, 0.0
  %v6313 = vmax.f32 %v6297, 0.0
  %v6314 = vld [vmem:[%s5] sm:$0xff]
  %v6315 = vld [vmem:[%s5 + $0x8] sm:$0xff]
  %v6316 = vld [vmem:[%s5 + $0x10] sm:$0xff]
  %v6317 = vld [vmem:[%s5 + $0x18] sm:$0xff]
  %v6318 = vld [vmem:[%s5 + $0x20] sm:$0xff]
  %v6319 = vld [vmem:[%s5 + $0x28] sm:$0xff]
  %v6320 = vld [vmem:[%s5 + $0x30] sm:$0xff]
  %v6321 = vld [vmem:[%s5 + $0x38] sm:$0xff]
  %v6322 = vld [vmem:[%s5 + $0x40] sm:$0xff]
  %v6323 = vld [vmem:[%s5 + $0x48] sm:$0xff]
  %v6324 = vld [vmem:[%s5 + $0x50] sm:$0xff]
  %v6325 = vld [vmem:[%s5 + $0x58] sm:$0xff]
  %v6326 = vld [vmem:[%s5 + $0x60] sm:$0xff]
  %v6327 = vld [vmem:[%s5 + $0x68] sm:$0xff]
  %v6328 = vld [vmem:[%s5 + $0x70] sm:$0xff]
  %v6329 = vld [vmem:[%s5 + $0x78] sm:$0xff]
  %v6330 = vadd.f32 %v6298, 0.001
  %v6331 = vadd.f32 %v6299, 0.001
  %v6332 = vadd.f32 %v6300, 0.001
  %v6333 = vadd.f32 %v6301, 0.001
  %v6334 = vadd.f32 %v6302, 0.001
  %v6335 = vadd.f32 %v6303, 0.001
  %v6336 = vadd.f32 %v6304, 0.001
  %v6337 = vadd.f32 %v6305, 0.001
  %v6338 = vadd.f32 %v6306, 0.001
  %v6339 = vadd.f32 %v6307, 0.001
  %v6340 = vadd.f32 %v6308, 0.001
  %v6341 = vadd.f32 %v6309, 0.001
  %v6342 = vadd.f32 %v6310, 0.001
  %v6343 = vadd.f32 %v6311, 0.001
  %v6344 = vadd.f32 %v6312, 0.001
  %v6345 = vadd.f32 %v6313, 0.001
  %v6346 = vrsqrt.pop %v6330
  %v6347 = vrsqrt.pop %v6331
  %v6348 = vrsqrt.pop %v6332
  %v6349 = vrsqrt.pop %v6333
  %v6350 = vrsqrt.pop %v6334
  %v6351 = vrsqrt.pop %v6335
  %v6352 = vrsqrt.pop %v6336
  %v6353 = vrsqrt.pop %v6337
  %v6354 = vrsqrt.pop %v6338
  %v6355 = vrsqrt.pop %v6339
  %v6356 = vrsqrt.pop %v6340
  %v6357 = vrsqrt.pop %v6341
  %v6358 = vrsqrt.pop %v6342
  %v6359 = vrsqrt.pop %v6343
  %v6360 = vrsqrt.pop %v6344
  %v6361 = vrsqrt.pop %v6345
  %v6362 = vmul.f32 %v6346, %v6314
  %v6363 = vmul.f32 %v6347, %v6315
  %v6364 = vmul.f32 %v6348, %v6316
  %v6365 = vmul.f32 %v6349, %v6317
  %v6366 = vmul.f32 %v6350, %v6318
  %v6367 = vmul.f32 %v6351, %v6319
  %v6368 = vmul.f32 %v6352, %v6320
  %v6369 = vmul.f32 %v6353, %v6321
  %v6370 = vmul.f32 %v6354, %v6322
  %v6371 = vmul.f32 %v6355, %v6323
  %v6372 = vmul.f32 %v6356, %v6324
  %v6373 = vmul.f32 %v6357, %v6325
  %v6374 = vmul.f32 %v6358, %v6326
  %v6375 = vmul.f32 %v6359, %v6327
  %v6376 = vmul.f32 %v6360, %v6328
  %v6377 = vmul.f32 %v6361, %v6329
  %6379 = vset.pattern.permute.xlu0 0
  %6380 = vperm.xlu0 %6379, %v6362
  %v6381 = vpop.permute.xlu0 %6380
  %6384 = vset.pattern.permute.xlu0 0
  %6385 = vperm.xlu0 %6384, %v6363
  %v6386 = vpop.permute.xlu0 %6385
  %6389 = vset.pattern.permute.xlu0 0
  %6390 = vperm.xlu0 %6389, %v6364
  %v6391 = vpop.permute.xlu0 %6390
  %6394 = vset.pattern.permute.xlu0 0
  %6395 = vperm.xlu0 %6394, %v6365
  %v6396 = vpop.permute.xlu0 %6395
  %6399 = vset.pattern.permute.xlu0 0
  %6400 = vperm.xlu0 %6399, %v6366
  %v6401 = vpop.permute.xlu0 %6400
  %6404 = vset.pattern.permute.xlu0 0
  %6405 = vperm.xlu0 %6404, %v6367
  %v6406 = vpop.permute.xlu0 %6405
  %6409 = vset.pattern.permute.xlu0 0
  %6410 = vperm.xlu0 %6409, %v6368
  %v6411 = vpop.permute.xlu0 %6410
  %6414 = vset.pattern.permute.xlu0 0
  %6415 = vperm.xlu0 %6414, %v6369
  %v6416 = vpop.permute.xlu0 %6415
  %6419 = vset.pattern.permute.xlu0 0
  %6420 = vperm.xlu0 %6419, %v6370
  %v6421 = vpop.permute.xlu0 %6420
  %6424 = vset.pattern.permute.xlu0 0
  %6425 = vperm.xlu0 %6424, %v6371
  %v6426 = vpop.permute.xlu0 %6425
  %6429 = vset.pattern.permute.xlu0 0
  %6430 = vperm.xlu0 %6429, %v6372
  %v6431 = vpop.permute.xlu0 %6430
  %6434 = vset.pattern.permute.xlu0 0
  %6435 = vperm.xlu0 %6434, %v6373
  %v6436 = vpop.permute.xlu0 %6435
  %6439 = vset.pattern.permute.xlu0 0
  %6440 = vperm.xlu0 %6439, %v6374
  %v6441 = vpop.permute.xlu0 %6440
  %6444 = vset.pattern.permute.xlu0 0
  %6445 = vperm.xlu0 %6444, %v6375
  %v6446 = vpop.permute.xlu0 %6445
  %6449 = vset.pattern.permute.xlu0 0
  %6450 = vperm.xlu0 %6449, %v6376
  %v6451 = vpop.permute.xlu0 %6450
  %6454 = vset.pattern.permute.xlu0 0
  %6455 = vperm.xlu0 %6454, %v6377
  %v6456 = vpop.permute.xlu0 %6455
  %v6458 = vmul.f32 %v6154, %v6381
  %v6459 = vmul.f32 %v6155, %v6381
  %v6460 = vmul.f32 %v6156, %v6386
  %v6461 = vmul.f32 %v6157, %v6386
  %v6462 = vmul.f32 %v6158, %v6391
  %v6463 = vmul.f32 %v6159, %v6391
  %v6464 = vmul.f32 %v6160, %v6396
  %v6465 = vmul.f32 %v6161, %v6396
  %v6466 = vmul.f32 %v6162, %v6401
  %v6467 = vmul.f32 %v6163, %v6401
  %v6468 = vmul.f32 %v6164, %v6406
  %v6469 = vmul.f32 %v6165, %v6406
  %v6470 = vmul.f32 %v6166, %v6411
  %v6471 = vmul.f32 %v6167, %v6411
  %v6472 = vmul.f32 %v6168, %v6416
  %v6473 = vmul.f32 %v6169, %v6416
  %v6474 = vmul.f32 %v6170, %v6421
  %v6475 = vmul.f32 %v6171, %v6421
  %v6476 = vmul.f32 %v6172, %v6426
  %v6477 = vmul.f32 %v6173, %v6426
  %v6478 = vmul.f32 %v6174, %v6431
  %v6479 = vmul.f32 %v6175, %v6431
  %v6480 = vmul.f32 %v6176, %v6436
  %v6481 = vmul.f32 %v6177, %v6436
  %v6482 = vmul.f32 %v6178, %v6441
  %v6483 = vmul.f32 %v6179, %v6441
  %v6484 = vmul.f32 %v6180, %v6446
  %v6485 = vmul.f32 %v6181, %v6446
  %v6486 = vmul.f32 %v6182, %v6451
  %v6487 = vmul.f32 %v6183, %v6451
  %v6488 = vmul.f32 %v6184, %v6456
  %v6489 = vmul.f32 %v6185, %v6456
  %6491 = vset.pattern.permute.xlu0 1
  %6492 = vperm.xlu0 %6491, %v6314
  %v6493 = vpop.permute.xlu0 %6492
  %6496 = vset.pattern.permute.xlu0 1
  %6497 = vperm.xlu0 %6496, %v6315
  %v6498 = vpop.permute.xlu0 %6497
  %6501 = vset.pattern.permute.xlu0 1
  %6502 = vperm.xlu0 %6501, %v6316
  %v6503 = vpop.permute.xlu0 %6502
  %6506 = vset.pattern.permute.xlu0 1
  %6507 = vperm.xlu0 %6506, %v6317
  %v6508 = vpop.permute.xlu0 %6507
  %6511 = vset.pattern.permute.xlu0 1
  %6512 = vperm.xlu0 %6511, %v6318
  %v6513 = vpop.permute.xlu0 %6512
  %6516 = vset.pattern.permute.xlu0 1
  %6517 = vperm.xlu0 %6516, %v6319
  %v6518 = vpop.permute.xlu0 %6517
  %6521 = vset.pattern.permute.xlu0 1
  %6522 = vperm.xlu0 %6521, %v6320
  %v6523 = vpop.permute.xlu0 %6522
  %6526 = vset.pattern.permute.xlu0 1
  %6527 = vperm.xlu0 %6526, %v6321
  %v6528 = vpop.permute.xlu0 %6527
  %6531 = vset.pattern.permute.xlu0 1
  %6532 = vperm.xlu0 %6531, %v6322
  %v6533 = vpop.permute.xlu0 %6532
  %6536 = vset.pattern.permute.xlu0 1
  %6537 = vperm.xlu0 %6536, %v6323
  %v6538 = vpop.permute.xlu0 %6537
  %6541 = vset.pattern.permute.xlu0 1
  %6542 = vperm.xlu0 %6541, %v6324
  %v6543 = vpop.permute.xlu0 %6542
  %6546 = vset.pattern.permute.xlu0 1
  %6547 = vperm.xlu0 %6546, %v6325
  %v6548 = vpop.permute.xlu0 %6547
  %6551 = vset.pattern.permute.xlu0 1
  %6552 = vperm.xlu0 %6551, %v6326
  %v6553 = vpop.permute.xlu0 %6552
  %6556 = vset.pattern.permute.xlu0 1
  %6557 = vperm.xlu0 %6556, %v6327
  %v6558 = vpop.permute.xlu0 %6557
  %6561 = vset.pattern.permute.xlu0 1
  %6562 = vperm.xlu0 %6561, %v6328
  %v6563 = vpop.permute.xlu0 %6562
  %6566 = vset.pattern.permute.xlu0 1
  %6567 = vperm.xlu0 %6566, %v6329
  %v6568 = vpop.permute.xlu0 %6567
  %v6570 = vadd.f32 %v6458, %v6493
  %v6571 = vadd.f32 %v6459, %v6493
  %v6572 = vadd.f32 %v6460, %v6498
  %v6573 = vadd.f32 %v6461, %v6498
  %v6574 = vadd.f32 %v6462, %v6503
  %v6575 = vadd.f32 %v6463, %v6503
  %v6576 = vadd.f32 %v6464, %v6508
  %v6577 = vadd.f32 %v6465, %v6508
  %v6578 = vadd.f32 %v6466, %v6513
  %v6579 = vadd.f32 %v6467, %v6513
  %v6580 = vadd.f32 %v6468, %v6518
  %v6581 = vadd.f32 %v6469, %v6518
  %v6582 = vadd.f32 %v6470, %v6523
  %v6583 = vadd.f32 %v6471, %v6523
  %v6584 = vadd.f32 %v6472, %v6528
  %v6585 = vadd.f32 %v6473, %v6528
  %v6586 = vadd.f32 %v6474, %v6533
  %v6587 = vadd.f32 %v6475, %v6533
  %v6588 = vadd.f32 %v6476, %v6538
  %v6589 = vadd.f32 %v6477, %v6538
  %v6590 = vadd.f32 %v6478, %v6543
  %v6591 = vadd.f32 %v6479, %v6543
  %v6592 = vadd.f32 %v6480, %v6548
  %v6593 = vadd.f32 %v6481, %v6548
  %v6594 = vadd.f32 %v6482, %v6553
  %v6595 = vadd.f32 %v6483, %v6553
  %v6596 = vadd.f32 %v6484, %v6558
  %v6597 = vadd.f32 %v6485, %v6558
  %v6598 = vadd.f32 %v6486, %v6563
  %v6599 = vadd.f32 %v6487, %v6563
  %v6600 = vadd.f32 %v6488, %v6568
  %v6601 = vadd.f32 %v6489, %v6568
  %6602 = vst [vmem:[%s6] sm:$0xff] %v6570
  %6603 = vst.msk [vmem:[%s6 + $0x8] sm:$0xff] %vm6073, %v6571
  %6604 = vst [vmem:[%s6 + $0x10] sm:$0xff] %v6572
  %6605 = vst.msk [vmem:[%s6 + $0x18] sm:$0xff] %vm6073, %v6573
  %6606 = vst [vmem:[%s6 + $0x20] sm:$0xff] %v6574
  %6607 = vst.msk [vmem:[%s6 + $0x28] sm:$0xff] %vm6073, %v6575
  %6608 = vst [vmem:[%s6 + $0x30] sm:$0xff] %v6576
  %6609 = vst.msk [vmem:[%s6 + $0x38] sm:$0xff] %vm6073, %v6577
  %6610 = vst [vmem:[%s6 + $0x40] sm:$0xff] %v6578
  %6611 = vst.msk [vmem:[%s6 + $0x48] sm:$0xff] %vm6073, %v6579
  %6612 = vst [vmem:[%s6 + $0x50] sm:$0xff] %v6580
  %6613 = vst.msk [vmem:[%s6 + $0x58] sm:$0xff] %vm6073, %v6581
  %6614 = vst [vmem:[%s6 + $0x60] sm:$0xff] %v6582
  %6615 = vst.msk [vmem:[%s6 + $0x68] sm:$0xff] %vm6073, %v6583
  %6616 = vst [vmem:[%s6 + $0x70] sm:$0xff] %v6584
  %6617 = vst.msk [vmem:[%s6 + $0x78] sm:$0xff] %vm6073, %v6585
  %6618 = vst [vmem:[%s6 + $0x80] sm:$0xff] %v6586
  %6619 = vst.msk [vmem:[%s6 + $0x88] sm:$0xff] %vm6073, %v6587
  %6620 = vst [vmem:[%s6 + $0x90] sm:$0xff] %v6588
  %6621 = vst.msk [vmem:[%s6 + $0x98] sm:$0xff] %vm6073, %v6589
  %6622 = vst [vmem:[%s6 + $0xa0] sm:$0xff] %v6590
  %6623 = vst.msk [vmem:[%s6 + $0xa8] sm:$0xff] %vm6073, %v6591
  %6624 = vst [vmem:[%s6 + $0xb0] sm:$0xff] %v6592
  %6625 = vst.msk [vmem:[%s6 + $0xb8] sm:$0xff] %vm6073, %v6593
  %6626 = vst [vmem:[%s6 + $0xc0] sm:$0xff] %v6594
  %6627 = vst.msk [vmem:[%s6 + $0xc8] sm:$0xff] %vm6073, %v6595
  %6628 = vst [vmem:[%s6 + $0xd0] sm:$0xff] %v6596
  %6629 = vst.msk [vmem:[%s6 + $0xd8] sm:$0xff] %vm6073, %v6597
  %6630 = vst [vmem:[%s6 + $0xe0] sm:$0xff] %v6598
  %6631 = vst.msk [vmem:[%s6 + $0xe8] sm:$0xff] %vm6073, %v6599
  %6632 = vst [vmem:[%s6 + $0xf0] sm:$0xff] %v6600
  %6633 = vst.msk [vmem:[%s6 + $0xf8] sm:$0xff] %vm6073, %v6601
  // Predicated region
  $region92: #{tpu_custom_call.1} parent=0 // pred_check
    _
  $region93: #{tpu_custom_call.1} parent=0 // pred_check_branch
    %6635 = sbr.rel (0) target = $region95
  $region94: #{tpu_custom_call.1} parent=0 // pred_region
    _
  $region95: #{tpu_custom_call.1} parent=0 // pred_fallthru
    _
  // Predicated region
  $region96: #{tpu_custom_call.1} parent=0 // pred_check
    _
  $region97: #{tpu_custom_call.1} parent=0 // pred_check_branch
    %6637 = sbr.rel (0) target = $region99
  $region98: #{tpu_custom_call.1} parent=0 // pred_region
    _
  $region99: #{tpu_custom_call.1} parent=0 // pred_fallthru
    _
  %6638 = vsyncmov [#allocation4]
  %s6639 = vpop.sfrf %6638
  %p6640 = scmp.eq.s32.totalorder %s6639, 0
  %p6641 = pneg %p6640
  %6643 = shalt.err (%p6641)
  %s6644 = scalar_lea.sflag [#allocation4], 1
  %6645 = vsyncmov %s6644
  %s6646 = vpop.sfrf %6645
  %p6647 = scmp.eq.s32.totalorder %s6646, 0
  %p6648 = pneg %p6647
  %6650 = shalt.err (%p6648)

</llo_original>
